<compile_context>
chip_gen: v7x
topology: tpu7x:2x2x1
jax: 0.10.0
libtpu: 0.0.40
codegen_flags: <defaults>
</compile_context>

<pallas_src>
import math
from functools import partial

import jax
import jax.numpy as jnp
from jax.experimental import pallas as pl
from jax.experimental.pallas import tpu as pltpu

INPUT_DIM = 768        # wav2vec2 hidden size
NUM_CHANNELS = 50      # CNNExtractor num_channels == transformer d_model == fc in_features
KERNEL_SIZE = 2
D_MODEL = NUM_CHANNELS
N_HEADS = 10
HEAD_DIM = D_MODEL // N_HEADS
FFN_DIM = 2048
FFN_CHUNK = 512        # FFN inner-dim chunk (bounds the live (M, 2048) intermediate)
N_CLASSES = 2
N_LAYERS = 2
LN_EPS = 1e-5

STREAM_DTYPE = jnp.bfloat16    # inter-kernel (B, L, 50) activations
MATMUL_DTYPE = jnp.bfloat16    # MXU operand dtype (accumulation stays f32)
MAX_L_TILE = 512


# ---------------------------------------------------------------------------
# Generation-aware VMEM budgeting / tile sizing.
# ---------------------------------------------------------------------------
def _physical_vmem_bytes():
    try:
        return int(pltpu.get_tpu_info().vmem_capacity_bytes)
    except Exception:
        return 64 << 20                      # conservative (v7x-sized) fallback


def _vmem_budget_bytes():
    # Working-set target: ~32 MB on v7x (64 MiB/TC), ~64 MB on v5e/v6e (128 MiB).
    return min(_physical_vmem_bytes() // 2, 80 << 20)


def _vmem_limit_bytes():
    # Scoped-VMEM limit handed to Mosaic: generous headroom above the budget.
    return min(_physical_vmem_bytes() - (16 << 20), 112 << 20)


def _pick_l_tile(batch, l_pad, budget):
    """Largest multiple-of-8 L-tile whose encoder working set fits `budget`.

    Rough per-position VMEM bytes (f32 intermediates):
      B^2-scaled attention tensors (q*k prod, expanded attn, H-wide logits) ~ 700*B^2
      B-scaled row tensors (qkv, q/k/v, ctx, residuals, 512-wide FFN chunk) ~ 6000*B
    plus ~2 MB for double-buffered (bf16) weights and Mosaic internal scratch.
    """
    per_row = 700 * batch * batch + 6000 * batch
    avail = max(budget - (2 << 20), 8 * per_row)
    tl = max(8, (int(avail // per_row) // 8) * 8)
    return int(min(tl, MAX_L_TILE, l_pad))


# ---------------------------------------------------------------------------
# Kernel 1: Conv1d(768 -> 50, kernel_size=2) as one fused (T,768)@(768,100) matmul.
# Output written directly in the padded (B, L_pad, 50) bf16 stream layout.
# ---------------------------------------------------------------------------
def _conv1d_k2_kernel(x_ref, w01_ref, b_ref, o_ref, *, out_rows):
    T = x_ref.shape[1]
    C = b_ref.shape[1]
    x = x_ref[0].astype(MATMUL_DTYPE)                                    # (T, 768)
    # Single fused matmul (taps 0 and 1 concatenated along columns); the k=2 tap shift
    # is applied on the narrow (T, 100) result, never on the 768-lane-wide input.
    y01 = jnp.dot(x, w01_ref[...], preferred_element_type=jnp.float32)   # (T, 2C)
    y = y01[:-1, :C] + y01[1:, C:] + b_ref[...]                           # (T-1, C) f32
    pad = out_rows - (T - 1)
    if pad > 0:  # zero-fill L padding (finite, masked out of the final mean)
        y = jnp.concatenate([y, jnp.zeros((pad, C), jnp.float32)], axis=0)
    o_ref[0] = y.astype(o_ref.dtype)


def conv1d_k2(x, w01, b, *, out_rows):
    B, T, D = x.shape
    C = b.shape[1]
    # NOTE: for very long audio (T >~ 2000) this full-T-per-batch block should be
    # T-tiled with a 1-frame seam; left untiled here (conv is <5% of total flops).
    return pl.pallas_call(
        partial(_conv1d_k2_kernel, out_rows=out_rows),
        out_shape=jax.ShapeDtypeStruct((B, out_rows, C), STREAM_DTYPE),
        grid=(B,),
        in_specs=[
            pl.BlockSpec((1, T, D), lambda b_: (b_, 0, 0)),
            pl.BlockSpec((D, 2 * C), lambda b_: (0, 0)),
            pl.BlockSpec((1, C), lambda b_: (0, 0)),
        ],
        out_specs=pl.BlockSpec((1, out_rows, C), lambda b_: (b_, 0, 0)),
        compiler_params=pltpu.CompilerParams(
            dimension_semantics=("parallel",),
            vmem_limit_bytes=_vmem_limit_bytes()),
    )(x, w01, b)


# ---------------------------------------------------------------------------
# Shared encoder-layer math on one (B, TL, d) tile of L positions (refs in, f32 out).
# ---------------------------------------------------------------------------
def _layernorm(x, gamma, beta):
    mu = jnp.mean(x, axis=-1, keepdims=True)
    xc = x - mu
    var = jnp.mean(xc * xc, axis=-1, keepdims=True)
    return xc * jax.lax.rsqrt(var + LN_EPS) * gamma + beta


def _encoder_layer_math(x_ref, wqkv_ref, bqkv_ref, wo_ref, bo_ref, gdh_ref, ghd_ref,
                        w1_ref, b1_ref, w2_ref, b2_ref,
                        ln1g_ref, ln1b_ref, ln2g_ref, ln2b_ref):
    B, TL, d = x_ref.shape
    H = gdh_ref.shape[1]
    M = B * TL

    x2 = x_ref[...].astype(jnp.float32).reshape(M, d)                   # f32 residual
    xb = x2.astype(MATMUL_DTYPE)

    # Fused Q/K/V projection: one MXU matmul (bf16 operands, f32 accumulation).
    qkv = jnp.dot(xb, wqkv_ref[...], preferred_element_type=jnp.float32) + bqkv_ref[...]
    q = qkv[:, 0 * d:1 * d].reshape(B, TL, d)
    k = qkv[:, 1 * d:2 * d].reshape(B, TL, d)
    v = qkv[:, 2 * d:3 * d].reshape(B, TL, d)

    # CustomAttention quirk: attention runs over the B samples independently per
    # position l.  Logits are produced H-wide via the (d, H) head-indicator (with the
    # log(d_model)/sqrt(head_dim) scale pre-folded), so max/exp/sum run on 5x fewer
    # elements; expansion back to d channels happens only for the attn*V contraction.
    prod = q[:, None, :, :] * k[None, :, :, :]                          # (B,B,TL,d) f32
    e = jnp.dot(prod.reshape(B * B * TL, d), gdh_ref[...],
                preferred_element_type=jnp.float32).reshape(B, B, TL, H)
    m = jnp.max(e, axis=1, keepdims=True)
    p = jnp.exp(e - m)
    attn = p * pl.reciprocal(jnp.sum(p, axis=1, keepdims=True), approx=False)
    attn_d = jnp.dot(attn.reshape(B * B * TL, H), ghd_ref[...],
                     preferred_element_type=jnp.float32).reshape(B, B, TL, d)
    ctx = jnp.sum(attn_d * v[None, :, :, :], axis=1)                    # (B, TL, d)

    attn_out = jnp.dot(ctx.reshape(M, d).astype(MATMUL_DTYPE), wo_ref[...],
                       preferred_element_type=jnp.float32) + bo_ref[...]

    # Dropouts are identity (eval mode).
    h = _layernorm(x2 + attn_out, ln1g_ref[...], ln1b_ref[...])         # (M, d) f32

    # FFN 50 -> 2048 -> 50, chunked over the 2048 axis; bf16 operands, f32 accumulation.
    hb = h.astype(MATMUL_DTYPE)

    def ffn_chunk(c, acc):
        col = pl.multiple_of(c * FFN_CHUNK, FFN_CHUNK)
        f = jnp.dot(hb, w1_ref[:, pl.ds(col, FFN_CHUNK)],
                    preferred_element_type=jnp.float32)
        f = jnp.maximum(f + b1_ref[:, pl.ds(col, FFN_CHUNK)], 0.0).astype(MATMUL_DTYPE)
        return acc + jnp.dot(f, w2_ref[pl.ds(col, FFN_CHUNK), :],
                             preferred_element_type=jnp.float32)

    ffn = jax.lax.fori_loop(0, FFN_DIM // FFN_CHUNK, ffn_chunk,
                            jnp.zeros((M, d), jnp.float32), unroll=True)
    ffn = ffn + b2_ref[...]

    y = _layernorm(h + ffn, ln2g_ref[...], ln2b_ref[...])
    return y.reshape(B, TL, d)                                          # f32


# ---------------------------------------------------------------------------
# Kernel 2: one encoder layer, gridded over L-tiles (parallel), bf16 stream out.
# Kernel 3: last encoder layer, emits per-tile masked partial sums (parallel grid);
#           the tiny mean + Linear(50->2) is done by the caller in plain jnp.
# ---------------------------------------------------------------------------
def _encoder_layer_kernel(x_ref, *refs):
    o_ref = refs[-1]
    y = _encoder_layer_math(x_ref, *refs[:-1])
    o_ref[...] = y.astype(o_ref.dtype)


def _encoder_tail_kernel(x_ref, *refs, l_tile, l_true):
    o_ref = refs[-1]
    y = _encoder_layer_math(x_ref, *refs[:-1])                           # (B, TL, d) f32
    pos = pl.program_id(0) * l_tile + jax.lax.broadcasted_iota(
        jnp.int32, (1, l_tile, 1), 1)
    o_ref[0] = jnp.sum(jnp.where(pos < l_true, y, 0.0), axis=1)          # (B, d)


_LAYER_KEYS = ("wqkv", "bqkv", "wo", "bo", "g_dh", "g_hd",
               "w1", "b1", "w2", "b2", "ln1_g", "ln1_b", "ln2_g", "ln2_b")


def _const_spec(a):
    nd = a.ndim
    return pl.BlockSpec(a.shape, lambda l: (0,) * nd)


def encoder_layer(x, p):
    B, Lp, d = x.shape
    tl = _pick_l_tile(B, Lp, _vmem_budget_bytes())
    weights = [p[k] for k in _LAYER_KEYS]
    return pl.pallas_call(
        _encoder_layer_kernel,
        out_shape=jax.ShapeDtypeStruct((B, Lp, d), STREAM_DTYPE),
        grid=(pl.cdiv(Lp, tl),),
        in_specs=[pl.BlockSpec((B, tl, d), lambda l: (0, l, 0))]
                 + [_const_spec(w) for w in weights],
        out_specs=pl.BlockSpec((B, tl, d), lambda l: (0, l, 0)),
        compiler_params=pltpu.CompilerParams(
            dimension_semantics=("parallel",),
            vmem_limit_bytes=_vmem_limit_bytes()),
    )(x, *weights)


def encoder_layer_partial_sums(x, p, *, l_true):
    B, Lp, d = x.shape
    tl = _pick_l_tile(B, Lp, _vmem_budget_bytes())
    n_tiles = pl.cdiv(Lp, tl)
    weights = [p[k] for k in _LAYER_KEYS]
    return pl.pallas_call(
        partial(_encoder_tail_kernel, l_tile=tl, l_true=l_true),
        out_shape=jax.ShapeDtypeStruct((n_tiles, B, d), jnp.float32),
        grid=(n_tiles,),
        in_specs=[pl.BlockSpec((B, tl, d), lambda l: (0, l, 0))]
                 + [_const_spec(w) for w in weights],
        out_specs=pl.BlockSpec((1, B, d), lambda l: (l, 0, 0)),
        compiler_params=pltpu.CompilerParams(
            dimension_semantics=("parallel",),
            vmem_limit_bytes=_vmem_limit_bytes()),
    )(x, *weights)


# ---------------------------------------------------------------------------
# Parameter initialization (deterministic, PyTorch-default-style scales).
# ---------------------------------------------------------------------------
def _uniform(key, shape, bound):
    return jax.random.uniform(key, shape, jnp.float32, -bound, bound)


def _linear(key, fan_in, fan_out):
    k1, k2 = jax.random.split(key)
    bound = 1.0 / math.sqrt(fan_in)
    return _uniform(k1, (fan_in, fan_out), bound), _uniform(k2, (1, fan_out), bound)


def _init_layer(key):
    ks = jax.random.split(key, 6)
    wq, bq = _linear(ks[0], D_MODEL, D_MODEL)
    wk, bk = _linear(ks[1], D_MODEL, D_MODEL)
    wv, bv = _linear(ks[2], D_MODEL, D_MODEL)
    wo, bo = _linear(ks[3], D_MODEL, D_MODEL)
    w1, b1 = _linear(ks[4], D_MODEL, FFN_DIM)
    w2, b2 = _linear(ks[5], FFN_DIM, D_MODEL)
    head_id = jnp.arange(D_MODEL) // HEAD_DIM                            # channel -> head
    indicator = (head_id[:, None] == jnp.arange(N_HEADS)[None, :]).astype(jnp.float32)
    # energy = log(n) * q.k / sqrt(head_dim) with n = k_linear.in_features = d_model (=50),
    # NOT the number of attended tokens; the whole scale is folded into the indicator.
    scale = math.log(D_MODEL) / math.sqrt(HEAD_DIM)
    ones = jnp.ones((1, D_MODEL), jnp.float32)
    zeros = jnp.zeros((1, D_MODEL), jnp.float32)
    return dict(
        wqkv=jnp.concatenate([wq, wk, wv], axis=1).astype(MATMUL_DTYPE),  # (d, 3d) bf16
        bqkv=jnp.concatenate([bq, bk, bv], axis=1),                       # (1, 3d) f32
        wo=wo.astype(MATMUL_DTYPE), bo=bo,
        g_dh=indicator * scale,                                           # (d, H) f32
        g_hd=jnp.transpose(indicator),                                    # (H, d) f32
        w1=w1.astype(MATMUL_DTYPE), b1=b1,
        w2=w2.astype(MATMUL_DTYPE), b2=b2,
        ln1_g=ones, ln1_b=zeros, ln2_g=ones, ln2_b=zeros)


def init_params(key):
    k_conv_w, k_conv_b, k_layer, k_fc = jax.random.split(key, 4)
    cb = 1.0 / math.sqrt(INPUT_DIM * KERNEL_SIZE)
    conv_w = _uniform(k_conv_w, (NUM_CHANNELS, INPUT_DIM, KERNEL_SIZE), cb)  # (C_out, C_in, K)
    conv_b = _uniform(k_conv_b, (1, NUM_CHANNELS), cb)
    layer = _init_layer(k_layer)
    fc_w, fc_b = _linear(k_fc, D_MODEL, N_CLASSES)
    return dict(
        # fused conv taps: columns [0:50] = tap 0, [50:100] = tap 1
        conv_w01=jnp.concatenate(
            [jnp.transpose(conv_w[:, :, 0]), jnp.transpose(conv_w[:, :, 1])],
            axis=1).astype(MATMUL_DTYPE),                                 # (768, 100) bf16
        conv_b=conv_b,
        # nn.TransformerEncoder deep-copies the layer -> both layers share identical init.
        layers=[layer] * N_LAYERS,
        fc_w=fc_w, fc_b=fc_b)


# ---------------------------------------------------------------------------
# Full forward.
# ---------------------------------------------------------------------------
def disfluency_forward(features, params):
    # TODO(synk): Wav2Vec2FeatureExtractor is a frozen pretrained HF wav2vec2 backbone with
    # no clean Pallas equivalent; this kernel consumes its (B, T, 768) hidden states directly.
    B, T, _ = features.shape
    L = T - 1                                    # Conv1d(kernel_size=2) output length
    L_pad = max(8, ((L + 7) // 8) * 8)           # keep the stream's L a multiple of 8

    x = conv1d_k2(features, params["conv_w01"], params["conv_b"], out_rows=L_pad)
    for lp in params["layers"][:-1]:
        x = encoder_layer(x, lp)
    partial_sums = encoder_layer_partial_sums(x, params["layers"][-1], l_true=L)
    mean = jnp.sum(partial_sums, axis=0) * (1.0 / L)                     # (B, 50) f32
    return jnp.dot(mean, params["fc_w"]) + params["fc_b"]                # (B, 2) f32


if __name__ == "__main__":
    key = jax.random.PRNGKey(0)
    pkey, xkey = jax.random.split(key)
    params = init_params(pkey)

    B, T = 2, 16                                  # small example: L = 15 -> padded to 16
    features = jax.random.normal(xkey, (B, T, INPUT_DIM), jnp.float32)

    out = jax.block_until_ready(jax.jit(disfluency_forward)(features, params))
    assert out.shape == (B, N_CLASSES)
    assert bool(jnp.all(jnp.isfinite(out)))
    print("KERNEL_OK")
</pallas_src>

<mosaic_0001>
module attributes {stable_mosaic.version = 11 : i64} {
  func.func @_conv1d_k2_kernel(%arg0: i32, %arg1: memref<1x16x768xf32, #tpu.memory_space<vmem>>, %arg2: memref<768x100xbf16, #tpu.memory_space<vmem>>, %arg3: memref<1x50xf32, #tpu.memory_space<vmem>>, %arg4: memref<1x16x50xbf16, #tpu.memory_space<vmem>>) attributes {dimension_semantics = [#tpu.dimension_semantics<parallel>], iteration_bounds = array<i64: 2>, scalar_prefetch = 0 : i64, scratch_operands = 0 : i64, tpu.core_type = #tpu.core_type<tc>, window_params = [{transform_indices = @transform_0, window_bounds = array<i64: 1, 16, 768>}, {pipeline_mode = #tpu.pipeline_mode<synchronous>, transform_indices = @transform_1, window_bounds = array<i64: 768, 100>}, {pipeline_mode = #tpu.pipeline_mode<synchronous>, transform_indices = @transform_2, window_bounds = array<i64: 1, 50>}, {transform_indices = @transform_3, window_bounds = array<i64: 1, 16, 50>}]} {
    %c0 = arith.constant 0 : index
    %c0_0 = arith.constant 0 : index
    %c0_1 = arith.constant 0 : index
    %0 = vector.load %arg1[%c0, %c0_0, %c0_1] : memref<1x16x768xf32, #tpu.memory_space<vmem>>, vector<1x16x768xf32>
    %1 = vector.shape_cast %0 : vector<1x16x768xf32> to vector<16x768xf32>
    %2 = arith.truncf %1 : vector<16x768xf32> to vector<16x768xbf16>
    %c0_2 = arith.constant 0 : index
    %c0_3 = arith.constant 0 : index
    %3 = vector.load %arg2[%c0_2, %c0_3] : memref<768x100xbf16, #tpu.memory_space<vmem>>, vector<768x100xbf16>
    %cst = arith.constant dense<0.000000e+00> : vector<16x100xf32>
    %4 = tpu.matmul %2, %3, %cst {dimension_numbers = #tpu.dot_dimension_numbers<[1], [0], [0], [1], [0, 0, 1, 1], [], []>} : vector<16x768xbf16>, vector<768x100xbf16>, vector<16x100xf32> -> vector<16x100xf32>
    %5 = vector.extract_strided_slice %4 {offsets = [0, 0], sizes = [15, 50], strides = [1, 1]} : vector<16x100xf32> to vector<15x50xf32>
    %6 = vector.extract_strided_slice %4 {offsets = [1, 50], sizes = [15, 50], strides = [1, 1]} : vector<16x100xf32> to vector<15x50xf32>
    %7 = arith.addf %5, %6 : vector<15x50xf32>
    %c0_4 = arith.constant 0 : index
    %c0_5 = arith.constant 0 : index
    %8 = vector.load %arg3[%c0_4, %c0_5] : memref<1x50xf32, #tpu.memory_space<vmem>>, vector<1x50xf32>
    %9 = vector.broadcast %8 : vector<1x50xf32> to vector<15x50xf32>
    %10 = arith.addf %7, %9 : vector<15x50xf32>
    %cst_6 = arith.constant 0.000000e+00 : f32
    %11 = vector.broadcast %cst_6 : f32 to vector<1x50xf32>
    %12 = tpu.concatenate %10, %11 in 0 : vector<15x50xf32>, vector<1x50xf32> -> vector<16x50xf32>
    %13 = arith.truncf %12 : vector<16x50xf32> to vector<16x50xbf16>
    %c0_7 = arith.constant 0 : index
    %c0_8 = arith.constant 0 : index
    %c0_9 = arith.constant 0 : index
    %14 = vector.load %arg4[%c0_7, %c0_8, %c0_9] : memref<1x16x50xbf16, #tpu.memory_space<vmem>>, vector<1x16x50xbf16>
    %15 = vector.shape_cast %14 : vector<1x16x50xbf16> to vector<16x50xbf16>
    %16 = vector.shape_cast %13 : vector<16x50xbf16> to vector<1x16x50xbf16>
    tpu.vector_store %arg4[%c0_7, %c0_8, %c0_9], %16 {strides = array<i32>} : memref<1x16x50xbf16, #tpu.memory_space<vmem>>, vector<1x16x50xbf16>,
    return
  }
  func.func @transform_0(%arg0: i32) -> (i32, i32, i32) {
    %c0_i32 = arith.constant 0 : i32
    %c0_i32_0 = arith.constant 0 : i32
    %c0_i32_1 = arith.constant 0 : i32
    return %arg0, %c0_i32, %c0_i32_0 : i32, i32, i32
  }
  func.func @transform_1(%arg0: i32) -> (i32, i32) {
    %c0_i32 = arith.constant 0 : i32
    %c0_i32_0 = arith.constant 0 : i32
    %c0_i32_1 = arith.constant 0 : i32
    return %c0_i32, %c0_i32_0 : i32, i32
  }
  func.func @transform_2(%arg0: i32) -> (i32, i32) {
    %c0_i32 = arith.constant 0 : i32
    %c0_i32_0 = arith.constant 0 : i32
    %c0_i32_1 = arith.constant 0 : i32
    return %c0_i32, %c0_i32_0 : i32, i32
  }
  func.func @transform_3(%arg0: i32) -> (i32, i32, i32) {
    %c0_i32 = arith.constant 0 : i32
    %c0_i32_0 = arith.constant 0 : i32
    %c0_i32_1 = arith.constant 0 : i32
    return %arg0, %c0_i32, %c0_i32_0 : i32, i32, i32
  }
}

module attributes {stable_mosaic.version = 11 : i64} {
  func.func @_encoder_tail_kernel(%arg0: i32, %arg1: memref<2x16x50xbf16, #tpu.memory_space<vmem>>, %arg2: memref<50x150xbf16, #tpu.memory_space<vmem>>, %arg3: memref<1x150xf32, #tpu.memory_space<vmem>>, %arg4: memref<50x50xbf16, #tpu.memory_space<vmem>>, %arg5: memref<1x50xf32, #tpu.memory_space<vmem>>, %arg6: memref<50x10xf32, #tpu.memory_space<vmem>>, %arg7: memref<10x50xf32, #tpu.memory_space<vmem>>, %arg8: memref<50x2048xbf16, #tpu.memory_space<vmem>>, %arg9: memref<1x2048xf32, #tpu.memory_space<vmem>>, %arg10: memref<2048x50xbf16, #tpu.memory_space<vmem>>, %arg11: memref<1x50xf32, #tpu.memory_space<vmem>>, %arg12: memref<1x50xf32, #tpu.memory_space<vmem>>, %arg13: memref<1x50xf32, #tpu.memory_space<vmem>>, %arg14: memref<1x50xf32, #tpu.memory_space<vmem>>, %arg15: memref<1x50xf32, #tpu.memory_space<vmem>>, %arg16: memref<1x2x50xf32, #tpu.memory_space<vmem>>) attributes {dimension_semantics = [#tpu.dimension_semantics<parallel>], iteration_bounds = array<i64: 1>, scalar_prefetch = 0 : i64, scratch_operands = 0 : i64, tpu.core_type = #tpu.core_type<tc>, window_params = [{transform_indices = @transform_0, window_bounds = array<i64: 2, 16, 50>}, {pipeline_mode = #tpu.pipeline_mode<synchronous>, transform_indices = @transform_1, window_bounds = array<i64: 50, 150>}, {pipeline_mode = #tpu.pipeline_mode<synchronous>, transform_indices = @transform_2, window_bounds = array<i64: 1, 150>}, {pipeline_mode = #tpu.pipeline_mode<synchronous>, transform_indices = @transform_3, window_bounds = array<i64: 50, 50>}, {pipeline_mode = #tpu.pipeline_mode<synchronous>, transform_indices = @transform_4, window_bounds = array<i64: 1, 50>}, {pipeline_mode = #tpu.pipeline_mode<synchronous>, transform_indices = @transform_5, window_bounds = array<i64: 50, 10>}, {pipeline_mode = #tpu.pipeline_mode<synchronous>, transform_indices = @transform_6, window_bounds = array<i64: 10, 50>}, {pipeline_mode = #tpu.pipeline_mode<synchronous>, transform_indices = @transform_7, window_bounds = array<i64: 50, 2048>}, {pipeline_mode = #tpu.pipeline_mode<synchronous>, transform_indices = @transform_8, window_bounds = array<i64: 1, 2048>}, {pipeline_mode = #tpu.pipeline_mode<synchronous>, transform_indices = @transform_9, window_bounds = array<i64: 2048, 50>}, {pipeline_mode = #tpu.pipeline_mode<synchronous>, transform_indices = @transform_10, window_bounds = array<i64: 1, 50>}, {pipeline_mode = #tpu.pipeline_mode<synchronous>, transform_indices = @transform_11, window_bounds = array<i64: 1, 50>}, {pipeline_mode = #tpu.pipeline_mode<synchronous>, transform_indices = @transform_12, window_bounds = array<i64: 1, 50>}, {pipeline_mode = #tpu.pipeline_mode<synchronous>, transform_indices = @transform_13, window_bounds = array<i64: 1, 50>}, {pipeline_mode = #tpu.pipeline_mode<synchronous>, transform_indices = @transform_14, window_bounds = array<i64: 1, 50>}, {transform_indices = @transform_15, window_bounds = array<i64: 1, 2, 50>}]} {
    %c0 = arith.constant 0 : index
    %c0_0 = arith.constant 0 : index
    %c0_1 = arith.constant 0 : index
    %0 = vector.load %arg1[%c0, %c0_0, %c0_1] : memref<2x16x50xbf16, #tpu.memory_space<vmem>>, vector<2x16x50xbf16>
    %1 = arith.extf %0 : vector<2x16x50xbf16> to vector<2x16x50xf32>
    %2 = vector.shape_cast %1 : vector<2x16x50xf32> to vector<32x50xf32>
    %3 = arith.truncf %2 : vector<32x50xf32> to vector<32x50xbf16>
    %c0_2 = arith.constant 0 : index
    %c0_3 = arith.constant 0 : index
    %4 = vector.load %arg2[%c0_2, %c0_3] : memref<50x150xbf16, #tpu.memory_space<vmem>>, vector<50x150xbf16>
    %cst = arith.constant dense<0.000000e+00> : vector<32x150xf32>
    %5 = tpu.matmul %3, %4, %cst {dimension_numbers = #tpu.dot_dimension_numbers<[1], [0], [0], [1], [0, 0, 1, 1], [], []>} : vector<32x50xbf16>, vector<50x150xbf16>, vector<32x150xf32> -> vector<32x150xf32>
    %c0_4 = arith.constant 0 : index
    %c0_5 = arith.constant 0 : index
    %6 = vector.load %arg3[%c0_4, %c0_5] : memref<1x150xf32, #tpu.memory_space<vmem>>, vector<1x150xf32>
    %7 = vector.broadcast %6 : vector<1x150xf32> to vector<32x150xf32>
    %8 = arith.addf %5, %7 : vector<32x150xf32>
    %9 = vector.extract_strided_slice %8 {offsets = [0, 0], sizes = [32, 50], strides = [1, 1]} : vector<32x150xf32> to vector<32x50xf32>
    %10 = vector.shape_cast %9 : vector<32x50xf32> to vector<2x16x50xf32>
    %11 = vector.extract_strided_slice %8 {offsets = [0, 50], sizes = [32, 50], strides = [1, 1]} : vector<32x150xf32> to vector<32x50xf32>
    %12 = vector.shape_cast %11 : vector<32x50xf32> to vector<2x16x50xf32>
    %13 = vector.extract_strided_slice %8 {offsets = [0, 100], sizes = [32, 50], strides = [1, 1]} : vector<32x150xf32> to vector<32x50xf32>
    %14 = vector.shape_cast %13 : vector<32x50xf32> to vector<2x16x50xf32>
    %15 = vector.shape_cast %10 : vector<2x16x50xf32> to vector<2x1x16x50xf32>
    %16 = vector.shape_cast %12 : vector<2x16x50xf32> to vector<1x2x16x50xf32>
    %17 = vector.broadcast %15 : vector<2x1x16x50xf32> to vector<2x2x16x50xf32>
    %18 = vector.broadcast %16 : vector<1x2x16x50xf32> to vector<2x2x16x50xf32>
    %19 = arith.mulf %17, %18 : vector<2x2x16x50xf32>
    %20 = vector.shape_cast %19 : vector<2x2x16x50xf32> to vector<64x50xf32>
    %c0_6 = arith.constant 0 : index
    %c0_7 = arith.constant 0 : index
    %21 = vector.load %arg6[%c0_6, %c0_7] : memref<50x10xf32, #tpu.memory_space<vmem>>, vector<50x10xf32>
    %cst_8 = arith.constant dense<0.000000e+00> : vector<64x10xf32>
    %22 = tpu.matmul %20, %21, %cst_8 {dimension_numbers = #tpu.dot_dimension_numbers<[1], [0], [0], [1], [0, 0, 1, 1], [], []>} : vector<64x50xf32>, vector<50x10xf32>, vector<64x10xf32> -> vector<64x10xf32>
    %23 = vector.shape_cast %22 : vector<64x10xf32> to vector<2x2x16x10xf32>
    %cst_9 = arith.constant dense<0xFF800000> : vector<2x16x10xf32>
    %24 = vector.multi_reduction <maximumf>, %23, %cst_9 [1] : vector<2x2x16x10xf32> to vector<2x16x10xf32>
    %25 = vector.shape_cast %24 : vector<2x16x10xf32> to vector<2x1x16x10xf32>
    %26 = vector.broadcast %25 : vector<2x1x16x10xf32> to vector<2x2x16x10xf32>
    %27 = arith.subf %23, %26 : vector<2x2x16x10xf32>
    %28 = math.exp %27 : vector<2x2x16x10xf32>
    %cst_10 = arith.constant dense<0.000000e+00> : vector<2x16x10xf32>
    %29 = vector.multi_reduction <add>, %28, %cst_10 [1] : vector<2x2x16x10xf32> to vector<2x16x10xf32>
    %30 = vector.shape_cast %29 : vector<2x16x10xf32> to vector<2x1x16x10xf32>
    %31 = tpu.reciprocal %30 : vector<2x1x16x10xf32> -> vector<2x1x16x10xf32>
    %32 = vector.broadcast %31 : vector<2x1x16x10xf32> to vector<2x2x16x10xf32>
    %33 = arith.mulf %28, %32 : vector<2x2x16x10xf32>
    %34 = vector.shape_cast %33 : vector<2x2x16x10xf32> to vector<64x10xf32>
    %c0_11 = arith.constant 0 : index
    %c0_12 = arith.constant 0 : index
    %35 = vector.load %arg7[%c0_11, %c0_12] : memref<10x50xf32, #tpu.memory_space<vmem>>, vector<10x50xf32>
    %cst_13 = arith.constant dense<0.000000e+00> : vector<64x50xf32>
    %36 = tpu.matmul %34, %35, %cst_13 {dimension_numbers = #tpu.dot_dimension_numbers<[1], [0], [0], [1], [0, 0, 1, 1], [], []>} : vector<64x10xf32>, vector<10x50xf32>, vector<64x50xf32> -> vector<64x50xf32>
    %37 = vector.shape_cast %36 : vector<64x50xf32> to vector<2x2x16x50xf32>
    %38 = vector.shape_cast %14 : vector<2x16x50xf32> to vector<1x2x16x50xf32>
    %39 = vector.broadcast %38 : vector<1x2x16x50xf32> to vector<2x2x16x50xf32>
    %40 = arith.mulf %37, %39 : vector<2x2x16x50xf32>
    %cst_14 = arith.constant dense<0.000000e+00> : vector<2x16x50xf32>
    %41 = vector.multi_reduction <add>, %40, %cst_14 [1] : vector<2x2x16x50xf32> to vector<2x16x50xf32>
    %42 = vector.shape_cast %41 : vector<2x16x50xf32> to vector<32x50xf32>
    %43 = arith.truncf %42 : vector<32x50xf32> to vector<32x50xbf16>
    %c0_15 = arith.constant 0 : index
    %c0_16 = arith.constant 0 : index
    %44 = vector.load %arg4[%c0_15, %c0_16] : memref<50x50xbf16, #tpu.memory_space<vmem>>, vector<50x50xbf16>
    %cst_17 = arith.constant dense<0.000000e+00> : vector<32x50xf32>
    %45 = tpu.matmul %43, %44, %cst_17 {dimension_numbers = #tpu.dot_dimension_numbers<[1], [0], [0], [1], [0, 0, 1, 1], [], []>} : vector<32x50xbf16>, vector<50x50xbf16>, vector<32x50xf32> -> vector<32x50xf32>
    %c0_18 = arith.constant 0 : index
    %c0_19 = arith.constant 0 : index
    %46 = vector.load %arg5[%c0_18, %c0_19] : memref<1x50xf32, #tpu.memory_space<vmem>>, vector<1x50xf32>
    %47 = vector.broadcast %46 : vector<1x50xf32> to vector<32x50xf32>
    %48 = arith.addf %45, %47 : vector<32x50xf32>
    %49 = arith.addf %2, %48 : vector<32x50xf32>
    %c0_20 = arith.constant 0 : index
    %c0_21 = arith.constant 0 : index
    %50 = vector.load %arg12[%c0_20, %c0_21] : memref<1x50xf32, #tpu.memory_space<vmem>>, vector<1x50xf32>
    %c0_22 = arith.constant 0 : index
    %c0_23 = arith.constant 0 : index
    %51 = vector.load %arg13[%c0_22, %c0_23] : memref<1x50xf32, #tpu.memory_space<vmem>>, vector<1x50xf32>
    %cst_24 = arith.constant dense<0.000000e+00> : vector<32xf32>
    %52 = vector.multi_reduction <add>, %49, %cst_24 [1] : vector<32x50xf32> to vector<32xf32>
    %53 = vector.shape_cast %52 : vector<32xf32> to vector<32x1xf32>
    %cst_25 = arith.constant 5.000000e+01 : f32
    %54 = vector.broadcast %cst_25 : f32 to vector<32x1xf32>
    %55 = arith.divf %53, %54 : vector<32x1xf32>
    %56 = vector.broadcast %55 : vector<32x1xf32> to vector<32x50xf32>
    %57 = arith.subf %49, %56 : vector<32x50xf32>
    %58 = arith.mulf %57, %57 : vector<32x50xf32>
    %cst_26 = arith.constant dense<0.000000e+00> : vector<32xf32>
    %59 = vector.multi_reduction <add>, %58, %cst_26 [1] : vector<32x50xf32> to vector<32xf32>
    %60 = vector.shape_cast %59 : vector<32xf32> to vector<32x1xf32>
    %cst_27 = arith.constant 5.000000e+01 : f32
    %61 = vector.broadcast %cst_27 : f32 to vector<32x1xf32>
    %62 = arith.divf %60, %61 : vector<32x1xf32>
    %cst_28 = arith.constant 9.99999974E-6 : f32
    %63 = vector.broadcast %cst_28 : f32 to vector<32x1xf32>
    %64 = arith.addf %62, %63 : vector<32x1xf32>
    %65 = math.rsqrt %64 : vector<32x1xf32>
    %66 = vector.broadcast %65 : vector<32x1xf32> to vector<32x50xf32>
    %67 = arith.mulf %57, %66 : vector<32x50xf32>
    %68 = vector.broadcast %50 : vector<1x50xf32> to vector<32x50xf32>
    %69 = arith.mulf %67, %68 : vector<32x50xf32>
    %70 = vector.broadcast %51 : vector<1x50xf32> to vector<32x50xf32>
    %71 = arith.addf %69, %70 : vector<32x50xf32>
    %72 = arith.truncf %71 : vector<32x50xf32> to vector<32x50xbf16>
    %cst_29 = arith.constant 0.000000e+00 : f32
    %73 = vector.broadcast %cst_29 : f32 to vector<32x50xf32>
    %c0_i32 = arith.constant 0 : i32
    %c512_i32 = arith.constant 512 : i32
    %74 = arith.muli %c0_i32, %c512_i32 : i32
    %75 = tpu.assume_multiple %74, 512 : i32
    %c0_30 = arith.constant 0 : index
    %76 = arith.index_cast %75 : i32 to index
    %77 = vector.load %arg8[%c0_30, %76] : memref<50x2048xbf16, #tpu.memory_space<vmem>>, vector<50x512xbf16>
    %cst_31 = arith.constant dense<0.000000e+00> : vector<32x512xf32>
    %78 = tpu.matmul %72, %77, %cst_31 {dimension_numbers = #tpu.dot_dimension_numbers<[1], [0], [0], [1], [0, 0, 1, 1], [], []>} : vector<32x50xbf16>, vector<50x512xbf16>, vector<32x512xf32> -> vector<32x512xf32>
    %c0_32 = arith.constant 0 : index
    %79 = arith.index_cast %75 : i32 to index
    %80 = vector.load %arg9[%c0_32, %79] : memref<1x2048xf32, #tpu.memory_space<vmem>>, vector<1x512xf32>
    %81 = vector.broadcast %80 : vector<1x512xf32> to vector<32x512xf32>
    %82 = arith.addf %78, %81 : vector<32x512xf32>
    %cst_33 = arith.constant 0.000000e+00 : f32
    %83 = vector.broadcast %cst_33 : f32 to vector<32x512xf32>
    %84 = arith.maximumf %82, %83 : vector<32x512xf32>
    %85 = arith.truncf %84 : vector<32x512xf32> to vector<32x512xbf16>
    %86 = arith.index_cast %75 : i32 to index
    %c0_34 = arith.constant 0 : index
    %87 = vector.load %arg10[%86, %c0_34] : memref<2048x50xbf16, #tpu.memory_space<vmem>>, vector<512x50xbf16>
    %cst_35 = arith.constant dense<0.000000e+00> : vector<32x50xf32>
    %88 = tpu.matmul %85, %87, %cst_35 {dimension_numbers = #tpu.dot_dimension_numbers<[1], [0], [0], [1], [0, 0, 1, 1], [], []>} : vector<32x512xbf16>, vector<512x50xbf16>, vector<32x50xf32> -> vector<32x50xf32>
    %89 = arith.addf %73, %88 : vector<32x50xf32>
    %c1_i32 = arith.constant 1 : i32
    %c512_i32_36 = arith.constant 512 : i32
    %90 = arith.muli %c1_i32, %c512_i32_36 : i32
    %91 = tpu.assume_multiple %90, 512 : i32
    %c0_37 = arith.constant 0 : index
    %92 = arith.index_cast %91 : i32 to index
    %93 = vector.load %arg8[%c0_37, %92] : memref<50x2048xbf16, #tpu.memory_space<vmem>>, vector<50x512xbf16>
    %cst_38 = arith.constant dense<0.000000e+00> : vector<32x512xf32>
    %94 = tpu.matmul %72, %93, %cst_38 {dimension_numbers = #tpu.dot_dimension_numbers<[1], [0], [0], [1], [0, 0, 1, 1], [], []>} : vector<32x50xbf16>, vector<50x512xbf16>, vector<32x512xf32> -> vector<32x512xf32>
    %c0_39 = arith.constant 0 : index
    %95 = arith.index_cast %91 : i32 to index
    %96 = vector.load %arg9[%c0_39, %95] : memref<1x2048xf32, #tpu.memory_space<vmem>>, vector<1x512xf32>
    %97 = vector.broadcast %96 : vector<1x512xf32> to vector<32x512xf32>
    %98 = arith.addf %94, %97 : vector<32x512xf32>
    %cst_40 = arith.constant 0.000000e+00 : f32
    %99 = vector.broadcast %cst_40 : f32 to vector<32x512xf32>
    %100 = arith.maximumf %98, %99 : vector<32x512xf32>
    %101 = arith.truncf %100 : vector<32x512xf32> to vector<32x512xbf16>
    %102 = arith.index_cast %91 : i32 to index
    %c0_41 = arith.constant 0 : index
    %103 = vector.load %arg10[%102, %c0_41] : memref<2048x50xbf16, #tpu.memory_space<vmem>>, vector<512x50xbf16>
    %cst_42 = arith.constant dense<0.000000e+00> : vector<32x50xf32>
    %104 = tpu.matmul %101, %103, %cst_42 {dimension_numbers = #tpu.dot_dimension_numbers<[1], [0], [0], [1], [0, 0, 1, 1], [], []>} : vector<32x512xbf16>, vector<512x50xbf16>, vector<32x50xf32> -> vector<32x50xf32>
    %105 = arith.addf %89, %104 : vector<32x50xf32>
    %c2_i32 = arith.constant 2 : i32
    %c512_i32_43 = arith.constant 512 : i32
    %106 = arith.muli %c2_i32, %c512_i32_43 : i32
    %107 = tpu.assume_multiple %106, 512 : i32
    %c0_44 = arith.constant 0 : index
    %108 = arith.index_cast %107 : i32 to index
    %109 = vector.load %arg8[%c0_44, %108] : memref<50x2048xbf16, #tpu.memory_space<vmem>>, vector<50x512xbf16>
    %cst_45 = arith.constant dense<0.000000e+00> : vector<32x512xf32>
    %110 = tpu.matmul %72, %109, %cst_45 {dimension_numbers = #tpu.dot_dimension_numbers<[1], [0], [0], [1], [0, 0, 1, 1], [], []>} : vector<32x50xbf16>, vector<50x512xbf16>, vector<32x512xf32> -> vector<32x512xf32>
    %c0_46 = arith.constant 0 : index
    %111 = arith.index_cast %107 : i32 to index
    %112 = vector.load %arg9[%c0_46, %111] : memref<1x2048xf32, #tpu.memory_space<vmem>>, vector<1x512xf32>
    %113 = vector.broadcast %112 : vector<1x512xf32> to vector<32x512xf32>
    %114 = arith.addf %110, %113 : vector<32x512xf32>
    %cst_47 = arith.constant 0.000000e+00 : f32
    %115 = vector.broadcast %cst_47 : f32 to vector<32x512xf32>
    %116 = arith.maximumf %114, %115 : vector<32x512xf32>
    %117 = arith.truncf %116 : vector<32x512xf32> to vector<32x512xbf16>
    %118 = arith.index_cast %107 : i32 to index
    %c0_48 = arith.constant 0 : index
    %119 = vector.load %arg10[%118, %c0_48] : memref<2048x50xbf16, #tpu.memory_space<vmem>>, vector<512x50xbf16>
    %cst_49 = arith.constant dense<0.000000e+00> : vector<32x50xf32>
    %120 = tpu.matmul %117, %119, %cst_49 {dimension_numbers = #tpu.dot_dimension_numbers<[1], [0], [0], [1], [0, 0, 1, 1], [], []>} : vector<32x512xbf16>, vector<512x50xbf16>, vector<32x50xf32> -> vector<32x50xf32>
    %121 = arith.addf %105, %120 : vector<32x50xf32>
    %c3_i32 = arith.constant 3 : i32
    %c512_i32_50 = arith.constant 512 : i32
    %122 = arith.muli %c3_i32, %c512_i32_50 : i32
    %123 = tpu.assume_multiple %122, 512 : i32
    %c0_51 = arith.constant 0 : index
    %124 = arith.index_cast %123 : i32 to index
    %125 = vector.load %arg8[%c0_51, %124] : memref<50x2048xbf16, #tpu.memory_space<vmem>>, vector<50x512xbf16>
    %cst_52 = arith.constant dense<0.000000e+00> : vector<32x512xf32>
    %126 = tpu.matmul %72, %125, %cst_52 {dimension_numbers = #tpu.dot_dimension_numbers<[1], [0], [0], [1], [0, 0, 1, 1], [], []>} : vector<32x50xbf16>, vector<50x512xbf16>, vector<32x512xf32> -> vector<32x512xf32>
    %c0_53 = arith.constant 0 : index
    %127 = arith.index_cast %123 : i32 to index
    %128 = vector.load %arg9[%c0_53, %127] : memref<1x2048xf32, #tpu.memory_space<vmem>>, vector<1x512xf32>
    %129 = vector.broadcast %128 : vector<1x512xf32> to vector<32x512xf32>
    %130 = arith.addf %126, %129 : vector<32x512xf32>
    %cst_54 = arith.constant 0.000000e+00 : f32
    %131 = vector.broadcast %cst_54 : f32 to vector<32x512xf32>
    %132 = arith.maximumf %130, %131 : vector<32x512xf32>
    %133 = arith.truncf %132 : vector<32x512xf32> to vector<32x512xbf16>
    %134 = arith.index_cast %123 : i32 to index
    %c0_55 = arith.constant 0 : index
    %135 = vector.load %arg10[%134, %c0_55] : memref<2048x50xbf16, #tpu.memory_space<vmem>>, vector<512x50xbf16>
    %cst_56 = arith.constant dense<0.000000e+00> : vector<32x50xf32>
    %136 = tpu.matmul %133, %135, %cst_56 {dimension_numbers = #tpu.dot_dimension_numbers<[1], [0], [0], [1], [0, 0, 1, 1], [], []>} : vector<32x512xbf16>, vector<512x50xbf16>, vector<32x50xf32> -> vector<32x50xf32>
    %137 = arith.addf %121, %136 : vector<32x50xf32>
    %c4_i32 = arith.constant 4 : i32
    %c0_57 = arith.constant 0 : index
    %c0_58 = arith.constant 0 : index
    %138 = vector.load %arg11[%c0_57, %c0_58] : memref<1x50xf32, #tpu.memory_space<vmem>>, vector<1x50xf32>
    %139 = vector.broadcast %138 : vector<1x50xf32> to vector<32x50xf32>
    %140 = arith.addf %137, %139 : vector<32x50xf32>
    %141 = arith.addf %71, %140 : vector<32x50xf32>
    %c0_59 = arith.constant 0 : index
    %c0_60 = arith.constant 0 : index
    %142 = vector.load %arg14[%c0_59, %c0_60] : memref<1x50xf32, #tpu.memory_space<vmem>>, vector<1x50xf32>
    %c0_61 = arith.constant 0 : index
    %c0_62 = arith.constant 0 : index
    %143 = vector.load %arg15[%c0_61, %c0_62] : memref<1x50xf32, #tpu.memory_space<vmem>>, vector<1x50xf32>
    %cst_63 = arith.constant dense<0.000000e+00> : vector<32xf32>
    %144 = vector.multi_reduction <add>, %141, %cst_63 [1] : vector<32x50xf32> to vector<32xf32>
    %145 = vector.shape_cast %144 : vector<32xf32> to vector<32x1xf32>
    %cst_64 = arith.constant 5.000000e+01 : f32
    %146 = vector.broadcast %cst_64 : f32 to vector<32x1xf32>
    %147 = arith.divf %145, %146 : vector<32x1xf32>
    %148 = vector.broadcast %147 : vector<32x1xf32> to vector<32x50xf32>
    %149 = arith.subf %141, %148 : vector<32x50xf32>
    %150 = arith.mulf %149, %149 : vector<32x50xf32>
    %cst_65 = arith.constant dense<0.000000e+00> : vector<32xf32>
    %151 = vector.multi_reduction <add>, %150, %cst_65 [1] : vector<32x50xf32> to vector<32xf32>
    %152 = vector.shape_cast %151 : vector<32xf32> to vector<32x1xf32>
    %cst_66 = arith.constant 5.000000e+01 : f32
    %153 = vector.broadcast %cst_66 : f32 to vector<32x1xf32>
    %154 = arith.divf %152, %153 : vector<32x1xf32>
    %cst_67 = arith.constant 9.99999974E-6 : f32
    %155 = vector.broadcast %cst_67 : f32 to vector<32x1xf32>
    %156 = arith.addf %154, %155 : vector<32x1xf32>
    %157 = math.rsqrt %156 : vector<32x1xf32>
    %158 = vector.broadcast %157 : vector<32x1xf32> to vector<32x50xf32>
    %159 = arith.mulf %149, %158 : vector<32x50xf32>
    %160 = vector.broadcast %142 : vector<1x50xf32> to vector<32x50xf32>
    %161 = arith.mulf %159, %160 : vector<32x50xf32>
    %162 = vector.broadcast %143 : vector<1x50xf32> to vector<32x50xf32>
    %163 = arith.addf %161, %162 : vector<32x50xf32>
    %164 = vector.shape_cast %163 : vector<32x50xf32> to vector<2x16x50xf32>
    %c16_i32 = arith.constant 16 : i32
    %165 = arith.muli %arg0, %c16_i32 : i32
    %166 = tpu.iota {dimensions = array<i32: 1>} : vector<1x16x1xi32>
    %167 = vector.broadcast %165 : i32 to vector<1x16x1xi32>
    %168 = arith.addi %167, %166 : vector<1x16x1xi32>
    %c15_i32 = arith.constant 15 : i32
    %169 = vector.broadcast %c15_i32 : i32 to vector<1x16x1xi32>
    %170 = arith.cmpi slt, %168, %169 : vector<1x16x1xi32>
    %cst_68 = arith.constant 0.000000e+00 : f32
    %171 = vector.shape_cast %170 : vector<1x16x1xi1> to vector<1x16x1xi1>
    %172 = vector.broadcast %171 : vector<1x16x1xi1> to vector<2x16x50xi1>
    %173 = vector.broadcast %cst_68 : f32 to vector<2x16x50xf32>
    %174 = arith.select %172, %164, %173 : vector<2x16x50xi1>, vector<2x16x50xf32>
    %cst_69 = arith.constant dense<0.000000e+00> : vector<2x50xf32>
    %175 = vector.multi_reduction <add>, %174, %cst_69 [1] : vector<2x16x50xf32> to vector<2x50xf32>
    %c0_70 = arith.constant 0 : index
    %c0_71 = arith.constant 0 : index
    %c0_72 = arith.constant 0 : index
    %176 = vector.load %arg16[%c0_70, %c0_71, %c0_72] : memref<1x2x50xf32, #tpu.memory_space<vmem>>, vector<1x2x50xf32>
    %177 = vector.shape_cast %176 : vector<1x2x50xf32> to vector<2x50xf32>
    %178 = vector.shape_cast %175 : vector<2x50xf32> to vector<1x2x50xf32>
    tpu.vector_store %arg16[%c0_70, %c0_71, %c0_72], %178 {strides = array<i32>} : memref<1x2x50xf32, #tpu.memory_space<vmem>>, vector<1x2x50xf32>,
    return
  }
  func.func @transform_0(%arg0: i32) -> (i32, i32, i32) {
    %c0_i32 = arith.constant 0 : i32
    %c0_i32_0 = arith.constant 0 : i32
    %c0_i32_1 = arith.constant 0 : i32
    return %c0_i32, %arg0, %c0_i32_0 : i32, i32, i32
  }
  func.func @transform_1(%arg0: i32) -> (i32, i32) {
    %c0_i32 = arith.constant 0 : i32
    %c0_i32_0 = arith.constant 0 : i32
    %c0_i32_1 = arith.constant 0 : i32
    return %c0_i32, %c0_i32_0 : i32, i32
  }
  func.func @transform_2(%arg0: i32) -> (i32, i32) {
    %c0_i32 = arith.constant 0 : i32
    %c0_i32_0 = arith.constant 0 : i32
    %c0_i32_1 = arith.constant 0 : i32
    return %c0_i32, %c0_i32_0 : i32, i32
  }
  func.func @transform_3(%arg0: i32) -> (i32, i32) {
    %c0_i32 = arith.constant 0 : i32
    %c0_i32_0 = arith.constant 0 : i32
    %c0_i32_1 = arith.constant 0 : i32
    return %c0_i32, %c0_i32_0 : i32, i32
  }
  func.func @transform_4(%arg0: i32) -> (i32, i32) {
    %c0_i32 = arith.constant 0 : i32
    %c0_i32_0 = arith.constant 0 : i32
    %c0_i32_1 = arith.constant 0 : i32
    return %c0_i32, %c0_i32_0 : i32, i32
  }
  func.func @transform_5(%arg0: i32) -> (i32, i32) {
    %c0_i32 = arith.constant 0 : i32
    %c0_i32_0 = arith.constant 0 : i32
    %c0_i32_1 = arith.constant 0 : i32
    return %c0_i32, %c0_i32_0 : i32, i32
  }
  func.func @transform_6(%arg0: i32) -> (i32, i32) {
    %c0_i32 = arith.constant 0 : i32
    %c0_i32_0 = arith.constant 0 : i32
    %c0_i32_1 = arith.constant 0 : i32
    return %c0_i32, %c0_i32_0 : i32, i32
  }
  func.func @transform_7(%arg0: i32) -> (i32, i32) {
    %c0_i32 = arith.constant 0 : i32
    %c0_i32_0 = arith.constant 0 : i32
    %c0_i32_1 = arith.constant 0 : i32
    return %c0_i32, %c0_i32_0 : i32, i32
  }
  func.func @transform_8(%arg0: i32) -> (i32, i32) {
    %c0_i32 = arith.constant 0 : i32
    %c0_i32_0 = arith.constant 0 : i32
    %c0_i32_1 = arith.constant 0 : i32
    return %c0_i32, %c0_i32_0 : i32, i32
  }
  func.func @transform_9(%arg0: i32) -> (i32, i32) {
    %c0_i32 = arith.constant 0 : i32
    %c0_i32_0 = arith.constant 0 : i32
    %c0_i32_1 = arith.constant 0 : i32
    return %c0_i32, %c0_i32_0 : i32, i32
  }
  func.func @transform_10(%arg0: i32) -> (i32, i32) {
    %c0_i32 = arith.constant 0 : i32
    %c0_i32_0 = arith.constant 0 : i32
    %c0_i32_1 = arith.constant 0 : i32
    return %c0_i32, %c0_i32_0 : i32, i32
  }
  func.func @transform_11(%arg0: i32) -> (i32, i32) {
    %c0_i32 = arith.constant 0 : i32
    %c0_i32_0 = arith.constant 0 : i32
    %c0_i32_1 = arith.constant 0 : i32
    return %c0_i32, %c0_i32_0 : i32, i32
  }
  func.func @transform_12(%arg0: i32) -> (i32, i32) {
    %c0_i32 = arith.constant 0 : i32
    %c0_i32_0 = arith.constant 0 : i32
    %c0_i32_1 = arith.constant 0 : i32
    return %c0_i32, %c0_i32_0 : i32, i32
  }
  func.func @transform_13(%arg0: i32) -> (i32, i32) {
    %c0_i32 = arith.constant 0 : i32
    %c0_i32_0 = arith.constant 0 : i32
    %c0_i32_1 = arith.constant 0 : i32
    return %c0_i32, %c0_i32_0 : i32, i32
  }
  func.func @transform_14(%arg0: i32) -> (i32, i32) {
    %c0_i32 = arith.constant 0 : i32
    %c0_i32_0 = arith.constant 0 : i32
    %c0_i32_1 = arith.constant 0 : i32
    return %c0_i32, %c0_i32_0 : i32, i32
  }
  func.func @transform_15(%arg0: i32) -> (i32, i32, i32) {
    %c0_i32 = arith.constant 0 : i32
    %c0_i32_0 = arith.constant 0 : i32
    %c0_i32_1 = arith.constant 0 : i32
    return %arg0, %c0_i32, %c0_i32_0 : i32, i32, i32
  }
}

module attributes {stable_mosaic.version = 11 : i64} {
  func.func @_encoder_layer_kernel(%arg0: i32, %arg1: memref<2x16x50xbf16, #tpu.memory_space<vmem>>, %arg2: memref<50x150xbf16, #tpu.memory_space<vmem>>, %arg3: memref<1x150xf32, #tpu.memory_space<vmem>>, %arg4: memref<50x50xbf16, #tpu.memory_space<vmem>>, %arg5: memref<1x50xf32, #tpu.memory_space<vmem>>, %arg6: memref<50x10xf32, #tpu.memory_space<vmem>>, %arg7: memref<10x50xf32, #tpu.memory_space<vmem>>, %arg8: memref<50x2048xbf16, #tpu.memory_space<vmem>>, %arg9: memref<1x2048xf32, #tpu.memory_space<vmem>>, %arg10: memref<2048x50xbf16, #tpu.memory_space<vmem>>, %arg11: memref<1x50xf32, #tpu.memory_space<vmem>>, %arg12: memref<1x50xf32, #tpu.memory_space<vmem>>, %arg13: memref<1x50xf32, #tpu.memory_space<vmem>>, %arg14: memref<1x50xf32, #tpu.memory_space<vmem>>, %arg15: memref<1x50xf32, #tpu.memory_space<vmem>>, %arg16: memref<2x16x50xbf16, #tpu.memory_space<vmem>>) attributes {dimension_semantics = [#tpu.dimension_semantics<parallel>], iteration_bounds = array<i64: 1>, scalar_prefetch = 0 : i64, scratch_operands = 0 : i64, tpu.core_type = #tpu.core_type<tc>, window_params = [{transform_indices = @transform_0, window_bounds = array<i64: 2, 16, 50>}, {pipeline_mode = #tpu.pipeline_mode<synchronous>, transform_indices = @transform_1, window_bounds = array<i64: 50, 150>}, {pipeline_mode = #tpu.pipeline_mode<synchronous>, transform_indices = @transform_2, window_bounds = array<i64: 1, 150>}, {pipeline_mode = #tpu.pipeline_mode<synchronous>, transform_indices = @transform_3, window_bounds = array<i64: 50, 50>}, {pipeline_mode = #tpu.pipeline_mode<synchronous>, transform_indices = @transform_4, window_bounds = array<i64: 1, 50>}, {pipeline_mode = #tpu.pipeline_mode<synchronous>, transform_indices = @transform_5, window_bounds = array<i64: 50, 10>}, {pipeline_mode = #tpu.pipeline_mode<synchronous>, transform_indices = @transform_6, window_bounds = array<i64: 10, 50>}, {pipeline_mode = #tpu.pipeline_mode<synchronous>, transform_indices = @transform_7, window_bounds = array<i64: 50, 2048>}, {pipeline_mode = #tpu.pipeline_mode<synchronous>, transform_indices = @transform_8, window_bounds = array<i64: 1, 2048>}, {pipeline_mode = #tpu.pipeline_mode<synchronous>, transform_indices = @transform_9, window_bounds = array<i64: 2048, 50>}, {pipeline_mode = #tpu.pipeline_mode<synchronous>, transform_indices = @transform_10, window_bounds = array<i64: 1, 50>}, {pipeline_mode = #tpu.pipeline_mode<synchronous>, transform_indices = @transform_11, window_bounds = array<i64: 1, 50>}, {pipeline_mode = #tpu.pipeline_mode<synchronous>, transform_indices = @transform_12, window_bounds = array<i64: 1, 50>}, {pipeline_mode = #tpu.pipeline_mode<synchronous>, transform_indices = @transform_13, window_bounds = array<i64: 1, 50>}, {pipeline_mode = #tpu.pipeline_mode<synchronous>, transform_indices = @transform_14, window_bounds = array<i64: 1, 50>}, {transform_indices = @transform_15, window_bounds = array<i64: 2, 16, 50>}]} {
    %c0 = arith.constant 0 : index
    %c0_0 = arith.constant 0 : index
    %c0_1 = arith.constant 0 : index
    %0 = vector.load %arg1[%c0, %c0_0, %c0_1] : memref<2x16x50xbf16, #tpu.memory_space<vmem>>, vector<2x16x50xbf16>
    %1 = arith.extf %0 : vector<2x16x50xbf16> to vector<2x16x50xf32>
    %2 = vector.shape_cast %1 : vector<2x16x50xf32> to vector<32x50xf32>
    %3 = arith.truncf %2 : vector<32x50xf32> to vector<32x50xbf16>
    %c0_2 = arith.constant 0 : index
    %c0_3 = arith.constant 0 : index
    %4 = vector.load %arg2[%c0_2, %c0_3] : memref<50x150xbf16, #tpu.memory_space<vmem>>, vector<50x150xbf16>
    %cst = arith.constant dense<0.000000e+00> : vector<32x150xf32>
    %5 = tpu.matmul %3, %4, %cst {dimension_numbers = #tpu.dot_dimension_numbers<[1], [0], [0], [1], [0, 0, 1, 1], [], []>} : vector<32x50xbf16>, vector<50x150xbf16>, vector<32x150xf32> -> vector<32x150xf32>
    %c0_4 = arith.constant 0 : index
    %c0_5 = arith.constant 0 : index
    %6 = vector.load %arg3[%c0_4, %c0_5] : memref<1x150xf32, #tpu.memory_space<vmem>>, vector<1x150xf32>
    %7 = vector.broadcast %6 : vector<1x150xf32> to vector<32x150xf32>
    %8 = arith.addf %5, %7 : vector<32x150xf32>
    %9 = vector.extract_strided_slice %8 {offsets = [0, 0], sizes = [32, 50], strides = [1, 1]} : vector<32x150xf32> to vector<32x50xf32>
    %10 = vector.shape_cast %9 : vector<32x50xf32> to vector<2x16x50xf32>
    %11 = vector.extract_strided_slice %8 {offsets = [0, 50], sizes = [32, 50], strides = [1, 1]} : vector<32x150xf32> to vector<32x50xf32>
    %12 = vector.shape_cast %11 : vector<32x50xf32> to vector<2x16x50xf32>
    %13 = vector.extract_strided_slice %8 {offsets = [0, 100], sizes = [32, 50], strides = [1, 1]} : vector<32x150xf32> to vector<32x50xf32>
    %14 = vector.shape_cast %13 : vector<32x50xf32> to vector<2x16x50xf32>
    %15 = vector.shape_cast %10 : vector<2x16x50xf32> to vector<2x1x16x50xf32>
    %16 = vector.shape_cast %12 : vector<2x16x50xf32> to vector<1x2x16x50xf32>
    %17 = vector.broadcast %15 : vector<2x1x16x50xf32> to vector<2x2x16x50xf32>
    %18 = vector.broadcast %16 : vector<1x2x16x50xf32> to vector<2x2x16x50xf32>
    %19 = arith.mulf %17, %18 : vector<2x2x16x50xf32>
    %20 = vector.shape_cast %19 : vector<2x2x16x50xf32> to vector<64x50xf32>
    %c0_6 = arith.constant 0 : index
    %c0_7 = arith.constant 0 : index
    %21 = vector.load %arg6[%c0_6, %c0_7] : memref<50x10xf32, #tpu.memory_space<vmem>>, vector<50x10xf32>
    %cst_8 = arith.constant dense<0.000000e+00> : vector<64x10xf32>
    %22 = tpu.matmul %20, %21, %cst_8 {dimension_numbers = #tpu.dot_dimension_numbers<[1], [0], [0], [1], [0, 0, 1, 1], [], []>} : vector<64x50xf32>, vector<50x10xf32>, vector<64x10xf32> -> vector<64x10xf32>
    %23 = vector.shape_cast %22 : vector<64x10xf32> to vector<2x2x16x10xf32>
    %cst_9 = arith.constant dense<0xFF800000> : vector<2x16x10xf32>
    %24 = vector.multi_reduction <maximumf>, %23, %cst_9 [1] : vector<2x2x16x10xf32> to vector<2x16x10xf32>
    %25 = vector.shape_cast %24 : vector<2x16x10xf32> to vector<2x1x16x10xf32>
    %26 = vector.broadcast %25 : vector<2x1x16x10xf32> to vector<2x2x16x10xf32>
    %27 = arith.subf %23, %26 : vector<2x2x16x10xf32>
    %28 = math.exp %27 : vector<2x2x16x10xf32>
    %cst_10 = arith.constant dense<0.000000e+00> : vector<2x16x10xf32>
    %29 = vector.multi_reduction <add>, %28, %cst_10 [1] : vector<2x2x16x10xf32> to vector<2x16x10xf32>
    %30 = vector.shape_cast %29 : vector<2x16x10xf32> to vector<2x1x16x10xf32>
    %31 = tpu.reciprocal %30 : vector<2x1x16x10xf32> -> vector<2x1x16x10xf32>
    %32 = vector.broadcast %31 : vector<2x1x16x10xf32> to vector<2x2x16x10xf32>
    %33 = arith.mulf %28, %32 : vector<2x2x16x10xf32>
    %34 = vector.shape_cast %33 : vector<2x2x16x10xf32> to vector<64x10xf32>
    %c0_11 = arith.constant 0 : index
    %c0_12 = arith.constant 0 : index
    %35 = vector.load %arg7[%c0_11, %c0_12] : memref<10x50xf32, #tpu.memory_space<vmem>>, vector<10x50xf32>
    %cst_13 = arith.constant dense<0.000000e+00> : vector<64x50xf32>
    %36 = tpu.matmul %34, %35, %cst_13 {dimension_numbers = #tpu.dot_dimension_numbers<[1], [0], [0], [1], [0, 0, 1, 1], [], []>} : vector<64x10xf32>, vector<10x50xf32>, vector<64x50xf32> -> vector<64x50xf32>
    %37 = vector.shape_cast %36 : vector<64x50xf32> to vector<2x2x16x50xf32>
    %38 = vector.shape_cast %14 : vector<2x16x50xf32> to vector<1x2x16x50xf32>
    %39 = vector.broadcast %38 : vector<1x2x16x50xf32> to vector<2x2x16x50xf32>
    %40 = arith.mulf %37, %39 : vector<2x2x16x50xf32>
    %cst_14 = arith.constant dense<0.000000e+00> : vector<2x16x50xf32>
    %41 = vector.multi_reduction <add>, %40, %cst_14 [1] : vector<2x2x16x50xf32> to vector<2x16x50xf32>
    %42 = vector.shape_cast %41 : vector<2x16x50xf32> to vector<32x50xf32>
    %43 = arith.truncf %42 : vector<32x50xf32> to vector<32x50xbf16>
    %c0_15 = arith.constant 0 : index
    %c0_16 = arith.constant 0 : index
    %44 = vector.load %arg4[%c0_15, %c0_16] : memref<50x50xbf16, #tpu.memory_space<vmem>>, vector<50x50xbf16>
    %cst_17 = arith.constant dense<0.000000e+00> : vector<32x50xf32>
    %45 = tpu.matmul %43, %44, %cst_17 {dimension_numbers = #tpu.dot_dimension_numbers<[1], [0], [0], [1], [0, 0, 1, 1], [], []>} : vector<32x50xbf16>, vector<50x50xbf16>, vector<32x50xf32> -> vector<32x50xf32>
    %c0_18 = arith.constant 0 : index
    %c0_19 = arith.constant 0 : index
    %46 = vector.load %arg5[%c0_18, %c0_19] : memref<1x50xf32, #tpu.memory_space<vmem>>, vector<1x50xf32>
    %47 = vector.broadcast %46 : vector<1x50xf32> to vector<32x50xf32>
    %48 = arith.addf %45, %47 : vector<32x50xf32>
    %49 = arith.addf %2, %48 : vector<32x50xf32>
    %c0_20 = arith.constant 0 : index
    %c0_21 = arith.constant 0 : index
    %50 = vector.load %arg12[%c0_20, %c0_21] : memref<1x50xf32, #tpu.memory_space<vmem>>, vector<1x50xf32>
    %c0_22 = arith.constant 0 : index
    %c0_23 = arith.constant 0 : index
    %51 = vector.load %arg13[%c0_22, %c0_23] : memref<1x50xf32, #tpu.memory_space<vmem>>, vector<1x50xf32>
    %cst_24 = arith.constant dense<0.000000e+00> : vector<32xf32>
    %52 = vector.multi_reduction <add>, %49, %cst_24 [1] : vector<32x50xf32> to vector<32xf32>
    %53 = vector.shape_cast %52 : vector<32xf32> to vector<32x1xf32>
    %cst_25 = arith.constant 5.000000e+01 : f32
    %54 = vector.broadcast %cst_25 : f32 to vector<32x1xf32>
    %55 = arith.divf %53, %54 : vector<32x1xf32>
    %56 = vector.broadcast %55 : vector<32x1xf32> to vector<32x50xf32>
    %57 = arith.subf %49, %56 : vector<32x50xf32>
    %58 = arith.mulf %57, %57 : vector<32x50xf32>
    %cst_26 = arith.constant dense<0.000000e+00> : vector<32xf32>
    %59 = vector.multi_reduction <add>, %58, %cst_26 [1] : vector<32x50xf32> to vector<32xf32>
    %60 = vector.shape_cast %59 : vector<32xf32> to vector<32x1xf32>
    %cst_27 = arith.constant 5.000000e+01 : f32
    %61 = vector.broadcast %cst_27 : f32 to vector<32x1xf32>
    %62 = arith.divf %60, %61 : vector<32x1xf32>
    %cst_28 = arith.constant 9.99999974E-6 : f32
    %63 = vector.broadcast %cst_28 : f32 to vector<32x1xf32>
    %64 = arith.addf %62, %63 : vector<32x1xf32>
    %65 = math.rsqrt %64 : vector<32x1xf32>
    %66 = vector.broadcast %65 : vector<32x1xf32> to vector<32x50xf32>
    %67 = arith.mulf %57, %66 : vector<32x50xf32>
    %68 = vector.broadcast %50 : vector<1x50xf32> to vector<32x50xf32>
    %69 = arith.mulf %67, %68 : vector<32x50xf32>
    %70 = vector.broadcast %51 : vector<1x50xf32> to vector<32x50xf32>
    %71 = arith.addf %69, %70 : vector<32x50xf32>
    %72 = arith.truncf %71 : vector<32x50xf32> to vector<32x50xbf16>
    %cst_29 = arith.constant 0.000000e+00 : f32
    %73 = vector.broadcast %cst_29 : f32 to vector<32x50xf32>
    %c0_i32 = arith.constant 0 : i32
    %c512_i32 = arith.constant 512 : i32
    %74 = arith.muli %c0_i32, %c512_i32 : i32
    %75 = tpu.assume_multiple %74, 512 : i32
    %c0_30 = arith.constant 0 : index
    %76 = arith.index_cast %75 : i32 to index
    %77 = vector.load %arg8[%c0_30, %76] : memref<50x2048xbf16, #tpu.memory_space<vmem>>, vector<50x512xbf16>
    %cst_31 = arith.constant dense<0.000000e+00> : vector<32x512xf32>
    %78 = tpu.matmul %72, %77, %cst_31 {dimension_numbers = #tpu.dot_dimension_numbers<[1], [0], [0], [1], [0, 0, 1, 1], [], []>} : vector<32x50xbf16>, vector<50x512xbf16>, vector<32x512xf32> -> vector<32x512xf32>
    %c0_32 = arith.constant 0 : index
    %79 = arith.index_cast %75 : i32 to index
    %80 = vector.load %arg9[%c0_32, %79] : memref<1x2048xf32, #tpu.memory_space<vmem>>, vector<1x512xf32>
    %81 = vector.broadcast %80 : vector<1x512xf32> to vector<32x512xf32>
    %82 = arith.addf %78, %81 : vector<32x512xf32>
    %cst_33 = arith.constant 0.000000e+00 : f32
    %83 = vector.broadcast %cst_33 : f32 to vector<32x512xf32>
    %84 = arith.maximumf %82, %83 : vector<32x512xf32>
    %85 = arith.truncf %84 : vector<32x512xf32> to vector<32x512xbf16>
    %86 = arith.index_cast %75 : i32 to index
    %c0_34 = arith.constant 0 : index
    %87 = vector.load %arg10[%86, %c0_34] : memref<2048x50xbf16, #tpu.memory_space<vmem>>, vector<512x50xbf16>
    %cst_35 = arith.constant dense<0.000000e+00> : vector<32x50xf32>
    %88 = tpu.matmul %85, %87, %cst_35 {dimension_numbers = #tpu.dot_dimension_numbers<[1], [0], [0], [1], [0, 0, 1, 1], [], []>} : vector<32x512xbf16>, vector<512x50xbf16>, vector<32x50xf32> -> vector<32x50xf32>
    %89 = arith.addf %73, %88 : vector<32x50xf32>
    %c1_i32 = arith.constant 1 : i32
    %c512_i32_36 = arith.constant 512 : i32
    %90 = arith.muli %c1_i32, %c512_i32_36 : i32
    %91 = tpu.assume_multiple %90, 512 : i32
    %c0_37 = arith.constant 0 : index
    %92 = arith.index_cast %91 : i32 to index
    %93 = vector.load %arg8[%c0_37, %92] : memref<50x2048xbf16, #tpu.memory_space<vmem>>, vector<50x512xbf16>
    %cst_38 = arith.constant dense<0.000000e+00> : vector<32x512xf32>
    %94 = tpu.matmul %72, %93, %cst_38 {dimension_numbers = #tpu.dot_dimension_numbers<[1], [0], [0], [1], [0, 0, 1, 1], [], []>} : vector<32x50xbf16>, vector<50x512xbf16>, vector<32x512xf32> -> vector<32x512xf32>
    %c0_39 = arith.constant 0 : index
    %95 = arith.index_cast %91 : i32 to index
    %96 = vector.load %arg9[%c0_39, %95] : memref<1x2048xf32, #tpu.memory_space<vmem>>, vector<1x512xf32>
    %97 = vector.broadcast %96 : vector<1x512xf32> to vector<32x512xf32>
    %98 = arith.addf %94, %97 : vector<32x512xf32>
    %cst_40 = arith.constant 0.000000e+00 : f32
    %99 = vector.broadcast %cst_40 : f32 to vector<32x512xf32>
    %100 = arith.maximumf %98, %99 : vector<32x512xf32>
    %101 = arith.truncf %100 : vector<32x512xf32> to vector<32x512xbf16>
    %102 = arith.index_cast %91 : i32 to index
    %c0_41 = arith.constant 0 : index
    %103 = vector.load %arg10[%102, %c0_41] : memref<2048x50xbf16, #tpu.memory_space<vmem>>, vector<512x50xbf16>
    %cst_42 = arith.constant dense<0.000000e+00> : vector<32x50xf32>
    %104 = tpu.matmul %101, %103, %cst_42 {dimension_numbers = #tpu.dot_dimension_numbers<[1], [0], [0], [1], [0, 0, 1, 1], [], []>} : vector<32x512xbf16>, vector<512x50xbf16>, vector<32x50xf32> -> vector<32x50xf32>
    %105 = arith.addf %89, %104 : vector<32x50xf32>
    %c2_i32 = arith.constant 2 : i32
    %c512_i32_43 = arith.constant 512 : i32
    %106 = arith.muli %c2_i32, %c512_i32_43 : i32
    %107 = tpu.assume_multiple %106, 512 : i32
    %c0_44 = arith.constant 0 : index
    %108 = arith.index_cast %107 : i32 to index
    %109 = vector.load %arg8[%c0_44, %108] : memref<50x2048xbf16, #tpu.memory_space<vmem>>, vector<50x512xbf16>
    %cst_45 = arith.constant dense<0.000000e+00> : vector<32x512xf32>
    %110 = tpu.matmul %72, %109, %cst_45 {dimension_numbers = #tpu.dot_dimension_numbers<[1], [0], [0], [1], [0, 0, 1, 1], [], []>} : vector<32x50xbf16>, vector<50x512xbf16>, vector<32x512xf32> -> vector<32x512xf32>
    %c0_46 = arith.constant 0 : index
    %111 = arith.index_cast %107 : i32 to index
    %112 = vector.load %arg9[%c0_46, %111] : memref<1x2048xf32, #tpu.memory_space<vmem>>, vector<1x512xf32>
    %113 = vector.broadcast %112 : vector<1x512xf32> to vector<32x512xf32>
    %114 = arith.addf %110, %113 : vector<32x512xf32>
    %cst_47 = arith.constant 0.000000e+00 : f32
    %115 = vector.broadcast %cst_47 : f32 to vector<32x512xf32>
    %116 = arith.maximumf %114, %115 : vector<32x512xf32>
    %117 = arith.truncf %116 : vector<32x512xf32> to vector<32x512xbf16>
    %118 = arith.index_cast %107 : i32 to index
    %c0_48 = arith.constant 0 : index
    %119 = vector.load %arg10[%118, %c0_48] : memref<2048x50xbf16, #tpu.memory_space<vmem>>, vector<512x50xbf16>
    %cst_49 = arith.constant dense<0.000000e+00> : vector<32x50xf32>
    %120 = tpu.matmul %117, %119, %cst_49 {dimension_numbers = #tpu.dot_dimension_numbers<[1], [0], [0], [1], [0, 0, 1, 1], [], []>} : vector<32x512xbf16>, vector<512x50xbf16>, vector<32x50xf32> -> vector<32x50xf32>
    %121 = arith.addf %105, %120 : vector<32x50xf32>
    %c3_i32 = arith.constant 3 : i32
    %c512_i32_50 = arith.constant 512 : i32
    %122 = arith.muli %c3_i32, %c512_i32_50 : i32
    %123 = tpu.assume_multiple %122, 512 : i32
    %c0_51 = arith.constant 0 : index
    %124 = arith.index_cast %123 : i32 to index
    %125 = vector.load %arg8[%c0_51, %124] : memref<50x2048xbf16, #tpu.memory_space<vmem>>, vector<50x512xbf16>
    %cst_52 = arith.constant dense<0.000000e+00> : vector<32x512xf32>
    %126 = tpu.matmul %72, %125, %cst_52 {dimension_numbers = #tpu.dot_dimension_numbers<[1], [0], [0], [1], [0, 0, 1, 1], [], []>} : vector<32x50xbf16>, vector<50x512xbf16>, vector<32x512xf32> -> vector<32x512xf32>
    %c0_53 = arith.constant 0 : index
    %127 = arith.index_cast %123 : i32 to index
    %128 = vector.load %arg9[%c0_53, %127] : memref<1x2048xf32, #tpu.memory_space<vmem>>, vector<1x512xf32>
    %129 = vector.broadcast %128 : vector<1x512xf32> to vector<32x512xf32>
    %130 = arith.addf %126, %129 : vector<32x512xf32>
    %cst_54 = arith.constant 0.000000e+00 : f32
    %131 = vector.broadcast %cst_54 : f32 to vector<32x512xf32>
    %132 = arith.maximumf %130, %131 : vector<32x512xf32>
    %133 = arith.truncf %132 : vector<32x512xf32> to vector<32x512xbf16>
    %134 = arith.index_cast %123 : i32 to index
    %c0_55 = arith.constant 0 : index
    %135 = vector.load %arg10[%134, %c0_55] : memref<2048x50xbf16, #tpu.memory_space<vmem>>, vector<512x50xbf16>
    %cst_56 = arith.constant dense<0.000000e+00> : vector<32x50xf32>
    %136 = tpu.matmul %133, %135, %cst_56 {dimension_numbers = #tpu.dot_dimension_numbers<[1], [0], [0], [1], [0, 0, 1, 1], [], []>} : vector<32x512xbf16>, vector<512x50xbf16>, vector<32x50xf32> -> vector<32x50xf32>
    %137 = arith.addf %121, %136 : vector<32x50xf32>
    %c4_i32 = arith.constant 4 : i32
    %c0_57 = arith.constant 0 : index
    %c0_58 = arith.constant 0 : index
    %138 = vector.load %arg11[%c0_57, %c0_58] : memref<1x50xf32, #tpu.memory_space<vmem>>, vector<1x50xf32>
    %139 = vector.broadcast %138 : vector<1x50xf32> to vector<32x50xf32>
    %140 = arith.addf %137, %139 : vector<32x50xf32>
    %141 = arith.addf %71, %140 : vector<32x50xf32>
    %c0_59 = arith.constant 0 : index
    %c0_60 = arith.constant 0 : index
    %142 = vector.load %arg14[%c0_59, %c0_60] : memref<1x50xf32, #tpu.memory_space<vmem>>, vector<1x50xf32>
    %c0_61 = arith.constant 0 : index
    %c0_62 = arith.constant 0 : index
    %143 = vector.load %arg15[%c0_61, %c0_62] : memref<1x50xf32, #tpu.memory_space<vmem>>, vector<1x50xf32>
    %cst_63 = arith.constant dense<0.000000e+00> : vector<32xf32>
    %144 = vector.multi_reduction <add>, %141, %cst_63 [1] : vector<32x50xf32> to vector<32xf32>
    %145 = vector.shape_cast %144 : vector<32xf32> to vector<32x1xf32>
    %cst_64 = arith.constant 5.000000e+01 : f32
    %146 = vector.broadcast %cst_64 : f32 to vector<32x1xf32>
    %147 = arith.divf %145, %146 : vector<32x1xf32>
    %148 = vector.broadcast %147 : vector<32x1xf32> to vector<32x50xf32>
    %149 = arith.subf %141, %148 : vector<32x50xf32>
    %150 = arith.mulf %149, %149 : vector<32x50xf32>
    %cst_65 = arith.constant dense<0.000000e+00> : vector<32xf32>
    %151 = vector.multi_reduction <add>, %150, %cst_65 [1] : vector<32x50xf32> to vector<32xf32>
    %152 = vector.shape_cast %151 : vector<32xf32> to vector<32x1xf32>
    %cst_66 = arith.constant 5.000000e+01 : f32
    %153 = vector.broadcast %cst_66 : f32 to vector<32x1xf32>
    %154 = arith.divf %152, %153 : vector<32x1xf32>
    %cst_67 = arith.constant 9.99999974E-6 : f32
    %155 = vector.broadcast %cst_67 : f32 to vector<32x1xf32>
    %156 = arith.addf %154, %155 : vector<32x1xf32>
    %157 = math.rsqrt %156 : vector<32x1xf32>
    %158 = vector.broadcast %157 : vector<32x1xf32> to vector<32x50xf32>
    %159 = arith.mulf %149, %158 : vector<32x50xf32>
    %160 = vector.broadcast %142 : vector<1x50xf32> to vector<32x50xf32>
    %161 = arith.mulf %159, %160 : vector<32x50xf32>
    %162 = vector.broadcast %143 : vector<1x50xf32> to vector<32x50xf32>
    %163 = arith.addf %161, %162 : vector<32x50xf32>
    %164 = vector.shape_cast %163 : vector<32x50xf32> to vector<2x16x50xf32>
    %165 = arith.truncf %164 : vector<2x16x50xf32> to vector<2x16x50xbf16>
    %c0_68 = arith.constant 0 : index
    %c0_69 = arith.constant 0 : index
    %c0_70 = arith.constant 0 : index
    %166 = vector.load %arg16[%c0_68, %c0_69, %c0_70] : memref<2x16x50xbf16, #tpu.memory_space<vmem>>, vector<2x16x50xbf16>
    tpu.vector_store %arg16[%c0_68, %c0_69, %c0_70], %165 {strides = array<i32>} : memref<2x16x50xbf16, #tpu.memory_space<vmem>>, vector<2x16x50xbf16>,
    return
  }
  func.func @transform_0(%arg0: i32) -> (i32, i32, i32) {
    %c0_i32 = arith.constant 0 : i32
    %c0_i32_0 = arith.constant 0 : i32
    %c0_i32_1 = arith.constant 0 : i32
    return %c0_i32, %arg0, %c0_i32_0 : i32, i32, i32
  }
  func.func @transform_1(%arg0: i32) -> (i32, i32) {
    %c0_i32 = arith.constant 0 : i32
    %c0_i32_0 = arith.constant 0 : i32
    %c0_i32_1 = arith.constant 0 : i32
    return %c0_i32, %c0_i32_0 : i32, i32
  }
  func.func @transform_2(%arg0: i32) -> (i32, i32) {
    %c0_i32 = arith.constant 0 : i32
    %c0_i32_0 = arith.constant 0 : i32
    %c0_i32_1 = arith.constant 0 : i32
    return %c0_i32, %c0_i32_0 : i32, i32
  }
  func.func @transform_3(%arg0: i32) -> (i32, i32) {
    %c0_i32 = arith.constant 0 : i32
    %c0_i32_0 = arith.constant 0 : i32
    %c0_i32_1 = arith.constant 0 : i32
    return %c0_i32, %c0_i32_0 : i32, i32
  }
  func.func @transform_4(%arg0: i32) -> (i32, i32) {
    %c0_i32 = arith.constant 0 : i32
    %c0_i32_0 = arith.constant 0 : i32
    %c0_i32_1 = arith.constant 0 : i32
    return %c0_i32, %c0_i32_0 : i32, i32
  }
  func.func @transform_5(%arg0: i32) -> (i32, i32) {
    %c0_i32 = arith.constant 0 : i32
    %c0_i32_0 = arith.constant 0 : i32
    %c0_i32_1 = arith.constant 0 : i32
    return %c0_i32, %c0_i32_0 : i32, i32
  }
  func.func @transform_6(%arg0: i32) -> (i32, i32) {
    %c0_i32 = arith.constant 0 : i32
    %c0_i32_0 = arith.constant 0 : i32
    %c0_i32_1 = arith.constant 0 : i32
    return %c0_i32, %c0_i32_0 : i32, i32
  }
  func.func @transform_7(%arg0: i32) -> (i32, i32) {
    %c0_i32 = arith.constant 0 : i32
    %c0_i32_0 = arith.constant 0 : i32
    %c0_i32_1 = arith.constant 0 : i32
    return %c0_i32, %c0_i32_0 : i32, i32
  }
  func.func @transform_8(%arg0: i32) -> (i32, i32) {
    %c0_i32 = arith.constant 0 : i32
    %c0_i32_0 = arith.constant 0 : i32
    %c0_i32_1 = arith.constant 0 : i32
    return %c0_i32, %c0_i32_0 : i32, i32
  }
  func.func @transform_9(%arg0: i32) -> (i32, i32) {
    %c0_i32 = arith.constant 0 : i32
    %c0_i32_0 = arith.constant 0 : i32
    %c0_i32_1 = arith.constant 0 : i32
    return %c0_i32, %c0_i32_0 : i32, i32
  }
  func.func @transform_10(%arg0: i32) -> (i32, i32) {
    %c0_i32 = arith.constant 0 : i32
    %c0_i32_0 = arith.constant 0 : i32
    %c0_i32_1 = arith.constant 0 : i32
    return %c0_i32, %c0_i32_0 : i32, i32
  }
  func.func @transform_11(%arg0: i32) -> (i32, i32) {
    %c0_i32 = arith.constant 0 : i32
    %c0_i32_0 = arith.constant 0 : i32
    %c0_i32_1 = arith.constant 0 : i32
    return %c0_i32, %c0_i32_0 : i32, i32
  }
  func.func @transform_12(%arg0: i32) -> (i32, i32) {
    %c0_i32 = arith.constant 0 : i32
    %c0_i32_0 = arith.constant 0 : i32
    %c0_i32_1 = arith.constant 0 : i32
    return %c0_i32, %c0_i32_0 : i32, i32
  }
  func.func @transform_13(%arg0: i32) -> (i32, i32) {
    %c0_i32 = arith.constant 0 : i32
    %c0_i32_0 = arith.constant 0 : i32
    %c0_i32_1 = arith.constant 0 : i32
    return %c0_i32, %c0_i32_0 : i32, i32
  }
  func.func @transform_14(%arg0: i32) -> (i32, i32) {
    %c0_i32 = arith.constant 0 : i32
    %c0_i32_0 = arith.constant 0 : i32
    %c0_i32_1 = arith.constant 0 : i32
    return %c0_i32, %c0_i32_0 : i32, i32
  }
  func.func @transform_15(%arg0: i32) -> (i32, i32, i32) {
    %c0_i32 = arith.constant 0 : i32
    %c0_i32_0 = arith.constant 0 : i32
    %c0_i32_1 = arith.constant 0 : i32
    return %c0_i32, %arg0, %c0_i32_0 : i32, i32, i32
  }
}

</mosaic_0001>

<llo_original>
// kernel: disfluency_forward.3
$region0: #{disfluency_forward.3}
  #allocation0 [shape = 'u32[]', space=smem, size = 0x4, offset = 0x4, fixed_abs, tag = 'smem constant byte address 0x4 - core index']
  #allocation1 [shape = 'u32[144,128]{1,0:T(1,128)}', space=vmem, size = 0x12000, scoped, tag = 'internal scratch']
  %s0 = inlined_call_operand.vmem [shape: f32[2,16,768], index: 0, kind: input, shape index: {}]
  %s1 = inlined_call_operand.vmem [shape: bf16[768,100], index: 1, kind: input, shape index: {}]
  %s2 = inlined_call_operand.vmem [shape: f32[1,50], index: 2, kind: input, shape index: {}]
  %s3 = inlined_call_operand.vmem [shape: bf16[2,16,50], index: 3, kind: output, shape index: {}]
  %s4 = sld [smem:[#allocation0]]
  $region45: #{disfluency_forward.3} parent=0
    _
  %s6 = ssub.s32 1, %s4
  %s7 = scalar_select 0, %s6, %s4
  loop: start=0, step=1, limit=4
  $region2: #{disfluency_forward.3} parent=0 // loop_pre_header
    _
  $region3: #{disfluency_forward.3} parent=0 // loop_header
    %s9 = sphi 0, %s13
    %p10 = scmp.ge.s32.totalorder %s9, 4
    %s19 = sphi 0, %s21
    %s22 = sphi 0, %s19
    %s23 = sphi 0, %s22
    %s39 = sphi 0, %s23
    %s43 = sphi 0, %s43
    %s45 = sphi 0, %s43
    %s46 = sphi 0, %s45
    %s60 = sphi 0, %s46
    %s64 = sphi 0, %s64
    %s66 = sphi 0, %s64
    %s67 = sphi 0, %s66
    %s81 = sphi 0, %s67
    %s87 = sphi 0, %s89
    %s90 = sphi 0, %s87
    %s91 = sphi 0, %s90
    %s107 = sphi 0, %s91
  $region4: #{disfluency_forward.3} parent=0 // loop_header_branch
    %12 = sbr.rel (%p10) target = $region8
  $region5: #{disfluency_forward.3} parent=0 // loop_body
    %s14 = ssub.s32 %s9, 1
    %s15 = ssub.s32 %s9, 2
    %s16 = sadd.s32 %s9, 1
    %s17 = ssub.s32 %s9, %s16
    %p18 = scmp.eq.s32.totalorder %s17, 0
    %s20 = sadd.s32 %s19, 1
    %s21 = scalar_select %p18, %s19, %s20
    %p24 = pneg %p18
    %p25 = scmp.eq.s32.totalorder %s9, 1
    %p26 = por %p24, %p25
    %p27 = scmp.ne.s32.totalorder %s19, %s22
    %p28 = scmp.eq.s32.totalorder %s9, 0
    %p29 = por %p27, %p28
    %p30 = scmp.ne.s32.totalorder %s19, %s22
    %p31 = scmp.eq.s32.totalorder %s14, 1
    %p32 = por %p30, %p31
    %p33 = scmp.ne.s32.totalorder %s22, %s23
    %p34 = scmp.eq.s32.totalorder %s14, 0
    %p35 = por %p33, %p34
    %p36 = scmp.ne.s32.totalorder %s22, %s23
    %p37 = scmp.eq.s32.totalorder %s15, 1
    %p38 = por %p36, %p37
    %p40 = scmp.ne.s32.totalorder %s23, %s39
    %p41 = scmp.eq.s32.totalorder %s15, 0
    %p42 = por %p40, %p41
    %s44 = sadd.s32 %s43, 1
    %p47 = scmp.eq.s32.totalorder %s9, 1
    %p48 = scmp.ne.s32.totalorder %s43, %s45
    %p49 = scmp.eq.s32.totalorder %s9, 0
    %p50 = por %p48, %p49
    %p51 = scmp.ne.s32.totalorder %s43, %s45
    %p52 = scmp.eq.s32.totalorder %s14, 1
    %p53 = por %p51, %p52
    %p54 = scmp.ne.s32.totalorder %s45, %s46
    %p55 = scmp.eq.s32.totalorder %s14, 0
    %p56 = por %p54, %p55
    %p57 = scmp.ne.s32.totalorder %s45, %s46
    %p58 = scmp.eq.s32.totalorder %s15, 1
    %p59 = por %p57, %p58
    %p61 = scmp.ne.s32.totalorder %s46, %s60
    %p62 = scmp.eq.s32.totalorder %s15, 0
    %p63 = por %p61, %p62
    %s65 = sadd.s32 %s64, 1
    %p68 = scmp.eq.s32.totalorder %s9, 1
    %p69 = scmp.ne.s32.totalorder %s64, %s66
    %p70 = scmp.eq.s32.totalorder %s9, 0
    %p71 = por %p69, %p70
    %p72 = scmp.ne.s32.totalorder %s64, %s66
    %p73 = scmp.eq.s32.totalorder %s14, 1
    %p74 = por %p72, %p73
    %p75 = scmp.ne.s32.totalorder %s66, %s67
    %p76 = scmp.eq.s32.totalorder %s14, 0
    %p77 = por %p75, %p76
    %p78 = scmp.ne.s32.totalorder %s66, %s67
    %p79 = scmp.eq.s32.totalorder %s15, 1
    %p80 = por %p78, %p79
    %p82 = scmp.ne.s32.totalorder %s67, %s81
    %p83 = scmp.eq.s32.totalorder %s15, 0
    %p84 = por %p82, %p83
    %s85 = ssub.s32 %s9, %s16
    %p86 = scmp.eq.s32.totalorder %s85, 0
    %s88 = sadd.s32 %s87, 1
    %s89 = scalar_select %p86, %s87, %s88
    %p92 = pneg %p86
    %p93 = scmp.eq.s32.totalorder %s9, 1
    %p94 = por %p92, %p93
    %p95 = scmp.ne.s32.totalorder %s87, %s90
    %p96 = scmp.eq.s32.totalorder %s9, 0
    %p97 = por %p95, %p96
    %p98 = scmp.ne.s32.totalorder %s87, %s90
    %p99 = scmp.eq.s32.totalorder %s14, 1
    %p100 = por %p98, %p99
    %p101 = scmp.ne.s32.totalorder %s90, %s91
    %p102 = scmp.eq.s32.totalorder %s14, 0
    %p103 = por %p101, %p102
    %p104 = scmp.ne.s32.totalorder %s90, %s91
    %p105 = scmp.eq.s32.totalorder %s15, 1
    %p106 = por %p104, %p105
    %p108 = scmp.ne.s32.totalorder %s91, %s107
    %p109 = scmp.eq.s32.totalorder %s15, 0
    %p110 = por %p108, %p109
    %p111 = scmp.le.s32.totalorder 1, %s9
    %p112 = scmp.lt.s32.totalorder %s9, 3
    %p113 = pnand %p111, %p112
    %p114 = pneg %p113
    // Predicated region
    $region9: #{disfluency_forward.3} parent=5 // pred_check
      _
    $region10: #{disfluency_forward.3} parent=5 // pred_check_branch
      %116 = sbr.rel (%p113) target = $region12
    $region11: #{disfluency_forward.3} parent=5 // pred_region
      %s117 = ssub.s32 %s9, 1
      // Predicated region
      $region13: #{disfluency_forward.3} parent=11 // pred_check
        %p118 = pneg %p56
      $region14: #{disfluency_forward.3} parent=11 // pred_check_branch
        %120 = sbr.rel (%p118) target = $region16
      $region15: #{disfluency_forward.3} parent=11 // pred_region
        _
      $region16: #{disfluency_forward.3} parent=11 // pred_fallthru
        _
      // Predicated region
      $region17: #{disfluency_forward.3} parent=11 // pred_check
        %p121 = pneg %p77
      $region18: #{disfluency_forward.3} parent=11 // pred_check_branch
        %123 = sbr.rel (%p121) target = $region20
      $region19: #{disfluency_forward.3} parent=11 // pred_region
        _
      $region20: #{disfluency_forward.3} parent=11 // pred_fallthru
        _
    $region12: #{disfluency_forward.3} parent=5 // pred_fallthru
      _
    %p124 = scmp.lt.s32.totalorder %s9, 2
    // Predicated region
    $region21: #{disfluency_forward.3} parent=5 // pred_check
      %p125 = pneg %p124
    $region22: #{disfluency_forward.3} parent=5 // pred_check_branch
      %127 = sbr.rel (%p125) target = $region24
    $region23: #{disfluency_forward.3} parent=5 // pred_region
      // Predicated region
      $region25: #{disfluency_forward.3} parent=23 // pred_check
        %p128 = pneg %p29
      $region26: #{disfluency_forward.3} parent=23 // pred_check_branch
        %130 = sbr.rel (%p128) target = $region28
      $region27: #{disfluency_forward.3} parent=23 // pred_region
        %p131 = scmp.lt.s32.totalorder %s9, 1
        %s132 = scalar_select %p131, %s9, 1
        %s133 = smul.addr %s132, 12
        %s134 = smul.addr %s133, 8
        %s135 = scalar_lea.vmem %s0, %s134
      $region28: #{disfluency_forward.3} parent=23 // pred_fallthru
        _
    $region24: #{disfluency_forward.3} parent=5 // pred_fallthru
      _
    %p136 = scmp.le.s32.totalorder 1, %s9
    %p137 = scmp.lt.s32.totalorder %s9, 3
    %p138 = pnand %p136, %p137
    %p139 = pneg %p138
    // Predicated region
    $region29: #{disfluency_forward.3} parent=5 // pred_check
      _
    $region30: #{disfluency_forward.3} parent=5 // pred_check_branch
      %141 = sbr.rel (%p138) target = $region32
    $region31: #{disfluency_forward.3} parent=5 // pred_region
      %s142 = ssub.s32 %s9, 1
      %p143 = scmp.lt.s32.totalorder %s14, 1
      %s144 = scalar_select %p143, %s14, 1
      %s145 = smul.addr %s144, 12
      %s146 = smul.addr %s145, 8
      %s147 = scalar_lea.vmem %s0, %s146
      %p148 = pneg %p35
      %p149 = pneg %p32
      %p150 = pneg %p56
      %p151 = pneg %p53
      %p152 = pneg %p77
      %p153 = pneg %p74
      %p154 = pneg %p103
      %p155 = pneg %p100
      %p156 = scmp.lt.s32.totalorder %s14, 1
      %s157 = scalar_select %p156, %s14, 1
      %s158 = smul.addr %s157, 2
      %s159 = smul.addr %s158, 4
      %s160 = scalar_lea.vmem %s3, %s159
      %p161 = scmp.lt.s32.totalorder %s14, 1
      %s162 = scalar_select %p161, %s14, 1
      %s163 = smul.addr %s162, 12
      %s164 = smul.addr %s163, 8
      %s165 = scalar_lea.vmem %s0, %s164
      %p166 = scmp.lt.s32.totalorder %s14, 1
      %s167 = scalar_select %p166, %s14, 1
      %s168 = smul.addr %s167, 2
      %s169 = smul.addr %s168, 4
      %s170 = scalar_lea.vmem %s3, %s169
      %v172 = vld [vmem:[%s165] sm:$0xff]
      %v173 = vld [vmem:[%s165 + $0x8] sm:$0xff]
      %v174 = vld [vmem:[%s165 + $0x10] sm:$0xff]
      %v175 = vld [vmem:[%s165 + $0x18] sm:$0xff]
      %v176 = vld [vmem:[%s165 + $0x20] sm:$0xff]
      %v177 = vld [vmem:[%s165 + $0x28] sm:$0xff]
      %v178 = vld [vmem:[%s165 + $0x30] sm:$0xff]
      %v179 = vld [vmem:[%s165 + $0x38] sm:$0xff]
      %v180 = vld [vmem:[%s165 + $0x40] sm:$0xff]
      %v181 = vld [vmem:[%s165 + $0x48] sm:$0xff]
      %v182 = vld [vmem:[%s165 + $0x50] sm:$0xff]
      %v183 = vld [vmem:[%s165 + $0x58] sm:$0xff]
      %v184 = vpack.c.bf16 %v178, %v172
      %v185 = vpack.c.bf16 %v179, %v173
      %v186 = vpack.c.bf16 %v180, %v174
      %v187 = vpack.c.bf16 %v181, %v175
      %v188 = vpack.c.bf16 %v182, %v176
      %v189 = vpack.c.bf16 %v183, %v177
      %v190 = vld [vmem:[%s1] sm:$0xf]
      %v191 = vld [vmem:[%s1 + $0x4] sm:$0xf]
      %v192 = vld [vmem:[%s1 + $0x8] sm:$0xf]
      %v193 = vld [vmem:[%s1 + $0xc] sm:$0xf]
      %v194 = vld [vmem:[%s1 + $0x10] sm:$0xf]
      %v195 = vld [vmem:[%s1 + $0x14] sm:$0xf]
      %v196 = vld [vmem:[%s1 + $0x18] sm:$0xf]
      %v197 = vld [vmem:[%s1 + $0x1c] sm:$0xf]
      %v198 = vld [vmem:[%s1 + $0x20] sm:$0xf]
      %v199 = vld [vmem:[%s1 + $0x24] sm:$0xf]
      %v200 = vld [vmem:[%s1 + $0x28] sm:$0xf]
      %v201 = vld [vmem:[%s1 + $0x2c] sm:$0xf]
      %v202 = vld [vmem:[%s1 + $0x30] sm:$0xf]
      %v203 = vld [vmem:[%s1 + $0x34] sm:$0xf]
      %v204 = vld [vmem:[%s1 + $0x38] sm:$0xf]
      %v205 = vld [vmem:[%s1 + $0x3c] sm:$0xf]
      %v206 = vld [vmem:[%s1 + $0x40] sm:$0xf]
      %v207 = vld [vmem:[%s1 + $0x44] sm:$0xf]
      %v208 = vld [vmem:[%s1 + $0x48] sm:$0xf]
      %v209 = vld [vmem:[%s1 + $0x4c] sm:$0xf]
      %v210 = vld [vmem:[%s1 + $0x50] sm:$0xf]
      %v211 = vld [vmem:[%s1 + $0x54] sm:$0xf]
      %v212 = vld [vmem:[%s1 + $0x58] sm:$0xf]
      %v213 = vld [vmem:[%s1 + $0x5c] sm:$0xf]
      %v214 = vld [vmem:[%s1 + $0x60] sm:$0xf]
      %v215 = vld [vmem:[%s1 + $0x64] sm:$0xf]
      %v216 = vld [vmem:[%s1 + $0x68] sm:$0xf]
      %v217 = vld [vmem:[%s1 + $0x6c] sm:$0xf]
      %v218 = vld [vmem:[%s1 + $0x70] sm:$0xf]
      %v219 = vld [vmem:[%s1 + $0x74] sm:$0xf]
      %v220 = vld [vmem:[%s1 + $0x78] sm:$0xf]
      %v221 = vld [vmem:[%s1 + $0x7c] sm:$0xf]
      %v222 = vld [vmem:[%s1 + $0x80] sm:$0xf]
      %v223 = vld [vmem:[%s1 + $0x84] sm:$0xf]
      %v224 = vld [vmem:[%s1 + $0x88] sm:$0xf]
      %v225 = vld [vmem:[%s1 + $0x8c] sm:$0xf]
      %v226 = vld [vmem:[%s1 + $0x90] sm:$0xf]
      %v227 = vld [vmem:[%s1 + $0x94] sm:$0xf]
      %v228 = vld [vmem:[%s1 + $0x98] sm:$0xf]
      %v229 = vld [vmem:[%s1 + $0x9c] sm:$0xf]
      %v230 = vld [vmem:[%s1 + $0xa0] sm:$0xf]
      %v231 = vld [vmem:[%s1 + $0xa4] sm:$0xf]
      %v232 = vld [vmem:[%s1 + $0xa8] sm:$0xf]
      %v233 = vld [vmem:[%s1 + $0xac] sm:$0xf]
      %v234 = vld [vmem:[%s1 + $0xb0] sm:$0xf]
      %v235 = vld [vmem:[%s1 + $0xb4] sm:$0xf]
      %v236 = vld [vmem:[%s1 + $0xb8] sm:$0xf]
      %v237 = vld [vmem:[%s1 + $0xbc] sm:$0xf]
      %v238 = vld [vmem:[%s1 + $0xc0] sm:$0xf]
      %v239 = vld [vmem:[%s1 + $0xc4] sm:$0xf]
      %v240 = vld [vmem:[%s1 + $0xc8] sm:$0xf]
      %v241 = vld [vmem:[%s1 + $0xcc] sm:$0xf]
      %v242 = vld [vmem:[%s1 + $0xd0] sm:$0xf]
      %v243 = vld [vmem:[%s1 + $0xd4] sm:$0xf]
      %v244 = vld [vmem:[%s1 + $0xd8] sm:$0xf]
      %v245 = vld [vmem:[%s1 + $0xdc] sm:$0xf]
      %v246 = vld [vmem:[%s1 + $0xe0] sm:$0xf]
      %v247 = vld [vmem:[%s1 + $0xe4] sm:$0xf]
      %v248 = vld [vmem:[%s1 + $0xe8] sm:$0xf]
      %v249 = vld [vmem:[%s1 + $0xec] sm:$0xf]
      %v250 = vld [vmem:[%s1 + $0xf0] sm:$0xf]
      %v251 = vld [vmem:[%s1 + $0xf4] sm:$0xf]
      %v252 = vld [vmem:[%s1 + $0xf8] sm:$0xf]
      %v253 = vld [vmem:[%s1 + $0xfc] sm:$0xf]
      %v254 = vld [vmem:[%s1 + $0x100] sm:$0xf]
      %v255 = vld [vmem:[%s1 + $0x104] sm:$0xf]
      %v256 = vld [vmem:[%s1 + $0x108] sm:$0xf]
      %v257 = vld [vmem:[%s1 + $0x10c] sm:$0xf]
      %v258 = vld [vmem:[%s1 + $0x110] sm:$0xf]
      %v259 = vld [vmem:[%s1 + $0x114] sm:$0xf]
      %v260 = vld [vmem:[%s1 + $0x118] sm:$0xf]
      %v261 = vld [vmem:[%s1 + $0x11c] sm:$0xf]
      %v262 = vld [vmem:[%s1 + $0x120] sm:$0xf]
      %v263 = vld [vmem:[%s1 + $0x124] sm:$0xf]
      %v264 = vld [vmem:[%s1 + $0x128] sm:$0xf]
      %v265 = vld [vmem:[%s1 + $0x12c] sm:$0xf]
      %v266 = vld [vmem:[%s1 + $0x130] sm:$0xf]
      %v267 = vld [vmem:[%s1 + $0x134] sm:$0xf]
      %v268 = vld [vmem:[%s1 + $0x138] sm:$0xf]
      %v269 = vld [vmem:[%s1 + $0x13c] sm:$0xf]
      %v270 = vld [vmem:[%s1 + $0x140] sm:$0xf]
      %v271 = vld [vmem:[%s1 + $0x144] sm:$0xf]
      %v272 = vld [vmem:[%s1 + $0x148] sm:$0xf]
      %v273 = vld [vmem:[%s1 + $0x14c] sm:$0xf]
      %v274 = vld [vmem:[%s1 + $0x150] sm:$0xf]
      %v275 = vld [vmem:[%s1 + $0x154] sm:$0xf]
      %v276 = vld [vmem:[%s1 + $0x158] sm:$0xf]
      %v277 = vld [vmem:[%s1 + $0x15c] sm:$0xf]
      %v278 = vld [vmem:[%s1 + $0x160] sm:$0xf]
      %v279 = vld [vmem:[%s1 + $0x164] sm:$0xf]
      %v280 = vld [vmem:[%s1 + $0x168] sm:$0xf]
      %v281 = vld [vmem:[%s1 + $0x16c] sm:$0xf]
      %v282 = vld [vmem:[%s1 + $0x170] sm:$0xf]
      %v283 = vld [vmem:[%s1 + $0x174] sm:$0xf]
      %v284 = vld [vmem:[%s1 + $0x178] sm:$0xf]
      %v285 = vld [vmem:[%s1 + $0x17c] sm:$0xf]
      %v382 = vunpack.c.l.b16 %v190
      %v383 = vunpack.c.l.b16 %v191
      %v384 = vunpack.c.l.b16 %v192
      %v385 = vunpack.c.l.b16 %v193
      %v386 = vunpack.c.l.b16 %v194
      %v387 = vunpack.c.l.b16 %v195
      %v388 = vunpack.c.l.b16 %v196
      %v389 = vunpack.c.l.b16 %v197
      %v390 = vunpack.c.l.b16 %v198
      %v391 = vunpack.c.l.b16 %v199
      %v392 = vunpack.c.l.b16 %v200
      %v393 = vunpack.c.l.b16 %v201
      %v394 = vunpack.c.l.b16 %v202
      %v395 = vunpack.c.l.b16 %v203
      %v396 = vunpack.c.l.b16 %v204
      %v397 = vunpack.c.l.b16 %v205
      %v398 = vunpack.c.l.b16 %v206
      %v399 = vunpack.c.l.b16 %v207
      %v400 = vunpack.c.l.b16 %v208
      %v401 = vunpack.c.l.b16 %v209
      %v402 = vunpack.c.l.b16 %v210
      %v403 = vunpack.c.l.b16 %v211
      %v404 = vunpack.c.l.b16 %v212
      %v405 = vunpack.c.l.b16 %v213
      %v406 = vunpack.c.l.b16 %v214
      %v407 = vunpack.c.l.b16 %v215
      %v408 = vunpack.c.l.b16 %v216
      %v409 = vunpack.c.l.b16 %v217
      %v410 = vunpack.c.l.b16 %v218
      %v411 = vunpack.c.l.b16 %v219
      %v412 = vunpack.c.l.b16 %v220
      %v413 = vunpack.c.l.b16 %v221
      %v414 = vunpack.c.l.b16 %v222
      %v415 = vunpack.c.l.b16 %v223
      %v416 = vunpack.c.l.b16 %v224
      %v417 = vunpack.c.l.b16 %v225
      %v418 = vunpack.c.l.b16 %v226
      %v419 = vunpack.c.l.b16 %v227
      %v420 = vunpack.c.l.b16 %v228
      %v421 = vunpack.c.l.b16 %v229
      %v422 = vunpack.c.l.b16 %v230
      %v423 = vunpack.c.l.b16 %v231
      %v424 = vunpack.c.l.b16 %v232
      %v425 = vunpack.c.l.b16 %v233
      %v426 = vunpack.c.l.b16 %v234
      %v427 = vunpack.c.l.b16 %v235
      %v428 = vunpack.c.l.b16 %v236
      %v429 = vunpack.c.l.b16 %v237
      %v430 = vunpack.c.l.b16 %v238
      %v431 = vunpack.c.l.b16 %v239
      %v432 = vunpack.c.l.b16 %v240
      %v433 = vunpack.c.l.b16 %v241
      %v434 = vunpack.c.l.b16 %v242
      %v435 = vunpack.c.l.b16 %v243
      %v436 = vunpack.c.l.b16 %v244
      %v437 = vunpack.c.l.b16 %v245
      %v438 = vunpack.c.l.b16 %v246
      %v439 = vunpack.c.l.b16 %v247
      %v440 = vunpack.c.l.b16 %v248
      %v441 = vunpack.c.l.b16 %v249
      %v442 = vunpack.c.l.b16 %v250
      %v443 = vunpack.c.l.b16 %v251
      %v444 = vunpack.c.l.b16 %v252
      %v445 = vunpack.c.l.b16 %v253
      %v446 = vunpack.c.l.b16 %v254
      %v447 = vunpack.c.l.b16 %v255
      %v448 = vunpack.c.l.b16 %v256
      %v449 = vunpack.c.l.b16 %v257
      %v450 = vunpack.c.l.b16 %v258
      %v451 = vunpack.c.l.b16 %v259
      %v452 = vunpack.c.l.b16 %v260
      %v453 = vunpack.c.l.b16 %v261
      %v454 = vunpack.c.l.b16 %v262
      %v455 = vunpack.c.l.b16 %v263
      %v456 = vunpack.c.l.b16 %v264
      %v457 = vunpack.c.l.b16 %v265
      %v458 = vunpack.c.l.b16 %v266
      %v459 = vunpack.c.l.b16 %v267
      %v460 = vunpack.c.l.b16 %v268
      %v461 = vunpack.c.l.b16 %v269
      %v462 = vunpack.c.l.b16 %v270
      %v463 = vunpack.c.l.b16 %v271
      %v464 = vunpack.c.l.b16 %v272
      %v465 = vunpack.c.l.b16 %v273
      %v466 = vunpack.c.l.b16 %v274
      %v467 = vunpack.c.l.b16 %v275
      %v468 = vunpack.c.l.b16 %v276
      %v469 = vunpack.c.l.b16 %v277
      %v470 = vunpack.c.l.b16 %v278
      %v471 = vunpack.c.l.b16 %v279
      %v472 = vunpack.c.l.b16 %v280
      %v473 = vunpack.c.l.b16 %v281
      %v474 = vunpack.c.l.b16 %v282
      %v475 = vunpack.c.l.b16 %v283
      %v476 = vunpack.c.l.b16 %v284
      %v477 = vunpack.c.l.b16 %v285
      %v478 = vpack.c.b16 %v383, %v382
      %v479 = vpack.c.b16 %v385, %v384
      %v480 = vpack.c.b16 %v387, %v386
      %v481 = vpack.c.b16 %v389, %v388
      %v482 = vpack.c.b16 %v391, %v390
      %v483 = vpack.c.b16 %v393, %v392
      %v484 = vpack.c.b16 %v395, %v394
      %v485 = vpack.c.b16 %v397, %v396
      %v486 = vpack.c.b16 %v399, %v398
      %v487 = vpack.c.b16 %v401, %v400
      %v488 = vpack.c.b16 %v403, %v402
      %v489 = vpack.c.b16 %v405, %v404
      %v490 = vpack.c.b16 %v407, %v406
      %v491 = vpack.c.b16 %v409, %v408
      %v492 = vpack.c.b16 %v411, %v410
      %v493 = vpack.c.b16 %v413, %v412
      %v494 = vpack.c.b16 %v415, %v414
      %v495 = vpack.c.b16 %v417, %v416
      %v496 = vpack.c.b16 %v419, %v418
      %v497 = vpack.c.b16 %v421, %v420
      %v498 = vpack.c.b16 %v423, %v422
      %v499 = vpack.c.b16 %v425, %v424
      %v500 = vpack.c.b16 %v427, %v426
      %v501 = vpack.c.b16 %v429, %v428
      %v502 = vpack.c.b16 %v431, %v430
      %v503 = vpack.c.b16 %v433, %v432
      %v504 = vpack.c.b16 %v435, %v434
      %v505 = vpack.c.b16 %v437, %v436
      %v506 = vpack.c.b16 %v439, %v438
      %v507 = vpack.c.b16 %v441, %v440
      %v508 = vpack.c.b16 %v443, %v442
      %v509 = vpack.c.b16 %v445, %v444
      %v510 = vpack.c.b16 %v447, %v446
      %v511 = vpack.c.b16 %v449, %v448
      %v512 = vpack.c.b16 %v451, %v450
      %v513 = vpack.c.b16 %v453, %v452
      %v514 = vpack.c.b16 %v455, %v454
      %v515 = vpack.c.b16 %v457, %v456
      %v516 = vpack.c.b16 %v459, %v458
      %v517 = vpack.c.b16 %v461, %v460
      %v518 = vpack.c.b16 %v463, %v462
      %v519 = vpack.c.b16 %v465, %v464
      %v520 = vpack.c.b16 %v467, %v466
      %v521 = vpack.c.b16 %v469, %v468
      %v522 = vpack.c.b16 %v471, %v470
      %v523 = vpack.c.b16 %v473, %v472
      %v524 = vpack.c.b16 %v475, %v474
      %v525 = vpack.c.b16 %v477, %v476
      %574 = vmatprep.subr.bf16.mxu0 0
      %575 = vmatpush1.bf16.msra.mxu0 %v478
      %576 = vmatprep.subr.bf16.mxu0 0
      %577 = vmatpush1.bf16.msra.mxu0 %v479
      %578 = vmatprep.subr.bf16.mxu0 0
      %579 = vmatpush1.bf16.msra.mxu0 %v480
      %580 = vmatprep.subr.bf16.mxu0 0
      %581 = vmatpush1.bf16.msra.mxu0 %v481
      %582 = vmatprep.subr.bf16.mxu0 0
      %583 = vmatpush1.bf16.msra.mxu0 %v482
      %584 = vmatprep.subr.bf16.mxu0 0
      %585 = vmatpush1.bf16.msra.mxu0 %v483
      %586 = vmatprep.subr.bf16.mxu0 0
      %587 = vmatpush1.bf16.msra.mxu0 %v484
      %588 = vmatprep.subr.bf16.mxu0 0
      %589 = vmatpush1.bf16.msra.mxu0 %v485
      %590 = vmatprep.subr.bf16.mxu0 0
      %591 = vmatpush1.bf16.msra.mxu0 %v486
      %592 = vmatprep.subr.bf16.mxu0 0
      %593 = vmatpush1.bf16.msra.mxu0 %v487
      %594 = vmatprep.subr.bf16.mxu0 0
      %595 = vmatpush1.bf16.msra.mxu0 %v488
      %596 = vmatprep.subr.bf16.mxu0 0
      %597 = vmatpush1.bf16.msra.mxu0 %v489
      %598 = vmatprep.subr.bf16.mxu0 0
      %599 = vmatpush1.bf16.msra.mxu0 %v490
      %600 = vmatprep.subr.bf16.mxu0 0
      %601 = vmatpush1.bf16.msra.mxu0 %v491
      %602 = vmatprep.subr.bf16.mxu0 0
      %603 = vmatpush1.bf16.msra.mxu0 %v492
      %604 = vmatprep.subr.bf16.mxu0 0
      %605 = vmatpush1.bf16.msra.mxu0 %v493
      %606 = vmatprep.mubr.bf16.mxu0 %v185
      %607 = vmatmul.mubr.bf16.gmra.mrb[0].mxu0 %v184
      %v608 = vpop.f32.mrb[0].mxu0
      %v609 = vadd.f32 0.0, %v608
      %v610 = vpop.f32.mrb[0].mxu0
      %v611 = vpop.f32.mrb[0].mxu0
      %v612 = vadd.f32 0.0, %v611
      %v613 = vpop.f32.mrb[0].mxu0
      %614 = vdwg.mxu0
      %615 = vmatprep.subr.bf16.mxu0 0
      %616 = vmatpush1.bf16.msra.mxu0 %v494
      %617 = vmatprep.subr.bf16.mxu0 0
      %618 = vmatpush1.bf16.msra.mxu0 %v495
      %619 = vmatprep.subr.bf16.mxu0 0
      %620 = vmatpush1.bf16.msra.mxu0 %v496
      %621 = vmatprep.subr.bf16.mxu0 0
      %622 = vmatpush1.bf16.msra.mxu0 %v497
      %623 = vmatprep.subr.bf16.mxu0 0
      %624 = vmatpush1.bf16.msra.mxu0 %v498
      %625 = vmatprep.subr.bf16.mxu0 0
      %626 = vmatpush1.bf16.msra.mxu0 %v499
      %627 = vmatprep.subr.bf16.mxu0 0
      %628 = vmatpush1.bf16.msra.mxu0 %v500
      %629 = vmatprep.subr.bf16.mxu0 0
      %630 = vmatpush1.bf16.msra.mxu0 %v501
      %631 = vmatprep.subr.bf16.mxu0 0
      %632 = vmatpush1.bf16.msra.mxu0 %v502
      %633 = vmatprep.subr.bf16.mxu0 0
      %634 = vmatpush1.bf16.msra.mxu0 %v503
      %635 = vmatprep.subr.bf16.mxu0 0
      %636 = vmatpush1.bf16.msra.mxu0 %v504
      %637 = vmatprep.subr.bf16.mxu0 0
      %638 = vmatpush1.bf16.msra.mxu0 %v505
      %639 = vmatprep.subr.bf16.mxu0 0
      %640 = vmatpush1.bf16.msra.mxu0 %v506
      %641 = vmatprep.subr.bf16.mxu0 0
      %642 = vmatpush1.bf16.msra.mxu0 %v507
      %643 = vmatprep.subr.bf16.mxu0 0
      %644 = vmatpush1.bf16.msra.mxu0 %v508
      %645 = vmatprep.subr.bf16.mxu0 0
      %646 = vmatpush1.bf16.msra.mxu0 %v509
      %647 = vmatprep.mubr.bf16.mxu0 %v187
      %648 = vmatmul.mubr.bf16.gmra.mrb[0].mxu0 %v186
      %v649 = vpop.f32.mrb[0].mxu0
      %v650 = vadd.f32 %v609, %v649
      %v651 = vpop.f32.mrb[0].mxu0
      %v652 = vpop.f32.mrb[0].mxu0
      %v653 = vadd.f32 %v612, %v652
      %v654 = vpop.f32.mrb[0].mxu0
      %655 = vdwg.mxu0
      %656 = vmatprep.subr.bf16.mxu0 0
      %657 = vmatpush1.bf16.msra.mxu0 %v510
      %658 = vmatprep.subr.bf16.mxu0 0
      %659 = vmatpush1.bf16.msra.mxu0 %v511
      %660 = vmatprep.subr.bf16.mxu0 0
      %661 = vmatpush1.bf16.msra.mxu0 %v512
      %662 = vmatprep.subr.bf16.mxu0 0
      %663 = vmatpush1.bf16.msra.mxu0 %v513
      %664 = vmatprep.subr.bf16.mxu0 0
      %665 = vmatpush1.bf16.msra.mxu0 %v514
      %666 = vmatprep.subr.bf16.mxu0 0
      %667 = vmatpush1.bf16.msra.mxu0 %v515
      %668 = vmatprep.subr.bf16.mxu0 0
      %669 = vmatpush1.bf16.msra.mxu0 %v516
      %670 = vmatprep.subr.bf16.mxu0 0
      %671 = vmatpush1.bf16.msra.mxu0 %v517
      %672 = vmatprep.subr.bf16.mxu0 0
      %673 = vmatpush1.bf16.msra.mxu0 %v518
      %674 = vmatprep.subr.bf16.mxu0 0
      %675 = vmatpush1.bf16.msra.mxu0 %v519
      %676 = vmatprep.subr.bf16.mxu0 0
      %677 = vmatpush1.bf16.msra.mxu0 %v520
      %678 = vmatprep.subr.bf16.mxu0 0
      %679 = vmatpush1.bf16.msra.mxu0 %v521
      %680 = vmatprep.subr.bf16.mxu0 0
      %681 = vmatpush1.bf16.msra.mxu0 %v522
      %682 = vmatprep.subr.bf16.mxu0 0
      %683 = vmatpush1.bf16.msra.mxu0 %v523
      %684 = vmatprep.subr.bf16.mxu0 0
      %685 = vmatpush1.bf16.msra.mxu0 %v524
      %686 = vmatprep.subr.bf16.mxu0 0
      %687 = vmatpush1.bf16.msra.mxu0 %v525
      %688 = vmatprep.mubr.bf16.mxu0 %v189
      %689 = vmatmul.mubr.bf16.gmra.mrb[0].mxu0 %v188
      %v690 = vpop.f32.mrb[0].mxu0
      %v691 = vadd.f32 %v650, %v690
      %v692 = vpop.f32.mrb[0].mxu0
      %v693 = vpop.f32.mrb[0].mxu0
      %v694 = vadd.f32 %v653, %v693
      %v695 = vpop.f32.mrb[0].mxu0
      %696 = vdwg.mxu0
      %vm699 = vcmask 1046528
      %v700 = vrot.slane %v691, 1
      %v701 = vrot.slane %v694, 1
      %v702 = vsel %vm699, %v700, %v701
      %703 = vrot.lane.b32.xlu0 %v702, 78
      %v704 = vpop.permute.xlu0 %703
      %705 = vrot.lane.b32.xlu0 %v701, 78
      %v706 = vpop.permute.xlu0 %705
      %v709 = vadd.f32 %v691, %v704
      %v710 = vadd.f32 %v694, %v706
      %v711 = vld [vmem:[%s2] sm:$0x1]
      %v713 = vlaneseq
      %v714 = vshrl.u32 %v713, 7
      %v715 = vsub.s32 0, %v714
      %v716 = vrot.slane %v711, %v715
      %v718 = vadd.f32 %v709, %v716
      %v719 = vadd.f32 %v710, %v716
      %v720 = vsel %vm699, %v719, 0.0
      %v721 = vpack.c.bf16 %v720, %v718
      %v723 = vunpack.c.l.b16 %v721
      %v724 = vunpack.c.h.b16 %v721
      %v725 = vpack.c.b16 %v723, %v723
      %v726 = vpack.c.b16 %v724, %v724
      %vm729 = vcmask 404480
      %730 = vst.msk [vmem:[%s170] sm:$0xf] %vm729, %v725
      %731 = vst.msk [vmem:[%s170 + $0x4] sm:$0xf] %vm729, %v726
      %p732 = scmp.lt.s32.totalorder %s14, 1
      %s733 = scalar_select %p732, %s14, 1
      %s734 = smul.addr %s733, 2
      %s735 = smul.addr %s734, 4
      %s736 = scalar_lea.vmem %s3, %s735
      // Predicated region
      $region33: #{disfluency_forward.3} parent=31 // pred_check
        %p737 = pneg %p100
      $region34: #{disfluency_forward.3} parent=31 // pred_check_branch
        %739 = sbr.rel (%p737) target = $region36
      $region35: #{disfluency_forward.3} parent=31 // pred_region
        _
      $region36: #{disfluency_forward.3} parent=31 // pred_fallthru
        _
    $region32: #{disfluency_forward.3} parent=5 // pred_fallthru
      _
    %p740 = scmp.le.s32.totalorder 2, %s9
    // Predicated region
    $region37: #{disfluency_forward.3} parent=5 // pred_check
      %p741 = pneg %p740
    $region38: #{disfluency_forward.3} parent=5 // pred_check_branch
      %743 = sbr.rel (%p741) target = $region40
    $region39: #{disfluency_forward.3} parent=5 // pred_region
      %s744 = ssub.s32 %s9, 2
      // Predicated region
      $region41: #{disfluency_forward.3} parent=39 // pred_check
        %p745 = pneg %p106
      $region42: #{disfluency_forward.3} parent=39 // pred_check_branch
        %747 = sbr.rel (%p745) target = $region44
      $region43: #{disfluency_forward.3} parent=39 // pred_region
        %p748 = scmp.lt.s32.totalorder %s15, 1
        %s749 = scalar_select %p748, %s15, 1
        %s750 = smul.addr %s749, 2
        %s751 = smul.addr %s750, 4
        %s752 = scalar_lea.vmem %s3, %s751
      $region44: #{disfluency_forward.3} parent=39 // pred_fallthru
        _
    $region40: #{disfluency_forward.3} parent=5 // pred_fallthru
      _
  $region6: #{disfluency_forward.3} parent=0 // loop_footer
    %s13 = sadd.s32 1, %s9
  $region7: #{disfluency_forward.3} parent=0 // loop_footer_branch
    %8 = sbr.rel target = $region3
  $region8: #{disfluency_forward.3} parent=0 // loop_exit
    _

// kernel: disfluency_forward.5
$region0: #{disfluency_forward.5}
  #allocation0 [shape = 'u32[]', space=smem, size = 0x4, offset = 0x4, fixed_abs, tag = 'smem constant byte address 0x4 - core index']
  #allocation1 [shape = 'u32[144,128]{1,0:T(1,128)}', space=vmem, size = 0x12000, scoped, tag = 'internal scratch']
  %s0 = inlined_call_operand.vmem [shape: bf16[2,16,50], index: 0, kind: input, shape index: {}]
  %s1 = inlined_call_operand.vmem [shape: bf16[50,150], index: 1, kind: input, shape index: {}]
  %s2 = inlined_call_operand.vmem [shape: f32[1,150], index: 2, kind: input, shape index: {}]
  %s3 = inlined_call_operand.vmem [shape: bf16[50,50], index: 3, kind: input, shape index: {}]
  %s4 = inlined_call_operand.vmem [shape: f32[1,50], index: 4, kind: input, shape index: {}]
  %s5 = inlined_call_operand.vmem [shape: f32[50,10], index: 5, kind: input, shape index: {}]
  %s6 = inlined_call_operand.vmem [shape: f32[10,50], index: 6, kind: input, shape index: {}]
  %s7 = inlined_call_operand.vmem [shape: bf16[50,2048], index: 7, kind: input, shape index: {}]
  %s8 = inlined_call_operand.vmem [shape: f32[1,2048], index: 8, kind: input, shape index: {}]
  %s9 = inlined_call_operand.vmem [shape: bf16[2048,50], index: 9, kind: input, shape index: {}]
  %s10 = inlined_call_operand.vmem [shape: f32[1,50], index: 10, kind: input, shape index: {}]
  %s11 = inlined_call_operand.vmem [shape: f32[1,50], index: 11, kind: input, shape index: {}]
  %s12 = inlined_call_operand.vmem [shape: f32[1,50], index: 12, kind: input, shape index: {}]
  %s13 = inlined_call_operand.vmem [shape: f32[1,50], index: 13, kind: input, shape index: {}]
  %s14 = inlined_call_operand.vmem [shape: f32[1,50], index: 14, kind: input, shape index: {}]
  %s15 = inlined_call_operand.vmem [shape: f32[1,2,50], index: 15, kind: output, shape index: {}]
  %s16 = sld [smem:[#allocation0]]
  $region70: #{disfluency_forward.5} parent=0
    _
  %s18 = ssub.s32 1, %s16
  %s19 = scalar_select 0, %s18, %s16
  // Predicated region
  $region2: #{disfluency_forward.5} parent=0 // pred_check
    _
  $region3: #{disfluency_forward.5} parent=0 // pred_check_branch
    %21 = sbr.rel (0) target = $region5
  $region4: #{disfluency_forward.5} parent=0 // pred_region
    _
  $region5: #{disfluency_forward.5} parent=0 // pred_fallthru
    _
  // Predicated region
  $region6: #{disfluency_forward.5} parent=0 // pred_check
    _
  $region7: #{disfluency_forward.5} parent=0 // pred_check_branch
    %23 = sbr.rel (0) target = $region9
  $region8: #{disfluency_forward.5} parent=0 // pred_region
    _
  $region9: #{disfluency_forward.5} parent=0 // pred_fallthru
    _
  // Predicated region
  $region10: #{disfluency_forward.5} parent=0 // pred_check
    _
  $region11: #{disfluency_forward.5} parent=0 // pred_check_branch
    %25 = sbr.rel (0) target = $region13
  $region12: #{disfluency_forward.5} parent=0 // pred_region
    _
  $region13: #{disfluency_forward.5} parent=0 // pred_fallthru
    _
  // Predicated region
  $region14: #{disfluency_forward.5} parent=0 // pred_check
    _
  $region15: #{disfluency_forward.5} parent=0 // pred_check_branch
    %27 = sbr.rel (0) target = $region17
  $region16: #{disfluency_forward.5} parent=0 // pred_region
    _
  $region17: #{disfluency_forward.5} parent=0 // pred_fallthru
    _
  // Predicated region
  $region18: #{disfluency_forward.5} parent=0 // pred_check
    _
  $region19: #{disfluency_forward.5} parent=0 // pred_check_branch
    %29 = sbr.rel (0) target = $region21
  $region20: #{disfluency_forward.5} parent=0 // pred_region
    _
  $region21: #{disfluency_forward.5} parent=0 // pred_fallthru
    _
  // Predicated region
  $region22: #{disfluency_forward.5} parent=0 // pred_check
    _
  $region23: #{disfluency_forward.5} parent=0 // pred_check_branch
    %31 = sbr.rel (0) target = $region25
  $region24: #{disfluency_forward.5} parent=0 // pred_region
    _
  $region25: #{disfluency_forward.5} parent=0 // pred_fallthru
    _
  // Predicated region
  $region26: #{disfluency_forward.5} parent=0 // pred_check
    _
  $region27: #{disfluency_forward.5} parent=0 // pred_check_branch
    %33 = sbr.rel (0) target = $region29
  $region28: #{disfluency_forward.5} parent=0 // pred_region
    _
  $region29: #{disfluency_forward.5} parent=0 // pred_fallthru
    _
  // Predicated region
  $region30: #{disfluency_forward.5} parent=0 // pred_check
    _
  $region31: #{disfluency_forward.5} parent=0 // pred_check_branch
    %35 = sbr.rel (0) target = $region33
  $region32: #{disfluency_forward.5} parent=0 // pred_region
    _
  $region33: #{disfluency_forward.5} parent=0 // pred_fallthru
    _
  // Predicated region
  $region34: #{disfluency_forward.5} parent=0 // pred_check
    _
  $region35: #{disfluency_forward.5} parent=0 // pred_check_branch
    %37 = sbr.rel (0) target = $region37
  $region36: #{disfluency_forward.5} parent=0 // pred_region
    _
  $region37: #{disfluency_forward.5} parent=0 // pred_fallthru
    _
  // Predicated region
  $region38: #{disfluency_forward.5} parent=0 // pred_check
    _
  $region39: #{disfluency_forward.5} parent=0 // pred_check_branch
    %39 = sbr.rel (0) target = $region41
  $region40: #{disfluency_forward.5} parent=0 // pred_region
    _
  $region41: #{disfluency_forward.5} parent=0 // pred_fallthru
    _
  // Predicated region
  $region42: #{disfluency_forward.5} parent=0 // pred_check
    _
  $region43: #{disfluency_forward.5} parent=0 // pred_check_branch
    %41 = sbr.rel (0) target = $region45
  $region44: #{disfluency_forward.5} parent=0 // pred_region
    _
  $region45: #{disfluency_forward.5} parent=0 // pred_fallthru
    _
  // Predicated region
  $region46: #{disfluency_forward.5} parent=0 // pred_check
    _
  $region47: #{disfluency_forward.5} parent=0 // pred_check_branch
    %43 = sbr.rel (0) target = $region49
  $region48: #{disfluency_forward.5} parent=0 // pred_region
    _
  $region49: #{disfluency_forward.5} parent=0 // pred_fallthru
    _
  // Predicated region
  $region50: #{disfluency_forward.5} parent=0 // pred_check
    _
  $region51: #{disfluency_forward.5} parent=0 // pred_check_branch
    %45 = sbr.rel (0) target = $region53
  $region52: #{disfluency_forward.5} parent=0 // pred_region
    _
  $region53: #{disfluency_forward.5} parent=0 // pred_fallthru
    _
  // Predicated region
  $region54: #{disfluency_forward.5} parent=0 // pred_check
    _
  $region55: #{disfluency_forward.5} parent=0 // pred_check_branch
    %47 = sbr.rel (0) target = $region57
  $region56: #{disfluency_forward.5} parent=0 // pred_region
    _
  $region57: #{disfluency_forward.5} parent=0 // pred_fallthru
    _
  // Predicated region
  $region58: #{disfluency_forward.5} parent=0 // pred_check
    _
  $region59: #{disfluency_forward.5} parent=0 // pred_check_branch
    %49 = sbr.rel (0) target = $region61
  $region60: #{disfluency_forward.5} parent=0 // pred_region
    _
  $region61: #{disfluency_forward.5} parent=0 // pred_fallthru
    _
  %v51 = vld [vmem:[%s0] sm:$0xf]
  %v52 = vld [vmem:[%s0 + $0x4] sm:$0xf]
  %v53 = vld [vmem:[%s0 + $0x8] sm:$0xf]
  %v54 = vld [vmem:[%s0 + $0xc] sm:$0xf]
  %v55 = vunpack.c.l.bf16 %v51
  %v56 = vunpack.c.l.bf16 %v52
  %v57 = vunpack.c.l.bf16 %v53
  %v58 = vunpack.c.l.bf16 %v54
  %v59 = vpack.c.bf16 %v56, %v55
  %v60 = vpack.c.bf16 %v58, %v57
  %v61 = vld [vmem:[%s1] sm:$0xff]
  %v62 = vld [vmem:[%s1 + $0x8] sm:$0xff]
  %v63 = vld [vmem:[%s1 + $0x10] sm:$0xff]
  %v64 = vld [vmem:[%s1 + $0x18] sm:$0xff]
  %v65 = vld [vmem:[%s1 + $0x20] sm:$0xff]
  %v66 = vld [vmem:[%s1 + $0x28] sm:$0xff]
  %v67 = vld [vmem:[%s1 + $0x30] sm:$0x11]
  %v68 = vld [vmem:[%s2] sm:$0x3]
  %v70 = vlaneseq
  %v71 = vshrl.u32 %v70, 7
  %v72 = vsub.s32 0, %v71
  %v73 = vrot.slane %v68, %v72
  %v74 = vlaneseq
  %v75 = vshrl.u32 %v74, 7
  %v76 = vsub.s32 1, %v75
  %v77 = vrot.slane %v68, %v76
  %v87 = vunpack.c.l.b16 %v61
  %v88 = vunpack.c.h.b16 %v61
  %v89 = vunpack.c.l.b16 %v62
  %v90 = vunpack.c.h.b16 %v62
  %v91 = vunpack.c.l.b16 %v63
  %v92 = vunpack.c.h.b16 %v63
  %v93 = vunpack.c.l.b16 %v64
  %v94 = vunpack.c.h.b16 %v64
  %v95 = vunpack.c.l.b16 %v65
  %v96 = vunpack.c.h.b16 %v65
  %v97 = vunpack.c.l.b16 %v66
  %v98 = vunpack.c.h.b16 %v66
  %v99 = vunpack.c.l.b16 %v67
  %v100 = vunpack.c.h.b16 %v67
  %v101 = vpack.c.b16 %v89, %v87
  %v102 = vpack.c.b16 %v90, %v88
  %v103 = vpack.c.b16 %v93, %v91
  %v104 = vpack.c.b16 %v94, %v92
  %v105 = vpack.c.b16 %v97, %v95
  %v106 = vpack.c.b16 %v98, %v96
  %v107 = vpack.c.b16 %v99, %v99
  %v108 = vpack.c.b16 %v100, %v100
  %vm115 = vcmask 408576
  %v117 = vsel %vm115, %v59, 0
  %v120 = vsel %vm115, %v60, 0
  %vm122 = vcmask 1040384
  %v124 = vsel %vm122, %v107, 0
  %v127 = vsel %vm122, %v108, 0
  %129 = vmatprep.subr.bf16.mxu0 %v102
  %130 = vmatpush1.bf16.msra.mxu0 %v101
  %131 = vmatprep.subr.bf16.mxu0 %v104
  %132 = vmatpush1.bf16.msra.mxu0 %v103
  %133 = vmatprep.subr.bf16.mxu0 %v106
  %134 = vmatpush1.bf16.msra.mxu0 %v105
  %135 = vmatprep.subr.bf16.mxu0 %v127
  %136 = vmatpush1.bf16.msra.mxu0 %v124
  %137 = vmatprep.subr.bf16.mxu0 0
  %138 = vmatpush1.bf16.msra.mxu0 0
  %139 = vmatprep.subr.bf16.mxu0 0
  %140 = vmatpush1.bf16.msra.mxu0 0
  %141 = vmatprep.subr.bf16.mxu0 0
  %142 = vmatpush1.bf16.msra.mxu0 0
  %143 = vmatprep.subr.bf16.mxu0 0
  %144 = vmatpush1.bf16.msra.mxu0 0
  %145 = vmatprep.subr.bf16.mxu0 0
  %146 = vmatpush1.bf16.msra.mxu0 0
  %147 = vmatprep.subr.bf16.mxu0 0
  %148 = vmatpush1.bf16.msra.mxu0 0
  %149 = vmatprep.subr.bf16.mxu0 0
  %150 = vmatpush1.bf16.msra.mxu0 0
  %151 = vmatprep.subr.bf16.mxu0 0
  %152 = vmatpush1.bf16.msra.mxu0 0
  %153 = vmatprep.subr.bf16.mxu0 0
  %154 = vmatpush1.bf16.msra.mxu0 0
  %155 = vmatprep.subr.bf16.mxu0 0
  %156 = vmatpush1.bf16.msra.mxu0 0
  %157 = vmatprep.subr.bf16.mxu0 0
  %158 = vmatpush1.bf16.msra.mxu0 0
  %159 = vmatprep.subr.bf16.mxu0 0
  %160 = vmatpush1.bf16.msra.mxu0 0
  %161 = vmatprep.mubr.bf16.mxu0 0
  %162 = vmatmul.mubr.bf16.gmra.mrb[0].mxu0 %v117
  %v163 = vpop.f32.mrb[0].mxu0
  %v164 = vadd.f32 %v73, %v163
  %v165 = vpop.f32.mrb[0].mxu0
  %v166 = vadd.f32 %v77, %v165
  %v167 = vpop.f32.mrb[0].mxu0
  %v168 = vadd.f32 %v73, %v167
  %v169 = vpop.f32.mrb[0].mxu0
  %v170 = vadd.f32 %v77, %v169
  %171 = vmatprep.mubr.bf16.mxu0 0
  %172 = vmatmul.mubr.bf16.gmra.mrb[0].mxu0 %v120
  %v173 = vpop.f32.mrb[0].mxu0
  %v174 = vadd.f32 %v73, %v173
  %v175 = vpop.f32.mrb[0].mxu0
  %v176 = vadd.f32 %v77, %v175
  %v177 = vpop.f32.mrb[0].mxu0
  %v178 = vadd.f32 %v73, %v177
  %v179 = vpop.f32.mrb[0].mxu0
  %v180 = vadd.f32 %v77, %v179
  %181 = vdwg.mxu0
  %186 = vrot.lane.b32.xlu0 %v164, 78
  %v187 = vpop.permute.xlu0 %186
  %188 = vrot.lane.b32.xlu0 %v168, 78
  %v189 = vpop.permute.xlu0 %188
  %190 = vrot.lane.b32.xlu0 %v174, 78
  %v191 = vpop.permute.xlu0 %190
  %192 = vrot.lane.b32.xlu0 %v178, 78
  %v193 = vpop.permute.xlu0 %192
  %v198 = vmul.f32 %v164, %v187
  %v199 = vmul.f32 %v168, %v189
  %v200 = vmul.f32 %v164, %v191
  %v201 = vmul.f32 %v168, %v193
  %v202 = vmul.f32 %v174, %v187
  %v203 = vmul.f32 %v178, %v189
  %v204 = vmul.f32 %v174, %v191
  %v205 = vmul.f32 %v178, %v193
  %v206 = vld [vmem:[%s5] sm:$0xff]
  %v207 = vld [vmem:[%s5 + $0x8] sm:$0xff]
  %v208 = vld [vmem:[%s5 + $0x10] sm:$0xff]
  %v209 = vld [vmem:[%s5 + $0x18] sm:$0xff]
  %v210 = vld [vmem:[%s5 + $0x20] sm:$0xff]
  %v211 = vld [vmem:[%s5 + $0x28] sm:$0xff]
  %v212 = vld [vmem:[%s5 + $0x30] sm:$0x3]
  %v214 = vsel %vm115, %v198, 0
  %v217 = vsel %vm115, %v199, 0
  %v220 = vsel %vm115, %v200, 0
  %v223 = vsel %vm115, %v201, 0
  %v226 = vsel %vm115, %v202, 0
  %v229 = vsel %vm115, %v203, 0
  %v232 = vsel %vm115, %v204, 0
  %v235 = vsel %vm115, %v205, 0
  %vm237 = vcmask 1041408
  %v239 = vsel %vm237, %v212, 0
  %241 = vmatprep.subr.mxu0 0.0
  %242 = vmatpush1.msra.mxu0 %v206
  %243 = vmatprep.subr.mxu0 0.0
  %244 = vmatpush1.msra.mxu0 %v207
  %245 = vmatprep.subr.mxu0 0.0
  %246 = vmatpush1.msra.mxu0 %v208
  %247 = vmatprep.subr.mxu0 0.0
  %248 = vmatpush1.msra.mxu0 %v209
  %249 = vmatprep.subr.mxu0 0.0
  %250 = vmatpush1.msra.mxu0 %v210
  %251 = vmatprep.subr.mxu0 0.0
  %252 = vmatpush1.msra.mxu0 %v211
  %253 = vmatprep.subr.mxu0 0.0
  %254 = vmatpush1.msra.mxu0 %v239
  %255 = vmatprep.subr.mxu0 0.0
  %256 = vmatpush1.msra.mxu0 0.0
  %257 = vmatprep.subr.mxu0 0.0
  %258 = vmatpush1.msra.mxu0 0.0
  %259 = vmatprep.subr.mxu0 0.0
  %260 = vmatpush1.msra.mxu0 0.0
  %261 = vmatprep.subr.mxu0 0.0
  %262 = vmatpush1.msra.mxu0 0.0
  %263 = vmatprep.subr.mxu0 0.0
  %264 = vmatpush1.msra.mxu0 0.0
  %265 = vmatprep.subr.mxu0 0.0
  %266 = vmatpush1.msra.mxu0 0.0
  %267 = vmatprep.subr.mxu0 0.0
  %268 = vmatpush1.msra.mxu0 0.0
  %269 = vmatprep.subr.mxu0 0.0
  %270 = vmatpush1.msra.mxu0 0.0
  %271 = vmatprep.subr.mxu0 0.0
  %272 = vmatpush1.msra.mxu0 0.0
  %273 = vmatprep.subr.mxu0 0.0
  %274 = vmatpush1.msra.mxu0 0.0
  %275 = vmatprep.subr.mxu0 0.0
  %276 = vmatpush1.msra.mxu0 0.0
  %277 = vmatprep.subr.mxu0 0.0
  %278 = vmatpush1.msra.mxu0 0.0
  %279 = vmatprep.subr.mxu0 0.0
  %280 = vmatpush1.msra.mxu0 0.0
  %281 = vmatprep.subr.mxu0 0.0
  %282 = vmatpush1.msra.mxu0 0.0
  %283 = vmatprep.subr.mxu0 0.0
  %284 = vmatpush1.msra.mxu0 0.0
  %285 = vmatprep.subr.mxu0 0.0
  %286 = vmatpush1.msra.mxu0 0.0
  %287 = vmatprep.subr.mxu0 0.0
  %288 = vmatpush1.msra.mxu0 0.0
  %289 = vmatprep.subr.mxu0 0.0
  %290 = vmatpush1.msra.mxu0 0.0
  %291 = vmatprep.subr.mxu0 0.0
  %292 = vmatpush1.msra.mxu0 0.0
  %293 = vmatprep.subr.mxu0 0.0
  %294 = vmatpush1.msra.mxu0 0.0
  %295 = vmatprep.subr.mxu0 0.0
  %296 = vmatpush1.msra.mxu0 0.0
  %297 = vmatprep.subr.mxu0 0.0
  %298 = vmatpush1.msra.mxu0 0.0
  %299 = vmatprep.subr.mxu0 0.0
  %300 = vmatpush1.msra.mxu0 0.0
  %301 = vmatprep.subr.mxu0 0.0
  %302 = vmatpush1.msra.mxu0 0.0
  %303 = vmatprep.subr.mxu0 0.0
  %304 = vmatpush1.msra.mxu0 0.0
  %305 = vmatprep.mubr.f32.mxu0 0.0
  %306 = vmatmul.mubr.f32.gmra.mrb[0].mxu0 %v214
  %v307 = vpop.f32.mrb[0].mxu0
  %v308 = vadd.f32 0.0, %v307
  %v309 = vpop.f32.mrb[0].mxu0
  %310 = vmatprep.mubr.f32.mxu0 0.0
  %311 = vmatmul.mubr.f32.gmra.mrb[0].mxu0 %v217
  %v312 = vpop.f32.mrb[0].mxu0
  %v313 = vadd.f32 0.0, %v312
  %v314 = vpop.f32.mrb[0].mxu0
  %315 = vmatprep.mubr.f32.mxu0 0.0
  %316 = vmatmul.mubr.f32.gmra.mrb[0].mxu0 %v220
  %v317 = vpop.f32.mrb[0].mxu0
  %v318 = vadd.f32 0.0, %v317
  %v319 = vpop.f32.mrb[0].mxu0
  %320 = vmatprep.mubr.f32.mxu0 0.0
  %321 = vmatmul.mubr.f32.gmra.mrb[0].mxu0 %v223
  %v322 = vpop.f32.mrb[0].mxu0
  %v323 = vadd.f32 0.0, %v322
  %v324 = vpop.f32.mrb[0].mxu0
  %325 = vmatprep.mubr.f32.mxu0 0.0
  %326 = vmatmul.mubr.f32.gmra.mrb[0].mxu0 %v226
  %v327 = vpop.f32.mrb[0].mxu0
  %v328 = vadd.f32 0.0, %v327
  %v329 = vpop.f32.mrb[0].mxu0
  %330 = vmatprep.mubr.f32.mxu0 0.0
  %331 = vmatmul.mubr.f32.gmra.mrb[0].mxu0 %v229
  %v332 = vpop.f32.mrb[0].mxu0
  %v333 = vadd.f32 0.0, %v332
  %v334 = vpop.f32.mrb[0].mxu0
  %335 = vmatprep.mubr.f32.mxu0 0.0
  %336 = vmatmul.mubr.f32.gmra.mrb[0].mxu0 %v232
  %v337 = vpop.f32.mrb[0].mxu0
  %v338 = vadd.f32 0.0, %v337
  %v339 = vpop.f32.mrb[0].mxu0
  %340 = vmatprep.mubr.f32.mxu0 0.0
  %341 = vmatmul.mubr.f32.gmra.mrb[0].mxu0 %v235
  %v342 = vpop.f32.mrb[0].mxu0
  %v343 = vadd.f32 0.0, %v342
  %v344 = vpop.f32.mrb[0].mxu0
  %345 = vdwg.mxu0
  %vm346 = vcmask 80896
  %v347 = vsel %vm346, %v308, -inf
  %v348 = vsel %vm346, %v318, -inf
  %v349 = vmax.f32 %v347, %v348
  %v350 = vsel %vm346, %v313, -inf
  %v351 = vsel %vm346, %v323, -inf
  %v352 = vmax.f32 %v350, %v351
  %v353 = vsel %vm346, %v328, -inf
  %v354 = vsel %vm346, %v338, -inf
  %v355 = vmax.f32 %v353, %v354
  %v356 = vsel %vm346, %v333, -inf
  %v357 = vsel %vm346, %v343, -inf
  %v358 = vmax.f32 %v356, %v357
  %v359 = vsub.f32 %v308, %v349
  %v360 = vsub.f32 %v313, %v352
  %v361 = vsub.f32 %v318, %v349
  %v362 = vsub.f32 %v323, %v352
  %v363 = vsub.f32 %v328, %v355
  %v364 = vsub.f32 %v333, %v358
  %v365 = vsub.f32 %v338, %v355
  %v366 = vsub.f32 %v343, %v358
  %v367 = vmul.f32 %v359, 1.442695
  %v368 = vpow.pop %v367
  %v369 = vmul.f32 %v360, 1.442695
  %v370 = vpow.pop %v369
  %v371 = vmul.f32 %v361, 1.442695
  %v372 = vpow.pop %v371
  %v373 = vmul.f32 %v362, 1.442695
  %v374 = vpow.pop %v373
  %v375 = vmul.f32 %v363, 1.442695
  %v376 = vpow.pop %v375
  %v377 = vmul.f32 %v364, 1.442695
  %v378 = vpow.pop %v377
  %v379 = vmul.f32 %v365, 1.442695
  %v380 = vpow.pop %v379
  %v381 = vmul.f32 %v366, 1.442695
  %v382 = vpow.pop %v381
  %v383 = vsel %vm346, %v368, 0.0
  %v384 = vsel %vm346, %v372, 0.0
  %v385 = vadd.f32 %v383, %v384
  %v386 = vsel %vm346, %v370, 0.0
  %v387 = vsel %vm346, %v374, 0.0
  %v388 = vadd.f32 %v386, %v387
  %v389 = vsel %vm346, %v376, 0.0
  %v390 = vsel %vm346, %v380, 0.0
  %v391 = vadd.f32 %v389, %v390
  %v392 = vsel %vm346, %v378, 0.0
  %v393 = vsel %vm346, %v382, 0.0
  %v394 = vadd.f32 %v392, %v393
  %v395 = vrcp.pop %v385
  %v396 = vrcp.pop %v388
  %v397 = vrcp.pop %v391
  %v398 = vrcp.pop %v394
  %v399 = vmul.f32 %v368, %v395
  %v400 = vmul.f32 %v370, %v396
  %v401 = vmul.f32 %v372, %v395
  %v402 = vmul.f32 %v374, %v396
  %v403 = vmul.f32 %v376, %v397
  %v404 = vmul.f32 %v378, %v398
  %v405 = vmul.f32 %v380, %v397
  %v406 = vmul.f32 %v382, %v398
  %v407 = vld [vmem:[%s6] sm:$0xff]
  %v408 = vld [vmem:[%s6 + $0x8] sm:$0x3]
  %v410 = vsel %vm346, %v399, 0
  %v413 = vsel %vm346, %v400, 0
  %v416 = vsel %vm346, %v401, 0
  %v419 = vsel %vm346, %v402, 0
  %v422 = vsel %vm346, %v403, 0
  %v425 = vsel %vm346, %v404, 0
  %v428 = vsel %vm346, %v405, 0
  %v431 = vsel %vm346, %v406, 0
  %v434 = vsel %vm237, %v408, 0
  %436 = vmatprep.subr.mxu0 0.0
  %437 = vmatpush1.msra.mxu0 %v407
  %438 = vmatprep.subr.mxu0 0.0
  %439 = vmatpush1.msra.mxu0 %v434
  %440 = vmatprep.subr.mxu0 0.0
  %441 = vmatpush1.msra.mxu0 0.0
  %442 = vmatprep.subr.mxu0 0.0
  %443 = vmatpush1.msra.mxu0 0.0
  %444 = vmatprep.subr.mxu0 0.0
  %445 = vmatpush1.msra.mxu0 0.0
  %446 = vmatprep.subr.mxu0 0.0
  %447 = vmatpush1.msra.mxu0 0.0
  %448 = vmatprep.subr.mxu0 0.0
  %449 = vmatpush1.msra.mxu0 0.0
  %450 = vmatprep.subr.mxu0 0.0
  %451 = vmatpush1.msra.mxu0 0.0
  %452 = vmatprep.subr.mxu0 0.0
  %453 = vmatpush1.msra.mxu0 0.0
  %454 = vmatprep.subr.mxu0 0.0
  %455 = vmatpush1.msra.mxu0 0.0
  %456 = vmatprep.subr.mxu0 0.0
  %457 = vmatpush1.msra.mxu0 0.0
  %458 = vmatprep.subr.mxu0 0.0
  %459 = vmatpush1.msra.mxu0 0.0
  %460 = vmatprep.subr.mxu0 0.0
  %461 = vmatpush1.msra.mxu0 0.0
  %462 = vmatprep.subr.mxu0 0.0
  %463 = vmatpush1.msra.mxu0 0.0
  %464 = vmatprep.subr.mxu0 0.0
  %465 = vmatpush1.msra.mxu0 0.0
  %466 = vmatprep.subr.mxu0 0.0
  %467 = vmatpush1.msra.mxu0 0.0
  %468 = vmatprep.subr.mxu0 0.0
  %469 = vmatpush1.msra.mxu0 0.0
  %470 = vmatprep.subr.mxu0 0.0
  %471 = vmatpush1.msra.mxu0 0.0
  %472 = vmatprep.subr.mxu0 0.0
  %473 = vmatpush1.msra.mxu0 0.0
  %474 = vmatprep.subr.mxu0 0.0
  %475 = vmatpush1.msra.mxu0 0.0
  %476 = vmatprep.subr.mxu0 0.0
  %477 = vmatpush1.msra.mxu0 0.0
  %478 = vmatprep.subr.mxu0 0.0
  %479 = vmatpush1.msra.mxu0 0.0
  %480 = vmatprep.subr.mxu0 0.0
  %481 = vmatpush1.msra.mxu0 0.0
  %482 = vmatprep.subr.mxu0 0.0
  %483 = vmatpush1.msra.mxu0 0.0
  %484 = vmatprep.subr.mxu0 0.0
  %485 = vmatpush1.msra.mxu0 0.0
  %486 = vmatprep.subr.mxu0 0.0
  %487 = vmatpush1.msra.mxu0 0.0
  %488 = vmatprep.subr.mxu0 0.0
  %489 = vmatpush1.msra.mxu0 0.0
  %490 = vmatprep.subr.mxu0 0.0
  %491 = vmatpush1.msra.mxu0 0.0
  %492 = vmatprep.subr.mxu0 0.0
  %493 = vmatpush1.msra.mxu0 0.0
  %494 = vmatprep.subr.mxu0 0.0
  %495 = vmatpush1.msra.mxu0 0.0
  %496 = vmatprep.subr.mxu0 0.0
  %497 = vmatpush1.msra.mxu0 0.0
  %498 = vmatprep.subr.mxu0 0.0
  %499 = vmatpush1.msra.mxu0 0.0
  %500 = vmatprep.mubr.f32.mxu0 0.0
  %501 = vmatmul.mubr.f32.gmra.mrb[0].mxu0 %v410
  %v502 = vpop.f32.mrb[0].mxu0
  %v503 = vadd.f32 0.0, %v502
  %v504 = vpop.f32.mrb[0].mxu0
  %505 = vmatprep.mubr.f32.mxu0 0.0
  %506 = vmatmul.mubr.f32.gmra.mrb[0].mxu0 %v413
  %v507 = vpop.f32.mrb[0].mxu0
  %v508 = vadd.f32 0.0, %v507
  %v509 = vpop.f32.mrb[0].mxu0
  %510 = vmatprep.mubr.f32.mxu0 0.0
  %511 = vmatmul.mubr.f32.gmra.mrb[0].mxu0 %v416
  %v512 = vpop.f32.mrb[0].mxu0
  %v513 = vadd.f32 0.0, %v512
  %v514 = vpop.f32.mrb[0].mxu0
  %515 = vmatprep.mubr.f32.mxu0 0.0
  %516 = vmatmul.mubr.f32.gmra.mrb[0].mxu0 %v419
  %v517 = vpop.f32.mrb[0].mxu0
  %v518 = vadd.f32 0.0, %v517
  %v519 = vpop.f32.mrb[0].mxu0
  %520 = vmatprep.mubr.f32.mxu0 0.0
  %521 = vmatmul.mubr.f32.gmra.mrb[0].mxu0 %v422
  %v522 = vpop.f32.mrb[0].mxu0
  %v523 = vadd.f32 0.0, %v522
  %v524 = vpop.f32.mrb[0].mxu0
  %525 = vmatprep.mubr.f32.mxu0 0.0
  %526 = vmatmul.mubr.f32.gmra.mrb[0].mxu0 %v425
  %v527 = vpop.f32.mrb[0].mxu0
  %v528 = vadd.f32 0.0, %v527
  %v529 = vpop.f32.mrb[0].mxu0
  %530 = vmatprep.mubr.f32.mxu0 0.0
  %531 = vmatmul.mubr.f32.gmra.mrb[0].mxu0 %v428
  %v532 = vpop.f32.mrb[0].mxu0
  %v533 = vadd.f32 0.0, %v532
  %v534 = vpop.f32.mrb[0].mxu0
  %535 = vmatprep.mubr.f32.mxu0 0.0
  %536 = vmatmul.mubr.f32.gmra.mrb[0].mxu0 %v431
  %v537 = vpop.f32.mrb[0].mxu0
  %v538 = vadd.f32 0.0, %v537
  %v539 = vpop.f32.mrb[0].mxu0
  %540 = vdwg.mxu0
  %545 = vrot.lane.b32.xlu0 %v164, 28
  %v546 = vpop.permute.xlu0 %545
  %547 = vrot.lane.b32.xlu0 %v166, 28
  %v548 = vpop.permute.xlu0 %547
  %549 = vrot.lane.b32.xlu0 %v168, 28
  %v550 = vpop.permute.xlu0 %549
  %551 = vrot.lane.b32.xlu0 %v170, 28
  %v552 = vpop.permute.xlu0 %551
  %553 = vrot.lane.b32.xlu0 %v174, 28
  %v554 = vpop.permute.xlu0 %553
  %555 = vrot.lane.b32.xlu0 %v176, 28
  %v556 = vpop.permute.xlu0 %555
  %557 = vrot.lane.b32.xlu0 %v178, 28
  %v558 = vpop.permute.xlu0 %557
  %559 = vrot.lane.b32.xlu0 %v180, 28
  %v560 = vpop.permute.xlu0 %559
  %vm561 = vcmask 228352
  %v562 = vsel %vm561, %v546, %v548
  %v563 = vsel %vm561, %v550, %v552
  %v564 = vsel %vm561, %v554, %v556
  %v565 = vsel %vm561, %v558, %v560
  %v570 = vmul.f32 %v503, %v562
  %v571 = vmul.f32 %v508, %v563
  %v572 = vmul.f32 %v513, %v564
  %v573 = vmul.f32 %v518, %v565
  %v574 = vmul.f32 %v523, %v562
  %v575 = vmul.f32 %v528, %v563
  %v576 = vmul.f32 %v533, %v564
  %v577 = vmul.f32 %v538, %v565
  %v578 = vsel %vm115, %v570, 0.0
  %v579 = vsel %vm115, %v572, 0.0
  %v580 = vadd.f32 %v578, %v579
  %v581 = vsel %vm115, %v571, 0.0
  %v582 = vsel %vm115, %v573, 0.0
  %v583 = vadd.f32 %v581, %v582
  %v584 = vsel %vm115, %v574, 0.0
  %v585 = vsel %vm115, %v576, 0.0
  %v586 = vadd.f32 %v584, %v585
  %v587 = vsel %vm115, %v575, 0.0
  %v588 = vsel %vm115, %v577, 0.0
  %v589 = vadd.f32 %v587, %v588
  %v590 = vpack.c.bf16 %v583, %v580
  %v591 = vpack.c.bf16 %v589, %v586
  %v592 = vld [vmem:[%s3] sm:$0xf]
  %v593 = vld [vmem:[%s3 + $0x4] sm:$0xf]
  %v594 = vld [vmem:[%s3 + $0x8] sm:$0xf]
  %v595 = vld [vmem:[%s3 + $0xc] sm:$0xf]
  %v596 = vld [vmem:[%s3 + $0x10] sm:$0xf]
  %v597 = vld [vmem:[%s3 + $0x14] sm:$0xf]
  %v598 = vld [vmem:[%s3 + $0x18] sm:$0x1]
  %v599 = vld [vmem:[%s4] sm:$0x1]
  %v601 = vlaneseq
  %v602 = vshrl.u32 %v601, 7
  %v603 = vsub.s32 0, %v602
  %v604 = vrot.slane %v599, %v603
  %v613 = vunpack.c.l.b16 %v592
  %v614 = vunpack.c.l.b16 %v593
  %v615 = vunpack.c.l.b16 %v594
  %v616 = vunpack.c.l.b16 %v595
  %v617 = vunpack.c.l.b16 %v596
  %v618 = vunpack.c.l.b16 %v597
  %v619 = vunpack.c.l.b16 %v598
  %v620 = vpack.c.b16 %v614, %v613
  %v621 = vpack.c.b16 %v616, %v615
  %v622 = vpack.c.b16 %v618, %v617
  %v623 = vpack.c.b16 %v619, %v619
  %v628 = vsel %vm115, %v590, 0
  %v631 = vsel %vm115, %v591, 0
  %v634 = vsel %vm122, %v623, 0
  %636 = vmatprep.subr.bf16.mxu0 0
  %637 = vmatpush1.bf16.msra.mxu0 %v620
  %638 = vmatprep.subr.bf16.mxu0 0
  %639 = vmatpush1.bf16.msra.mxu0 %v621
  %640 = vmatprep.subr.bf16.mxu0 0
  %641 = vmatpush1.bf16.msra.mxu0 %v622
  %642 = vmatprep.subr.bf16.mxu0 0
  %643 = vmatpush1.bf16.msra.mxu0 %v634
  %644 = vmatprep.subr.bf16.mxu0 0
  %645 = vmatpush1.bf16.msra.mxu0 0
  %646 = vmatprep.subr.bf16.mxu0 0
  %647 = vmatpush1.bf16.msra.mxu0 0
  %648 = vmatprep.subr.bf16.mxu0 0
  %649 = vmatpush1.bf16.msra.mxu0 0
  %650 = vmatprep.subr.bf16.mxu0 0
  %651 = vmatpush1.bf16.msra.mxu0 0
  %652 = vmatprep.subr.bf16.mxu0 0
  %653 = vmatpush1.bf16.msra.mxu0 0
  %654 = vmatprep.subr.bf16.mxu0 0
  %655 = vmatpush1.bf16.msra.mxu0 0
  %656 = vmatprep.subr.bf16.mxu0 0
  %657 = vmatpush1.bf16.msra.mxu0 0
  %658 = vmatprep.subr.bf16.mxu0 0
  %659 = vmatpush1.bf16.msra.mxu0 0
  %660 = vmatprep.subr.bf16.mxu0 0
  %661 = vmatpush1.bf16.msra.mxu0 0
  %662 = vmatprep.subr.bf16.mxu0 0
  %663 = vmatpush1.bf16.msra.mxu0 0
  %664 = vmatprep.subr.bf16.mxu0 0
  %665 = vmatpush1.bf16.msra.mxu0 0
  %666 = vmatprep.subr.bf16.mxu0 0
  %667 = vmatpush1.bf16.msra.mxu0 0
  %668 = vmatprep.mubr.bf16.mxu0 0
  %669 = vmatmul.mubr.bf16.gmra.mrb[0].mxu0 %v628
  %v670 = vpop.f32.mrb[0].mxu0
  %v671 = vadd.f32 %v604, %v670
  %v672 = vpop.f32.mrb[0].mxu0
  %v673 = vpop.f32.mrb[0].mxu0
  %v674 = vadd.f32 %v604, %v673
  %v675 = vpop.f32.mrb[0].mxu0
  %676 = vmatprep.mubr.bf16.mxu0 0
  %677 = vmatmul.mubr.bf16.gmra.mrb[0].mxu0 %v631
  %v678 = vpop.f32.mrb[0].mxu0
  %v679 = vadd.f32 %v604, %v678
  %v680 = vpop.f32.mrb[0].mxu0
  %v681 = vpop.f32.mrb[0].mxu0
  %v682 = vadd.f32 %v604, %v681
  %v683 = vpop.f32.mrb[0].mxu0
  %684 = vdwg.mxu0
  %v685 = vadd.f32 %v55, %v671
  %v686 = vadd.f32 %v56, %v674
  %v687 = vadd.f32 %v57, %v679
  %v688 = vadd.f32 %v58, %v682
  %v689 = vld [vmem:[%s11] sm:$0x1]
  %v690 = vld [vmem:[%s12] sm:$0x1]
  %v691 = vsel %vm115, %v685, 0.0
  %692 = vadd.xlane.f32.xlu0 %v691
  %v693 = vpop.xlane.xlu0 %692
  %v694 = vsel %vm115, %v686, 0.0
  %695 = vadd.xlane.f32.xlu0 %v694
  %v696 = vpop.xlane.xlu0 %695
  %v697 = vsel %vm115, %v687, 0.0
  %698 = vadd.xlane.f32.xlu0 %v697
  %v699 = vpop.xlane.xlu0 %698
  %v700 = vsel %vm115, %v688, 0.0
  %701 = vadd.xlane.f32.xlu0 %v700
  %v702 = vpop.xlane.xlu0 %701
  %v703 = vrcp.pop 50.0
  %v704 = vmul.f32 %v693, %v703
  %v705 = vmul.f32 %v696, %v703
  %v706 = vmul.f32 %v699, %v703
  %v707 = vmul.f32 %v702, %v703
  %v708 = vsub.f32 %v685, %v704
  %v709 = vsub.f32 %v686, %v705
  %v710 = vsub.f32 %v687, %v706
  %v711 = vsub.f32 %v688, %v707
  %v712 = vmul.f32 %v708, %v708
  %v713 = vmul.f32 %v709, %v709
  %v714 = vmul.f32 %v710, %v710
  %v715 = vmul.f32 %v711, %v711
  %v716 = vsel %vm115, %v712, 0.0
  %717 = vadd.xlane.f32.xlu0 %v716
  %v718 = vpop.xlane.xlu0 %717
  %v719 = vsel %vm115, %v713, 0.0
  %720 = vadd.xlane.f32.xlu0 %v719
  %v721 = vpop.xlane.xlu0 %720
  %v722 = vsel %vm115, %v714, 0.0
  %723 = vadd.xlane.f32.xlu0 %v722
  %v724 = vpop.xlane.xlu0 %723
  %v725 = vsel %vm115, %v715, 0.0
  %726 = vadd.xlane.f32.xlu0 %v725
  %v727 = vpop.xlane.xlu0 %726
  %v728 = vmul.f32 %v718, %v703
  %v729 = vmul.f32 %v721, %v703
  %v730 = vmul.f32 %v724, %v703
  %v731 = vmul.f32 %v727, %v703
  %v732 = vadd.f32 %v728, 1e-05
  %v733 = vadd.f32 %v729, 1e-05
  %v734 = vadd.f32 %v730, 1e-05
  %v735 = vadd.f32 %v731, 1e-05
  %v736 = vrsqrt.pop %v732
  %v737 = vrsqrt.pop %v733
  %v738 = vrsqrt.pop %v734
  %v739 = vrsqrt.pop %v735
  %v740 = vmul.f32 %v708, %v736
  %v741 = vmul.f32 %v709, %v737
  %v742 = vmul.f32 %v710, %v738
  %v743 = vmul.f32 %v711, %v739
  %v745 = vlaneseq
  %v746 = vshrl.u32 %v745, 7
  %v747 = vsub.s32 0, %v746
  %v748 = vrot.slane %v689, %v747
  %v750 = vmul.f32 %v740, %v748
  %v751 = vmul.f32 %v741, %v748
  %v752 = vmul.f32 %v742, %v748
  %v753 = vmul.f32 %v743, %v748
  %v755 = vlaneseq
  %v756 = vshrl.u32 %v755, 7
  %v757 = vsub.s32 0, %v756
  %v758 = vrot.slane %v690, %v757
  %v760 = vadd.f32 %v750, %v758
  %v761 = vadd.f32 %v751, %v758
  %v762 = vadd.f32 %v752, %v758
  %v763 = vadd.f32 %v753, %v758
  %v764 = vpack.c.bf16 %v761, %v760
  %v765 = vpack.c.bf16 %v763, %v762
  %v766 = vld [vmem:[%s7] sm:$0xff]
  %v767 = vld [vmem:[%s7 + $0x8] sm:$0xff]
  %v768 = vld [vmem:[%s7 + $0x40] sm:$0xff]
  %v769 = vld [vmem:[%s7 + $0x48] sm:$0xff]
  %v770 = vld [vmem:[%s7 + $0x80] sm:$0xff]
  %v771 = vld [vmem:[%s7 + $0x88] sm:$0xff]
  %v772 = vld [vmem:[%s7 + $0xc0] sm:$0xff]
  %v773 = vld [vmem:[%s7 + $0xc8] sm:$0xff]
  %v774 = vld [vmem:[%s7 + $0x100] sm:$0xff]
  %v775 = vld [vmem:[%s7 + $0x108] sm:$0xff]
  %v776 = vld [vmem:[%s7 + $0x140] sm:$0xff]
  %v777 = vld [vmem:[%s7 + $0x148] sm:$0xff]
  %v778 = vld [vmem:[%s7 + $0x180] sm:$0x11]
  %v779 = vld [vmem:[%s7 + $0x188] sm:$0x11]
  %v780 = vld [vmem:[%s8] sm:$0xf]
  %v782 = vlaneseq
  %v783 = vshrl.u32 %v782, 7
  %v784 = vsub.s32 0, %v783
  %v785 = vrot.slane %v780, %v784
  %v786 = vlaneseq
  %v787 = vshrl.u32 %v786, 7
  %v788 = vsub.s32 1, %v787
  %v789 = vrot.slane %v780, %v788
  %v790 = vlaneseq
  %v791 = vshrl.u32 %v790, 7
  %v792 = vsub.s32 2, %v791
  %v793 = vrot.slane %v780, %v792
  %v794 = vlaneseq
  %v795 = vshrl.u32 %v794, 7
  %v796 = vsub.s32 3, %v795
  %v797 = vrot.slane %v780, %v796
  %v816 = vunpack.c.l.b16 %v766
  %v817 = vunpack.c.h.b16 %v766
  %v818 = vunpack.c.l.b16 %v767
  %v819 = vunpack.c.h.b16 %v767
  %v820 = vunpack.c.l.b16 %v768
  %v821 = vunpack.c.h.b16 %v768
  %v822 = vunpack.c.l.b16 %v769
  %v823 = vunpack.c.h.b16 %v769
  %v824 = vunpack.c.l.b16 %v770
  %v825 = vunpack.c.h.b16 %v770
  %v826 = vunpack.c.l.b16 %v771
  %v827 = vunpack.c.h.b16 %v771
  %v828 = vunpack.c.l.b16 %v772
  %v829 = vunpack.c.h.b16 %v772
  %v830 = vunpack.c.l.b16 %v773
  %v831 = vunpack.c.h.b16 %v773
  %v832 = vunpack.c.l.b16 %v774
  %v833 = vunpack.c.h.b16 %v774
  %v834 = vunpack.c.l.b16 %v775
  %v835 = vunpack.c.h.b16 %v775
  %v836 = vunpack.c.l.b16 %v776
  %v837 = vunpack.c.h.b16 %v776
  %v838 = vunpack.c.l.b16 %v777
  %v839 = vunpack.c.h.b16 %v777
  %v840 = vunpack.c.l.b16 %v778
  %v841 = vunpack.c.h.b16 %v778
  %v842 = vunpack.c.l.b16 %v779
  %v843 = vunpack.c.h.b16 %v779
  %v844 = vpack.c.b16 %v820, %v816
  %v845 = vpack.c.b16 %v821, %v817
  %v846 = vpack.c.b16 %v822, %v818
  %v847 = vpack.c.b16 %v823, %v819
  %v848 = vpack.c.b16 %v828, %v824
  %v849 = vpack.c.b16 %v829, %v825
  %v850 = vpack.c.b16 %v830, %v826
  %v851 = vpack.c.b16 %v831, %v827
  %v852 = vpack.c.b16 %v836, %v832
  %v853 = vpack.c.b16 %v837, %v833
  %v854 = vpack.c.b16 %v838, %v834
  %v855 = vpack.c.b16 %v839, %v835
  %v856 = vpack.c.b16 %v840, %v840
  %v857 = vpack.c.b16 %v841, %v841
  %v858 = vpack.c.b16 %v842, %v842
  %v859 = vpack.c.b16 %v843, %v843
  %v873 = vsel %vm115, %v764, 0
  %v876 = vsel %vm115, %v765, 0
  %v879 = vsel %vm122, %v856, 0
  %v882 = vsel %vm122, %v857, 0
  %v885 = vsel %vm122, %v858, 0
  %v888 = vsel %vm122, %v859, 0
  %890 = vmatprep.subr.bf16.mxu0 %v845
  %891 = vmatpush1.bf16.msra.mxu0 %v844
  %892 = vmatprep.subr.bf16.mxu0 %v849
  %893 = vmatpush1.bf16.msra.mxu0 %v848
  %894 = vmatprep.subr.bf16.mxu0 %v853
  %895 = vmatpush1.bf16.msra.mxu0 %v852
  %896 = vmatprep.subr.bf16.mxu0 %v882
  %897 = vmatpush1.bf16.msra.mxu0 %v879
  %898 = vmatprep.subr.bf16.mxu0 0
  %899 = vmatpush1.bf16.msra.mxu0 0
  %900 = vmatprep.subr.bf16.mxu0 0
  %901 = vmatpush1.bf16.msra.mxu0 0
  %902 = vmatprep.subr.bf16.mxu0 0
  %903 = vmatpush1.bf16.msra.mxu0 0
  %904 = vmatprep.subr.bf16.mxu0 0
  %905 = vmatpush1.bf16.msra.mxu0 0
  %906 = vmatprep.subr.bf16.mxu0 0
  %907 = vmatpush1.bf16.msra.mxu0 0
  %908 = vmatprep.subr.bf16.mxu0 0
  %909 = vmatpush1.bf16.msra.mxu0 0
  %910 = vmatprep.subr.bf16.mxu0 0
  %911 = vmatpush1.bf16.msra.mxu0 0
  %912 = vmatprep.subr.bf16.mxu0 0
  %913 = vmatpush1.bf16.msra.mxu0 0
  %914 = vmatprep.subr.bf16.mxu0 0
  %915 = vmatpush1.bf16.msra.mxu0 0
  %916 = vmatprep.subr.bf16.mxu0 0
  %917 = vmatpush1.bf16.msra.mxu0 0
  %918 = vmatprep.subr.bf16.mxu0 0
  %919 = vmatpush1.bf16.msra.mxu0 0
  %920 = vmatprep.subr.bf16.mxu0 0
  %921 = vmatpush1.bf16.msra.mxu0 0
  %922 = vmatprep.mubr.bf16.mxu0 0
  %923 = vmatmul.mubr.bf16.gmra.mrb[0].mxu0 %v873
  %v924 = vpop.f32.mrb[0].mxu0
  %v925 = vadd.f32 %v785, %v924
  %v926 = vpop.f32.mrb[0].mxu0
  %v927 = vadd.f32 %v789, %v926
  %v928 = vpop.f32.mrb[0].mxu0
  %v929 = vadd.f32 %v785, %v928
  %v930 = vpop.f32.mrb[0].mxu0
  %v931 = vadd.f32 %v789, %v930
  %932 = vmatprep.mubr.bf16.mxu0 0
  %933 = vmatmul.mubr.bf16.gmra.mrb[0].mxu0 %v876
  %v934 = vpop.f32.mrb[0].mxu0
  %v935 = vadd.f32 %v785, %v934
  %v936 = vpop.f32.mrb[0].mxu0
  %v937 = vadd.f32 %v789, %v936
  %v938 = vpop.f32.mrb[0].mxu0
  %v939 = vadd.f32 %v785, %v938
  %v940 = vpop.f32.mrb[0].mxu0
  %v941 = vadd.f32 %v789, %v940
  %942 = vdwg.mxu0
  %943 = vmatprep.subr.bf16.mxu0 %v847
  %944 = vmatpush1.bf16.msra.mxu0 %v846
  %945 = vmatprep.subr.bf16.mxu0 %v851
  %946 = vmatpush1.bf16.msra.mxu0 %v850
  %947 = vmatprep.subr.bf16.mxu0 %v855
  %948 = vmatpush1.bf16.msra.mxu0 %v854
  %949 = vmatprep.subr.bf16.mxu0 %v888
  %950 = vmatpush1.bf16.msra.mxu0 %v885
  %951 = vmatprep.subr.bf16.mxu0 0
  %952 = vmatpush1.bf16.msra.mxu0 0
  %953 = vmatprep.subr.bf16.mxu0 0
  %954 = vmatpush1.bf16.msra.mxu0 0
  %955 = vmatprep.subr.bf16.mxu0 0
  %956 = vmatpush1.bf16.msra.mxu0 0
  %957 = vmatprep.subr.bf16.mxu0 0
  %958 = vmatpush1.bf16.msra.mxu0 0
  %959 = vmatprep.subr.bf16.mxu0 0
  %960 = vmatpush1.bf16.msra.mxu0 0
  %961 = vmatprep.subr.bf16.mxu0 0
  %962 = vmatpush1.bf16.msra.mxu0 0
  %963 = vmatprep.subr.bf16.mxu0 0
  %964 = vmatpush1.bf16.msra.mxu0 0
  %965 = vmatprep.subr.bf16.mxu0 0
  %966 = vmatpush1.bf16.msra.mxu0 0
  %967 = vmatprep.subr.bf16.mxu0 0
  %968 = vmatpush1.bf16.msra.mxu0 0
  %969 = vmatprep.subr.bf16.mxu0 0
  %970 = vmatpush1.bf16.msra.mxu0 0
  %971 = vmatprep.subr.bf16.mxu0 0
  %972 = vmatpush1.bf16.msra.mxu0 0
  %973 = vmatprep.subr.bf16.mxu0 0
  %974 = vmatpush1.bf16.msra.mxu0 0
  %975 = vmatprep.mubr.bf16.mxu0 0
  %976 = vmatmul.mubr.bf16.gmra.mrb[0].mxu0 %v873
  %v977 = vpop.f32.mrb[0].mxu0
  %v978 = vadd.f32 %v793, %v977
  %v979 = vpop.f32.mrb[0].mxu0
  %v980 = vadd.f32 %v797, %v979
  %v981 = vpop.f32.mrb[0].mxu0
  %v982 = vadd.f32 %v793, %v981
  %v983 = vpop.f32.mrb[0].mxu0
  %v984 = vadd.f32 %v797, %v983
  %985 = vmatprep.mubr.bf16.mxu0 0
  %986 = vmatmul.mubr.bf16.gmra.mrb[0].mxu0 %v876
  %v987 = vpop.f32.mrb[0].mxu0
  %v988 = vadd.f32 %v793, %v987
  %v989 = vpop.f32.mrb[0].mxu0
  %v990 = vadd.f32 %v797, %v989
  %v991 = vpop.f32.mrb[0].mxu0
  %v992 = vadd.f32 %v793, %v991
  %v993 = vpop.f32.mrb[0].mxu0
  %v994 = vadd.f32 %v797, %v993
  %995 = vdwg.mxu0
  %v996 = vmax.f32 %v925, 0.0
  %v997 = vmax.f32 %v927, 0.0
  %v998 = vmax.f32 %v978, 0.0
  %v999 = vmax.f32 %v980, 0.0
  %v1000 = vmax.f32 %v929, 0.0
  %v1001 = vmax.f32 %v931, 0.0
  %v1002 = vmax.f32 %v982, 0.0
  %v1003 = vmax.f32 %v984, 0.0
  %v1004 = vmax.f32 %v935, 0.0
  %v1005 = vmax.f32 %v937, 0.0
  %v1006 = vmax.f32 %v988, 0.0
  %v1007 = vmax.f32 %v990, 0.0
  %v1008 = vmax.f32 %v939, 0.0
  %v1009 = vmax.f32 %v941, 0.0
  %v1010 = vmax.f32 %v992, 0.0
  %v1011 = vmax.f32 %v994, 0.0
  %v1012 = vpack.c.bf16 %v1000, %v996
  %v1013 = vpack.c.bf16 %v1001, %v997
  %v1014 = vpack.c.bf16 %v1002, %v998
  %v1015 = vpack.c.bf16 %v1003, %v999
  %v1016 = vpack.c.bf16 %v1008, %v1004
  %v1017 = vpack.c.bf16 %v1009, %v1005
  %v1018 = vpack.c.bf16 %v1010, %v1006
  %v1019 = vpack.c.bf16 %v1011, %v1007
  %v1020 = vld [vmem:[%s9] sm:$0xf]
  %v1021 = vld [vmem:[%s9 + $0x4] sm:$0xf]
  %v1022 = vld [vmem:[%s9 + $0x8] sm:$0xf]
  %v1023 = vld [vmem:[%s9 + $0xc] sm:$0xf]
  %v1024 = vld [vmem:[%s9 + $0x10] sm:$0xf]
  %v1025 = vld [vmem:[%s9 + $0x14] sm:$0xf]
  %v1026 = vld [vmem:[%s9 + $0x18] sm:$0xf]
  %v1027 = vld [vmem:[%s9 + $0x1c] sm:$0xf]
  %v1028 = vld [vmem:[%s9 + $0x20] sm:$0xf]
  %v1029 = vld [vmem:[%s9 + $0x24] sm:$0xf]
  %v1030 = vld [vmem:[%s9 + $0x28] sm:$0xf]
  %v1031 = vld [vmem:[%s9 + $0x2c] sm:$0xf]
  %v1032 = vld [vmem:[%s9 + $0x30] sm:$0xf]
  %v1033 = vld [vmem:[%s9 + $0x34] sm:$0xf]
  %v1034 = vld [vmem:[%s9 + $0x38] sm:$0xf]
  %v1035 = vld [vmem:[%s9 + $0x3c] sm:$0xf]
  %v1036 = vld [vmem:[%s9 + $0x40] sm:$0xf]
  %v1037 = vld [vmem:[%s9 + $0x44] sm:$0xf]
  %v1038 = vld [vmem:[%s9 + $0x48] sm:$0xf]
  %v1039 = vld [vmem:[%s9 + $0x4c] sm:$0xf]
  %v1040 = vld [vmem:[%s9 + $0x50] sm:$0xf]
  %v1041 = vld [vmem:[%s9 + $0x54] sm:$0xf]
  %v1042 = vld [vmem:[%s9 + $0x58] sm:$0xf]
  %v1043 = vld [vmem:[%s9 + $0x5c] sm:$0xf]
  %v1044 = vld [vmem:[%s9 + $0x60] sm:$0xf]
  %v1045 = vld [vmem:[%s9 + $0x64] sm:$0xf]
  %v1046 = vld [vmem:[%s9 + $0x68] sm:$0xf]
  %v1047 = vld [vmem:[%s9 + $0x6c] sm:$0xf]
  %v1048 = vld [vmem:[%s9 + $0x70] sm:$0xf]
  %v1049 = vld [vmem:[%s9 + $0x74] sm:$0xf]
  %v1050 = vld [vmem:[%s9 + $0x78] sm:$0xf]
  %v1051 = vld [vmem:[%s9 + $0x7c] sm:$0xf]
  %v1052 = vld [vmem:[%s9 + $0x80] sm:$0xf]
  %v1053 = vld [vmem:[%s9 + $0x84] sm:$0xf]
  %v1054 = vld [vmem:[%s9 + $0x88] sm:$0xf]
  %v1055 = vld [vmem:[%s9 + $0x8c] sm:$0xf]
  %v1056 = vld [vmem:[%s9 + $0x90] sm:$0xf]
  %v1057 = vld [vmem:[%s9 + $0x94] sm:$0xf]
  %v1058 = vld [vmem:[%s9 + $0x98] sm:$0xf]
  %v1059 = vld [vmem:[%s9 + $0x9c] sm:$0xf]
  %v1060 = vld [vmem:[%s9 + $0xa0] sm:$0xf]
  %v1061 = vld [vmem:[%s9 + $0xa4] sm:$0xf]
  %v1062 = vld [vmem:[%s9 + $0xa8] sm:$0xf]
  %v1063 = vld [vmem:[%s9 + $0xac] sm:$0xf]
  %v1064 = vld [vmem:[%s9 + $0xb0] sm:$0xf]
  %v1065 = vld [vmem:[%s9 + $0xb4] sm:$0xf]
  %v1066 = vld [vmem:[%s9 + $0xb8] sm:$0xf]
  %v1067 = vld [vmem:[%s9 + $0xbc] sm:$0xf]
  %v1068 = vld [vmem:[%s9 + $0xc0] sm:$0xf]
  %v1069 = vld [vmem:[%s9 + $0xc4] sm:$0xf]
  %v1070 = vld [vmem:[%s9 + $0xc8] sm:$0xf]
  %v1071 = vld [vmem:[%s9 + $0xcc] sm:$0xf]
  %v1072 = vld [vmem:[%s9 + $0xd0] sm:$0xf]
  %v1073 = vld [vmem:[%s9 + $0xd4] sm:$0xf]
  %v1074 = vld [vmem:[%s9 + $0xd8] sm:$0xf]
  %v1075 = vld [vmem:[%s9 + $0xdc] sm:$0xf]
  %v1076 = vld [vmem:[%s9 + $0xe0] sm:$0xf]
  %v1077 = vld [vmem:[%s9 + $0xe4] sm:$0xf]
  %v1078 = vld [vmem:[%s9 + $0xe8] sm:$0xf]
  %v1079 = vld [vmem:[%s9 + $0xec] sm:$0xf]
  %v1080 = vld [vmem:[%s9 + $0xf0] sm:$0xf]
  %v1081 = vld [vmem:[%s9 + $0xf4] sm:$0xf]
  %v1082 = vld [vmem:[%s9 + $0xf8] sm:$0xf]
  %v1083 = vld [vmem:[%s9 + $0xfc] sm:$0xf]
  %s1084 = scalar_lea.vmem %s7, 16
  %v1085 = vld [vmem:[%s1084] sm:$0xff]
  %v1086 = vld [vmem:[%s1084 + $0x8] sm:$0xff]
  %v1087 = vld [vmem:[%s1084 + $0x40] sm:$0xff]
  %v1088 = vld [vmem:[%s1084 + $0x48] sm:$0xff]
  %v1089 = vld [vmem:[%s1084 + $0x80] sm:$0xff]
  %v1090 = vld [vmem:[%s1084 + $0x88] sm:$0xff]
  %v1091 = vld [vmem:[%s1084 + $0xc0] sm:$0xff]
  %v1092 = vld [vmem:[%s1084 + $0xc8] sm:$0xff]
  %v1093 = vld [vmem:[%s1084 + $0x100] sm:$0xff]
  %v1094 = vld [vmem:[%s1084 + $0x108] sm:$0xff]
  %v1095 = vld [vmem:[%s1084 + $0x140] sm:$0xff]
  %v1096 = vld [vmem:[%s1084 + $0x148] sm:$0xff]
  %v1097 = vld [vmem:[%s1084 + $0x180] sm:$0x11]
  %v1098 = vld [vmem:[%s1084 + $0x188] sm:$0x11]
  %s1099 = scalar_lea.vmem %s8, 4
  %v1100 = vld [vmem:[%s1099] sm:$0xf]
  %v1102 = vlaneseq
  %v1103 = vshrl.u32 %v1102, 7
  %v1104 = vsub.s32 0, %v1103
  %v1105 = vrot.slane %v1100, %v1104
  %v1106 = vlaneseq
  %v1107 = vshrl.u32 %v1106, 7
  %v1108 = vsub.s32 1, %v1107
  %v1109 = vrot.slane %v1100, %v1108
  %v1110 = vlaneseq
  %v1111 = vshrl.u32 %v1110, 7
  %v1112 = vsub.s32 2, %v1111
  %v1113 = vrot.slane %v1100, %v1112
  %v1114 = vlaneseq
  %v1115 = vshrl.u32 %v1114, 7
  %v1116 = vsub.s32 3, %v1115
  %v1117 = vrot.slane %v1100, %v1116
  %v1136 = vunpack.c.l.b16 %v1085
  %v1137 = vunpack.c.h.b16 %v1085
  %v1138 = vunpack.c.l.b16 %v1086
  %v1139 = vunpack.c.h.b16 %v1086
  %v1140 = vunpack.c.l.b16 %v1087
  %v1141 = vunpack.c.h.b16 %v1087
  %v1142 = vunpack.c.l.b16 %v1088
  %v1143 = vunpack.c.h.b16 %v1088
  %v1144 = vunpack.c.l.b16 %v1089
  %v1145 = vunpack.c.h.b16 %v1089
  %v1146 = vunpack.c.l.b16 %v1090
  %v1147 = vunpack.c.h.b16 %v1090
  %v1148 = vunpack.c.l.b16 %v1091
  %v1149 = vunpack.c.h.b16 %v1091
  %v1150 = vunpack.c.l.b16 %v1092
  %v1151 = vunpack.c.h.b16 %v1092
  %v1152 = vunpack.c.l.b16 %v1093
  %v1153 = vunpack.c.h.b16 %v1093
  %v1154 = vunpack.c.l.b16 %v1094
  %v1155 = vunpack.c.h.b16 %v1094
  %v1156 = vunpack.c.l.b16 %v1095
  %v1157 = vunpack.c.h.b16 %v1095
  %v1158 = vunpack.c.l.b16 %v1096
  %v1159 = vunpack.c.h.b16 %v1096
  %v1160 = vunpack.c.l.b16 %v1097
  %v1161 = vunpack.c.h.b16 %v1097
  %v1162 = vunpack.c.l.b16 %v1098
  %v1163 = vunpack.c.h.b16 %v1098
  %v1164 = vpack.c.b16 %v1140, %v1136
  %v1165 = vpack.c.b16 %v1141, %v1137
  %v1166 = vpack.c.b16 %v1142, %v1138
  %v1167 = vpack.c.b16 %v1143, %v1139
  %v1168 = vpack.c.b16 %v1148, %v1144
  %v1169 = vpack.c.b16 %v1149, %v1145
  %v1170 = vpack.c.b16 %v1150, %v1146
  %v1171 = vpack.c.b16 %v1151, %v1147
  %v1172 = vpack.c.b16 %v1156, %v1152
  %v1173 = vpack.c.b16 %v1157, %v1153
  %v1174 = vpack.c.b16 %v1158, %v1154
  %v1175 = vpack.c.b16 %v1159, %v1155
  %v1176 = vpack.c.b16 %v1160, %v1160
  %v1177 = vpack.c.b16 %v1161, %v1161
  %v1178 = vpack.c.b16 %v1162, %v1162
  %v1179 = vpack.c.b16 %v1163, %v1163
  %v1193 = vsel %vm122, %v1176, 0
  %v1196 = vsel %vm122, %v1177, 0
  %v1199 = vsel %vm122, %v1178, 0
  %v1202 = vsel %vm122, %v1179, 0
  %1204 = vmatprep.subr.bf16.mxu0 %v1165
  %1205 = vmatpush1.bf16.msra.mxu0 %v1164
  %1206 = vmatprep.subr.bf16.mxu0 %v1169
  %1207 = vmatpush1.bf16.msra.mxu0 %v1168
  %1208 = vmatprep.subr.bf16.mxu0 %v1173
  %1209 = vmatpush1.bf16.msra.mxu0 %v1172
  %1210 = vmatprep.subr.bf16.mxu0 %v1196
  %1211 = vmatpush1.bf16.msra.mxu0 %v1193
  %1212 = vmatprep.subr.bf16.mxu0 0
  %1213 = vmatpush1.bf16.msra.mxu0 0
  %1214 = vmatprep.subr.bf16.mxu0 0
  %1215 = vmatpush1.bf16.msra.mxu0 0
  %1216 = vmatprep.subr.bf16.mxu0 0
  %1217 = vmatpush1.bf16.msra.mxu0 0
  %1218 = vmatprep.subr.bf16.mxu0 0
  %1219 = vmatpush1.bf16.msra.mxu0 0
  %1220 = vmatprep.subr.bf16.mxu0 0
  %1221 = vmatpush1.bf16.msra.mxu0 0
  %1222 = vmatprep.subr.bf16.mxu0 0
  %1223 = vmatpush1.bf16.msra.mxu0 0
  %1224 = vmatprep.subr.bf16.mxu0 0
  %1225 = vmatpush1.bf16.msra.mxu0 0
  %1226 = vmatprep.subr.bf16.mxu0 0
  %1227 = vmatpush1.bf16.msra.mxu0 0
  %1228 = vmatprep.subr.bf16.mxu0 0
  %1229 = vmatpush1.bf16.msra.mxu0 0
  %1230 = vmatprep.subr.bf16.mxu0 0
  %1231 = vmatpush1.bf16.msra.mxu0 0
  %1232 = vmatprep.subr.bf16.mxu0 0
  %1233 = vmatpush1.bf16.msra.mxu0 0
  %1234 = vmatprep.subr.bf16.mxu0 0
  %1235 = vmatpush1.bf16.msra.mxu0 0
  %1236 = vmatprep.mubr.bf16.mxu0 0
  %1237 = vmatmul.mubr.bf16.gmra.mrb[0].mxu0 %v873
  %v1238 = vpop.f32.mrb[0].mxu0
  %v1239 = vadd.f32 %v1105, %v1238
  %v1240 = vpop.f32.mrb[0].mxu0
  %v1241 = vadd.f32 %v1109, %v1240
  %v1242 = vpop.f32.mrb[0].mxu0
  %v1243 = vadd.f32 %v1105, %v1242
  %v1244 = vpop.f32.mrb[0].mxu0
  %v1245 = vadd.f32 %v1109, %v1244
  %1246 = vmatprep.mubr.bf16.mxu0 0
  %1247 = vmatmul.mubr.bf16.gmra.mrb[0].mxu0 %v876
  %v1248 = vpop.f32.mrb[0].mxu0
  %v1249 = vadd.f32 %v1105, %v1248
  %v1250 = vpop.f32.mrb[0].mxu0
  %v1251 = vadd.f32 %v1109, %v1250
  %v1252 = vpop.f32.mrb[0].mxu0
  %v1253 = vadd.f32 %v1105, %v1252
  %v1254 = vpop.f32.mrb[0].mxu0
  %v1255 = vadd.f32 %v1109, %v1254
  %1256 = vdwg.mxu0
  %1257 = vmatprep.subr.bf16.mxu0 %v1167
  %1258 = vmatpush1.bf16.msra.mxu0 %v1166
  %1259 = vmatprep.subr.bf16.mxu0 %v1171
  %1260 = vmatpush1.bf16.msra.mxu0 %v1170
  %1261 = vmatprep.subr.bf16.mxu0 %v1175
  %1262 = vmatpush1.bf16.msra.mxu0 %v1174
  %1263 = vmatprep.subr.bf16.mxu0 %v1202
  %1264 = vmatpush1.bf16.msra.mxu0 %v1199
  %1265 = vmatprep.subr.bf16.mxu0 0
  %1266 = vmatpush1.bf16.msra.mxu0 0
  %1267 = vmatprep.subr.bf16.mxu0 0
  %1268 = vmatpush1.bf16.msra.mxu0 0
  %1269 = vmatprep.subr.bf16.mxu0 0
  %1270 = vmatpush1.bf16.msra.mxu0 0
  %1271 = vmatprep.subr.bf16.mxu0 0
  %1272 = vmatpush1.bf16.msra.mxu0 0
  %1273 = vmatprep.subr.bf16.mxu0 0
  %1274 = vmatpush1.bf16.msra.mxu0 0
  %1275 = vmatprep.subr.bf16.mxu0 0
  %1276 = vmatpush1.bf16.msra.mxu0 0
  %1277 = vmatprep.subr.bf16.mxu0 0
  %1278 = vmatpush1.bf16.msra.mxu0 0
  %1279 = vmatprep.subr.bf16.mxu0 0
  %1280 = vmatpush1.bf16.msra.mxu0 0
  %1281 = vmatprep.subr.bf16.mxu0 0
  %1282 = vmatpush1.bf16.msra.mxu0 0
  %1283 = vmatprep.subr.bf16.mxu0 0
  %1284 = vmatpush1.bf16.msra.mxu0 0
  %1285 = vmatprep.subr.bf16.mxu0 0
  %1286 = vmatpush1.bf16.msra.mxu0 0
  %1287 = vmatprep.subr.bf16.mxu0 0
  %1288 = vmatpush1.bf16.msra.mxu0 0
  %1289 = vmatprep.mubr.bf16.mxu0 0
  %1290 = vmatmul.mubr.bf16.gmra.mrb[0].mxu0 %v873
  %v1291 = vpop.f32.mrb[0].mxu0
  %v1292 = vadd.f32 %v1113, %v1291
  %v1293 = vpop.f32.mrb[0].mxu0
  %v1294 = vadd.f32 %v1117, %v1293
  %v1295 = vpop.f32.mrb[0].mxu0
  %v1296 = vadd.f32 %v1113, %v1295
  %v1297 = vpop.f32.mrb[0].mxu0
  %v1298 = vadd.f32 %v1117, %v1297
  %1299 = vmatprep.mubr.bf16.mxu0 0
  %1300 = vmatmul.mubr.bf16.gmra.mrb[0].mxu0 %v876
  %v1301 = vpop.f32.mrb[0].mxu0
  %v1302 = vadd.f32 %v1113, %v1301
  %v1303 = vpop.f32.mrb[0].mxu0
  %v1304 = vadd.f32 %v1117, %v1303
  %v1305 = vpop.f32.mrb[0].mxu0
  %v1306 = vadd.f32 %v1113, %v1305
  %v1307 = vpop.f32.mrb[0].mxu0
  %v1308 = vadd.f32 %v1117, %v1307
  %1309 = vdwg.mxu0
  %v1310 = vmax.f32 %v1239, 0.0
  %v1311 = vmax.f32 %v1241, 0.0
  %v1312 = vmax.f32 %v1292, 0.0
  %v1313 = vmax.f32 %v1294, 0.0
  %v1314 = vmax.f32 %v1243, 0.0
  %v1315 = vmax.f32 %v1245, 0.0
  %v1316 = vmax.f32 %v1296, 0.0
  %v1317 = vmax.f32 %v1298, 0.0
  %v1318 = vmax.f32 %v1249, 0.0
  %v1319 = vmax.f32 %v1251, 0.0
  %v1320 = vmax.f32 %v1302, 0.0
  %v1321 = vmax.f32 %v1304, 0.0
  %v1322 = vmax.f32 %v1253, 0.0
  %v1323 = vmax.f32 %v1255, 0.0
  %v1324 = vmax.f32 %v1306, 0.0
  %v1325 = vmax.f32 %v1308, 0.0
  %v1326 = vpack.c.bf16 %v1314, %v1310
  %v1327 = vpack.c.bf16 %v1315, %v1311
  %v1328 = vpack.c.bf16 %v1316, %v1312
  %v1329 = vpack.c.bf16 %v1317, %v1313
  %v1330 = vpack.c.bf16 %v1322, %v1318
  %v1331 = vpack.c.bf16 %v1323, %v1319
  %v1332 = vpack.c.bf16 %v1324, %v1320
  %v1333 = vpack.c.bf16 %v1325, %v1321
  %s1334 = scalar_lea.vmem %s9, 256
  %v1335 = vld [vmem:[%s1334] sm:$0xf]
  %v1336 = vld [vmem:[%s1334 + $0x4] sm:$0xf]
  %v1337 = vld [vmem:[%s1334 + $0x8] sm:$0xf]
  %v1338 = vld [vmem:[%s1334 + $0xc] sm:$0xf]
  %v1339 = vld [vmem:[%s1334 + $0x10] sm:$0xf]
  %v1340 = vld [vmem:[%s1334 + $0x14] sm:$0xf]
  %v1341 = vld [vmem:[%s1334 + $0x18] sm:$0xf]
  %v1342 = vld [vmem:[%s1334 + $0x1c] sm:$0xf]
  %v1343 = vld [vmem:[%s1334 + $0x20] sm:$0xf]
  %v1344 = vld [vmem:[%s1334 + $0x24] sm:$0xf]
  %v1345 = vld [vmem:[%s1334 + $0x28] sm:$0xf]
  %v1346 = vld [vmem:[%s1334 + $0x2c] sm:$0xf]
  %v1347 = vld [vmem:[%s1334 + $0x30] sm:$0xf]
  %v1348 = vld [vmem:[%s1334 + $0x34] sm:$0xf]
  %v1349 = vld [vmem:[%s1334 + $0x38] sm:$0xf]
  %v1350 = vld [vmem:[%s1334 + $0x3c] sm:$0xf]
  %v1351 = vld [vmem:[%s1334 + $0x40] sm:$0xf]
  %v1352 = vld [vmem:[%s1334 + $0x44] sm:$0xf]
  %v1353 = vld [vmem:[%s1334 + $0x48] sm:$0xf]
  %v1354 = vld [vmem:[%s1334 + $0x4c] sm:$0xf]
  %v1355 = vld [vmem:[%s1334 + $0x50] sm:$0xf]
  %v1356 = vld [vmem:[%s1334 + $0x54] sm:$0xf]
  %v1357 = vld [vmem:[%s1334 + $0x58] sm:$0xf]
  %v1358 = vld [vmem:[%s1334 + $0x5c] sm:$0xf]
  %v1359 = vld [vmem:[%s1334 + $0x60] sm:$0xf]
  %v1360 = vld [vmem:[%s1334 + $0x64] sm:$0xf]
  %v1361 = vld [vmem:[%s1334 + $0x68] sm:$0xf]
  %v1362 = vld [vmem:[%s1334 + $0x6c] sm:$0xf]
  %v1363 = vld [vmem:[%s1334 + $0x70] sm:$0xf]
  %v1364 = vld [vmem:[%s1334 + $0x74] sm:$0xf]
  %v1365 = vld [vmem:[%s1334 + $0x78] sm:$0xf]
  %v1366 = vld [vmem:[%s1334 + $0x7c] sm:$0xf]
  %v1367 = vld [vmem:[%s1334 + $0x80] sm:$0xf]
  %v1368 = vld [vmem:[%s1334 + $0x84] sm:$0xf]
  %v1369 = vld [vmem:[%s1334 + $0x88] sm:$0xf]
  %v1370 = vld [vmem:[%s1334 + $0x8c] sm:$0xf]
  %v1371 = vld [vmem:[%s1334 + $0x90] sm:$0xf]
  %v1372 = vld [vmem:[%s1334 + $0x94] sm:$0xf]
  %v1373 = vld [vmem:[%s1334 + $0x98] sm:$0xf]
  %v1374 = vld [vmem:[%s1334 + $0x9c] sm:$0xf]
  %v1375 = vld [vmem:[%s1334 + $0xa0] sm:$0xf]
  %v1376 = vld [vmem:[%s1334 + $0xa4] sm:$0xf]
  %v1377 = vld [vmem:[%s1334 + $0xa8] sm:$0xf]
  %v1378 = vld [vmem:[%s1334 + $0xac] sm:$0xf]
  %v1379 = vld [vmem:[%s1334 + $0xb0] sm:$0xf]
  %v1380 = vld [vmem:[%s1334 + $0xb4] sm:$0xf]
  %v1381 = vld [vmem:[%s1334 + $0xb8] sm:$0xf]
  %v1382 = vld [vmem:[%s1334 + $0xbc] sm:$0xf]
  %v1383 = vld [vmem:[%s1334 + $0xc0] sm:$0xf]
  %v1384 = vld [vmem:[%s1334 + $0xc4] sm:$0xf]
  %v1385 = vld [vmem:[%s1334 + $0xc8] sm:$0xf]
  %v1386 = vld [vmem:[%s1334 + $0xcc] sm:$0xf]
  %v1387 = vld [vmem:[%s1334 + $0xd0] sm:$0xf]
  %v1388 = vld [vmem:[%s1334 + $0xd4] sm:$0xf]
  %v1389 = vld [vmem:[%s1334 + $0xd8] sm:$0xf]
  %v1390 = vld [vmem:[%s1334 + $0xdc] sm:$0xf]
  %v1391 = vld [vmem:[%s1334 + $0xe0] sm:$0xf]
  %v1392 = vld [vmem:[%s1334 + $0xe4] sm:$0xf]
  %v1393 = vld [vmem:[%s1334 + $0xe8] sm:$0xf]
  %v1394 = vld [vmem:[%s1334 + $0xec] sm:$0xf]
  %v1395 = vld [vmem:[%s1334 + $0xf0] sm:$0xf]
  %v1396 = vld [vmem:[%s1334 + $0xf4] sm:$0xf]
  %v1397 = vld [vmem:[%s1334 + $0xf8] sm:$0xf]
  %v1398 = vld [vmem:[%s1334 + $0xfc] sm:$0xf]
  %v1463 = vunpack.c.l.b16 %v1335
  %v1464 = vunpack.c.l.b16 %v1336
  %v1465 = vunpack.c.l.b16 %v1337
  %v1466 = vunpack.c.l.b16 %v1338
  %v1467 = vunpack.c.l.b16 %v1339
  %v1468 = vunpack.c.l.b16 %v1340
  %v1469 = vunpack.c.l.b16 %v1341
  %v1470 = vunpack.c.l.b16 %v1342
  %v1471 = vunpack.c.l.b16 %v1343
  %v1472 = vunpack.c.l.b16 %v1344
  %v1473 = vunpack.c.l.b16 %v1345
  %v1474 = vunpack.c.l.b16 %v1346
  %v1475 = vunpack.c.l.b16 %v1347
  %v1476 = vunpack.c.l.b16 %v1348
  %v1477 = vunpack.c.l.b16 %v1349
  %v1478 = vunpack.c.l.b16 %v1350
  %v1479 = vunpack.c.l.b16 %v1351
  %v1480 = vunpack.c.l.b16 %v1352
  %v1481 = vunpack.c.l.b16 %v1353
  %v1482 = vunpack.c.l.b16 %v1354
  %v1483 = vunpack.c.l.b16 %v1355
  %v1484 = vunpack.c.l.b16 %v1356
  %v1485 = vunpack.c.l.b16 %v1357
  %v1486 = vunpack.c.l.b16 %v1358
  %v1487 = vunpack.c.l.b16 %v1359
  %v1488 = vunpack.c.l.b16 %v1360
  %v1489 = vunpack.c.l.b16 %v1361
  %v1490 = vunpack.c.l.b16 %v1362
  %v1491 = vunpack.c.l.b16 %v1363
  %v1492 = vunpack.c.l.b16 %v1364
  %v1493 = vunpack.c.l.b16 %v1365
  %v1494 = vunpack.c.l.b16 %v1366
  %v1495 = vunpack.c.l.b16 %v1367
  %v1496 = vunpack.c.l.b16 %v1368
  %v1497 = vunpack.c.l.b16 %v1369
  %v1498 = vunpack.c.l.b16 %v1370
  %v1499 = vunpack.c.l.b16 %v1371
  %v1500 = vunpack.c.l.b16 %v1372
  %v1501 = vunpack.c.l.b16 %v1373
  %v1502 = vunpack.c.l.b16 %v1374
  %v1503 = vunpack.c.l.b16 %v1375
  %v1504 = vunpack.c.l.b16 %v1376
  %v1505 = vunpack.c.l.b16 %v1377
  %v1506 = vunpack.c.l.b16 %v1378
  %v1507 = vunpack.c.l.b16 %v1379
  %v1508 = vunpack.c.l.b16 %v1380
  %v1509 = vunpack.c.l.b16 %v1381
  %v1510 = vunpack.c.l.b16 %v1382
  %v1511 = vunpack.c.l.b16 %v1383
  %v1512 = vunpack.c.l.b16 %v1384
  %v1513 = vunpack.c.l.b16 %v1385
  %v1514 = vunpack.c.l.b16 %v1386
  %v1515 = vunpack.c.l.b16 %v1387
  %v1516 = vunpack.c.l.b16 %v1388
  %v1517 = vunpack.c.l.b16 %v1389
  %v1518 = vunpack.c.l.b16 %v1390
  %v1519 = vunpack.c.l.b16 %v1391
  %v1520 = vunpack.c.l.b16 %v1392
  %v1521 = vunpack.c.l.b16 %v1393
  %v1522 = vunpack.c.l.b16 %v1394
  %v1523 = vunpack.c.l.b16 %v1395
  %v1524 = vunpack.c.l.b16 %v1396
  %v1525 = vunpack.c.l.b16 %v1397
  %v1526 = vunpack.c.l.b16 %v1398
  %v1527 = vpack.c.b16 %v1464, %v1463
  %v1528 = vpack.c.b16 %v1466, %v1465
  %v1529 = vpack.c.b16 %v1468, %v1467
  %v1530 = vpack.c.b16 %v1470, %v1469
  %v1531 = vpack.c.b16 %v1472, %v1471
  %v1532 = vpack.c.b16 %v1474, %v1473
  %v1533 = vpack.c.b16 %v1476, %v1475
  %v1534 = vpack.c.b16 %v1478, %v1477
  %v1535 = vpack.c.b16 %v1480, %v1479
  %v1536 = vpack.c.b16 %v1482, %v1481
  %v1537 = vpack.c.b16 %v1484, %v1483
  %v1538 = vpack.c.b16 %v1486, %v1485
  %v1539 = vpack.c.b16 %v1488, %v1487
  %v1540 = vpack.c.b16 %v1490, %v1489
  %v1541 = vpack.c.b16 %v1492, %v1491
  %v1542 = vpack.c.b16 %v1494, %v1493
  %v1543 = vpack.c.b16 %v1496, %v1495
  %v1544 = vpack.c.b16 %v1498, %v1497
  %v1545 = vpack.c.b16 %v1500, %v1499
  %v1546 = vpack.c.b16 %v1502, %v1501
  %v1547 = vpack.c.b16 %v1504, %v1503
  %v1548 = vpack.c.b16 %v1506, %v1505
  %v1549 = vpack.c.b16 %v1508, %v1507
  %v1550 = vpack.c.b16 %v1510, %v1509
  %v1551 = vpack.c.b16 %v1512, %v1511
  %v1552 = vpack.c.b16 %v1514, %v1513
  %v1553 = vpack.c.b16 %v1516, %v1515
  %v1554 = vpack.c.b16 %v1518, %v1517
  %v1555 = vpack.c.b16 %v1520, %v1519
  %v1556 = vpack.c.b16 %v1522, %v1521
  %v1557 = vpack.c.b16 %v1524, %v1523
  %v1558 = vpack.c.b16 %v1526, %v1525
  %1591 = vmatprep.subr.bf16.mxu0 0
  %1592 = vmatpush1.bf16.msra.mxu0 %v1527
  %1593 = vmatprep.subr.bf16.mxu0 0
  %1594 = vmatpush1.bf16.msra.mxu0 %v1528
  %1595 = vmatprep.subr.bf16.mxu0 0
  %1596 = vmatpush1.bf16.msra.mxu0 %v1529
  %1597 = vmatprep.subr.bf16.mxu0 0
  %1598 = vmatpush1.bf16.msra.mxu0 %v1530
  %1599 = vmatprep.subr.bf16.mxu0 0
  %1600 = vmatpush1.bf16.msra.mxu0 %v1531
  %1601 = vmatprep.subr.bf16.mxu0 0
  %1602 = vmatpush1.bf16.msra.mxu0 %v1532
  %1603 = vmatprep.subr.bf16.mxu0 0
  %1604 = vmatpush1.bf16.msra.mxu0 %v1533
  %1605 = vmatprep.subr.bf16.mxu0 0
  %1606 = vmatpush1.bf16.msra.mxu0 %v1534
  %1607 = vmatprep.subr.bf16.mxu0 0
  %1608 = vmatpush1.bf16.msra.mxu0 %v1535
  %1609 = vmatprep.subr.bf16.mxu0 0
  %1610 = vmatpush1.bf16.msra.mxu0 %v1536
  %1611 = vmatprep.subr.bf16.mxu0 0
  %1612 = vmatpush1.bf16.msra.mxu0 %v1537
  %1613 = vmatprep.subr.bf16.mxu0 0
  %1614 = vmatpush1.bf16.msra.mxu0 %v1538
  %1615 = vmatprep.subr.bf16.mxu0 0
  %1616 = vmatpush1.bf16.msra.mxu0 %v1539
  %1617 = vmatprep.subr.bf16.mxu0 0
  %1618 = vmatpush1.bf16.msra.mxu0 %v1540
  %1619 = vmatprep.subr.bf16.mxu0 0
  %1620 = vmatpush1.bf16.msra.mxu0 %v1541
  %1621 = vmatprep.subr.bf16.mxu0 0
  %1622 = vmatpush1.bf16.msra.mxu0 %v1542
  %1623 = vmatprep.mubr.bf16.mxu0 %v1327
  %1624 = vmatmul.mubr.bf16.gmra.mrb[0].mxu0 %v1326
  %v1625 = vpop.f32.mrb[0].mxu0
  %v1626 = vadd.f32 0.0, %v1625
  %v1627 = vpop.f32.mrb[0].mxu0
  %v1628 = vpop.f32.mrb[0].mxu0
  %v1629 = vadd.f32 0.0, %v1628
  %v1630 = vpop.f32.mrb[0].mxu0
  %1631 = vmatprep.mubr.bf16.mxu0 %v1331
  %1632 = vmatmul.mubr.bf16.gmra.mrb[0].mxu0 %v1330
  %v1633 = vpop.f32.mrb[0].mxu0
  %v1634 = vadd.f32 0.0, %v1633
  %v1635 = vpop.f32.mrb[0].mxu0
  %v1636 = vpop.f32.mrb[0].mxu0
  %v1637 = vadd.f32 0.0, %v1636
  %v1638 = vpop.f32.mrb[0].mxu0
  %1639 = vdwg.mxu0
  %1640 = vmatprep.subr.bf16.mxu0 0
  %1641 = vmatpush1.bf16.msra.mxu0 %v1543
  %1642 = vmatprep.subr.bf16.mxu0 0
  %1643 = vmatpush1.bf16.msra.mxu0 %v1544
  %1644 = vmatprep.subr.bf16.mxu0 0
  %1645 = vmatpush1.bf16.msra.mxu0 %v1545
  %1646 = vmatprep.subr.bf16.mxu0 0
  %1647 = vmatpush1.bf16.msra.mxu0 %v1546
  %1648 = vmatprep.subr.bf16.mxu0 0
  %1649 = vmatpush1.bf16.msra.mxu0 %v1547
  %1650 = vmatprep.subr.bf16.mxu0 0
  %1651 = vmatpush1.bf16.msra.mxu0 %v1548
  %1652 = vmatprep.subr.bf16.mxu0 0
  %1653 = vmatpush1.bf16.msra.mxu0 %v1549
  %1654 = vmatprep.subr.bf16.mxu0 0
  %1655 = vmatpush1.bf16.msra.mxu0 %v1550
  %1656 = vmatprep.subr.bf16.mxu0 0
  %1657 = vmatpush1.bf16.msra.mxu0 %v1551
  %1658 = vmatprep.subr.bf16.mxu0 0
  %1659 = vmatpush1.bf16.msra.mxu0 %v1552
  %1660 = vmatprep.subr.bf16.mxu0 0
  %1661 = vmatpush1.bf16.msra.mxu0 %v1553
  %1662 = vmatprep.subr.bf16.mxu0 0
  %1663 = vmatpush1.bf16.msra.mxu0 %v1554
  %1664 = vmatprep.subr.bf16.mxu0 0
  %1665 = vmatpush1.bf16.msra.mxu0 %v1555
  %1666 = vmatprep.subr.bf16.mxu0 0
  %1667 = vmatpush1.bf16.msra.mxu0 %v1556
  %1668 = vmatprep.subr.bf16.mxu0 0
  %1669 = vmatpush1.bf16.msra.mxu0 %v1557
  %1670 = vmatprep.subr.bf16.mxu0 0
  %1671 = vmatpush1.bf16.msra.mxu0 %v1558
  %1672 = vmatprep.mubr.bf16.mxu0 %v1329
  %1673 = vmatmul.mubr.bf16.gmra.mrb[0].mxu0 %v1328
  %v1674 = vpop.f32.mrb[0].mxu0
  %v1675 = vadd.f32 %v1626, %v1674
  %v1676 = vpop.f32.mrb[0].mxu0
  %v1677 = vpop.f32.mrb[0].mxu0
  %v1678 = vadd.f32 %v1629, %v1677
  %v1679 = vpop.f32.mrb[0].mxu0
  %1680 = vmatprep.mubr.bf16.mxu0 %v1333
  %1681 = vmatmul.mubr.bf16.gmra.mrb[0].mxu0 %v1332
  %v1682 = vpop.f32.mrb[0].mxu0
  %v1683 = vadd.f32 %v1634, %v1682
  %v1684 = vpop.f32.mrb[0].mxu0
  %v1685 = vpop.f32.mrb[0].mxu0
  %v1686 = vadd.f32 %v1637, %v1685
  %v1687 = vpop.f32.mrb[0].mxu0
  %1688 = vdwg.mxu0
  %v1753 = vunpack.c.l.b16 %v1020
  %v1754 = vunpack.c.l.b16 %v1021
  %v1755 = vunpack.c.l.b16 %v1022
  %v1756 = vunpack.c.l.b16 %v1023
  %v1757 = vunpack.c.l.b16 %v1024
  %v1758 = vunpack.c.l.b16 %v1025
  %v1759 = vunpack.c.l.b16 %v1026
  %v1760 = vunpack.c.l.b16 %v1027
  %v1761 = vunpack.c.l.b16 %v1028
  %v1762 = vunpack.c.l.b16 %v1029
  %v1763 = vunpack.c.l.b16 %v1030
  %v1764 = vunpack.c.l.b16 %v1031
  %v1765 = vunpack.c.l.b16 %v1032
  %v1766 = vunpack.c.l.b16 %v1033
  %v1767 = vunpack.c.l.b16 %v1034
  %v1768 = vunpack.c.l.b16 %v1035
  %v1769 = vunpack.c.l.b16 %v1036
  %v1770 = vunpack.c.l.b16 %v1037
  %v1771 = vunpack.c.l.b16 %v1038
  %v1772 = vunpack.c.l.b16 %v1039
  %v1773 = vunpack.c.l.b16 %v1040
  %v1774 = vunpack.c.l.b16 %v1041
  %v1775 = vunpack.c.l.b16 %v1042
  %v1776 = vunpack.c.l.b16 %v1043
  %v1777 = vunpack.c.l.b16 %v1044
  %v1778 = vunpack.c.l.b16 %v1045
  %v1779 = vunpack.c.l.b16 %v1046
  %v1780 = vunpack.c.l.b16 %v1047
  %v1781 = vunpack.c.l.b16 %v1048
  %v1782 = vunpack.c.l.b16 %v1049
  %v1783 = vunpack.c.l.b16 %v1050
  %v1784 = vunpack.c.l.b16 %v1051
  %v1785 = vunpack.c.l.b16 %v1052
  %v1786 = vunpack.c.l.b16 %v1053
  %v1787 = vunpack.c.l.b16 %v1054
  %v1788 = vunpack.c.l.b16 %v1055
  %v1789 = vunpack.c.l.b16 %v1056
  %v1790 = vunpack.c.l.b16 %v1057
  %v1791 = vunpack.c.l.b16 %v1058
  %v1792 = vunpack.c.l.b16 %v1059
  %v1793 = vunpack.c.l.b16 %v1060
  %v1794 = vunpack.c.l.b16 %v1061
  %v1795 = vunpack.c.l.b16 %v1062
  %v1796 = vunpack.c.l.b16 %v1063
  %v1797 = vunpack.c.l.b16 %v1064
  %v1798 = vunpack.c.l.b16 %v1065
  %v1799 = vunpack.c.l.b16 %v1066
  %v1800 = vunpack.c.l.b16 %v1067
  %v1801 = vunpack.c.l.b16 %v1068
  %v1802 = vunpack.c.l.b16 %v1069
  %v1803 = vunpack.c.l.b16 %v1070
  %v1804 = vunpack.c.l.b16 %v1071
  %v1805 = vunpack.c.l.b16 %v1072
  %v1806 = vunpack.c.l.b16 %v1073
  %v1807 = vunpack.c.l.b16 %v1074
  %v1808 = vunpack.c.l.b16 %v1075
  %v1809 = vunpack.c.l.b16 %v1076
  %v1810 = vunpack.c.l.b16 %v1077
  %v1811 = vunpack.c.l.b16 %v1078
  %v1812 = vunpack.c.l.b16 %v1079
  %v1813 = vunpack.c.l.b16 %v1080
  %v1814 = vunpack.c.l.b16 %v1081
  %v1815 = vunpack.c.l.b16 %v1082
  %v1816 = vunpack.c.l.b16 %v1083
  %v1817 = vpack.c.b16 %v1754, %v1753
  %v1818 = vpack.c.b16 %v1756, %v1755
  %v1819 = vpack.c.b16 %v1758, %v1757
  %v1820 = vpack.c.b16 %v1760, %v1759
  %v1821 = vpack.c.b16 %v1762, %v1761
  %v1822 = vpack.c.b16 %v1764, %v1763
  %v1823 = vpack.c.b16 %v1766, %v1765
  %v1824 = vpack.c.b16 %v1768, %v1767
  %v1825 = vpack.c.b16 %v1770, %v1769
  %v1826 = vpack.c.b16 %v1772, %v1771
  %v1827 = vpack.c.b16 %v1774, %v1773
  %v1828 = vpack.c.b16 %v1776, %v1775
  %v1829 = vpack.c.b16 %v1778, %v1777
  %v1830 = vpack.c.b16 %v1780, %v1779
  %v1831 = vpack.c.b16 %v1782, %v1781
  %v1832 = vpack.c.b16 %v1784, %v1783
  %v1833 = vpack.c.b16 %v1786, %v1785
  %v1834 = vpack.c.b16 %v1788, %v1787
  %v1835 = vpack.c.b16 %v1790, %v1789
  %v1836 = vpack.c.b16 %v1792, %v1791
  %v1837 = vpack.c.b16 %v1794, %v1793
  %v1838 = vpack.c.b16 %v1796, %v1795
  %v1839 = vpack.c.b16 %v1798, %v1797
  %v1840 = vpack.c.b16 %v1800, %v1799
  %v1841 = vpack.c.b16 %v1802, %v1801
  %v1842 = vpack.c.b16 %v1804, %v1803
  %v1843 = vpack.c.b16 %v1806, %v1805
  %v1844 = vpack.c.b16 %v1808, %v1807
  %v1845 = vpack.c.b16 %v1810, %v1809
  %v1846 = vpack.c.b16 %v1812, %v1811
  %v1847 = vpack.c.b16 %v1814, %v1813
  %v1848 = vpack.c.b16 %v1816, %v1815
  %1881 = vmatprep.subr.bf16.mxu0 0
  %1882 = vmatpush1.bf16.msra.mxu0 %v1817
  %1883 = vmatprep.subr.bf16.mxu0 0
  %1884 = vmatpush1.bf16.msra.mxu0 %v1818
  %1885 = vmatprep.subr.bf16.mxu0 0
  %1886 = vmatpush1.bf16.msra.mxu0 %v1819
  %1887 = vmatprep.subr.bf16.mxu0 0
  %1888 = vmatpush1.bf16.msra.mxu0 %v1820
  %1889 = vmatprep.subr.bf16.mxu0 0
  %1890 = vmatpush1.bf16.msra.mxu0 %v1821
  %1891 = vmatprep.subr.bf16.mxu0 0
  %1892 = vmatpush1.bf16.msra.mxu0 %v1822
  %1893 = vmatprep.subr.bf16.mxu0 0
  %1894 = vmatpush1.bf16.msra.mxu0 %v1823
  %1895 = vmatprep.subr.bf16.mxu0 0
  %1896 = vmatpush1.bf16.msra.mxu0 %v1824
  %1897 = vmatprep.subr.bf16.mxu0 0
  %1898 = vmatpush1.bf16.msra.mxu0 %v1825
  %1899 = vmatprep.subr.bf16.mxu0 0
  %1900 = vmatpush1.bf16.msra.mxu0 %v1826
  %1901 = vmatprep.subr.bf16.mxu0 0
  %1902 = vmatpush1.bf16.msra.mxu0 %v1827
  %1903 = vmatprep.subr.bf16.mxu0 0
  %1904 = vmatpush1.bf16.msra.mxu0 %v1828
  %1905 = vmatprep.subr.bf16.mxu0 0
  %1906 = vmatpush1.bf16.msra.mxu0 %v1829
  %1907 = vmatprep.subr.bf16.mxu0 0
  %1908 = vmatpush1.bf16.msra.mxu0 %v1830
  %1909 = vmatprep.subr.bf16.mxu0 0
  %1910 = vmatpush1.bf16.msra.mxu0 %v1831
  %1911 = vmatprep.subr.bf16.mxu0 0
  %1912 = vmatpush1.bf16.msra.mxu0 %v1832
  %1913 = vmatprep.mubr.bf16.mxu0 %v1013
  %1914 = vmatmul.mubr.bf16.gmra.mrb[0].mxu0 %v1012
  %v1915 = vpop.f32.mrb[0].mxu0
  %v1916 = vadd.f32 %v1675, %v1915
  %v1917 = vpop.f32.mrb[0].mxu0
  %v1918 = vpop.f32.mrb[0].mxu0
  %v1919 = vadd.f32 %v1678, %v1918
  %v1920 = vpop.f32.mrb[0].mxu0
  %1921 = vmatprep.mubr.bf16.mxu0 %v1017
  %1922 = vmatmul.mubr.bf16.gmra.mrb[0].mxu0 %v1016
  %v1923 = vpop.f32.mrb[0].mxu0
  %v1924 = vadd.f32 %v1683, %v1923
  %v1925 = vpop.f32.mrb[0].mxu0
  %v1926 = vpop.f32.mrb[0].mxu0
  %v1927 = vadd.f32 %v1686, %v1926
  %v1928 = vpop.f32.mrb[0].mxu0
  %1929 = vdwg.mxu0
  %1930 = vmatprep.subr.bf16.mxu0 0
  %1931 = vmatpush1.bf16.msra.mxu0 %v1833
  %1932 = vmatprep.subr.bf16.mxu0 0
  %1933 = vmatpush1.bf16.msra.mxu0 %v1834
  %1934 = vmatprep.subr.bf16.mxu0 0
  %1935 = vmatpush1.bf16.msra.mxu0 %v1835
  %1936 = vmatprep.subr.bf16.mxu0 0
  %1937 = vmatpush1.bf16.msra.mxu0 %v1836
  %1938 = vmatprep.subr.bf16.mxu0 0
  %1939 = vmatpush1.bf16.msra.mxu0 %v1837
  %1940 = vmatprep.subr.bf16.mxu0 0
  %1941 = vmatpush1.bf16.msra.mxu0 %v1838
  %1942 = vmatprep.subr.bf16.mxu0 0
  %1943 = vmatpush1.bf16.msra.mxu0 %v1839
  %1944 = vmatprep.subr.bf16.mxu0 0
  %1945 = vmatpush1.bf16.msra.mxu0 %v1840
  %1946 = vmatprep.subr.bf16.mxu0 0
  %1947 = vmatpush1.bf16.msra.mxu0 %v1841
  %1948 = vmatprep.subr.bf16.mxu0 0
  %1949 = vmatpush1.bf16.msra.mxu0 %v1842
  %1950 = vmatprep.subr.bf16.mxu0 0
  %1951 = vmatpush1.bf16.msra.mxu0 %v1843
  %1952 = vmatprep.subr.bf16.mxu0 0
  %1953 = vmatpush1.bf16.msra.mxu0 %v1844
  %1954 = vmatprep.subr.bf16.mxu0 0
  %1955 = vmatpush1.bf16.msra.mxu0 %v1845
  %1956 = vmatprep.subr.bf16.mxu0 0
  %1957 = vmatpush1.bf16.msra.mxu0 %v1846
  %1958 = vmatprep.subr.bf16.mxu0 0
  %1959 = vmatpush1.bf16.msra.mxu0 %v1847
  %1960 = vmatprep.subr.bf16.mxu0 0
  %1961 = vmatpush1.bf16.msra.mxu0 %v1848
  %1962 = vmatprep.mubr.bf16.mxu0 %v1015
  %1963 = vmatmul.mubr.bf16.gmra.mrb[0].mxu0 %v1014
  %v1964 = vpop.f32.mrb[0].mxu0
  %v1965 = vadd.f32 %v1916, %v1964
  %v1966 = vpop.f32.mrb[0].mxu0
  %v1967 = vpop.f32.mrb[0].mxu0
  %v1968 = vadd.f32 %v1919, %v1967
  %v1969 = vpop.f32.mrb[0].mxu0
  %1970 = vmatprep.mubr.bf16.mxu0 %v1019
  %1971 = vmatmul.mubr.bf16.gmra.mrb[0].mxu0 %v1018
  %v1972 = vpop.f32.mrb[0].mxu0
  %v1973 = vadd.f32 %v1924, %v1972
  %v1974 = vpop.f32.mrb[0].mxu0
  %v1975 = vpop.f32.mrb[0].mxu0
  %v1976 = vadd.f32 %v1927, %v1975
  %v1977 = vpop.f32.mrb[0].mxu0
  %1978 = vdwg.mxu0
  %s1979 = scalar_lea.vmem %s7, 32
  %v1980 = vld [vmem:[%s1979] sm:$0xff]
  %v1981 = vld [vmem:[%s1979 + $0x8] sm:$0xff]
  %v1982 = vld [vmem:[%s1979 + $0x40] sm:$0xff]
  %v1983 = vld [vmem:[%s1979 + $0x48] sm:$0xff]
  %v1984 = vld [vmem:[%s1979 + $0x80] sm:$0xff]
  %v1985 = vld [vmem:[%s1979 + $0x88] sm:$0xff]
  %v1986 = vld [vmem:[%s1979 + $0xc0] sm:$0xff]
  %v1987 = vld [vmem:[%s1979 + $0xc8] sm:$0xff]
  %v1988 = vld [vmem:[%s1979 + $0x100] sm:$0xff]
  %v1989 = vld [vmem:[%s1979 + $0x108] sm:$0xff]
  %v1990 = vld [vmem:[%s1979 + $0x140] sm:$0xff]
  %v1991 = vld [vmem:[%s1979 + $0x148] sm:$0xff]
  %v1992 = vld [vmem:[%s1979 + $0x180] sm:$0x11]
  %v1993 = vld [vmem:[%s1979 + $0x188] sm:$0x11]
  %s1994 = scalar_lea.vmem %s8, 8
  %v1995 = vld [vmem:[%s1994] sm:$0xf]
  %v1997 = vlaneseq
  %v1998 = vshrl.u32 %v1997, 7
  %v1999 = vsub.s32 0, %v1998
  %v2000 = vrot.slane %v1995, %v1999
  %v2001 = vlaneseq
  %v2002 = vshrl.u32 %v2001, 7
  %v2003 = vsub.s32 1, %v2002
  %v2004 = vrot.slane %v1995, %v2003
  %v2005 = vlaneseq
  %v2006 = vshrl.u32 %v2005, 7
  %v2007 = vsub.s32 2, %v2006
  %v2008 = vrot.slane %v1995, %v2007
  %v2009 = vlaneseq
  %v2010 = vshrl.u32 %v2009, 7
  %v2011 = vsub.s32 3, %v2010
  %v2012 = vrot.slane %v1995, %v2011
  %v2031 = vunpack.c.l.b16 %v1980
  %v2032 = vunpack.c.h.b16 %v1980
  %v2033 = vunpack.c.l.b16 %v1981
  %v2034 = vunpack.c.h.b16 %v1981
  %v2035 = vunpack.c.l.b16 %v1982
  %v2036 = vunpack.c.h.b16 %v1982
  %v2037 = vunpack.c.l.b16 %v1983
  %v2038 = vunpack.c.h.b16 %v1983
  %v2039 = vunpack.c.l.b16 %v1984
  %v2040 = vunpack.c.h.b16 %v1984
  %v2041 = vunpack.c.l.b16 %v1985
  %v2042 = vunpack.c.h.b16 %v1985
  %v2043 = vunpack.c.l.b16 %v1986
  %v2044 = vunpack.c.h.b16 %v1986
  %v2045 = vunpack.c.l.b16 %v1987
  %v2046 = vunpack.c.h.b16 %v1987
  %v2047 = vunpack.c.l.b16 %v1988
  %v2048 = vunpack.c.h.b16 %v1988
  %v2049 = vunpack.c.l.b16 %v1989
  %v2050 = vunpack.c.h.b16 %v1989
  %v2051 = vunpack.c.l.b16 %v1990
  %v2052 = vunpack.c.h.b16 %v1990
  %v2053 = vunpack.c.l.b16 %v1991
  %v2054 = vunpack.c.h.b16 %v1991
  %v2055 = vunpack.c.l.b16 %v1992
  %v2056 = vunpack.c.h.b16 %v1992
  %v2057 = vunpack.c.l.b16 %v1993
  %v2058 = vunpack.c.h.b16 %v1993
  %v2059 = vpack.c.b16 %v2035, %v2031
  %v2060 = vpack.c.b16 %v2036, %v2032
  %v2061 = vpack.c.b16 %v2037, %v2033
  %v2062 = vpack.c.b16 %v2038, %v2034
  %v2063 = vpack.c.b16 %v2043, %v2039
  %v2064 = vpack.c.b16 %v2044, %v2040
  %v2065 = vpack.c.b16 %v2045, %v2041
  %v2066 = vpack.c.b16 %v2046, %v2042
  %v2067 = vpack.c.b16 %v2051, %v2047
  %v2068 = vpack.c.b16 %v2052, %v2048
  %v2069 = vpack.c.b16 %v2053, %v2049
  %v2070 = vpack.c.b16 %v2054, %v2050
  %v2071 = vpack.c.b16 %v2055, %v2055
  %v2072 = vpack.c.b16 %v2056, %v2056
  %v2073 = vpack.c.b16 %v2057, %v2057
  %v2074 = vpack.c.b16 %v2058, %v2058
  %v2088 = vsel %vm122, %v2071, 0
  %v2091 = vsel %vm122, %v2072, 0
  %v2094 = vsel %vm122, %v2073, 0
  %v2097 = vsel %vm122, %v2074, 0
  %2099 = vmatprep.subr.bf16.mxu0 %v2060
  %2100 = vmatpush1.bf16.msra.mxu0 %v2059
  %2101 = vmatprep.subr.bf16.mxu0 %v2064
  %2102 = vmatpush1.bf16.msra.mxu0 %v2063
  %2103 = vmatprep.subr.bf16.mxu0 %v2068
  %2104 = vmatpush1.bf16.msra.mxu0 %v2067
  %2105 = vmatprep.subr.bf16.mxu0 %v2091
  %2106 = vmatpush1.bf16.msra.mxu0 %v2088
  %2107 = vmatprep.subr.bf16.mxu0 0
  %2108 = vmatpush1.bf16.msra.mxu0 0
  %2109 = vmatprep.subr.bf16.mxu0 0
  %2110 = vmatpush1.bf16.msra.mxu0 0
  %2111 = vmatprep.subr.bf16.mxu0 0
  %2112 = vmatpush1.bf16.msra.mxu0 0
  %2113 = vmatprep.subr.bf16.mxu0 0
  %2114 = vmatpush1.bf16.msra.mxu0 0
  %2115 = vmatprep.subr.bf16.mxu0 0
  %2116 = vmatpush1.bf16.msra.mxu0 0
  %2117 = vmatprep.subr.bf16.mxu0 0
  %2118 = vmatpush1.bf16.msra.mxu0 0
  %2119 = vmatprep.subr.bf16.mxu0 0
  %2120 = vmatpush1.bf16.msra.mxu0 0
  %2121 = vmatprep.subr.bf16.mxu0 0
  %2122 = vmatpush1.bf16.msra.mxu0 0
  %2123 = vmatprep.subr.bf16.mxu0 0
  %2124 = vmatpush1.bf16.msra.mxu0 0
  %2125 = vmatprep.subr.bf16.mxu0 0
  %2126 = vmatpush1.bf16.msra.mxu0 0
  %2127 = vmatprep.subr.bf16.mxu0 0
  %2128 = vmatpush1.bf16.msra.mxu0 0
  %2129 = vmatprep.subr.bf16.mxu0 0
  %2130 = vmatpush1.bf16.msra.mxu0 0
  %2131 = vmatprep.mubr.bf16.mxu0 0
  %2132 = vmatmul.mubr.bf16.gmra.mrb[0].mxu0 %v873
  %v2133 = vpop.f32.mrb[0].mxu0
  %v2134 = vadd.f32 %v2000, %v2133
  %v2135 = vpop.f32.mrb[0].mxu0
  %v2136 = vadd.f32 %v2004, %v2135
  %v2137 = vpop.f32.mrb[0].mxu0
  %v2138 = vadd.f32 %v2000, %v2137
  %v2139 = vpop.f32.mrb[0].mxu0
  %v2140 = vadd.f32 %v2004, %v2139
  %2141 = vmatprep.mubr.bf16.mxu0 0
  %2142 = vmatmul.mubr.bf16.gmra.mrb[0].mxu0 %v876
  %v2143 = vpop.f32.mrb[0].mxu0
  %v2144 = vadd.f32 %v2000, %v2143
  %v2145 = vpop.f32.mrb[0].mxu0
  %v2146 = vadd.f32 %v2004, %v2145
  %v2147 = vpop.f32.mrb[0].mxu0
  %v2148 = vadd.f32 %v2000, %v2147
  %v2149 = vpop.f32.mrb[0].mxu0
  %v2150 = vadd.f32 %v2004, %v2149
  %2151 = vdwg.mxu0
  %2152 = vmatprep.subr.bf16.mxu0 %v2062
  %2153 = vmatpush1.bf16.msra.mxu0 %v2061
  %2154 = vmatprep.subr.bf16.mxu0 %v2066
  %2155 = vmatpush1.bf16.msra.mxu0 %v2065
  %2156 = vmatprep.subr.bf16.mxu0 %v2070
  %2157 = vmatpush1.bf16.msra.mxu0 %v2069
  %2158 = vmatprep.subr.bf16.mxu0 %v2097
  %2159 = vmatpush1.bf16.msra.mxu0 %v2094
  %2160 = vmatprep.subr.bf16.mxu0 0
  %2161 = vmatpush1.bf16.msra.mxu0 0
  %2162 = vmatprep.subr.bf16.mxu0 0
  %2163 = vmatpush1.bf16.msra.mxu0 0
  %2164 = vmatprep.subr.bf16.mxu0 0
  %2165 = vmatpush1.bf16.msra.mxu0 0
  %2166 = vmatprep.subr.bf16.mxu0 0
  %2167 = vmatpush1.bf16.msra.mxu0 0
  %2168 = vmatprep.subr.bf16.mxu0 0
  %2169 = vmatpush1.bf16.msra.mxu0 0
  %2170 = vmatprep.subr.bf16.mxu0 0
  %2171 = vmatpush1.bf16.msra.mxu0 0
  %2172 = vmatprep.subr.bf16.mxu0 0
  %2173 = vmatpush1.bf16.msra.mxu0 0
  %2174 = vmatprep.subr.bf16.mxu0 0
  %2175 = vmatpush1.bf16.msra.mxu0 0
  %2176 = vmatprep.subr.bf16.mxu0 0
  %2177 = vmatpush1.bf16.msra.mxu0 0
  %2178 = vmatprep.subr.bf16.mxu0 0
  %2179 = vmatpush1.bf16.msra.mxu0 0
  %2180 = vmatprep.subr.bf16.mxu0 0
  %2181 = vmatpush1.bf16.msra.mxu0 0
  %2182 = vmatprep.subr.bf16.mxu0 0
  %2183 = vmatpush1.bf16.msra.mxu0 0
  %2184 = vmatprep.mubr.bf16.mxu0 0
  %2185 = vmatmul.mubr.bf16.gmra.mrb[0].mxu0 %v873
  %v2186 = vpop.f32.mrb[0].mxu0
  %v2187 = vadd.f32 %v2008, %v2186
  %v2188 = vpop.f32.mrb[0].mxu0
  %v2189 = vadd.f32 %v2012, %v2188
  %v2190 = vpop.f32.mrb[0].mxu0
  %v2191 = vadd.f32 %v2008, %v2190
  %v2192 = vpop.f32.mrb[0].mxu0
  %v2193 = vadd.f32 %v2012, %v2192
  %2194 = vmatprep.mubr.bf16.mxu0 0
  %2195 = vmatmul.mubr.bf16.gmra.mrb[0].mxu0 %v876
  %v2196 = vpop.f32.mrb[0].mxu0
  %v2197 = vadd.f32 %v2008, %v2196
  %v2198 = vpop.f32.mrb[0].mxu0
  %v2199 = vadd.f32 %v2012, %v2198
  %v2200 = vpop.f32.mrb[0].mxu0
  %v2201 = vadd.f32 %v2008, %v2200
  %v2202 = vpop.f32.mrb[0].mxu0
  %v2203 = vadd.f32 %v2012, %v2202
  %2204 = vdwg.mxu0
  %v2205 = vmax.f32 %v2134, 0.0
  %v2206 = vmax.f32 %v2136, 0.0
  %v2207 = vmax.f32 %v2187, 0.0
  %v2208 = vmax.f32 %v2189, 0.0
  %v2209 = vmax.f32 %v2138, 0.0
  %v2210 = vmax.f32 %v2140, 0.0
  %v2211 = vmax.f32 %v2191, 0.0
  %v2212 = vmax.f32 %v2193, 0.0
  %v2213 = vmax.f32 %v2144, 0.0
  %v2214 = vmax.f32 %v2146, 0.0
  %v2215 = vmax.f32 %v2197, 0.0
  %v2216 = vmax.f32 %v2199, 0.0
  %v2217 = vmax.f32 %v2148, 0.0
  %v2218 = vmax.f32 %v2150, 0.0
  %v2219 = vmax.f32 %v2201, 0.0
  %v2220 = vmax.f32 %v2203, 0.0
  %v2221 = vpack.c.bf16 %v2209, %v2205
  %v2222 = vpack.c.bf16 %v2210, %v2206
  %v2223 = vpack.c.bf16 %v2211, %v2207
  %v2224 = vpack.c.bf16 %v2212, %v2208
  %v2225 = vpack.c.bf16 %v2217, %v2213
  %v2226 = vpack.c.bf16 %v2218, %v2214
  %v2227 = vpack.c.bf16 %v2219, %v2215
  %v2228 = vpack.c.bf16 %v2220, %v2216
  %s2229 = scalar_lea.vmem %s9, 512
  %v2230 = vld [vmem:[%s2229] sm:$0xf]
  %v2231 = vld [vmem:[%s2229 + $0x4] sm:$0xf]
  %v2232 = vld [vmem:[%s2229 + $0x8] sm:$0xf]
  %v2233 = vld [vmem:[%s2229 + $0xc] sm:$0xf]
  %v2234 = vld [vmem:[%s2229 + $0x10] sm:$0xf]
  %v2235 = vld [vmem:[%s2229 + $0x14] sm:$0xf]
  %v2236 = vld [vmem:[%s2229 + $0x18] sm:$0xf]
  %v2237 = vld [vmem:[%s2229 + $0x1c] sm:$0xf]
  %v2238 = vld [vmem:[%s2229 + $0x20] sm:$0xf]
  %v2239 = vld [vmem:[%s2229 + $0x24] sm:$0xf]
  %v2240 = vld [vmem:[%s2229 + $0x28] sm:$0xf]
  %v2241 = vld [vmem:[%s2229 + $0x2c] sm:$0xf]
  %v2242 = vld [vmem:[%s2229 + $0x30] sm:$0xf]
  %v2243 = vld [vmem:[%s2229 + $0x34] sm:$0xf]
  %v2244 = vld [vmem:[%s2229 + $0x38] sm:$0xf]
  %v2245 = vld [vmem:[%s2229 + $0x3c] sm:$0xf]
  %v2246 = vld [vmem:[%s2229 + $0x40] sm:$0xf]
  %v2247 = vld [vmem:[%s2229 + $0x44] sm:$0xf]
  %v2248 = vld [vmem:[%s2229 + $0x48] sm:$0xf]
  %v2249 = vld [vmem:[%s2229 + $0x4c] sm:$0xf]
  %v2250 = vld [vmem:[%s2229 + $0x50] sm:$0xf]
  %v2251 = vld [vmem:[%s2229 + $0x54] sm:$0xf]
  %v2252 = vld [vmem:[%s2229 + $0x58] sm:$0xf]
  %v2253 = vld [vmem:[%s2229 + $0x5c] sm:$0xf]
  %v2254 = vld [vmem:[%s2229 + $0x60] sm:$0xf]
  %v2255 = vld [vmem:[%s2229 + $0x64] sm:$0xf]
  %v2256 = vld [vmem:[%s2229 + $0x68] sm:$0xf]
  %v2257 = vld [vmem:[%s2229 + $0x6c] sm:$0xf]
  %v2258 = vld [vmem:[%s2229 + $0x70] sm:$0xf]
  %v2259 = vld [vmem:[%s2229 + $0x74] sm:$0xf]
  %v2260 = vld [vmem:[%s2229 + $0x78] sm:$0xf]
  %v2261 = vld [vmem:[%s2229 + $0x7c] sm:$0xf]
  %v2262 = vld [vmem:[%s2229 + $0x80] sm:$0xf]
  %v2263 = vld [vmem:[%s2229 + $0x84] sm:$0xf]
  %v2264 = vld [vmem:[%s2229 + $0x88] sm:$0xf]
  %v2265 = vld [vmem:[%s2229 + $0x8c] sm:$0xf]
  %v2266 = vld [vmem:[%s2229 + $0x90] sm:$0xf]
  %v2267 = vld [vmem:[%s2229 + $0x94] sm:$0xf]
  %v2268 = vld [vmem:[%s2229 + $0x98] sm:$0xf]
  %v2269 = vld [vmem:[%s2229 + $0x9c] sm:$0xf]
  %v2270 = vld [vmem:[%s2229 + $0xa0] sm:$0xf]
  %v2271 = vld [vmem:[%s2229 + $0xa4] sm:$0xf]
  %v2272 = vld [vmem:[%s2229 + $0xa8] sm:$0xf]
  %v2273 = vld [vmem:[%s2229 + $0xac] sm:$0xf]
  %v2274 = vld [vmem:[%s2229 + $0xb0] sm:$0xf]
  %v2275 = vld [vmem:[%s2229 + $0xb4] sm:$0xf]
  %v2276 = vld [vmem:[%s2229 + $0xb8] sm:$0xf]
  %v2277 = vld [vmem:[%s2229 + $0xbc] sm:$0xf]
  %v2278 = vld [vmem:[%s2229 + $0xc0] sm:$0xf]
  %v2279 = vld [vmem:[%s2229 + $0xc4] sm:$0xf]
  %v2280 = vld [vmem:[%s2229 + $0xc8] sm:$0xf]
  %v2281 = vld [vmem:[%s2229 + $0xcc] sm:$0xf]
  %v2282 = vld [vmem:[%s2229 + $0xd0] sm:$0xf]
  %v2283 = vld [vmem:[%s2229 + $0xd4] sm:$0xf]
  %v2284 = vld [vmem:[%s2229 + $0xd8] sm:$0xf]
  %v2285 = vld [vmem:[%s2229 + $0xdc] sm:$0xf]
  %v2286 = vld [vmem:[%s2229 + $0xe0] sm:$0xf]
  %v2287 = vld [vmem:[%s2229 + $0xe4] sm:$0xf]
  %v2288 = vld [vmem:[%s2229 + $0xe8] sm:$0xf]
  %v2289 = vld [vmem:[%s2229 + $0xec] sm:$0xf]
  %v2290 = vld [vmem:[%s2229 + $0xf0] sm:$0xf]
  %v2291 = vld [vmem:[%s2229 + $0xf4] sm:$0xf]
  %v2292 = vld [vmem:[%s2229 + $0xf8] sm:$0xf]
  %v2293 = vld [vmem:[%s2229 + $0xfc] sm:$0xf]
  %v2358 = vunpack.c.l.b16 %v2230
  %v2359 = vunpack.c.l.b16 %v2231
  %v2360 = vunpack.c.l.b16 %v2232
  %v2361 = vunpack.c.l.b16 %v2233
  %v2362 = vunpack.c.l.b16 %v2234
  %v2363 = vunpack.c.l.b16 %v2235
  %v2364 = vunpack.c.l.b16 %v2236
  %v2365 = vunpack.c.l.b16 %v2237
  %v2366 = vunpack.c.l.b16 %v2238
  %v2367 = vunpack.c.l.b16 %v2239
  %v2368 = vunpack.c.l.b16 %v2240
  %v2369 = vunpack.c.l.b16 %v2241
  %v2370 = vunpack.c.l.b16 %v2242
  %v2371 = vunpack.c.l.b16 %v2243
  %v2372 = vunpack.c.l.b16 %v2244
  %v2373 = vunpack.c.l.b16 %v2245
  %v2374 = vunpack.c.l.b16 %v2246
  %v2375 = vunpack.c.l.b16 %v2247
  %v2376 = vunpack.c.l.b16 %v2248
  %v2377 = vunpack.c.l.b16 %v2249
  %v2378 = vunpack.c.l.b16 %v2250
  %v2379 = vunpack.c.l.b16 %v2251
  %v2380 = vunpack.c.l.b16 %v2252
  %v2381 = vunpack.c.l.b16 %v2253
  %v2382 = vunpack.c.l.b16 %v2254
  %v2383 = vunpack.c.l.b16 %v2255
  %v2384 = vunpack.c.l.b16 %v2256
  %v2385 = vunpack.c.l.b16 %v2257
  %v2386 = vunpack.c.l.b16 %v2258
  %v2387 = vunpack.c.l.b16 %v2259
  %v2388 = vunpack.c.l.b16 %v2260
  %v2389 = vunpack.c.l.b16 %v2261
  %v2390 = vunpack.c.l.b16 %v2262
  %v2391 = vunpack.c.l.b16 %v2263
  %v2392 = vunpack.c.l.b16 %v2264
  %v2393 = vunpack.c.l.b16 %v2265
  %v2394 = vunpack.c.l.b16 %v2266
  %v2395 = vunpack.c.l.b16 %v2267
  %v2396 = vunpack.c.l.b16 %v2268
  %v2397 = vunpack.c.l.b16 %v2269
  %v2398 = vunpack.c.l.b16 %v2270
  %v2399 = vunpack.c.l.b16 %v2271
  %v2400 = vunpack.c.l.b16 %v2272
  %v2401 = vunpack.c.l.b16 %v2273
  %v2402 = vunpack.c.l.b16 %v2274
  %v2403 = vunpack.c.l.b16 %v2275
  %v2404 = vunpack.c.l.b16 %v2276
  %v2405 = vunpack.c.l.b16 %v2277
  %v2406 = vunpack.c.l.b16 %v2278
  %v2407 = vunpack.c.l.b16 %v2279
  %v2408 = vunpack.c.l.b16 %v2280
  %v2409 = vunpack.c.l.b16 %v2281
  %v2410 = vunpack.c.l.b16 %v2282
  %v2411 = vunpack.c.l.b16 %v2283
  %v2412 = vunpack.c.l.b16 %v2284
  %v2413 = vunpack.c.l.b16 %v2285
  %v2414 = vunpack.c.l.b16 %v2286
  %v2415 = vunpack.c.l.b16 %v2287
  %v2416 = vunpack.c.l.b16 %v2288
  %v2417 = vunpack.c.l.b16 %v2289
  %v2418 = vunpack.c.l.b16 %v2290
  %v2419 = vunpack.c.l.b16 %v2291
  %v2420 = vunpack.c.l.b16 %v2292
  %v2421 = vunpack.c.l.b16 %v2293
  %v2422 = vpack.c.b16 %v2359, %v2358
  %v2423 = vpack.c.b16 %v2361, %v2360
  %v2424 = vpack.c.b16 %v2363, %v2362
  %v2425 = vpack.c.b16 %v2365, %v2364
  %v2426 = vpack.c.b16 %v2367, %v2366
  %v2427 = vpack.c.b16 %v2369, %v2368
  %v2428 = vpack.c.b16 %v2371, %v2370
  %v2429 = vpack.c.b16 %v2373, %v2372
  %v2430 = vpack.c.b16 %v2375, %v2374
  %v2431 = vpack.c.b16 %v2377, %v2376
  %v2432 = vpack.c.b16 %v2379, %v2378
  %v2433 = vpack.c.b16 %v2381, %v2380
  %v2434 = vpack.c.b16 %v2383, %v2382
  %v2435 = vpack.c.b16 %v2385, %v2384
  %v2436 = vpack.c.b16 %v2387, %v2386
  %v2437 = vpack.c.b16 %v2389, %v2388
  %v2438 = vpack.c.b16 %v2391, %v2390
  %v2439 = vpack.c.b16 %v2393, %v2392
  %v2440 = vpack.c.b16 %v2395, %v2394
  %v2441 = vpack.c.b16 %v2397, %v2396
  %v2442 = vpack.c.b16 %v2399, %v2398
  %v2443 = vpack.c.b16 %v2401, %v2400
  %v2444 = vpack.c.b16 %v2403, %v2402
  %v2445 = vpack.c.b16 %v2405, %v2404
  %v2446 = vpack.c.b16 %v2407, %v2406
  %v2447 = vpack.c.b16 %v2409, %v2408
  %v2448 = vpack.c.b16 %v2411, %v2410
  %v2449 = vpack.c.b16 %v2413, %v2412
  %v2450 = vpack.c.b16 %v2415, %v2414
  %v2451 = vpack.c.b16 %v2417, %v2416
  %v2452 = vpack.c.b16 %v2419, %v2418
  %v2453 = vpack.c.b16 %v2421, %v2420
  %2486 = vmatprep.subr.bf16.mxu0 0
  %2487 = vmatpush1.bf16.msra.mxu0 %v2422
  %2488 = vmatprep.subr.bf16.mxu0 0
  %2489 = vmatpush1.bf16.msra.mxu0 %v2423
  %2490 = vmatprep.subr.bf16.mxu0 0
  %2491 = vmatpush1.bf16.msra.mxu0 %v2424
  %2492 = vmatprep.subr.bf16.mxu0 0
  %2493 = vmatpush1.bf16.msra.mxu0 %v2425
  %2494 = vmatprep.subr.bf16.mxu0 0
  %2495 = vmatpush1.bf16.msra.mxu0 %v2426
  %2496 = vmatprep.subr.bf16.mxu0 0
  %2497 = vmatpush1.bf16.msra.mxu0 %v2427
  %2498 = vmatprep.subr.bf16.mxu0 0
  %2499 = vmatpush1.bf16.msra.mxu0 %v2428
  %2500 = vmatprep.subr.bf16.mxu0 0
  %2501 = vmatpush1.bf16.msra.mxu0 %v2429
  %2502 = vmatprep.subr.bf16.mxu0 0
  %2503 = vmatpush1.bf16.msra.mxu0 %v2430
  %2504 = vmatprep.subr.bf16.mxu0 0
  %2505 = vmatpush1.bf16.msra.mxu0 %v2431
  %2506 = vmatprep.subr.bf16.mxu0 0
  %2507 = vmatpush1.bf16.msra.mxu0 %v2432
  %2508 = vmatprep.subr.bf16.mxu0 0
  %2509 = vmatpush1.bf16.msra.mxu0 %v2433
  %2510 = vmatprep.subr.bf16.mxu0 0
  %2511 = vmatpush1.bf16.msra.mxu0 %v2434
  %2512 = vmatprep.subr.bf16.mxu0 0
  %2513 = vmatpush1.bf16.msra.mxu0 %v2435
  %2514 = vmatprep.subr.bf16.mxu0 0
  %2515 = vmatpush1.bf16.msra.mxu0 %v2436
  %2516 = vmatprep.subr.bf16.mxu0 0
  %2517 = vmatpush1.bf16.msra.mxu0 %v2437
  %2518 = vmatprep.mubr.bf16.mxu0 %v2222
  %2519 = vmatmul.mubr.bf16.gmra.mrb[0].mxu0 %v2221
  %v2520 = vpop.f32.mrb[0].mxu0
  %v2521 = vadd.f32 0.0, %v2520
  %v2522 = vpop.f32.mrb[0].mxu0
  %v2523 = vpop.f32.mrb[0].mxu0
  %v2524 = vadd.f32 0.0, %v2523
  %v2525 = vpop.f32.mrb[0].mxu0
  %2526 = vmatprep.mubr.bf16.mxu0 %v2226
  %2527 = vmatmul.mubr.bf16.gmra.mrb[0].mxu0 %v2225
  %v2528 = vpop.f32.mrb[0].mxu0
  %v2529 = vadd.f32 0.0, %v2528
  %v2530 = vpop.f32.mrb[0].mxu0
  %v2531 = vpop.f32.mrb[0].mxu0
  %v2532 = vadd.f32 0.0, %v2531
  %v2533 = vpop.f32.mrb[0].mxu0
  %2534 = vdwg.mxu0
  %2535 = vmatprep.subr.bf16.mxu0 0
  %2536 = vmatpush1.bf16.msra.mxu0 %v2438
  %2537 = vmatprep.subr.bf16.mxu0 0
  %2538 = vmatpush1.bf16.msra.mxu0 %v2439
  %2539 = vmatprep.subr.bf16.mxu0 0
  %2540 = vmatpush1.bf16.msra.mxu0 %v2440
  %2541 = vmatprep.subr.bf16.mxu0 0
  %2542 = vmatpush1.bf16.msra.mxu0 %v2441
  %2543 = vmatprep.subr.bf16.mxu0 0
  %2544 = vmatpush1.bf16.msra.mxu0 %v2442
  %2545 = vmatprep.subr.bf16.mxu0 0
  %2546 = vmatpush1.bf16.msra.mxu0 %v2443
  %2547 = vmatprep.subr.bf16.mxu0 0
  %2548 = vmatpush1.bf16.msra.mxu0 %v2444
  %2549 = vmatprep.subr.bf16.mxu0 0
  %2550 = vmatpush1.bf16.msra.mxu0 %v2445
  %2551 = vmatprep.subr.bf16.mxu0 0
  %2552 = vmatpush1.bf16.msra.mxu0 %v2446
  %2553 = vmatprep.subr.bf16.mxu0 0
  %2554 = vmatpush1.bf16.msra.mxu0 %v2447
  %2555 = vmatprep.subr.bf16.mxu0 0
  %2556 = vmatpush1.bf16.msra.mxu0 %v2448
  %2557 = vmatprep.subr.bf16.mxu0 0
  %2558 = vmatpush1.bf16.msra.mxu0 %v2449
  %2559 = vmatprep.subr.bf16.mxu0 0
  %2560 = vmatpush1.bf16.msra.mxu0 %v2450
  %2561 = vmatprep.subr.bf16.mxu0 0
  %2562 = vmatpush1.bf16.msra.mxu0 %v2451
  %2563 = vmatprep.subr.bf16.mxu0 0
  %2564 = vmatpush1.bf16.msra.mxu0 %v2452
  %2565 = vmatprep.subr.bf16.mxu0 0
  %2566 = vmatpush1.bf16.msra.mxu0 %v2453
  %2567 = vmatprep.mubr.bf16.mxu0 %v2224
  %2568 = vmatmul.mubr.bf16.gmra.mrb[0].mxu0 %v2223
  %v2569 = vpop.f32.mrb[0].mxu0
  %v2570 = vadd.f32 %v2521, %v2569
  %v2571 = vpop.f32.mrb[0].mxu0
  %v2572 = vpop.f32.mrb[0].mxu0
  %v2573 = vadd.f32 %v2524, %v2572
  %v2574 = vpop.f32.mrb[0].mxu0
  %2575 = vmatprep.mubr.bf16.mxu0 %v2228
  %2576 = vmatmul.mubr.bf16.gmra.mrb[0].mxu0 %v2227
  %v2577 = vpop.f32.mrb[0].mxu0
  %v2578 = vadd.f32 %v2529, %v2577
  %v2579 = vpop.f32.mrb[0].mxu0
  %v2580 = vpop.f32.mrb[0].mxu0
  %v2581 = vadd.f32 %v2532, %v2580
  %v2582 = vpop.f32.mrb[0].mxu0
  %2583 = vdwg.mxu0
  %v2584 = vadd.f32 %v1965, %v2570
  %v2585 = vadd.f32 %v1968, %v2573
  %v2586 = vadd.f32 %v1973, %v2578
  %v2587 = vadd.f32 %v1976, %v2581
  %s2588 = scalar_lea.vmem %s7, 48
  %v2589 = vld [vmem:[%s2588] sm:$0xff]
  %v2590 = vld [vmem:[%s2588 + $0x8] sm:$0xff]
  %v2591 = vld [vmem:[%s2588 + $0x40] sm:$0xff]
  %v2592 = vld [vmem:[%s2588 + $0x48] sm:$0xff]
  %v2593 = vld [vmem:[%s2588 + $0x80] sm:$0xff]
  %v2594 = vld [vmem:[%s2588 + $0x88] sm:$0xff]
  %v2595 = vld [vmem:[%s2588 + $0xc0] sm:$0xff]
  %v2596 = vld [vmem:[%s2588 + $0xc8] sm:$0xff]
  %v2597 = vld [vmem:[%s2588 + $0x100] sm:$0xff]
  %v2598 = vld [vmem:[%s2588 + $0x108] sm:$0xff]
  %v2599 = vld [vmem:[%s2588 + $0x140] sm:$0xff]
  %v2600 = vld [vmem:[%s2588 + $0x148] sm:$0xff]
  %v2601 = vld [vmem:[%s2588 + $0x180] sm:$0x11]
  %v2602 = vld [vmem:[%s2588 + $0x188] sm:$0x11]
  %s2603 = scalar_lea.vmem %s8, 12
  %v2604 = vld [vmem:[%s2603] sm:$0xf]
  %v2606 = vlaneseq
  %v2607 = vshrl.u32 %v2606, 7
  %v2608 = vsub.s32 0, %v2607
  %v2609 = vrot.slane %v2604, %v2608
  %v2610 = vlaneseq
  %v2611 = vshrl.u32 %v2610, 7
  %v2612 = vsub.s32 1, %v2611
  %v2613 = vrot.slane %v2604, %v2612
  %v2614 = vlaneseq
  %v2615 = vshrl.u32 %v2614, 7
  %v2616 = vsub.s32 2, %v2615
  %v2617 = vrot.slane %v2604, %v2616
  %v2618 = vlaneseq
  %v2619 = vshrl.u32 %v2618, 7
  %v2620 = vsub.s32 3, %v2619
  %v2621 = vrot.slane %v2604, %v2620
  %v2640 = vunpack.c.l.b16 %v2589
  %v2641 = vunpack.c.h.b16 %v2589
  %v2642 = vunpack.c.l.b16 %v2590
  %v2643 = vunpack.c.h.b16 %v2590
  %v2644 = vunpack.c.l.b16 %v2591
  %v2645 = vunpack.c.h.b16 %v2591
  %v2646 = vunpack.c.l.b16 %v2592
  %v2647 = vunpack.c.h.b16 %v2592
  %v2648 = vunpack.c.l.b16 %v2593
  %v2649 = vunpack.c.h.b16 %v2593
  %v2650 = vunpack.c.l.b16 %v2594
  %v2651 = vunpack.c.h.b16 %v2594
  %v2652 = vunpack.c.l.b16 %v2595
  %v2653 = vunpack.c.h.b16 %v2595
  %v2654 = vunpack.c.l.b16 %v2596
  %v2655 = vunpack.c.h.b16 %v2596
  %v2656 = vunpack.c.l.b16 %v2597
  %v2657 = vunpack.c.h.b16 %v2597
  %v2658 = vunpack.c.l.b16 %v2598
  %v2659 = vunpack.c.h.b16 %v2598
  %v2660 = vunpack.c.l.b16 %v2599
  %v2661 = vunpack.c.h.b16 %v2599
  %v2662 = vunpack.c.l.b16 %v2600
  %v2663 = vunpack.c.h.b16 %v2600
  %v2664 = vunpack.c.l.b16 %v2601
  %v2665 = vunpack.c.h.b16 %v2601
  %v2666 = vunpack.c.l.b16 %v2602
  %v2667 = vunpack.c.h.b16 %v2602
  %v2668 = vpack.c.b16 %v2644, %v2640
  %v2669 = vpack.c.b16 %v2645, %v2641
  %v2670 = vpack.c.b16 %v2646, %v2642
  %v2671 = vpack.c.b16 %v2647, %v2643
  %v2672 = vpack.c.b16 %v2652, %v2648
  %v2673 = vpack.c.b16 %v2653, %v2649
  %v2674 = vpack.c.b16 %v2654, %v2650
  %v2675 = vpack.c.b16 %v2655, %v2651
  %v2676 = vpack.c.b16 %v2660, %v2656
  %v2677 = vpack.c.b16 %v2661, %v2657
  %v2678 = vpack.c.b16 %v2662, %v2658
  %v2679 = vpack.c.b16 %v2663, %v2659
  %v2680 = vpack.c.b16 %v2664, %v2664
  %v2681 = vpack.c.b16 %v2665, %v2665
  %v2682 = vpack.c.b16 %v2666, %v2666
  %v2683 = vpack.c.b16 %v2667, %v2667
  %v2697 = vsel %vm122, %v2680, 0
  %v2700 = vsel %vm122, %v2681, 0
  %v2703 = vsel %vm122, %v2682, 0
  %v2706 = vsel %vm122, %v2683, 0
  %2708 = vmatprep.subr.bf16.mxu0 %v2669
  %2709 = vmatpush1.bf16.msra.mxu0 %v2668
  %2710 = vmatprep.subr.bf16.mxu0 %v2673
  %2711 = vmatpush1.bf16.msra.mxu0 %v2672
  %2712 = vmatprep.subr.bf16.mxu0 %v2677
  %2713 = vmatpush1.bf16.msra.mxu0 %v2676
  %2714 = vmatprep.subr.bf16.mxu0 %v2700
  %2715 = vmatpush1.bf16.msra.mxu0 %v2697
  %2716 = vmatprep.subr.bf16.mxu0 0
  %2717 = vmatpush1.bf16.msra.mxu0 0
  %2718 = vmatprep.subr.bf16.mxu0 0
  %2719 = vmatpush1.bf16.msra.mxu0 0
  %2720 = vmatprep.subr.bf16.mxu0 0
  %2721 = vmatpush1.bf16.msra.mxu0 0
  %2722 = vmatprep.subr.bf16.mxu0 0
  %2723 = vmatpush1.bf16.msra.mxu0 0
  %2724 = vmatprep.subr.bf16.mxu0 0
  %2725 = vmatpush1.bf16.msra.mxu0 0
  %2726 = vmatprep.subr.bf16.mxu0 0
  %2727 = vmatpush1.bf16.msra.mxu0 0
  %2728 = vmatprep.subr.bf16.mxu0 0
  %2729 = vmatpush1.bf16.msra.mxu0 0
  %2730 = vmatprep.subr.bf16.mxu0 0
  %2731 = vmatpush1.bf16.msra.mxu0 0
  %2732 = vmatprep.subr.bf16.mxu0 0
  %2733 = vmatpush1.bf16.msra.mxu0 0
  %2734 = vmatprep.subr.bf16.mxu0 0
  %2735 = vmatpush1.bf16.msra.mxu0 0
  %2736 = vmatprep.subr.bf16.mxu0 0
  %2737 = vmatpush1.bf16.msra.mxu0 0
  %2738 = vmatprep.subr.bf16.mxu0 0
  %2739 = vmatpush1.bf16.msra.mxu0 0
  %2740 = vmatprep.mubr.bf16.mxu0 0
  %2741 = vmatmul.mubr.bf16.gmra.mrb[0].mxu0 %v873
  %v2742 = vpop.f32.mrb[0].mxu0
  %v2743 = vadd.f32 %v2609, %v2742
  %v2744 = vpop.f32.mrb[0].mxu0
  %v2745 = vadd.f32 %v2613, %v2744
  %v2746 = vpop.f32.mrb[0].mxu0
  %v2747 = vadd.f32 %v2609, %v2746
  %v2748 = vpop.f32.mrb[0].mxu0
  %v2749 = vadd.f32 %v2613, %v2748
  %2750 = vmatprep.mubr.bf16.mxu0 0
  %2751 = vmatmul.mubr.bf16.gmra.mrb[0].mxu0 %v876
  %v2752 = vpop.f32.mrb[0].mxu0
  %v2753 = vadd.f32 %v2609, %v2752
  %v2754 = vpop.f32.mrb[0].mxu0
  %v2755 = vadd.f32 %v2613, %v2754
  %v2756 = vpop.f32.mrb[0].mxu0
  %v2757 = vadd.f32 %v2609, %v2756
  %v2758 = vpop.f32.mrb[0].mxu0
  %v2759 = vadd.f32 %v2613, %v2758
  %2760 = vdwg.mxu0
  %2761 = vmatprep.subr.bf16.mxu0 %v2671
  %2762 = vmatpush1.bf16.msra.mxu0 %v2670
  %2763 = vmatprep.subr.bf16.mxu0 %v2675
  %2764 = vmatpush1.bf16.msra.mxu0 %v2674
  %2765 = vmatprep.subr.bf16.mxu0 %v2679
  %2766 = vmatpush1.bf16.msra.mxu0 %v2678
  %2767 = vmatprep.subr.bf16.mxu0 %v2706
  %2768 = vmatpush1.bf16.msra.mxu0 %v2703
  %2769 = vmatprep.subr.bf16.mxu0 0
  %2770 = vmatpush1.bf16.msra.mxu0 0
  %2771 = vmatprep.subr.bf16.mxu0 0
  %2772 = vmatpush1.bf16.msra.mxu0 0
  %2773 = vmatprep.subr.bf16.mxu0 0
  %2774 = vmatpush1.bf16.msra.mxu0 0
  %2775 = vmatprep.subr.bf16.mxu0 0
  %2776 = vmatpush1.bf16.msra.mxu0 0
  %2777 = vmatprep.subr.bf16.mxu0 0
  %2778 = vmatpush1.bf16.msra.mxu0 0
  %2779 = vmatprep.subr.bf16.mxu0 0
  %2780 = vmatpush1.bf16.msra.mxu0 0
  %2781 = vmatprep.subr.bf16.mxu0 0
  %2782 = vmatpush1.bf16.msra.mxu0 0
  %2783 = vmatprep.subr.bf16.mxu0 0
  %2784 = vmatpush1.bf16.msra.mxu0 0
  %2785 = vmatprep.subr.bf16.mxu0 0
  %2786 = vmatpush1.bf16.msra.mxu0 0
  %2787 = vmatprep.subr.bf16.mxu0 0
  %2788 = vmatpush1.bf16.msra.mxu0 0
  %2789 = vmatprep.subr.bf16.mxu0 0
  %2790 = vmatpush1.bf16.msra.mxu0 0
  %2791 = vmatprep.subr.bf16.mxu0 0
  %2792 = vmatpush1.bf16.msra.mxu0 0
  %2793 = vmatprep.mubr.bf16.mxu0 0
  %2794 = vmatmul.mubr.bf16.gmra.mrb[0].mxu0 %v873
  %v2795 = vpop.f32.mrb[0].mxu0
  %v2796 = vadd.f32 %v2617, %v2795
  %v2797 = vpop.f32.mrb[0].mxu0
  %v2798 = vadd.f32 %v2621, %v2797
  %v2799 = vpop.f32.mrb[0].mxu0
  %v2800 = vadd.f32 %v2617, %v2799
  %v2801 = vpop.f32.mrb[0].mxu0
  %v2802 = vadd.f32 %v2621, %v2801
  %2803 = vmatprep.mubr.bf16.mxu0 0
  %2804 = vmatmul.mubr.bf16.gmra.mrb[0].mxu0 %v876
  %v2805 = vpop.f32.mrb[0].mxu0
  %v2806 = vadd.f32 %v2617, %v2805
  %v2807 = vpop.f32.mrb[0].mxu0
  %v2808 = vadd.f32 %v2621, %v2807
  %v2809 = vpop.f32.mrb[0].mxu0
  %v2810 = vadd.f32 %v2617, %v2809
  %v2811 = vpop.f32.mrb[0].mxu0
  %v2812 = vadd.f32 %v2621, %v2811
  %2813 = vdwg.mxu0
  %v2814 = vmax.f32 %v2743, 0.0
  %v2815 = vmax.f32 %v2745, 0.0
  %v2816 = vmax.f32 %v2796, 0.0
  %v2817 = vmax.f32 %v2798, 0.0
  %v2818 = vmax.f32 %v2747, 0.0
  %v2819 = vmax.f32 %v2749, 0.0
  %v2820 = vmax.f32 %v2800, 0.0
  %v2821 = vmax.f32 %v2802, 0.0
  %v2822 = vmax.f32 %v2753, 0.0
  %v2823 = vmax.f32 %v2755, 0.0
  %v2824 = vmax.f32 %v2806, 0.0
  %v2825 = vmax.f32 %v2808, 0.0
  %v2826 = vmax.f32 %v2757, 0.0
  %v2827 = vmax.f32 %v2759, 0.0
  %v2828 = vmax.f32 %v2810, 0.0
  %v2829 = vmax.f32 %v2812, 0.0
  %v2830 = vpack.c.bf16 %v2818, %v2814
  %v2831 = vpack.c.bf16 %v2819, %v2815
  %v2832 = vpack.c.bf16 %v2820, %v2816
  %v2833 = vpack.c.bf16 %v2821, %v2817
  %v2834 = vpack.c.bf16 %v2826, %v2822
  %v2835 = vpack.c.bf16 %v2827, %v2823
  %v2836 = vpack.c.bf16 %v2828, %v2824
  %v2837 = vpack.c.bf16 %v2829, %v2825
  %s2838 = scalar_lea.vmem %s9, 768
  %v2839 = vld [vmem:[%s2838] sm:$0xf]
  %v2840 = vld [vmem:[%s2838 + $0x4] sm:$0xf]
  %v2841 = vld [vmem:[%s2838 + $0x8] sm:$0xf]
  %v2842 = vld [vmem:[%s2838 + $0xc] sm:$0xf]
  %v2843 = vld [vmem:[%s2838 + $0x10] sm:$0xf]
  %v2844 = vld [vmem:[%s2838 + $0x14] sm:$0xf]
  %v2845 = vld [vmem:[%s2838 + $0x18] sm:$0xf]
  %v2846 = vld [vmem:[%s2838 + $0x1c] sm:$0xf]
  %v2847 = vld [vmem:[%s2838 + $0x20] sm:$0xf]
  %v2848 = vld [vmem:[%s2838 + $0x24] sm:$0xf]
  %v2849 = vld [vmem:[%s2838 + $0x28] sm:$0xf]
  %v2850 = vld [vmem:[%s2838 + $0x2c] sm:$0xf]
  %v2851 = vld [vmem:[%s2838 + $0x30] sm:$0xf]
  %v2852 = vld [vmem:[%s2838 + $0x34] sm:$0xf]
  %v2853 = vld [vmem:[%s2838 + $0x38] sm:$0xf]
  %v2854 = vld [vmem:[%s2838 + $0x3c] sm:$0xf]
  %v2855 = vld [vmem:[%s2838 + $0x40] sm:$0xf]
  %v2856 = vld [vmem:[%s2838 + $0x44] sm:$0xf]
  %v2857 = vld [vmem:[%s2838 + $0x48] sm:$0xf]
  %v2858 = vld [vmem:[%s2838 + $0x4c] sm:$0xf]
  %v2859 = vld [vmem:[%s2838 + $0x50] sm:$0xf]
  %v2860 = vld [vmem:[%s2838 + $0x54] sm:$0xf]
  %v2861 = vld [vmem:[%s2838 + $0x58] sm:$0xf]
  %v2862 = vld [vmem:[%s2838 + $0x5c] sm:$0xf]
  %v2863 = vld [vmem:[%s2838 + $0x60] sm:$0xf]
  %v2864 = vld [vmem:[%s2838 + $0x64] sm:$0xf]
  %v2865 = vld [vmem:[%s2838 + $0x68] sm:$0xf]
  %v2866 = vld [vmem:[%s2838 + $0x6c] sm:$0xf]
  %v2867 = vld [vmem:[%s2838 + $0x70] sm:$0xf]
  %v2868 = vld [vmem:[%s2838 + $0x74] sm:$0xf]
  %v2869 = vld [vmem:[%s2838 + $0x78] sm:$0xf]
  %v2870 = vld [vmem:[%s2838 + $0x7c] sm:$0xf]
  %v2871 = vld [vmem:[%s2838 + $0x80] sm:$0xf]
  %v2872 = vld [vmem:[%s2838 + $0x84] sm:$0xf]
  %v2873 = vld [vmem:[%s2838 + $0x88] sm:$0xf]
  %v2874 = vld [vmem:[%s2838 + $0x8c] sm:$0xf]
  %v2875 = vld [vmem:[%s2838 + $0x90] sm:$0xf]
  %v2876 = vld [vmem:[%s2838 + $0x94] sm:$0xf]
  %v2877 = vld [vmem:[%s2838 + $0x98] sm:$0xf]
  %v2878 = vld [vmem:[%s2838 + $0x9c] sm:$0xf]
  %v2879 = vld [vmem:[%s2838 + $0xa0] sm:$0xf]
  %v2880 = vld [vmem:[%s2838 + $0xa4] sm:$0xf]
  %v2881 = vld [vmem:[%s2838 + $0xa8] sm:$0xf]
  %v2882 = vld [vmem:[%s2838 + $0xac] sm:$0xf]
  %v2883 = vld [vmem:[%s2838 + $0xb0] sm:$0xf]
  %v2884 = vld [vmem:[%s2838 + $0xb4] sm:$0xf]
  %v2885 = vld [vmem:[%s2838 + $0xb8] sm:$0xf]
  %v2886 = vld [vmem:[%s2838 + $0xbc] sm:$0xf]
  %v2887 = vld [vmem:[%s2838 + $0xc0] sm:$0xf]
  %v2888 = vld [vmem:[%s2838 + $0xc4] sm:$0xf]
  %v2889 = vld [vmem:[%s2838 + $0xc8] sm:$0xf]
  %v2890 = vld [vmem:[%s2838 + $0xcc] sm:$0xf]
  %v2891 = vld [vmem:[%s2838 + $0xd0] sm:$0xf]
  %v2892 = vld [vmem:[%s2838 + $0xd4] sm:$0xf]
  %v2893 = vld [vmem:[%s2838 + $0xd8] sm:$0xf]
  %v2894 = vld [vmem:[%s2838 + $0xdc] sm:$0xf]
  %v2895 = vld [vmem:[%s2838 + $0xe0] sm:$0xf]
  %v2896 = vld [vmem:[%s2838 + $0xe4] sm:$0xf]
  %v2897 = vld [vmem:[%s2838 + $0xe8] sm:$0xf]
  %v2898 = vld [vmem:[%s2838 + $0xec] sm:$0xf]
  %v2899 = vld [vmem:[%s2838 + $0xf0] sm:$0xf]
  %v2900 = vld [vmem:[%s2838 + $0xf4] sm:$0xf]
  %v2901 = vld [vmem:[%s2838 + $0xf8] sm:$0xf]
  %v2902 = vld [vmem:[%s2838 + $0xfc] sm:$0xf]
  %v2967 = vunpack.c.l.b16 %v2839
  %v2968 = vunpack.c.l.b16 %v2840
  %v2969 = vunpack.c.l.b16 %v2841
  %v2970 = vunpack.c.l.b16 %v2842
  %v2971 = vunpack.c.l.b16 %v2843
  %v2972 = vunpack.c.l.b16 %v2844
  %v2973 = vunpack.c.l.b16 %v2845
  %v2974 = vunpack.c.l.b16 %v2846
  %v2975 = vunpack.c.l.b16 %v2847
  %v2976 = vunpack.c.l.b16 %v2848
  %v2977 = vunpack.c.l.b16 %v2849
  %v2978 = vunpack.c.l.b16 %v2850
  %v2979 = vunpack.c.l.b16 %v2851
  %v2980 = vunpack.c.l.b16 %v2852
  %v2981 = vunpack.c.l.b16 %v2853
  %v2982 = vunpack.c.l.b16 %v2854
  %v2983 = vunpack.c.l.b16 %v2855
  %v2984 = vunpack.c.l.b16 %v2856
  %v2985 = vunpack.c.l.b16 %v2857
  %v2986 = vunpack.c.l.b16 %v2858
  %v2987 = vunpack.c.l.b16 %v2859
  %v2988 = vunpack.c.l.b16 %v2860
  %v2989 = vunpack.c.l.b16 %v2861
  %v2990 = vunpack.c.l.b16 %v2862
  %v2991 = vunpack.c.l.b16 %v2863
  %v2992 = vunpack.c.l.b16 %v2864
  %v2993 = vunpack.c.l.b16 %v2865
  %v2994 = vunpack.c.l.b16 %v2866
  %v2995 = vunpack.c.l.b16 %v2867
  %v2996 = vunpack.c.l.b16 %v2868
  %v2997 = vunpack.c.l.b16 %v2869
  %v2998 = vunpack.c.l.b16 %v2870
  %v2999 = vunpack.c.l.b16 %v2871
  %v3000 = vunpack.c.l.b16 %v2872
  %v3001 = vunpack.c.l.b16 %v2873
  %v3002 = vunpack.c.l.b16 %v2874
  %v3003 = vunpack.c.l.b16 %v2875
  %v3004 = vunpack.c.l.b16 %v2876
  %v3005 = vunpack.c.l.b16 %v2877
  %v3006 = vunpack.c.l.b16 %v2878
  %v3007 = vunpack.c.l.b16 %v2879
  %v3008 = vunpack.c.l.b16 %v2880
  %v3009 = vunpack.c.l.b16 %v2881
  %v3010 = vunpack.c.l.b16 %v2882
  %v3011 = vunpack.c.l.b16 %v2883
  %v3012 = vunpack.c.l.b16 %v2884
  %v3013 = vunpack.c.l.b16 %v2885
  %v3014 = vunpack.c.l.b16 %v2886
  %v3015 = vunpack.c.l.b16 %v2887
  %v3016 = vunpack.c.l.b16 %v2888
  %v3017 = vunpack.c.l.b16 %v2889
  %v3018 = vunpack.c.l.b16 %v2890
  %v3019 = vunpack.c.l.b16 %v2891
  %v3020 = vunpack.c.l.b16 %v2892
  %v3021 = vunpack.c.l.b16 %v2893
  %v3022 = vunpack.c.l.b16 %v2894
  %v3023 = vunpack.c.l.b16 %v2895
  %v3024 = vunpack.c.l.b16 %v2896
  %v3025 = vunpack.c.l.b16 %v2897
  %v3026 = vunpack.c.l.b16 %v2898
  %v3027 = vunpack.c.l.b16 %v2899
  %v3028 = vunpack.c.l.b16 %v2900
  %v3029 = vunpack.c.l.b16 %v2901
  %v3030 = vunpack.c.l.b16 %v2902
  %v3031 = vpack.c.b16 %v2968, %v2967
  %v3032 = vpack.c.b16 %v2970, %v2969
  %v3033 = vpack.c.b16 %v2972, %v2971
  %v3034 = vpack.c.b16 %v2974, %v2973
  %v3035 = vpack.c.b16 %v2976, %v2975
  %v3036 = vpack.c.b16 %v2978, %v2977
  %v3037 = vpack.c.b16 %v2980, %v2979
  %v3038 = vpack.c.b16 %v2982, %v2981
  %v3039 = vpack.c.b16 %v2984, %v2983
  %v3040 = vpack.c.b16 %v2986, %v2985
  %v3041 = vpack.c.b16 %v2988, %v2987
  %v3042 = vpack.c.b16 %v2990, %v2989
  %v3043 = vpack.c.b16 %v2992, %v2991
  %v3044 = vpack.c.b16 %v2994, %v2993
  %v3045 = vpack.c.b16 %v2996, %v2995
  %v3046 = vpack.c.b16 %v2998, %v2997
  %v3047 = vpack.c.b16 %v3000, %v2999
  %v3048 = vpack.c.b16 %v3002, %v3001
  %v3049 = vpack.c.b16 %v3004, %v3003
  %v3050 = vpack.c.b16 %v3006, %v3005
  %v3051 = vpack.c.b16 %v3008, %v3007
  %v3052 = vpack.c.b16 %v3010, %v3009
  %v3053 = vpack.c.b16 %v3012, %v3011
  %v3054 = vpack.c.b16 %v3014, %v3013
  %v3055 = vpack.c.b16 %v3016, %v3015
  %v3056 = vpack.c.b16 %v3018, %v3017
  %v3057 = vpack.c.b16 %v3020, %v3019
  %v3058 = vpack.c.b16 %v3022, %v3021
  %v3059 = vpack.c.b16 %v3024, %v3023
  %v3060 = vpack.c.b16 %v3026, %v3025
  %v3061 = vpack.c.b16 %v3028, %v3027
  %v3062 = vpack.c.b16 %v3030, %v3029
  %3095 = vmatprep.subr.bf16.mxu0 0
  %3096 = vmatpush1.bf16.msra.mxu0 %v3031
  %3097 = vmatprep.subr.bf16.mxu0 0
  %3098 = vmatpush1.bf16.msra.mxu0 %v3032
  %3099 = vmatprep.subr.bf16.mxu0 0
  %3100 = vmatpush1.bf16.msra.mxu0 %v3033
  %3101 = vmatprep.subr.bf16.mxu0 0
  %3102 = vmatpush1.bf16.msra.mxu0 %v3034
  %3103 = vmatprep.subr.bf16.mxu0 0
  %3104 = vmatpush1.bf16.msra.mxu0 %v3035
  %3105 = vmatprep.subr.bf16.mxu0 0
  %3106 = vmatpush1.bf16.msra.mxu0 %v3036
  %3107 = vmatprep.subr.bf16.mxu0 0
  %3108 = vmatpush1.bf16.msra.mxu0 %v3037
  %3109 = vmatprep.subr.bf16.mxu0 0
  %3110 = vmatpush1.bf16.msra.mxu0 %v3038
  %3111 = vmatprep.subr.bf16.mxu0 0
  %3112 = vmatpush1.bf16.msra.mxu0 %v3039
  %3113 = vmatprep.subr.bf16.mxu0 0
  %3114 = vmatpush1.bf16.msra.mxu0 %v3040
  %3115 = vmatprep.subr.bf16.mxu0 0
  %3116 = vmatpush1.bf16.msra.mxu0 %v3041
  %3117 = vmatprep.subr.bf16.mxu0 0
  %3118 = vmatpush1.bf16.msra.mxu0 %v3042
  %3119 = vmatprep.subr.bf16.mxu0 0
  %3120 = vmatpush1.bf16.msra.mxu0 %v3043
  %3121 = vmatprep.subr.bf16.mxu0 0
  %3122 = vmatpush1.bf16.msra.mxu0 %v3044
  %3123 = vmatprep.subr.bf16.mxu0 0
  %3124 = vmatpush1.bf16.msra.mxu0 %v3045
  %3125 = vmatprep.subr.bf16.mxu0 0
  %3126 = vmatpush1.bf16.msra.mxu0 %v3046
  %3127 = vmatprep.mubr.bf16.mxu0 %v2831
  %3128 = vmatmul.mubr.bf16.gmra.mrb[0].mxu0 %v2830
  %v3129 = vpop.f32.mrb[0].mxu0
  %v3130 = vadd.f32 0.0, %v3129
  %v3131 = vpop.f32.mrb[0].mxu0
  %v3132 = vpop.f32.mrb[0].mxu0
  %v3133 = vadd.f32 0.0, %v3132
  %v3134 = vpop.f32.mrb[0].mxu0
  %3135 = vmatprep.mubr.bf16.mxu0 %v2835
  %3136 = vmatmul.mubr.bf16.gmra.mrb[0].mxu0 %v2834
  %v3137 = vpop.f32.mrb[0].mxu0
  %v3138 = vadd.f32 0.0, %v3137
  %v3139 = vpop.f32.mrb[0].mxu0
  %v3140 = vpop.f32.mrb[0].mxu0
  %v3141 = vadd.f32 0.0, %v3140
  %v3142 = vpop.f32.mrb[0].mxu0
  %3143 = vdwg.mxu0
  %3144 = vmatprep.subr.bf16.mxu0 0
  %3145 = vmatpush1.bf16.msra.mxu0 %v3047
  %3146 = vmatprep.subr.bf16.mxu0 0
  %3147 = vmatpush1.bf16.msra.mxu0 %v3048
  %3148 = vmatprep.subr.bf16.mxu0 0
  %3149 = vmatpush1.bf16.msra.mxu0 %v3049
  %3150 = vmatprep.subr.bf16.mxu0 0
  %3151 = vmatpush1.bf16.msra.mxu0 %v3050
  %3152 = vmatprep.subr.bf16.mxu0 0
  %3153 = vmatpush1.bf16.msra.mxu0 %v3051
  %3154 = vmatprep.subr.bf16.mxu0 0
  %3155 = vmatpush1.bf16.msra.mxu0 %v3052
  %3156 = vmatprep.subr.bf16.mxu0 0
  %3157 = vmatpush1.bf16.msra.mxu0 %v3053
  %3158 = vmatprep.subr.bf16.mxu0 0
  %3159 = vmatpush1.bf16.msra.mxu0 %v3054
  %3160 = vmatprep.subr.bf16.mxu0 0
  %3161 = vmatpush1.bf16.msra.mxu0 %v3055
  %3162 = vmatprep.subr.bf16.mxu0 0
  %3163 = vmatpush1.bf16.msra.mxu0 %v3056
  %3164 = vmatprep.subr.bf16.mxu0 0
  %3165 = vmatpush1.bf16.msra.mxu0 %v3057
  %3166 = vmatprep.subr.bf16.mxu0 0
  %3167 = vmatpush1.bf16.msra.mxu0 %v3058
  %3168 = vmatprep.subr.bf16.mxu0 0
  %3169 = vmatpush1.bf16.msra.mxu0 %v3059
  %3170 = vmatprep.subr.bf16.mxu0 0
  %3171 = vmatpush1.bf16.msra.mxu0 %v3060
  %3172 = vmatprep.subr.bf16.mxu0 0
  %3173 = vmatpush1.bf16.msra.mxu0 %v3061
  %3174 = vmatprep.subr.bf16.mxu0 0
  %3175 = vmatpush1.bf16.msra.mxu0 %v3062
  %3176 = vmatprep.mubr.bf16.mxu0 %v2833
  %3177 = vmatmul.mubr.bf16.gmra.mrb[0].mxu0 %v2832
  %v3178 = vpop.f32.mrb[0].mxu0
  %v3179 = vadd.f32 %v3130, %v3178
  %v3180 = vpop.f32.mrb[0].mxu0
  %v3181 = vpop.f32.mrb[0].mxu0
  %v3182 = vadd.f32 %v3133, %v3181
  %v3183 = vpop.f32.mrb[0].mxu0
  %3184 = vmatprep.mubr.bf16.mxu0 %v2837
  %3185 = vmatmul.mubr.bf16.gmra.mrb[0].mxu0 %v2836
  %v3186 = vpop.f32.mrb[0].mxu0
  %v3187 = vadd.f32 %v3138, %v3186
  %v3188 = vpop.f32.mrb[0].mxu0
  %v3189 = vpop.f32.mrb[0].mxu0
  %v3190 = vadd.f32 %v3141, %v3189
  %v3191 = vpop.f32.mrb[0].mxu0
  %3192 = vdwg.mxu0
  %v3193 = vadd.f32 %v2584, %v3179
  %v3194 = vadd.f32 %v2585, %v3182
  %v3195 = vadd.f32 %v2586, %v3187
  %v3196 = vadd.f32 %v2587, %v3190
  %v3197 = vld [vmem:[%s10] sm:$0x1]
  %v3199 = vlaneseq
  %v3200 = vshrl.u32 %v3199, 7
  %v3201 = vsub.s32 0, %v3200
  %v3202 = vrot.slane %v3197, %v3201
  %v3204 = vadd.f32 %v3193, %v3202
  %v3205 = vadd.f32 %v3194, %v3202
  %v3206 = vadd.f32 %v3195, %v3202
  %v3207 = vadd.f32 %v3196, %v3202
  %v3208 = vadd.f32 %v760, %v3204
  %v3209 = vadd.f32 %v761, %v3205
  %v3210 = vadd.f32 %v762, %v3206
  %v3211 = vadd.f32 %v763, %v3207
  %v3212 = vld [vmem:[%s13] sm:$0x1]
  %v3213 = vld [vmem:[%s14] sm:$0x1]
  %v3214 = vsel %vm115, %v3208, 0.0
  %3215 = vadd.xlane.f32.xlu0 %v3214
  %v3216 = vpop.xlane.xlu0 %3215
  %v3217 = vsel %vm115, %v3209, 0.0
  %3218 = vadd.xlane.f32.xlu0 %v3217
  %v3219 = vpop.xlane.xlu0 %3218
  %v3220 = vsel %vm115, %v3210, 0.0
  %3221 = vadd.xlane.f32.xlu0 %v3220
  %v3222 = vpop.xlane.xlu0 %3221
  %v3223 = vsel %vm115, %v3211, 0.0
  %3224 = vadd.xlane.f32.xlu0 %v3223
  %v3225 = vpop.xlane.xlu0 %3224
  %v3226 = vmul.f32 %v3216, %v703
  %v3227 = vmul.f32 %v3219, %v703
  %v3228 = vmul.f32 %v3222, %v703
  %v3229 = vmul.f32 %v3225, %v703
  %v3230 = vsub.f32 %v3208, %v3226
  %v3231 = vsub.f32 %v3209, %v3227
  %v3232 = vsub.f32 %v3210, %v3228
  %v3233 = vsub.f32 %v3211, %v3229
  %v3234 = vmul.f32 %v3230, %v3230
  %v3235 = vmul.f32 %v3231, %v3231
  %v3236 = vmul.f32 %v3232, %v3232
  %v3237 = vmul.f32 %v3233, %v3233
  %v3238 = vsel %vm115, %v3234, 0.0
  %3239 = vadd.xlane.f32.xlu0 %v3238
  %v3240 = vpop.xlane.xlu0 %3239
  %v3241 = vsel %vm115, %v3235, 0.0
  %3242 = vadd.xlane.f32.xlu0 %v3241
  %v3243 = vpop.xlane.xlu0 %3242
  %v3244 = vsel %vm115, %v3236, 0.0
  %3245 = vadd.xlane.f32.xlu0 %v3244
  %v3246 = vpop.xlane.xlu0 %3245
  %v3247 = vsel %vm115, %v3237, 0.0
  %3248 = vadd.xlane.f32.xlu0 %v3247
  %v3249 = vpop.xlane.xlu0 %3248
  %v3250 = vmul.f32 %v3240, %v703
  %v3251 = vmul.f32 %v3243, %v703
  %v3252 = vmul.f32 %v3246, %v703
  %v3253 = vmul.f32 %v3249, %v703
  %v3254 = vadd.f32 %v3250, 1e-05
  %v3255 = vadd.f32 %v3251, 1e-05
  %v3256 = vadd.f32 %v3252, 1e-05
  %v3257 = vadd.f32 %v3253, 1e-05
  %v3258 = vrsqrt.pop %v3254
  %v3259 = vrsqrt.pop %v3255
  %v3260 = vrsqrt.pop %v3256
  %v3261 = vrsqrt.pop %v3257
  %v3262 = vmul.f32 %v3230, %v3258
  %v3263 = vmul.f32 %v3231, %v3259
  %v3264 = vmul.f32 %v3232, %v3260
  %v3265 = vmul.f32 %v3233, %v3261
  %v3267 = vlaneseq
  %v3268 = vshrl.u32 %v3267, 7
  %v3269 = vsub.s32 0, %v3268
  %v3270 = vrot.slane %v3212, %v3269
  %v3272 = vmul.f32 %v3262, %v3270
  %v3273 = vmul.f32 %v3263, %v3270
  %v3274 = vmul.f32 %v3264, %v3270
  %v3275 = vmul.f32 %v3265, %v3270
  %v3277 = vlaneseq
  %v3278 = vshrl.u32 %v3277, 7
  %v3279 = vsub.s32 0, %v3278
  %v3280 = vrot.slane %v3213, %v3279
  %v3282 = vadd.f32 %v3272, %v3280
  %v3283 = vadd.f32 %v3273, %v3280
  %v3284 = vadd.f32 %v3274, %v3280
  %v3285 = vadd.f32 %v3275, %v3280
  %s3286 = smul.u32 0, 16
  %v3287 = vlaneseq
  %v3288 = vshrl.u32 %v3287, 7
  %v3289 = vadd.s32 %v3288, 8
  %v3290 = vstv %s3286
  %v3291 = vadd.s32 %v3290, %v3288
  %v3292 = vadd.s32 %v3290, %v3289
  %vm3293 = vcmp.lt.s32.totalorder %v3291, 15
  %vm3294 = vcmp.lt.s32.totalorder %v3292, 15
  %v3295 = vsel %vm3293, 1, 0
  %v3296 = vsel %vm3294, 1, 0
  %vm3297 = vcmp.eq.s32.totalorder %v3295, 1
  %vm3298 = vcmp.eq.s32.totalorder %v3296, 1
  %v3299 = vsel %vm3297, %v3282, 0.0
  %v3300 = vsel %vm3298, %v3283, 0.0
  %v3301 = vsel %vm3297, %v3284, 0.0
  %v3302 = vsel %vm3298, %v3285, 0.0
  %v3303 = vsel %vm115, %v3299, 0.0
  %v3304 = vsel %vm115, %v3300, 0.0
  %v3305 = vadd.f32 %v3303, %v3304
  %v3306 = vrot.slane %v3305, 4
  %v3307 = vadd.f32 %v3305, %v3306
  %v3308 = vrot.slane %v3307, 2
  %v3309 = vadd.f32 %v3307, %v3308
  %v3310 = vrot.slane %v3309, 1
  %v3311 = vadd.f32 %v3309, %v3310
  %v3312 = vsel %vm115, %v3301, 0.0
  %v3313 = vsel %vm115, %v3302, 0.0
  %v3314 = vadd.f32 %v3312, %v3313
  %v3315 = vrot.slane %v3314, 4
  %v3316 = vadd.f32 %v3314, %v3315
  %v3317 = vrot.slane %v3316, 2
  %v3318 = vadd.f32 %v3316, %v3317
  %v3319 = vrot.slane %v3318, 1
  %v3320 = vadd.f32 %v3318, %v3319
  %vm3323 = vcmask 1041409
  %v3324 = vsel %vm3323, %v3320, %v3311
  %vm3326 = vcmask 402432
  %3327 = vst.msk [vmem:[%s15] sm:$0x3] %vm3326, %v3324
  // Predicated region
  $region62: #{disfluency_forward.5} parent=0 // pred_check
    _
  $region63: #{disfluency_forward.5} parent=0 // pred_check_branch
    %3329 = sbr.rel (0) target = $region65
  $region64: #{disfluency_forward.5} parent=0 // pred_region
    _
  $region65: #{disfluency_forward.5} parent=0 // pred_fallthru
    _
  // Predicated region
  $region66: #{disfluency_forward.5} parent=0 // pred_check
    _
  $region67: #{disfluency_forward.5} parent=0 // pred_check_branch
    %3331 = sbr.rel (0) target = $region69
  $region68: #{disfluency_forward.5} parent=0 // pred_region
    _
  $region69: #{disfluency_forward.5} parent=0 // pred_fallthru
    _

// kernel: disfluency_forward.4
$region0: #{disfluency_forward.4}
  #allocation0 [shape = 'u32[]', space=smem, size = 0x4, offset = 0x4, fixed_abs, tag = 'smem constant byte address 0x4 - core index']
  #allocation1 [shape = 'u32[144,128]{1,0:T(1,128)}', space=vmem, size = 0x12000, scoped, tag = 'internal scratch']
  %s0 = inlined_call_operand.vmem [shape: bf16[2,16,50], index: 0, kind: input, shape index: {}]
  %s1 = inlined_call_operand.vmem [shape: bf16[50,150], index: 1, kind: input, shape index: {}]
  %s2 = inlined_call_operand.vmem [shape: f32[1,150], index: 2, kind: input, shape index: {}]
  %s3 = inlined_call_operand.vmem [shape: bf16[50,50], index: 3, kind: input, shape index: {}]
  %s4 = inlined_call_operand.vmem [shape: f32[1,50], index: 4, kind: input, shape index: {}]
  %s5 = inlined_call_operand.vmem [shape: f32[50,10], index: 5, kind: input, shape index: {}]
  %s6 = inlined_call_operand.vmem [shape: f32[10,50], index: 6, kind: input, shape index: {}]
  %s7 = inlined_call_operand.vmem [shape: bf16[50,2048], index: 7, kind: input, shape index: {}]
  %s8 = inlined_call_operand.vmem [shape: f32[1,2048], index: 8, kind: input, shape index: {}]
  %s9 = inlined_call_operand.vmem [shape: bf16[2048,50], index: 9, kind: input, shape index: {}]
  %s10 = inlined_call_operand.vmem [shape: f32[1,50], index: 10, kind: input, shape index: {}]
  %s11 = inlined_call_operand.vmem [shape: f32[1,50], index: 11, kind: input, shape index: {}]
  %s12 = inlined_call_operand.vmem [shape: f32[1,50], index: 12, kind: input, shape index: {}]
  %s13 = inlined_call_operand.vmem [shape: f32[1,50], index: 13, kind: input, shape index: {}]
  %s14 = inlined_call_operand.vmem [shape: f32[1,50], index: 14, kind: input, shape index: {}]
  %s15 = inlined_call_operand.vmem [shape: bf16[2,16,50], index: 15, kind: output, shape index: {}]
  %s16 = sld [smem:[#allocation0]]
  $region70: #{disfluency_forward.4} parent=0
    _
  %s18 = ssub.s32 1, %s16
  %s19 = scalar_select 0, %s18, %s16
  // Predicated region
  $region2: #{disfluency_forward.4} parent=0 // pred_check
    _
  $region3: #{disfluency_forward.4} parent=0 // pred_check_branch
    %21 = sbr.rel (0) target = $region5
  $region4: #{disfluency_forward.4} parent=0 // pred_region
    _
  $region5: #{disfluency_forward.4} parent=0 // pred_fallthru
    _
  // Predicated region
  $region6: #{disfluency_forward.4} parent=0 // pred_check
    _
  $region7: #{disfluency_forward.4} parent=0 // pred_check_branch
    %23 = sbr.rel (0) target = $region9
  $region8: #{disfluency_forward.4} parent=0 // pred_region
    _
  $region9: #{disfluency_forward.4} parent=0 // pred_fallthru
    _
  // Predicated region
  $region10: #{disfluency_forward.4} parent=0 // pred_check
    _
  $region11: #{disfluency_forward.4} parent=0 // pred_check_branch
    %25 = sbr.rel (0) target = $region13
  $region12: #{disfluency_forward.4} parent=0 // pred_region
    _
  $region13: #{disfluency_forward.4} parent=0 // pred_fallthru
    _
  // Predicated region
  $region14: #{disfluency_forward.4} parent=0 // pred_check
    _
  $region15: #{disfluency_forward.4} parent=0 // pred_check_branch
    %27 = sbr.rel (0) target = $region17
  $region16: #{disfluency_forward.4} parent=0 // pred_region
    _
  $region17: #{disfluency_forward.4} parent=0 // pred_fallthru
    _
  // Predicated region
  $region18: #{disfluency_forward.4} parent=0 // pred_check
    _
  $region19: #{disfluency_forward.4} parent=0 // pred_check_branch
    %29 = sbr.rel (0) target = $region21
  $region20: #{disfluency_forward.4} parent=0 // pred_region
    _
  $region21: #{disfluency_forward.4} parent=0 // pred_fallthru
    _
  // Predicated region
  $region22: #{disfluency_forward.4} parent=0 // pred_check
    _
  $region23: #{disfluency_forward.4} parent=0 // pred_check_branch
    %31 = sbr.rel (0) target = $region25
  $region24: #{disfluency_forward.4} parent=0 // pred_region
    _
  $region25: #{disfluency_forward.4} parent=0 // pred_fallthru
    _
  // Predicated region
  $region26: #{disfluency_forward.4} parent=0 // pred_check
    _
  $region27: #{disfluency_forward.4} parent=0 // pred_check_branch
    %33 = sbr.rel (0) target = $region29
  $region28: #{disfluency_forward.4} parent=0 // pred_region
    _
  $region29: #{disfluency_forward.4} parent=0 // pred_fallthru
    _
  // Predicated region
  $region30: #{disfluency_forward.4} parent=0 // pred_check
    _
  $region31: #{disfluency_forward.4} parent=0 // pred_check_branch
    %35 = sbr.rel (0) target = $region33
  $region32: #{disfluency_forward.4} parent=0 // pred_region
    _
  $region33: #{disfluency_forward.4} parent=0 // pred_fallthru
    _
  // Predicated region
  $region34: #{disfluency_forward.4} parent=0 // pred_check
    _
  $region35: #{disfluency_forward.4} parent=0 // pred_check_branch
    %37 = sbr.rel (0) target = $region37
  $region36: #{disfluency_forward.4} parent=0 // pred_region
    _
  $region37: #{disfluency_forward.4} parent=0 // pred_fallthru
    _
  // Predicated region
  $region38: #{disfluency_forward.4} parent=0 // pred_check
    _
  $region39: #{disfluency_forward.4} parent=0 // pred_check_branch
    %39 = sbr.rel (0) target = $region41
  $region40: #{disfluency_forward.4} parent=0 // pred_region
    _
  $region41: #{disfluency_forward.4} parent=0 // pred_fallthru
    _
  // Predicated region
  $region42: #{disfluency_forward.4} parent=0 // pred_check
    _
  $region43: #{disfluency_forward.4} parent=0 // pred_check_branch
    %41 = sbr.rel (0) target = $region45
  $region44: #{disfluency_forward.4} parent=0 // pred_region
    _
  $region45: #{disfluency_forward.4} parent=0 // pred_fallthru
    _
  // Predicated region
  $region46: #{disfluency_forward.4} parent=0 // pred_check
    _
  $region47: #{disfluency_forward.4} parent=0 // pred_check_branch
    %43 = sbr.rel (0) target = $region49
  $region48: #{disfluency_forward.4} parent=0 // pred_region
    _
  $region49: #{disfluency_forward.4} parent=0 // pred_fallthru
    _
  // Predicated region
  $region50: #{disfluency_forward.4} parent=0 // pred_check
    _
  $region51: #{disfluency_forward.4} parent=0 // pred_check_branch
    %45 = sbr.rel (0) target = $region53
  $region52: #{disfluency_forward.4} parent=0 // pred_region
    _
  $region53: #{disfluency_forward.4} parent=0 // pred_fallthru
    _
  // Predicated region
  $region54: #{disfluency_forward.4} parent=0 // pred_check
    _
  $region55: #{disfluency_forward.4} parent=0 // pred_check_branch
    %47 = sbr.rel (0) target = $region57
  $region56: #{disfluency_forward.4} parent=0 // pred_region
    _
  $region57: #{disfluency_forward.4} parent=0 // pred_fallthru
    _
  // Predicated region
  $region58: #{disfluency_forward.4} parent=0 // pred_check
    _
  $region59: #{disfluency_forward.4} parent=0 // pred_check_branch
    %49 = sbr.rel (0) target = $region61
  $region60: #{disfluency_forward.4} parent=0 // pred_region
    _
  $region61: #{disfluency_forward.4} parent=0 // pred_fallthru
    _
  %v51 = vld [vmem:[%s0] sm:$0xf]
  %v52 = vld [vmem:[%s0 + $0x4] sm:$0xf]
  %v53 = vld [vmem:[%s0 + $0x8] sm:$0xf]
  %v54 = vld [vmem:[%s0 + $0xc] sm:$0xf]
  %v55 = vunpack.c.l.bf16 %v51
  %v56 = vunpack.c.l.bf16 %v52
  %v57 = vunpack.c.l.bf16 %v53
  %v58 = vunpack.c.l.bf16 %v54
  %v59 = vpack.c.bf16 %v56, %v55
  %v60 = vpack.c.bf16 %v58, %v57
  %v61 = vld [vmem:[%s1] sm:$0xff]
  %v62 = vld [vmem:[%s1 + $0x8] sm:$0xff]
  %v63 = vld [vmem:[%s1 + $0x10] sm:$0xff]
  %v64 = vld [vmem:[%s1 + $0x18] sm:$0xff]
  %v65 = vld [vmem:[%s1 + $0x20] sm:$0xff]
  %v66 = vld [vmem:[%s1 + $0x28] sm:$0xff]
  %v67 = vld [vmem:[%s1 + $0x30] sm:$0x11]
  %v68 = vld [vmem:[%s2] sm:$0x3]
  %v70 = vlaneseq
  %v71 = vshrl.u32 %v70, 7
  %v72 = vsub.s32 0, %v71
  %v73 = vrot.slane %v68, %v72
  %v74 = vlaneseq
  %v75 = vshrl.u32 %v74, 7
  %v76 = vsub.s32 1, %v75
  %v77 = vrot.slane %v68, %v76
  %v87 = vunpack.c.l.b16 %v61
  %v88 = vunpack.c.h.b16 %v61
  %v89 = vunpack.c.l.b16 %v62
  %v90 = vunpack.c.h.b16 %v62
  %v91 = vunpack.c.l.b16 %v63
  %v92 = vunpack.c.h.b16 %v63
  %v93 = vunpack.c.l.b16 %v64
  %v94 = vunpack.c.h.b16 %v64
  %v95 = vunpack.c.l.b16 %v65
  %v96 = vunpack.c.h.b16 %v65
  %v97 = vunpack.c.l.b16 %v66
  %v98 = vunpack.c.h.b16 %v66
  %v99 = vunpack.c.l.b16 %v67
  %v100 = vunpack.c.h.b16 %v67
  %v101 = vpack.c.b16 %v89, %v87
  %v102 = vpack.c.b16 %v90, %v88
  %v103 = vpack.c.b16 %v93, %v91
  %v104 = vpack.c.b16 %v94, %v92
  %v105 = vpack.c.b16 %v97, %v95
  %v106 = vpack.c.b16 %v98, %v96
  %v107 = vpack.c.b16 %v99, %v99
  %v108 = vpack.c.b16 %v100, %v100
  %vm115 = vcmask 408576
  %v117 = vsel %vm115, %v59, 0
  %v120 = vsel %vm115, %v60, 0
  %vm122 = vcmask 1040384
  %v124 = vsel %vm122, %v107, 0
  %v127 = vsel %vm122, %v108, 0
  %129 = vmatprep.subr.bf16.mxu0 %v102
  %130 = vmatpush1.bf16.msra.mxu0 %v101
  %131 = vmatprep.subr.bf16.mxu0 %v104
  %132 = vmatpush1.bf16.msra.mxu0 %v103
  %133 = vmatprep.subr.bf16.mxu0 %v106
  %134 = vmatpush1.bf16.msra.mxu0 %v105
  %135 = vmatprep.subr.bf16.mxu0 %v127
  %136 = vmatpush1.bf16.msra.mxu0 %v124
  %137 = vmatprep.subr.bf16.mxu0 0
  %138 = vmatpush1.bf16.msra.mxu0 0
  %139 = vmatprep.subr.bf16.mxu0 0
  %140 = vmatpush1.bf16.msra.mxu0 0
  %141 = vmatprep.subr.bf16.mxu0 0
  %142 = vmatpush1.bf16.msra.mxu0 0
  %143 = vmatprep.subr.bf16.mxu0 0
  %144 = vmatpush1.bf16.msra.mxu0 0
  %145 = vmatprep.subr.bf16.mxu0 0
  %146 = vmatpush1.bf16.msra.mxu0 0
  %147 = vmatprep.subr.bf16.mxu0 0
  %148 = vmatpush1.bf16.msra.mxu0 0
  %149 = vmatprep.subr.bf16.mxu0 0
  %150 = vmatpush1.bf16.msra.mxu0 0
  %151 = vmatprep.subr.bf16.mxu0 0
  %152 = vmatpush1.bf16.msra.mxu0 0
  %153 = vmatprep.subr.bf16.mxu0 0
  %154 = vmatpush1.bf16.msra.mxu0 0
  %155 = vmatprep.subr.bf16.mxu0 0
  %156 = vmatpush1.bf16.msra.mxu0 0
  %157 = vmatprep.subr.bf16.mxu0 0
  %158 = vmatpush1.bf16.msra.mxu0 0
  %159 = vmatprep.subr.bf16.mxu0 0
  %160 = vmatpush1.bf16.msra.mxu0 0
  %161 = vmatprep.mubr.bf16.mxu0 0
  %162 = vmatmul.mubr.bf16.gmra.mrb[0].mxu0 %v117
  %v163 = vpop.f32.mrb[0].mxu0
  %v164 = vadd.f32 %v73, %v163
  %v165 = vpop.f32.mrb[0].mxu0
  %v166 = vadd.f32 %v77, %v165
  %v167 = vpop.f32.mrb[0].mxu0
  %v168 = vadd.f32 %v73, %v167
  %v169 = vpop.f32.mrb[0].mxu0
  %v170 = vadd.f32 %v77, %v169
  %171 = vmatprep.mubr.bf16.mxu0 0
  %172 = vmatmul.mubr.bf16.gmra.mrb[0].mxu0 %v120
  %v173 = vpop.f32.mrb[0].mxu0
  %v174 = vadd.f32 %v73, %v173
  %v175 = vpop.f32.mrb[0].mxu0
  %v176 = vadd.f32 %v77, %v175
  %v177 = vpop.f32.mrb[0].mxu0
  %v178 = vadd.f32 %v73, %v177
  %v179 = vpop.f32.mrb[0].mxu0
  %v180 = vadd.f32 %v77, %v179
  %181 = vdwg.mxu0
  %186 = vrot.lane.b32.xlu0 %v164, 78
  %v187 = vpop.permute.xlu0 %186
  %188 = vrot.lane.b32.xlu0 %v168, 78
  %v189 = vpop.permute.xlu0 %188
  %190 = vrot.lane.b32.xlu0 %v174, 78
  %v191 = vpop.permute.xlu0 %190
  %192 = vrot.lane.b32.xlu0 %v178, 78
  %v193 = vpop.permute.xlu0 %192
  %v198 = vmul.f32 %v164, %v187
  %v199 = vmul.f32 %v168, %v189
  %v200 = vmul.f32 %v164, %v191
  %v201 = vmul.f32 %v168, %v193
  %v202 = vmul.f32 %v174, %v187
  %v203 = vmul.f32 %v178, %v189
  %v204 = vmul.f32 %v174, %v191
  %v205 = vmul.f32 %v178, %v193
  %v206 = vld [vmem:[%s5] sm:$0xff]
  %v207 = vld [vmem:[%s5 + $0x8] sm:$0xff]
  %v208 = vld [vmem:[%s5 + $0x10] sm:$0xff]
  %v209 = vld [vmem:[%s5 + $0x18] sm:$0xff]
  %v210 = vld [vmem:[%s5 + $0x20] sm:$0xff]
  %v211 = vld [vmem:[%s5 + $0x28] sm:$0xff]
  %v212 = vld [vmem:[%s5 + $0x30] sm:$0x3]
  %v214 = vsel %vm115, %v198, 0
  %v217 = vsel %vm115, %v199, 0
  %v220 = vsel %vm115, %v200, 0
  %v223 = vsel %vm115, %v201, 0
  %v226 = vsel %vm115, %v202, 0
  %v229 = vsel %vm115, %v203, 0
  %v232 = vsel %vm115, %v204, 0
  %v235 = vsel %vm115, %v205, 0
  %vm237 = vcmask 1041408
  %v239 = vsel %vm237, %v212, 0
  %241 = vmatprep.subr.mxu0 0.0
  %242 = vmatpush1.msra.mxu0 %v206
  %243 = vmatprep.subr.mxu0 0.0
  %244 = vmatpush1.msra.mxu0 %v207
  %245 = vmatprep.subr.mxu0 0.0
  %246 = vmatpush1.msra.mxu0 %v208
  %247 = vmatprep.subr.mxu0 0.0
  %248 = vmatpush1.msra.mxu0 %v209
  %249 = vmatprep.subr.mxu0 0.0
  %250 = vmatpush1.msra.mxu0 %v210
  %251 = vmatprep.subr.mxu0 0.0
  %252 = vmatpush1.msra.mxu0 %v211
  %253 = vmatprep.subr.mxu0 0.0
  %254 = vmatpush1.msra.mxu0 %v239
  %255 = vmatprep.subr.mxu0 0.0
  %256 = vmatpush1.msra.mxu0 0.0
  %257 = vmatprep.subr.mxu0 0.0
  %258 = vmatpush1.msra.mxu0 0.0
  %259 = vmatprep.subr.mxu0 0.0
  %260 = vmatpush1.msra.mxu0 0.0
  %261 = vmatprep.subr.mxu0 0.0
  %262 = vmatpush1.msra.mxu0 0.0
  %263 = vmatprep.subr.mxu0 0.0
  %264 = vmatpush1.msra.mxu0 0.0
  %265 = vmatprep.subr.mxu0 0.0
  %266 = vmatpush1.msra.mxu0 0.0
  %267 = vmatprep.subr.mxu0 0.0
  %268 = vmatpush1.msra.mxu0 0.0
  %269 = vmatprep.subr.mxu0 0.0
  %270 = vmatpush1.msra.mxu0 0.0
  %271 = vmatprep.subr.mxu0 0.0
  %272 = vmatpush1.msra.mxu0 0.0
  %273 = vmatprep.subr.mxu0 0.0
  %274 = vmatpush1.msra.mxu0 0.0
  %275 = vmatprep.subr.mxu0 0.0
  %276 = vmatpush1.msra.mxu0 0.0
  %277 = vmatprep.subr.mxu0 0.0
  %278 = vmatpush1.msra.mxu0 0.0
  %279 = vmatprep.subr.mxu0 0.0
  %280 = vmatpush1.msra.mxu0 0.0
  %281 = vmatprep.subr.mxu0 0.0
  %282 = vmatpush1.msra.mxu0 0.0
  %283 = vmatprep.subr.mxu0 0.0
  %284 = vmatpush1.msra.mxu0 0.0
  %285 = vmatprep.subr.mxu0 0.0
  %286 = vmatpush1.msra.mxu0 0.0
  %287 = vmatprep.subr.mxu0 0.0
  %288 = vmatpush1.msra.mxu0 0.0
  %289 = vmatprep.subr.mxu0 0.0
  %290 = vmatpush1.msra.mxu0 0.0
  %291 = vmatprep.subr.mxu0 0.0
  %292 = vmatpush1.msra.mxu0 0.0
  %293 = vmatprep.subr.mxu0 0.0
  %294 = vmatpush1.msra.mxu0 0.0
  %295 = vmatprep.subr.mxu0 0.0
  %296 = vmatpush1.msra.mxu0 0.0
  %297 = vmatprep.subr.mxu0 0.0
  %298 = vmatpush1.msra.mxu0 0.0
  %299 = vmatprep.subr.mxu0 0.0
  %300 = vmatpush1.msra.mxu0 0.0
  %301 = vmatprep.subr.mxu0 0.0
  %302 = vmatpush1.msra.mxu0 0.0
  %303 = vmatprep.subr.mxu0 0.0
  %304 = vmatpush1.msra.mxu0 0.0
  %305 = vmatprep.mubr.f32.mxu0 0.0
  %306 = vmatmul.mubr.f32.gmra.mrb[0].mxu0 %v214
  %v307 = vpop.f32.mrb[0].mxu0
  %v308 = vadd.f32 0.0, %v307
  %v309 = vpop.f32.mrb[0].mxu0
  %310 = vmatprep.mubr.f32.mxu0 0.0
  %311 = vmatmul.mubr.f32.gmra.mrb[0].mxu0 %v217
  %v312 = vpop.f32.mrb[0].mxu0
  %v313 = vadd.f32 0.0, %v312
  %v314 = vpop.f32.mrb[0].mxu0
  %315 = vmatprep.mubr.f32.mxu0 0.0
  %316 = vmatmul.mubr.f32.gmra.mrb[0].mxu0 %v220
  %v317 = vpop.f32.mrb[0].mxu0
  %v318 = vadd.f32 0.0, %v317
  %v319 = vpop.f32.mrb[0].mxu0
  %320 = vmatprep.mubr.f32.mxu0 0.0
  %321 = vmatmul.mubr.f32.gmra.mrb[0].mxu0 %v223
  %v322 = vpop.f32.mrb[0].mxu0
  %v323 = vadd.f32 0.0, %v322
  %v324 = vpop.f32.mrb[0].mxu0
  %325 = vmatprep.mubr.f32.mxu0 0.0
  %326 = vmatmul.mubr.f32.gmra.mrb[0].mxu0 %v226
  %v327 = vpop.f32.mrb[0].mxu0
  %v328 = vadd.f32 0.0, %v327
  %v329 = vpop.f32.mrb[0].mxu0
  %330 = vmatprep.mubr.f32.mxu0 0.0
  %331 = vmatmul.mubr.f32.gmra.mrb[0].mxu0 %v229
  %v332 = vpop.f32.mrb[0].mxu0
  %v333 = vadd.f32 0.0, %v332
  %v334 = vpop.f32.mrb[0].mxu0
  %335 = vmatprep.mubr.f32.mxu0 0.0
  %336 = vmatmul.mubr.f32.gmra.mrb[0].mxu0 %v232
  %v337 = vpop.f32.mrb[0].mxu0
  %v338 = vadd.f32 0.0, %v337
  %v339 = vpop.f32.mrb[0].mxu0
  %340 = vmatprep.mubr.f32.mxu0 0.0
  %341 = vmatmul.mubr.f32.gmra.mrb[0].mxu0 %v235
  %v342 = vpop.f32.mrb[0].mxu0
  %v343 = vadd.f32 0.0, %v342
  %v344 = vpop.f32.mrb[0].mxu0
  %345 = vdwg.mxu0
  %vm346 = vcmask 80896
  %v347 = vsel %vm346, %v308, -inf
  %v348 = vsel %vm346, %v318, -inf
  %v349 = vmax.f32 %v347, %v348
  %v350 = vsel %vm346, %v313, -inf
  %v351 = vsel %vm346, %v323, -inf
  %v352 = vmax.f32 %v350, %v351
  %v353 = vsel %vm346, %v328, -inf
  %v354 = vsel %vm346, %v338, -inf
  %v355 = vmax.f32 %v353, %v354
  %v356 = vsel %vm346, %v333, -inf
  %v357 = vsel %vm346, %v343, -inf
  %v358 = vmax.f32 %v356, %v357
  %v359 = vsub.f32 %v308, %v349
  %v360 = vsub.f32 %v313, %v352
  %v361 = vsub.f32 %v318, %v349
  %v362 = vsub.f32 %v323, %v352
  %v363 = vsub.f32 %v328, %v355
  %v364 = vsub.f32 %v333, %v358
  %v365 = vsub.f32 %v338, %v355
  %v366 = vsub.f32 %v343, %v358
  %v367 = vmul.f32 %v359, 1.442695
  %v368 = vpow.pop %v367
  %v369 = vmul.f32 %v360, 1.442695
  %v370 = vpow.pop %v369
  %v371 = vmul.f32 %v361, 1.442695
  %v372 = vpow.pop %v371
  %v373 = vmul.f32 %v362, 1.442695
  %v374 = vpow.pop %v373
  %v375 = vmul.f32 %v363, 1.442695
  %v376 = vpow.pop %v375
  %v377 = vmul.f32 %v364, 1.442695
  %v378 = vpow.pop %v377
  %v379 = vmul.f32 %v365, 1.442695
  %v380 = vpow.pop %v379
  %v381 = vmul.f32 %v366, 1.442695
  %v382 = vpow.pop %v381
  %v383 = vsel %vm346, %v368, 0.0
  %v384 = vsel %vm346, %v372, 0.0
  %v385 = vadd.f32 %v383, %v384
  %v386 = vsel %vm346, %v370, 0.0
  %v387 = vsel %vm346, %v374, 0.0
  %v388 = vadd.f32 %v386, %v387
  %v389 = vsel %vm346, %v376, 0.0
  %v390 = vsel %vm346, %v380, 0.0
  %v391 = vadd.f32 %v389, %v390
  %v392 = vsel %vm346, %v378, 0.0
  %v393 = vsel %vm346, %v382, 0.0
  %v394 = vadd.f32 %v392, %v393
  %v395 = vrcp.pop %v385
  %v396 = vrcp.pop %v388
  %v397 = vrcp.pop %v391
  %v398 = vrcp.pop %v394
  %v399 = vmul.f32 %v368, %v395
  %v400 = vmul.f32 %v370, %v396
  %v401 = vmul.f32 %v372, %v395
  %v402 = vmul.f32 %v374, %v396
  %v403 = vmul.f32 %v376, %v397
  %v404 = vmul.f32 %v378, %v398
  %v405 = vmul.f32 %v380, %v397
  %v406 = vmul.f32 %v382, %v398
  %v407 = vld [vmem:[%s6] sm:$0xff]
  %v408 = vld [vmem:[%s6 + $0x8] sm:$0x3]
  %v410 = vsel %vm346, %v399, 0
  %v413 = vsel %vm346, %v400, 0
  %v416 = vsel %vm346, %v401, 0
  %v419 = vsel %vm346, %v402, 0
  %v422 = vsel %vm346, %v403, 0
  %v425 = vsel %vm346, %v404, 0
  %v428 = vsel %vm346, %v405, 0
  %v431 = vsel %vm346, %v406, 0
  %v434 = vsel %vm237, %v408, 0
  %436 = vmatprep.subr.mxu0 0.0
  %437 = vmatpush1.msra.mxu0 %v407
  %438 = vmatprep.subr.mxu0 0.0
  %439 = vmatpush1.msra.mxu0 %v434
  %440 = vmatprep.subr.mxu0 0.0
  %441 = vmatpush1.msra.mxu0 0.0
  %442 = vmatprep.subr.mxu0 0.0
  %443 = vmatpush1.msra.mxu0 0.0
  %444 = vmatprep.subr.mxu0 0.0
  %445 = vmatpush1.msra.mxu0 0.0
  %446 = vmatprep.subr.mxu0 0.0
  %447 = vmatpush1.msra.mxu0 0.0
  %448 = vmatprep.subr.mxu0 0.0
  %449 = vmatpush1.msra.mxu0 0.0
  %450 = vmatprep.subr.mxu0 0.0
  %451 = vmatpush1.msra.mxu0 0.0
  %452 = vmatprep.subr.mxu0 0.0
  %453 = vmatpush1.msra.mxu0 0.0
  %454 = vmatprep.subr.mxu0 0.0
  %455 = vmatpush1.msra.mxu0 0.0
  %456 = vmatprep.subr.mxu0 0.0
  %457 = vmatpush1.msra.mxu0 0.0
  %458 = vmatprep.subr.mxu0 0.0
  %459 = vmatpush1.msra.mxu0 0.0
  %460 = vmatprep.subr.mxu0 0.0
  %461 = vmatpush1.msra.mxu0 0.0
  %462 = vmatprep.subr.mxu0 0.0
  %463 = vmatpush1.msra.mxu0 0.0
  %464 = vmatprep.subr.mxu0 0.0
  %465 = vmatpush1.msra.mxu0 0.0
  %466 = vmatprep.subr.mxu0 0.0
  %467 = vmatpush1.msra.mxu0 0.0
  %468 = vmatprep.subr.mxu0 0.0
  %469 = vmatpush1.msra.mxu0 0.0
  %470 = vmatprep.subr.mxu0 0.0
  %471 = vmatpush1.msra.mxu0 0.0
  %472 = vmatprep.subr.mxu0 0.0
  %473 = vmatpush1.msra.mxu0 0.0
  %474 = vmatprep.subr.mxu0 0.0
  %475 = vmatpush1.msra.mxu0 0.0
  %476 = vmatprep.subr.mxu0 0.0
  %477 = vmatpush1.msra.mxu0 0.0
  %478 = vmatprep.subr.mxu0 0.0
  %479 = vmatpush1.msra.mxu0 0.0
  %480 = vmatprep.subr.mxu0 0.0
  %481 = vmatpush1.msra.mxu0 0.0
  %482 = vmatprep.subr.mxu0 0.0
  %483 = vmatpush1.msra.mxu0 0.0
  %484 = vmatprep.subr.mxu0 0.0
  %485 = vmatpush1.msra.mxu0 0.0
  %486 = vmatprep.subr.mxu0 0.0
  %487 = vmatpush1.msra.mxu0 0.0
  %488 = vmatprep.subr.mxu0 0.0
  %489 = vmatpush1.msra.mxu0 0.0
  %490 = vmatprep.subr.mxu0 0.0
  %491 = vmatpush1.msra.mxu0 0.0
  %492 = vmatprep.subr.mxu0 0.0
  %493 = vmatpush1.msra.mxu0 0.0
  %494 = vmatprep.subr.mxu0 0.0
  %495 = vmatpush1.msra.mxu0 0.0
  %496 = vmatprep.subr.mxu0 0.0
  %497 = vmatpush1.msra.mxu0 0.0
  %498 = vmatprep.subr.mxu0 0.0
  %499 = vmatpush1.msra.mxu0 0.0
  %500 = vmatprep.mubr.f32.mxu0 0.0
  %501 = vmatmul.mubr.f32.gmra.mrb[0].mxu0 %v410
  %v502 = vpop.f32.mrb[0].mxu0
  %v503 = vadd.f32 0.0, %v502
  %v504 = vpop.f32.mrb[0].mxu0
  %505 = vmatprep.mubr.f32.mxu0 0.0
  %506 = vmatmul.mubr.f32.gmra.mrb[0].mxu0 %v413
  %v507 = vpop.f32.mrb[0].mxu0
  %v508 = vadd.f32 0.0, %v507
  %v509 = vpop.f32.mrb[0].mxu0
  %510 = vmatprep.mubr.f32.mxu0 0.0
  %511 = vmatmul.mubr.f32.gmra.mrb[0].mxu0 %v416
  %v512 = vpop.f32.mrb[0].mxu0
  %v513 = vadd.f32 0.0, %v512
  %v514 = vpop.f32.mrb[0].mxu0
  %515 = vmatprep.mubr.f32.mxu0 0.0
  %516 = vmatmul.mubr.f32.gmra.mrb[0].mxu0 %v419
  %v517 = vpop.f32.mrb[0].mxu0
  %v518 = vadd.f32 0.0, %v517
  %v519 = vpop.f32.mrb[0].mxu0
  %520 = vmatprep.mubr.f32.mxu0 0.0
  %521 = vmatmul.mubr.f32.gmra.mrb[0].mxu0 %v422
  %v522 = vpop.f32.mrb[0].mxu0
  %v523 = vadd.f32 0.0, %v522
  %v524 = vpop.f32.mrb[0].mxu0
  %525 = vmatprep.mubr.f32.mxu0 0.0
  %526 = vmatmul.mubr.f32.gmra.mrb[0].mxu0 %v425
  %v527 = vpop.f32.mrb[0].mxu0
  %v528 = vadd.f32 0.0, %v527
  %v529 = vpop.f32.mrb[0].mxu0
  %530 = vmatprep.mubr.f32.mxu0 0.0
  %531 = vmatmul.mubr.f32.gmra.mrb[0].mxu0 %v428
  %v532 = vpop.f32.mrb[0].mxu0
  %v533 = vadd.f32 0.0, %v532
  %v534 = vpop.f32.mrb[0].mxu0
  %535 = vmatprep.mubr.f32.mxu0 0.0
  %536 = vmatmul.mubr.f32.gmra.mrb[0].mxu0 %v431
  %v537 = vpop.f32.mrb[0].mxu0
  %v538 = vadd.f32 0.0, %v537
  %v539 = vpop.f32.mrb[0].mxu0
  %540 = vdwg.mxu0
  %545 = vrot.lane.b32.xlu0 %v164, 28
  %v546 = vpop.permute.xlu0 %545
  %547 = vrot.lane.b32.xlu0 %v166, 28
  %v548 = vpop.permute.xlu0 %547
  %549 = vrot.lane.b32.xlu0 %v168, 28
  %v550 = vpop.permute.xlu0 %549
  %551 = vrot.lane.b32.xlu0 %v170, 28
  %v552 = vpop.permute.xlu0 %551
  %553 = vrot.lane.b32.xlu0 %v174, 28
  %v554 = vpop.permute.xlu0 %553
  %555 = vrot.lane.b32.xlu0 %v176, 28
  %v556 = vpop.permute.xlu0 %555
  %557 = vrot.lane.b32.xlu0 %v178, 28
  %v558 = vpop.permute.xlu0 %557
  %559 = vrot.lane.b32.xlu0 %v180, 28
  %v560 = vpop.permute.xlu0 %559
  %vm561 = vcmask 228352
  %v562 = vsel %vm561, %v546, %v548
  %v563 = vsel %vm561, %v550, %v552
  %v564 = vsel %vm561, %v554, %v556
  %v565 = vsel %vm561, %v558, %v560
  %v570 = vmul.f32 %v503, %v562
  %v571 = vmul.f32 %v508, %v563
  %v572 = vmul.f32 %v513, %v564
  %v573 = vmul.f32 %v518, %v565
  %v574 = vmul.f32 %v523, %v562
  %v575 = vmul.f32 %v528, %v563
  %v576 = vmul.f32 %v533, %v564
  %v577 = vmul.f32 %v538, %v565
  %v578 = vsel %vm115, %v570, 0.0
  %v579 = vsel %vm115, %v572, 0.0
  %v580 = vadd.f32 %v578, %v579
  %v581 = vsel %vm115, %v571, 0.0
  %v582 = vsel %vm115, %v573, 0.0
  %v583 = vadd.f32 %v581, %v582
  %v584 = vsel %vm115, %v574, 0.0
  %v585 = vsel %vm115, %v576, 0.0
  %v586 = vadd.f32 %v584, %v585
  %v587 = vsel %vm115, %v575, 0.0
  %v588 = vsel %vm115, %v577, 0.0
  %v589 = vadd.f32 %v587, %v588
  %v590 = vpack.c.bf16 %v583, %v580
  %v591 = vpack.c.bf16 %v589, %v586
  %v592 = vld [vmem:[%s3] sm:$0xf]
  %v593 = vld [vmem:[%s3 + $0x4] sm:$0xf]
  %v594 = vld [vmem:[%s3 + $0x8] sm:$0xf]
  %v595 = vld [vmem:[%s3 + $0xc] sm:$0xf]
  %v596 = vld [vmem:[%s3 + $0x10] sm:$0xf]
  %v597 = vld [vmem:[%s3 + $0x14] sm:$0xf]
  %v598 = vld [vmem:[%s3 + $0x18] sm:$0x1]
  %v599 = vld [vmem:[%s4] sm:$0x1]
  %v601 = vlaneseq
  %v602 = vshrl.u32 %v601, 7
  %v603 = vsub.s32 0, %v602
  %v604 = vrot.slane %v599, %v603
  %v613 = vunpack.c.l.b16 %v592
  %v614 = vunpack.c.l.b16 %v593
  %v615 = vunpack.c.l.b16 %v594
  %v616 = vunpack.c.l.b16 %v595
  %v617 = vunpack.c.l.b16 %v596
  %v618 = vunpack.c.l.b16 %v597
  %v619 = vunpack.c.l.b16 %v598
  %v620 = vpack.c.b16 %v614, %v613
  %v621 = vpack.c.b16 %v616, %v615
  %v622 = vpack.c.b16 %v618, %v617
  %v623 = vpack.c.b16 %v619, %v619
  %v628 = vsel %vm115, %v590, 0
  %v631 = vsel %vm115, %v591, 0
  %v634 = vsel %vm122, %v623, 0
  %636 = vmatprep.subr.bf16.mxu0 0
  %637 = vmatpush1.bf16.msra.mxu0 %v620
  %638 = vmatprep.subr.bf16.mxu0 0
  %639 = vmatpush1.bf16.msra.mxu0 %v621
  %640 = vmatprep.subr.bf16.mxu0 0
  %641 = vmatpush1.bf16.msra.mxu0 %v622
  %642 = vmatprep.subr.bf16.mxu0 0
  %643 = vmatpush1.bf16.msra.mxu0 %v634
  %644 = vmatprep.subr.bf16.mxu0 0
  %645 = vmatpush1.bf16.msra.mxu0 0
  %646 = vmatprep.subr.bf16.mxu0 0
  %647 = vmatpush1.bf16.msra.mxu0 0
  %648 = vmatprep.subr.bf16.mxu0 0
  %649 = vmatpush1.bf16.msra.mxu0 0
  %650 = vmatprep.subr.bf16.mxu0 0
  %651 = vmatpush1.bf16.msra.mxu0 0
  %652 = vmatprep.subr.bf16.mxu0 0
  %653 = vmatpush1.bf16.msra.mxu0 0
  %654 = vmatprep.subr.bf16.mxu0 0
  %655 = vmatpush1.bf16.msra.mxu0 0
  %656 = vmatprep.subr.bf16.mxu0 0
  %657 = vmatpush1.bf16.msra.mxu0 0
  %658 = vmatprep.subr.bf16.mxu0 0
  %659 = vmatpush1.bf16.msra.mxu0 0
  %660 = vmatprep.subr.bf16.mxu0 0
  %661 = vmatpush1.bf16.msra.mxu0 0
  %662 = vmatprep.subr.bf16.mxu0 0
  %663 = vmatpush1.bf16.msra.mxu0 0
  %664 = vmatprep.subr.bf16.mxu0 0
  %665 = vmatpush1.bf16.msra.mxu0 0
  %666 = vmatprep.subr.bf16.mxu0 0
  %667 = vmatpush1.bf16.msra.mxu0 0
  %668 = vmatprep.mubr.bf16.mxu0 0
  %669 = vmatmul.mubr.bf16.gmra.mrb[0].mxu0 %v628
  %v670 = vpop.f32.mrb[0].mxu0
  %v671 = vadd.f32 %v604, %v670
  %v672 = vpop.f32.mrb[0].mxu0
  %v673 = vpop.f32.mrb[0].mxu0
  %v674 = vadd.f32 %v604, %v673
  %v675 = vpop.f32.mrb[0].mxu0
  %676 = vmatprep.mubr.bf16.mxu0 0
  %677 = vmatmul.mubr.bf16.gmra.mrb[0].mxu0 %v631
  %v678 = vpop.f32.mrb[0].mxu0
  %v679 = vadd.f32 %v604, %v678
  %v680 = vpop.f32.mrb[0].mxu0
  %v681 = vpop.f32.mrb[0].mxu0
  %v682 = vadd.f32 %v604, %v681
  %v683 = vpop.f32.mrb[0].mxu0
  %684 = vdwg.mxu0
  %v685 = vadd.f32 %v55, %v671
  %v686 = vadd.f32 %v56, %v674
  %v687 = vadd.f32 %v57, %v679
  %v688 = vadd.f32 %v58, %v682
  %v689 = vld [vmem:[%s11] sm:$0x1]
  %v690 = vld [vmem:[%s12] sm:$0x1]
  %v691 = vsel %vm115, %v685, 0.0
  %692 = vadd.xlane.f32.xlu0 %v691
  %v693 = vpop.xlane.xlu0 %692
  %v694 = vsel %vm115, %v686, 0.0
  %695 = vadd.xlane.f32.xlu0 %v694
  %v696 = vpop.xlane.xlu0 %695
  %v697 = vsel %vm115, %v687, 0.0
  %698 = vadd.xlane.f32.xlu0 %v697
  %v699 = vpop.xlane.xlu0 %698
  %v700 = vsel %vm115, %v688, 0.0
  %701 = vadd.xlane.f32.xlu0 %v700
  %v702 = vpop.xlane.xlu0 %701
  %v703 = vrcp.pop 50.0
  %v704 = vmul.f32 %v693, %v703
  %v705 = vmul.f32 %v696, %v703
  %v706 = vmul.f32 %v699, %v703
  %v707 = vmul.f32 %v702, %v703
  %v708 = vsub.f32 %v685, %v704
  %v709 = vsub.f32 %v686, %v705
  %v710 = vsub.f32 %v687, %v706
  %v711 = vsub.f32 %v688, %v707
  %v712 = vmul.f32 %v708, %v708
  %v713 = vmul.f32 %v709, %v709
  %v714 = vmul.f32 %v710, %v710
  %v715 = vmul.f32 %v711, %v711
  %v716 = vsel %vm115, %v712, 0.0
  %717 = vadd.xlane.f32.xlu0 %v716
  %v718 = vpop.xlane.xlu0 %717
  %v719 = vsel %vm115, %v713, 0.0
  %720 = vadd.xlane.f32.xlu0 %v719
  %v721 = vpop.xlane.xlu0 %720
  %v722 = vsel %vm115, %v714, 0.0
  %723 = vadd.xlane.f32.xlu0 %v722
  %v724 = vpop.xlane.xlu0 %723
  %v725 = vsel %vm115, %v715, 0.0
  %726 = vadd.xlane.f32.xlu0 %v725
  %v727 = vpop.xlane.xlu0 %726
  %v728 = vmul.f32 %v718, %v703
  %v729 = vmul.f32 %v721, %v703
  %v730 = vmul.f32 %v724, %v703
  %v731 = vmul.f32 %v727, %v703
  %v732 = vadd.f32 %v728, 1e-05
  %v733 = vadd.f32 %v729, 1e-05
  %v734 = vadd.f32 %v730, 1e-05
  %v735 = vadd.f32 %v731, 1e-05
  %v736 = vrsqrt.pop %v732
  %v737 = vrsqrt.pop %v733
  %v738 = vrsqrt.pop %v734
  %v739 = vrsqrt.pop %v735
  %v740 = vmul.f32 %v708, %v736
  %v741 = vmul.f32 %v709, %v737
  %v742 = vmul.f32 %v710, %v738
  %v743 = vmul.f32 %v711, %v739
  %v745 = vlaneseq
  %v746 = vshrl.u32 %v745, 7
  %v747 = vsub.s32 0, %v746
  %v748 = vrot.slane %v689, %v747
  %v750 = vmul.f32 %v740, %v748
  %v751 = vmul.f32 %v741, %v748
  %v752 = vmul.f32 %v742, %v748
  %v753 = vmul.f32 %v743, %v748
  %v755 = vlaneseq
  %v756 = vshrl.u32 %v755, 7
  %v757 = vsub.s32 0, %v756
  %v758 = vrot.slane %v690, %v757
  %v760 = vadd.f32 %v750, %v758
  %v761 = vadd.f32 %v751, %v758
  %v762 = vadd.f32 %v752, %v758
  %v763 = vadd.f32 %v753, %v758
  %v764 = vpack.c.bf16 %v761, %v760
  %v765 = vpack.c.bf16 %v763, %v762
  %v766 = vld [vmem:[%s7] sm:$0xff]
  %v767 = vld [vmem:[%s7 + $0x8] sm:$0xff]
  %v768 = vld [vmem:[%s7 + $0x40] sm:$0xff]
  %v769 = vld [vmem:[%s7 + $0x48] sm:$0xff]
  %v770 = vld [vmem:[%s7 + $0x80] sm:$0xff]
  %v771 = vld [vmem:[%s7 + $0x88] sm:$0xff]
  %v772 = vld [vmem:[%s7 + $0xc0] sm:$0xff]
  %v773 = vld [vmem:[%s7 + $0xc8] sm:$0xff]
  %v774 = vld [vmem:[%s7 + $0x100] sm:$0xff]
  %v775 = vld [vmem:[%s7 + $0x108] sm:$0xff]
  %v776 = vld [vmem:[%s7 + $0x140] sm:$0xff]
  %v777 = vld [vmem:[%s7 + $0x148] sm:$0xff]
  %v778 = vld [vmem:[%s7 + $0x180] sm:$0x11]
  %v779 = vld [vmem:[%s7 + $0x188] sm:$0x11]
  %v780 = vld [vmem:[%s8] sm:$0xf]
  %v782 = vlaneseq
  %v783 = vshrl.u32 %v782, 7
  %v784 = vsub.s32 0, %v783
  %v785 = vrot.slane %v780, %v784
  %v786 = vlaneseq
  %v787 = vshrl.u32 %v786, 7
  %v788 = vsub.s32 1, %v787
  %v789 = vrot.slane %v780, %v788
  %v790 = vlaneseq
  %v791 = vshrl.u32 %v790, 7
  %v792 = vsub.s32 2, %v791
  %v793 = vrot.slane %v780, %v792
  %v794 = vlaneseq
  %v795 = vshrl.u32 %v794, 7
  %v796 = vsub.s32 3, %v795
  %v797 = vrot.slane %v780, %v796
  %v816 = vunpack.c.l.b16 %v766
  %v817 = vunpack.c.h.b16 %v766
  %v818 = vunpack.c.l.b16 %v767
  %v819 = vunpack.c.h.b16 %v767
  %v820 = vunpack.c.l.b16 %v768
  %v821 = vunpack.c.h.b16 %v768
  %v822 = vunpack.c.l.b16 %v769
  %v823 = vunpack.c.h.b16 %v769
  %v824 = vunpack.c.l.b16 %v770
  %v825 = vunpack.c.h.b16 %v770
  %v826 = vunpack.c.l.b16 %v771
  %v827 = vunpack.c.h.b16 %v771
  %v828 = vunpack.c.l.b16 %v772
  %v829 = vunpack.c.h.b16 %v772
  %v830 = vunpack.c.l.b16 %v773
  %v831 = vunpack.c.h.b16 %v773
  %v832 = vunpack.c.l.b16 %v774
  %v833 = vunpack.c.h.b16 %v774
  %v834 = vunpack.c.l.b16 %v775
  %v835 = vunpack.c.h.b16 %v775
  %v836 = vunpack.c.l.b16 %v776
  %v837 = vunpack.c.h.b16 %v776
  %v838 = vunpack.c.l.b16 %v777
  %v839 = vunpack.c.h.b16 %v777
  %v840 = vunpack.c.l.b16 %v778
  %v841 = vunpack.c.h.b16 %v778
  %v842 = vunpack.c.l.b16 %v779
  %v843 = vunpack.c.h.b16 %v779
  %v844 = vpack.c.b16 %v820, %v816
  %v845 = vpack.c.b16 %v821, %v817
  %v846 = vpack.c.b16 %v822, %v818
  %v847 = vpack.c.b16 %v823, %v819
  %v848 = vpack.c.b16 %v828, %v824
  %v849 = vpack.c.b16 %v829, %v825
  %v850 = vpack.c.b16 %v830, %v826
  %v851 = vpack.c.b16 %v831, %v827
  %v852 = vpack.c.b16 %v836, %v832
  %v853 = vpack.c.b16 %v837, %v833
  %v854 = vpack.c.b16 %v838, %v834
  %v855 = vpack.c.b16 %v839, %v835
  %v856 = vpack.c.b16 %v840, %v840
  %v857 = vpack.c.b16 %v841, %v841
  %v858 = vpack.c.b16 %v842, %v842
  %v859 = vpack.c.b16 %v843, %v843
  %v873 = vsel %vm115, %v764, 0
  %v876 = vsel %vm115, %v765, 0
  %v879 = vsel %vm122, %v856, 0
  %v882 = vsel %vm122, %v857, 0
  %v885 = vsel %vm122, %v858, 0
  %v888 = vsel %vm122, %v859, 0
  %890 = vmatprep.subr.bf16.mxu0 %v845
  %891 = vmatpush1.bf16.msra.mxu0 %v844
  %892 = vmatprep.subr.bf16.mxu0 %v849
  %893 = vmatpush1.bf16.msra.mxu0 %v848
  %894 = vmatprep.subr.bf16.mxu0 %v853
  %895 = vmatpush1.bf16.msra.mxu0 %v852
  %896 = vmatprep.subr.bf16.mxu0 %v882
  %897 = vmatpush1.bf16.msra.mxu0 %v879
  %898 = vmatprep.subr.bf16.mxu0 0
  %899 = vmatpush1.bf16.msra.mxu0 0
  %900 = vmatprep.subr.bf16.mxu0 0
  %901 = vmatpush1.bf16.msra.mxu0 0
  %902 = vmatprep.subr.bf16.mxu0 0
  %903 = vmatpush1.bf16.msra.mxu0 0
  %904 = vmatprep.subr.bf16.mxu0 0
  %905 = vmatpush1.bf16.msra.mxu0 0
  %906 = vmatprep.subr.bf16.mxu0 0
  %907 = vmatpush1.bf16.msra.mxu0 0
  %908 = vmatprep.subr.bf16.mxu0 0
  %909 = vmatpush1.bf16.msra.mxu0 0
  %910 = vmatprep.subr.bf16.mxu0 0
  %911 = vmatpush1.bf16.msra.mxu0 0
  %912 = vmatprep.subr.bf16.mxu0 0
  %913 = vmatpush1.bf16.msra.mxu0 0
  %914 = vmatprep.subr.bf16.mxu0 0
  %915 = vmatpush1.bf16.msra.mxu0 0
  %916 = vmatprep.subr.bf16.mxu0 0
  %917 = vmatpush1.bf16.msra.mxu0 0
  %918 = vmatprep.subr.bf16.mxu0 0
  %919 = vmatpush1.bf16.msra.mxu0 0
  %920 = vmatprep.subr.bf16.mxu0 0
  %921 = vmatpush1.bf16.msra.mxu0 0
  %922 = vmatprep.mubr.bf16.mxu0 0
  %923 = vmatmul.mubr.bf16.gmra.mrb[0].mxu0 %v873
  %v924 = vpop.f32.mrb[0].mxu0
  %v925 = vadd.f32 %v785, %v924
  %v926 = vpop.f32.mrb[0].mxu0
  %v927 = vadd.f32 %v789, %v926
  %v928 = vpop.f32.mrb[0].mxu0
  %v929 = vadd.f32 %v785, %v928
  %v930 = vpop.f32.mrb[0].mxu0
  %v931 = vadd.f32 %v789, %v930
  %932 = vmatprep.mubr.bf16.mxu0 0
  %933 = vmatmul.mubr.bf16.gmra.mrb[0].mxu0 %v876
  %v934 = vpop.f32.mrb[0].mxu0
  %v935 = vadd.f32 %v785, %v934
  %v936 = vpop.f32.mrb[0].mxu0
  %v937 = vadd.f32 %v789, %v936
  %v938 = vpop.f32.mrb[0].mxu0
  %v939 = vadd.f32 %v785, %v938
  %v940 = vpop.f32.mrb[0].mxu0
  %v941 = vadd.f32 %v789, %v940
  %942 = vdwg.mxu0
  %943 = vmatprep.subr.bf16.mxu0 %v847
  %944 = vmatpush1.bf16.msra.mxu0 %v846
  %945 = vmatprep.subr.bf16.mxu0 %v851
  %946 = vmatpush1.bf16.msra.mxu0 %v850
  %947 = vmatprep.subr.bf16.mxu0 %v855
  %948 = vmatpush1.bf16.msra.mxu0 %v854
  %949 = vmatprep.subr.bf16.mxu0 %v888
  %950 = vmatpush1.bf16.msra.mxu0 %v885
  %951 = vmatprep.subr.bf16.mxu0 0
  %952 = vmatpush1.bf16.msra.mxu0 0
  %953 = vmatprep.subr.bf16.mxu0 0
  %954 = vmatpush1.bf16.msra.mxu0 0
  %955 = vmatprep.subr.bf16.mxu0 0
  %956 = vmatpush1.bf16.msra.mxu0 0
  %957 = vmatprep.subr.bf16.mxu0 0
  %958 = vmatpush1.bf16.msra.mxu0 0
  %959 = vmatprep.subr.bf16.mxu0 0
  %960 = vmatpush1.bf16.msra.mxu0 0
  %961 = vmatprep.subr.bf16.mxu0 0
  %962 = vmatpush1.bf16.msra.mxu0 0
  %963 = vmatprep.subr.bf16.mxu0 0
  %964 = vmatpush1.bf16.msra.mxu0 0
  %965 = vmatprep.subr.bf16.mxu0 0
  %966 = vmatpush1.bf16.msra.mxu0 0
  %967 = vmatprep.subr.bf16.mxu0 0
  %968 = vmatpush1.bf16.msra.mxu0 0
  %969 = vmatprep.subr.bf16.mxu0 0
  %970 = vmatpush1.bf16.msra.mxu0 0
  %971 = vmatprep.subr.bf16.mxu0 0
  %972 = vmatpush1.bf16.msra.mxu0 0
  %973 = vmatprep.subr.bf16.mxu0 0
  %974 = vmatpush1.bf16.msra.mxu0 0
  %975 = vmatprep.mubr.bf16.mxu0 0
  %976 = vmatmul.mubr.bf16.gmra.mrb[0].mxu0 %v873
  %v977 = vpop.f32.mrb[0].mxu0
  %v978 = vadd.f32 %v793, %v977
  %v979 = vpop.f32.mrb[0].mxu0
  %v980 = vadd.f32 %v797, %v979
  %v981 = vpop.f32.mrb[0].mxu0
  %v982 = vadd.f32 %v793, %v981
  %v983 = vpop.f32.mrb[0].mxu0
  %v984 = vadd.f32 %v797, %v983
  %985 = vmatprep.mubr.bf16.mxu0 0
  %986 = vmatmul.mubr.bf16.gmra.mrb[0].mxu0 %v876
  %v987 = vpop.f32.mrb[0].mxu0
  %v988 = vadd.f32 %v793, %v987
  %v989 = vpop.f32.mrb[0].mxu0
  %v990 = vadd.f32 %v797, %v989
  %v991 = vpop.f32.mrb[0].mxu0
  %v992 = vadd.f32 %v793, %v991
  %v993 = vpop.f32.mrb[0].mxu0
  %v994 = vadd.f32 %v797, %v993
  %995 = vdwg.mxu0
  %v996 = vmax.f32 %v925, 0.0
  %v997 = vmax.f32 %v927, 0.0
  %v998 = vmax.f32 %v978, 0.0
  %v999 = vmax.f32 %v980, 0.0
  %v1000 = vmax.f32 %v929, 0.0
  %v1001 = vmax.f32 %v931, 0.0
  %v1002 = vmax.f32 %v982, 0.0
  %v1003 = vmax.f32 %v984, 0.0
  %v1004 = vmax.f32 %v935, 0.0
  %v1005 = vmax.f32 %v937, 0.0
  %v1006 = vmax.f32 %v988, 0.0
  %v1007 = vmax.f32 %v990, 0.0
  %v1008 = vmax.f32 %v939, 0.0
  %v1009 = vmax.f32 %v941, 0.0
  %v1010 = vmax.f32 %v992, 0.0
  %v1011 = vmax.f32 %v994, 0.0
  %v1012 = vpack.c.bf16 %v1000, %v996
  %v1013 = vpack.c.bf16 %v1001, %v997
  %v1014 = vpack.c.bf16 %v1002, %v998
  %v1015 = vpack.c.bf16 %v1003, %v999
  %v1016 = vpack.c.bf16 %v1008, %v1004
  %v1017 = vpack.c.bf16 %v1009, %v1005
  %v1018 = vpack.c.bf16 %v1010, %v1006
  %v1019 = vpack.c.bf16 %v1011, %v1007
  %v1020 = vld [vmem:[%s9] sm:$0xf]
  %v1021 = vld [vmem:[%s9 + $0x4] sm:$0xf]
  %v1022 = vld [vmem:[%s9 + $0x8] sm:$0xf]
  %v1023 = vld [vmem:[%s9 + $0xc] sm:$0xf]
  %v1024 = vld [vmem:[%s9 + $0x10] sm:$0xf]
  %v1025 = vld [vmem:[%s9 + $0x14] sm:$0xf]
  %v1026 = vld [vmem:[%s9 + $0x18] sm:$0xf]
  %v1027 = vld [vmem:[%s9 + $0x1c] sm:$0xf]
  %v1028 = vld [vmem:[%s9 + $0x20] sm:$0xf]
  %v1029 = vld [vmem:[%s9 + $0x24] sm:$0xf]
  %v1030 = vld [vmem:[%s9 + $0x28] sm:$0xf]
  %v1031 = vld [vmem:[%s9 + $0x2c] sm:$0xf]
  %v1032 = vld [vmem:[%s9 + $0x30] sm:$0xf]
  %v1033 = vld [vmem:[%s9 + $0x34] sm:$0xf]
  %v1034 = vld [vmem:[%s9 + $0x38] sm:$0xf]
  %v1035 = vld [vmem:[%s9 + $0x3c] sm:$0xf]
  %v1036 = vld [vmem:[%s9 + $0x40] sm:$0xf]
  %v1037 = vld [vmem:[%s9 + $0x44] sm:$0xf]
  %v1038 = vld [vmem:[%s9 + $0x48] sm:$0xf]
  %v1039 = vld [vmem:[%s9 + $0x4c] sm:$0xf]
  %v1040 = vld [vmem:[%s9 + $0x50] sm:$0xf]
  %v1041 = vld [vmem:[%s9 + $0x54] sm:$0xf]
  %v1042 = vld [vmem:[%s9 + $0x58] sm:$0xf]
  %v1043 = vld [vmem:[%s9 + $0x5c] sm:$0xf]
  %v1044 = vld [vmem:[%s9 + $0x60] sm:$0xf]
  %v1045 = vld [vmem:[%s9 + $0x64] sm:$0xf]
  %v1046 = vld [vmem:[%s9 + $0x68] sm:$0xf]
  %v1047 = vld [vmem:[%s9 + $0x6c] sm:$0xf]
  %v1048 = vld [vmem:[%s9 + $0x70] sm:$0xf]
  %v1049 = vld [vmem:[%s9 + $0x74] sm:$0xf]
  %v1050 = vld [vmem:[%s9 + $0x78] sm:$0xf]
  %v1051 = vld [vmem:[%s9 + $0x7c] sm:$0xf]
  %v1052 = vld [vmem:[%s9 + $0x80] sm:$0xf]
  %v1053 = vld [vmem:[%s9 + $0x84] sm:$0xf]
  %v1054 = vld [vmem:[%s9 + $0x88] sm:$0xf]
  %v1055 = vld [vmem:[%s9 + $0x8c] sm:$0xf]
  %v1056 = vld [vmem:[%s9 + $0x90] sm:$0xf]
  %v1057 = vld [vmem:[%s9 + $0x94] sm:$0xf]
  %v1058 = vld [vmem:[%s9 + $0x98] sm:$0xf]
  %v1059 = vld [vmem:[%s9 + $0x9c] sm:$0xf]
  %v1060 = vld [vmem:[%s9 + $0xa0] sm:$0xf]
  %v1061 = vld [vmem:[%s9 + $0xa4] sm:$0xf]
  %v1062 = vld [vmem:[%s9 + $0xa8] sm:$0xf]
  %v1063 = vld [vmem:[%s9 + $0xac] sm:$0xf]
  %v1064 = vld [vmem:[%s9 + $0xb0] sm:$0xf]
  %v1065 = vld [vmem:[%s9 + $0xb4] sm:$0xf]
  %v1066 = vld [vmem:[%s9 + $0xb8] sm:$0xf]
  %v1067 = vld [vmem:[%s9 + $0xbc] sm:$0xf]
  %v1068 = vld [vmem:[%s9 + $0xc0] sm:$0xf]
  %v1069 = vld [vmem:[%s9 + $0xc4] sm:$0xf]
  %v1070 = vld [vmem:[%s9 + $0xc8] sm:$0xf]
  %v1071 = vld [vmem:[%s9 + $0xcc] sm:$0xf]
  %v1072 = vld [vmem:[%s9 + $0xd0] sm:$0xf]
  %v1073 = vld [vmem:[%s9 + $0xd4] sm:$0xf]
  %v1074 = vld [vmem:[%s9 + $0xd8] sm:$0xf]
  %v1075 = vld [vmem:[%s9 + $0xdc] sm:$0xf]
  %v1076 = vld [vmem:[%s9 + $0xe0] sm:$0xf]
  %v1077 = vld [vmem:[%s9 + $0xe4] sm:$0xf]
  %v1078 = vld [vmem:[%s9 + $0xe8] sm:$0xf]
  %v1079 = vld [vmem:[%s9 + $0xec] sm:$0xf]
  %v1080 = vld [vmem:[%s9 + $0xf0] sm:$0xf]
  %v1081 = vld [vmem:[%s9 + $0xf4] sm:$0xf]
  %v1082 = vld [vmem:[%s9 + $0xf8] sm:$0xf]
  %v1083 = vld [vmem:[%s9 + $0xfc] sm:$0xf]
  %s1084 = scalar_lea.vmem %s7, 16
  %v1085 = vld [vmem:[%s1084] sm:$0xff]
  %v1086 = vld [vmem:[%s1084 + $0x8] sm:$0xff]
  %v1087 = vld [vmem:[%s1084 + $0x40] sm:$0xff]
  %v1088 = vld [vmem:[%s1084 + $0x48] sm:$0xff]
  %v1089 = vld [vmem:[%s1084 + $0x80] sm:$0xff]
  %v1090 = vld [vmem:[%s1084 + $0x88] sm:$0xff]
  %v1091 = vld [vmem:[%s1084 + $0xc0] sm:$0xff]
  %v1092 = vld [vmem:[%s1084 + $0xc8] sm:$0xff]
  %v1093 = vld [vmem:[%s1084 + $0x100] sm:$0xff]
  %v1094 = vld [vmem:[%s1084 + $0x108] sm:$0xff]
  %v1095 = vld [vmem:[%s1084 + $0x140] sm:$0xff]
  %v1096 = vld [vmem:[%s1084 + $0x148] sm:$0xff]
  %v1097 = vld [vmem:[%s1084 + $0x180] sm:$0x11]
  %v1098 = vld [vmem:[%s1084 + $0x188] sm:$0x11]
  %s1099 = scalar_lea.vmem %s8, 4
  %v1100 = vld [vmem:[%s1099] sm:$0xf]
  %v1102 = vlaneseq
  %v1103 = vshrl.u32 %v1102, 7
  %v1104 = vsub.s32 0, %v1103
  %v1105 = vrot.slane %v1100, %v1104
  %v1106 = vlaneseq
  %v1107 = vshrl.u32 %v1106, 7
  %v1108 = vsub.s32 1, %v1107
  %v1109 = vrot.slane %v1100, %v1108
  %v1110 = vlaneseq
  %v1111 = vshrl.u32 %v1110, 7
  %v1112 = vsub.s32 2, %v1111
  %v1113 = vrot.slane %v1100, %v1112
  %v1114 = vlaneseq
  %v1115 = vshrl.u32 %v1114, 7
  %v1116 = vsub.s32 3, %v1115
  %v1117 = vrot.slane %v1100, %v1116
  %v1136 = vunpack.c.l.b16 %v1085
  %v1137 = vunpack.c.h.b16 %v1085
  %v1138 = vunpack.c.l.b16 %v1086
  %v1139 = vunpack.c.h.b16 %v1086
  %v1140 = vunpack.c.l.b16 %v1087
  %v1141 = vunpack.c.h.b16 %v1087
  %v1142 = vunpack.c.l.b16 %v1088
  %v1143 = vunpack.c.h.b16 %v1088
  %v1144 = vunpack.c.l.b16 %v1089
  %v1145 = vunpack.c.h.b16 %v1089
  %v1146 = vunpack.c.l.b16 %v1090
  %v1147 = vunpack.c.h.b16 %v1090
  %v1148 = vunpack.c.l.b16 %v1091
  %v1149 = vunpack.c.h.b16 %v1091
  %v1150 = vunpack.c.l.b16 %v1092
  %v1151 = vunpack.c.h.b16 %v1092
  %v1152 = vunpack.c.l.b16 %v1093
  %v1153 = vunpack.c.h.b16 %v1093
  %v1154 = vunpack.c.l.b16 %v1094
  %v1155 = vunpack.c.h.b16 %v1094
  %v1156 = vunpack.c.l.b16 %v1095
  %v1157 = vunpack.c.h.b16 %v1095
  %v1158 = vunpack.c.l.b16 %v1096
  %v1159 = vunpack.c.h.b16 %v1096
  %v1160 = vunpack.c.l.b16 %v1097
  %v1161 = vunpack.c.h.b16 %v1097
  %v1162 = vunpack.c.l.b16 %v1098
  %v1163 = vunpack.c.h.b16 %v1098
  %v1164 = vpack.c.b16 %v1140, %v1136
  %v1165 = vpack.c.b16 %v1141, %v1137
  %v1166 = vpack.c.b16 %v1142, %v1138
  %v1167 = vpack.c.b16 %v1143, %v1139
  %v1168 = vpack.c.b16 %v1148, %v1144
  %v1169 = vpack.c.b16 %v1149, %v1145
  %v1170 = vpack.c.b16 %v1150, %v1146
  %v1171 = vpack.c.b16 %v1151, %v1147
  %v1172 = vpack.c.b16 %v1156, %v1152
  %v1173 = vpack.c.b16 %v1157, %v1153
  %v1174 = vpack.c.b16 %v1158, %v1154
  %v1175 = vpack.c.b16 %v1159, %v1155
  %v1176 = vpack.c.b16 %v1160, %v1160
  %v1177 = vpack.c.b16 %v1161, %v1161
  %v1178 = vpack.c.b16 %v1162, %v1162
  %v1179 = vpack.c.b16 %v1163, %v1163
  %v1193 = vsel %vm122, %v1176, 0
  %v1196 = vsel %vm122, %v1177, 0
  %v1199 = vsel %vm122, %v1178, 0
  %v1202 = vsel %vm122, %v1179, 0
  %1204 = vmatprep.subr.bf16.mxu0 %v1165
  %1205 = vmatpush1.bf16.msra.mxu0 %v1164
  %1206 = vmatprep.subr.bf16.mxu0 %v1169
  %1207 = vmatpush1.bf16.msra.mxu0 %v1168
  %1208 = vmatprep.subr.bf16.mxu0 %v1173
  %1209 = vmatpush1.bf16.msra.mxu0 %v1172
  %1210 = vmatprep.subr.bf16.mxu0 %v1196
  %1211 = vmatpush1.bf16.msra.mxu0 %v1193
  %1212 = vmatprep.subr.bf16.mxu0 0
  %1213 = vmatpush1.bf16.msra.mxu0 0
  %1214 = vmatprep.subr.bf16.mxu0 0
  %1215 = vmatpush1.bf16.msra.mxu0 0
  %1216 = vmatprep.subr.bf16.mxu0 0
  %1217 = vmatpush1.bf16.msra.mxu0 0
  %1218 = vmatprep.subr.bf16.mxu0 0
  %1219 = vmatpush1.bf16.msra.mxu0 0
  %1220 = vmatprep.subr.bf16.mxu0 0
  %1221 = vmatpush1.bf16.msra.mxu0 0
  %1222 = vmatprep.subr.bf16.mxu0 0
  %1223 = vmatpush1.bf16.msra.mxu0 0
  %1224 = vmatprep.subr.bf16.mxu0 0
  %1225 = vmatpush1.bf16.msra.mxu0 0
  %1226 = vmatprep.subr.bf16.mxu0 0
  %1227 = vmatpush1.bf16.msra.mxu0 0
  %1228 = vmatprep.subr.bf16.mxu0 0
  %1229 = vmatpush1.bf16.msra.mxu0 0
  %1230 = vmatprep.subr.bf16.mxu0 0
  %1231 = vmatpush1.bf16.msra.mxu0 0
  %1232 = vmatprep.subr.bf16.mxu0 0
  %1233 = vmatpush1.bf16.msra.mxu0 0
  %1234 = vmatprep.subr.bf16.mxu0 0
  %1235 = vmatpush1.bf16.msra.mxu0 0
  %1236 = vmatprep.mubr.bf16.mxu0 0
  %1237 = vmatmul.mubr.bf16.gmra.mrb[0].mxu0 %v873
  %v1238 = vpop.f32.mrb[0].mxu0
  %v1239 = vadd.f32 %v1105, %v1238
  %v1240 = vpop.f32.mrb[0].mxu0
  %v1241 = vadd.f32 %v1109, %v1240
  %v1242 = vpop.f32.mrb[0].mxu0
  %v1243 = vadd.f32 %v1105, %v1242
  %v1244 = vpop.f32.mrb[0].mxu0
  %v1245 = vadd.f32 %v1109, %v1244
  %1246 = vmatprep.mubr.bf16.mxu0 0
  %1247 = vmatmul.mubr.bf16.gmra.mrb[0].mxu0 %v876
  %v1248 = vpop.f32.mrb[0].mxu0
  %v1249 = vadd.f32 %v1105, %v1248
  %v1250 = vpop.f32.mrb[0].mxu0
  %v1251 = vadd.f32 %v1109, %v1250
  %v1252 = vpop.f32.mrb[0].mxu0
  %v1253 = vadd.f32 %v1105, %v1252
  %v1254 = vpop.f32.mrb[0].mxu0
  %v1255 = vadd.f32 %v1109, %v1254
  %1256 = vdwg.mxu0
  %1257 = vmatprep.subr.bf16.mxu0 %v1167
  %1258 = vmatpush1.bf16.msra.mxu0 %v1166
  %1259 = vmatprep.subr.bf16.mxu0 %v1171
  %1260 = vmatpush1.bf16.msra.mxu0 %v1170
  %1261 = vmatprep.subr.bf16.mxu0 %v1175
  %1262 = vmatpush1.bf16.msra.mxu0 %v1174
  %1263 = vmatprep.subr.bf16.mxu0 %v1202
  %1264 = vmatpush1.bf16.msra.mxu0 %v1199
  %1265 = vmatprep.subr.bf16.mxu0 0
  %1266 = vmatpush1.bf16.msra.mxu0 0
  %1267 = vmatprep.subr.bf16.mxu0 0
  %1268 = vmatpush1.bf16.msra.mxu0 0
  %1269 = vmatprep.subr.bf16.mxu0 0
  %1270 = vmatpush1.bf16.msra.mxu0 0
  %1271 = vmatprep.subr.bf16.mxu0 0
  %1272 = vmatpush1.bf16.msra.mxu0 0
  %1273 = vmatprep.subr.bf16.mxu0 0
  %1274 = vmatpush1.bf16.msra.mxu0 0
  %1275 = vmatprep.subr.bf16.mxu0 0
  %1276 = vmatpush1.bf16.msra.mxu0 0
  %1277 = vmatprep.subr.bf16.mxu0 0
  %1278 = vmatpush1.bf16.msra.mxu0 0
  %1279 = vmatprep.subr.bf16.mxu0 0
  %1280 = vmatpush1.bf16.msra.mxu0 0
  %1281 = vmatprep.subr.bf16.mxu0 0
  %1282 = vmatpush1.bf16.msra.mxu0 0
  %1283 = vmatprep.subr.bf16.mxu0 0
  %1284 = vmatpush1.bf16.msra.mxu0 0
  %1285 = vmatprep.subr.bf16.mxu0 0
  %1286 = vmatpush1.bf16.msra.mxu0 0
  %1287 = vmatprep.subr.bf16.mxu0 0
  %1288 = vmatpush1.bf16.msra.mxu0 0
  %1289 = vmatprep.mubr.bf16.mxu0 0
  %1290 = vmatmul.mubr.bf16.gmra.mrb[0].mxu0 %v873
  %v1291 = vpop.f32.mrb[0].mxu0
  %v1292 = vadd.f32 %v1113, %v1291
  %v1293 = vpop.f32.mrb[0].mxu0
  %v1294 = vadd.f32 %v1117, %v1293
  %v1295 = vpop.f32.mrb[0].mxu0
  %v1296 = vadd.f32 %v1113, %v1295
  %v1297 = vpop.f32.mrb[0].mxu0
  %v1298 = vadd.f32 %v1117, %v1297
  %1299 = vmatprep.mubr.bf16.mxu0 0
  %1300 = vmatmul.mubr.bf16.gmra.mrb[0].mxu0 %v876
  %v1301 = vpop.f32.mrb[0].mxu0
  %v1302 = vadd.f32 %v1113, %v1301
  %v1303 = vpop.f32.mrb[0].mxu0
  %v1304 = vadd.f32 %v1117, %v1303
  %v1305 = vpop.f32.mrb[0].mxu0
  %v1306 = vadd.f32 %v1113, %v1305
  %v1307 = vpop.f32.mrb[0].mxu0
  %v1308 = vadd.f32 %v1117, %v1307
  %1309 = vdwg.mxu0
  %v1310 = vmax.f32 %v1239, 0.0
  %v1311 = vmax.f32 %v1241, 0.0
  %v1312 = vmax.f32 %v1292, 0.0
  %v1313 = vmax.f32 %v1294, 0.0
  %v1314 = vmax.f32 %v1243, 0.0
  %v1315 = vmax.f32 %v1245, 0.0
  %v1316 = vmax.f32 %v1296, 0.0
  %v1317 = vmax.f32 %v1298, 0.0
  %v1318 = vmax.f32 %v1249, 0.0
  %v1319 = vmax.f32 %v1251, 0.0
  %v1320 = vmax.f32 %v1302, 0.0
  %v1321 = vmax.f32 %v1304, 0.0
  %v1322 = vmax.f32 %v1253, 0.0
  %v1323 = vmax.f32 %v1255, 0.0
  %v1324 = vmax.f32 %v1306, 0.0
  %v1325 = vmax.f32 %v1308, 0.0
  %v1326 = vpack.c.bf16 %v1314, %v1310
  %v1327 = vpack.c.bf16 %v1315, %v1311
  %v1328 = vpack.c.bf16 %v1316, %v1312
  %v1329 = vpack.c.bf16 %v1317, %v1313
  %v1330 = vpack.c.bf16 %v1322, %v1318
  %v1331 = vpack.c.bf16 %v1323, %v1319
  %v1332 = vpack.c.bf16 %v1324, %v1320
  %v1333 = vpack.c.bf16 %v1325, %v1321
  %s1334 = scalar_lea.vmem %s9, 256
  %v1335 = vld [vmem:[%s1334] sm:$0xf]
  %v1336 = vld [vmem:[%s1334 + $0x4] sm:$0xf]
  %v1337 = vld [vmem:[%s1334 + $0x8] sm:$0xf]
  %v1338 = vld [vmem:[%s1334 + $0xc] sm:$0xf]
  %v1339 = vld [vmem:[%s1334 + $0x10] sm:$0xf]
  %v1340 = vld [vmem:[%s1334 + $0x14] sm:$0xf]
  %v1341 = vld [vmem:[%s1334 + $0x18] sm:$0xf]
  %v1342 = vld [vmem:[%s1334 + $0x1c] sm:$0xf]
  %v1343 = vld [vmem:[%s1334 + $0x20] sm:$0xf]
  %v1344 = vld [vmem:[%s1334 + $0x24] sm:$0xf]
  %v1345 = vld [vmem:[%s1334 + $0x28] sm:$0xf]
  %v1346 = vld [vmem:[%s1334 + $0x2c] sm:$0xf]
  %v1347 = vld [vmem:[%s1334 + $0x30] sm:$0xf]
  %v1348 = vld [vmem:[%s1334 + $0x34] sm:$0xf]
  %v1349 = vld [vmem:[%s1334 + $0x38] sm:$0xf]
  %v1350 = vld [vmem:[%s1334 + $0x3c] sm:$0xf]
  %v1351 = vld [vmem:[%s1334 + $0x40] sm:$0xf]
  %v1352 = vld [vmem:[%s1334 + $0x44] sm:$0xf]
  %v1353 = vld [vmem:[%s1334 + $0x48] sm:$0xf]
  %v1354 = vld [vmem:[%s1334 + $0x4c] sm:$0xf]
  %v1355 = vld [vmem:[%s1334 + $0x50] sm:$0xf]
  %v1356 = vld [vmem:[%s1334 + $0x54] sm:$0xf]
  %v1357 = vld [vmem:[%s1334 + $0x58] sm:$0xf]
  %v1358 = vld [vmem:[%s1334 + $0x5c] sm:$0xf]
  %v1359 = vld [vmem:[%s1334 + $0x60] sm:$0xf]
  %v1360 = vld [vmem:[%s1334 + $0x64] sm:$0xf]
  %v1361 = vld [vmem:[%s1334 + $0x68] sm:$0xf]
  %v1362 = vld [vmem:[%s1334 + $0x6c] sm:$0xf]
  %v1363 = vld [vmem:[%s1334 + $0x70] sm:$0xf]
  %v1364 = vld [vmem:[%s1334 + $0x74] sm:$0xf]
  %v1365 = vld [vmem:[%s1334 + $0x78] sm:$0xf]
  %v1366 = vld [vmem:[%s1334 + $0x7c] sm:$0xf]
  %v1367 = vld [vmem:[%s1334 + $0x80] sm:$0xf]
  %v1368 = vld [vmem:[%s1334 + $0x84] sm:$0xf]
  %v1369 = vld [vmem:[%s1334 + $0x88] sm:$0xf]
  %v1370 = vld [vmem:[%s1334 + $0x8c] sm:$0xf]
  %v1371 = vld [vmem:[%s1334 + $0x90] sm:$0xf]
  %v1372 = vld [vmem:[%s1334 + $0x94] sm:$0xf]
  %v1373 = vld [vmem:[%s1334 + $0x98] sm:$0xf]
  %v1374 = vld [vmem:[%s1334 + $0x9c] sm:$0xf]
  %v1375 = vld [vmem:[%s1334 + $0xa0] sm:$0xf]
  %v1376 = vld [vmem:[%s1334 + $0xa4] sm:$0xf]
  %v1377 = vld [vmem:[%s1334 + $0xa8] sm:$0xf]
  %v1378 = vld [vmem:[%s1334 + $0xac] sm:$0xf]
  %v1379 = vld [vmem:[%s1334 + $0xb0] sm:$0xf]
  %v1380 = vld [vmem:[%s1334 + $0xb4] sm:$0xf]
  %v1381 = vld [vmem:[%s1334 + $0xb8] sm:$0xf]
  %v1382 = vld [vmem:[%s1334 + $0xbc] sm:$0xf]
  %v1383 = vld [vmem:[%s1334 + $0xc0] sm:$0xf]
  %v1384 = vld [vmem:[%s1334 + $0xc4] sm:$0xf]
  %v1385 = vld [vmem:[%s1334 + $0xc8] sm:$0xf]
  %v1386 = vld [vmem:[%s1334 + $0xcc] sm:$0xf]
  %v1387 = vld [vmem:[%s1334 + $0xd0] sm:$0xf]
  %v1388 = vld [vmem:[%s1334 + $0xd4] sm:$0xf]
  %v1389 = vld [vmem:[%s1334 + $0xd8] sm:$0xf]
  %v1390 = vld [vmem:[%s1334 + $0xdc] sm:$0xf]
  %v1391 = vld [vmem:[%s1334 + $0xe0] sm:$0xf]
  %v1392 = vld [vmem:[%s1334 + $0xe4] sm:$0xf]
  %v1393 = vld [vmem:[%s1334 + $0xe8] sm:$0xf]
  %v1394 = vld [vmem:[%s1334 + $0xec] sm:$0xf]
  %v1395 = vld [vmem:[%s1334 + $0xf0] sm:$0xf]
  %v1396 = vld [vmem:[%s1334 + $0xf4] sm:$0xf]
  %v1397 = vld [vmem:[%s1334 + $0xf8] sm:$0xf]
  %v1398 = vld [vmem:[%s1334 + $0xfc] sm:$0xf]
  %v1463 = vunpack.c.l.b16 %v1335
  %v1464 = vunpack.c.l.b16 %v1336
  %v1465 = vunpack.c.l.b16 %v1337
  %v1466 = vunpack.c.l.b16 %v1338
  %v1467 = vunpack.c.l.b16 %v1339
  %v1468 = vunpack.c.l.b16 %v1340
  %v1469 = vunpack.c.l.b16 %v1341
  %v1470 = vunpack.c.l.b16 %v1342
  %v1471 = vunpack.c.l.b16 %v1343
  %v1472 = vunpack.c.l.b16 %v1344
  %v1473 = vunpack.c.l.b16 %v1345
  %v1474 = vunpack.c.l.b16 %v1346
  %v1475 = vunpack.c.l.b16 %v1347
  %v1476 = vunpack.c.l.b16 %v1348
  %v1477 = vunpack.c.l.b16 %v1349
  %v1478 = vunpack.c.l.b16 %v1350
  %v1479 = vunpack.c.l.b16 %v1351
  %v1480 = vunpack.c.l.b16 %v1352
  %v1481 = vunpack.c.l.b16 %v1353
  %v1482 = vunpack.c.l.b16 %v1354
  %v1483 = vunpack.c.l.b16 %v1355
  %v1484 = vunpack.c.l.b16 %v1356
  %v1485 = vunpack.c.l.b16 %v1357
  %v1486 = vunpack.c.l.b16 %v1358
  %v1487 = vunpack.c.l.b16 %v1359
  %v1488 = vunpack.c.l.b16 %v1360
  %v1489 = vunpack.c.l.b16 %v1361
  %v1490 = vunpack.c.l.b16 %v1362
  %v1491 = vunpack.c.l.b16 %v1363
  %v1492 = vunpack.c.l.b16 %v1364
  %v1493 = vunpack.c.l.b16 %v1365
  %v1494 = vunpack.c.l.b16 %v1366
  %v1495 = vunpack.c.l.b16 %v1367
  %v1496 = vunpack.c.l.b16 %v1368
  %v1497 = vunpack.c.l.b16 %v1369
  %v1498 = vunpack.c.l.b16 %v1370
  %v1499 = vunpack.c.l.b16 %v1371
  %v1500 = vunpack.c.l.b16 %v1372
  %v1501 = vunpack.c.l.b16 %v1373
  %v1502 = vunpack.c.l.b16 %v1374
  %v1503 = vunpack.c.l.b16 %v1375
  %v1504 = vunpack.c.l.b16 %v1376
  %v1505 = vunpack.c.l.b16 %v1377
  %v1506 = vunpack.c.l.b16 %v1378
  %v1507 = vunpack.c.l.b16 %v1379
  %v1508 = vunpack.c.l.b16 %v1380
  %v1509 = vunpack.c.l.b16 %v1381
  %v1510 = vunpack.c.l.b16 %v1382
  %v1511 = vunpack.c.l.b16 %v1383
  %v1512 = vunpack.c.l.b16 %v1384
  %v1513 = vunpack.c.l.b16 %v1385
  %v1514 = vunpack.c.l.b16 %v1386
  %v1515 = vunpack.c.l.b16 %v1387
  %v1516 = vunpack.c.l.b16 %v1388
  %v1517 = vunpack.c.l.b16 %v1389
  %v1518 = vunpack.c.l.b16 %v1390
  %v1519 = vunpack.c.l.b16 %v1391
  %v1520 = vunpack.c.l.b16 %v1392
  %v1521 = vunpack.c.l.b16 %v1393
  %v1522 = vunpack.c.l.b16 %v1394
  %v1523 = vunpack.c.l.b16 %v1395
  %v1524 = vunpack.c.l.b16 %v1396
  %v1525 = vunpack.c.l.b16 %v1397
  %v1526 = vunpack.c.l.b16 %v1398
  %v1527 = vpack.c.b16 %v1464, %v1463
  %v1528 = vpack.c.b16 %v1466, %v1465
  %v1529 = vpack.c.b16 %v1468, %v1467
  %v1530 = vpack.c.b16 %v1470, %v1469
  %v1531 = vpack.c.b16 %v1472, %v1471
  %v1532 = vpack.c.b16 %v1474, %v1473
  %v1533 = vpack.c.b16 %v1476, %v1475
  %v1534 = vpack.c.b16 %v1478, %v1477
  %v1535 = vpack.c.b16 %v1480, %v1479
  %v1536 = vpack.c.b16 %v1482, %v1481
  %v1537 = vpack.c.b16 %v1484, %v1483
  %v1538 = vpack.c.b16 %v1486, %v1485
  %v1539 = vpack.c.b16 %v1488, %v1487
  %v1540 = vpack.c.b16 %v1490, %v1489
  %v1541 = vpack.c.b16 %v1492, %v1491
  %v1542 = vpack.c.b16 %v1494, %v1493
  %v1543 = vpack.c.b16 %v1496, %v1495
  %v1544 = vpack.c.b16 %v1498, %v1497
  %v1545 = vpack.c.b16 %v1500, %v1499
  %v1546 = vpack.c.b16 %v1502, %v1501
  %v1547 = vpack.c.b16 %v1504, %v1503
  %v1548 = vpack.c.b16 %v1506, %v1505
  %v1549 = vpack.c.b16 %v1508, %v1507
  %v1550 = vpack.c.b16 %v1510, %v1509
  %v1551 = vpack.c.b16 %v1512, %v1511
  %v1552 = vpack.c.b16 %v1514, %v1513
  %v1553 = vpack.c.b16 %v1516, %v1515
  %v1554 = vpack.c.b16 %v1518, %v1517
  %v1555 = vpack.c.b16 %v1520, %v1519
  %v1556 = vpack.c.b16 %v1522, %v1521
  %v1557 = vpack.c.b16 %v1524, %v1523
  %v1558 = vpack.c.b16 %v1526, %v1525
  %1591 = vmatprep.subr.bf16.mxu0 0
  %1592 = vmatpush1.bf16.msra.mxu0 %v1527
  %1593 = vmatprep.subr.bf16.mxu0 0
  %1594 = vmatpush1.bf16.msra.mxu0 %v1528
  %1595 = vmatprep.subr.bf16.mxu0 0
  %1596 = vmatpush1.bf16.msra.mxu0 %v1529
  %1597 = vmatprep.subr.bf16.mxu0 0
  %1598 = vmatpush1.bf16.msra.mxu0 %v1530
  %1599 = vmatprep.subr.bf16.mxu0 0
  %1600 = vmatpush1.bf16.msra.mxu0 %v1531
  %1601 = vmatprep.subr.bf16.mxu0 0
  %1602 = vmatpush1.bf16.msra.mxu0 %v1532
  %1603 = vmatprep.subr.bf16.mxu0 0
  %1604 = vmatpush1.bf16.msra.mxu0 %v1533
  %1605 = vmatprep.subr.bf16.mxu0 0
  %1606 = vmatpush1.bf16.msra.mxu0 %v1534
  %1607 = vmatprep.subr.bf16.mxu0 0
  %1608 = vmatpush1.bf16.msra.mxu0 %v1535
  %1609 = vmatprep.subr.bf16.mxu0 0
  %1610 = vmatpush1.bf16.msra.mxu0 %v1536
  %1611 = vmatprep.subr.bf16.mxu0 0
  %1612 = vmatpush1.bf16.msra.mxu0 %v1537
  %1613 = vmatprep.subr.bf16.mxu0 0
  %1614 = vmatpush1.bf16.msra.mxu0 %v1538
  %1615 = vmatprep.subr.bf16.mxu0 0
  %1616 = vmatpush1.bf16.msra.mxu0 %v1539
  %1617 = vmatprep.subr.bf16.mxu0 0
  %1618 = vmatpush1.bf16.msra.mxu0 %v1540
  %1619 = vmatprep.subr.bf16.mxu0 0
  %1620 = vmatpush1.bf16.msra.mxu0 %v1541
  %1621 = vmatprep.subr.bf16.mxu0 0
  %1622 = vmatpush1.bf16.msra.mxu0 %v1542
  %1623 = vmatprep.mubr.bf16.mxu0 %v1327
  %1624 = vmatmul.mubr.bf16.gmra.mrb[0].mxu0 %v1326
  %v1625 = vpop.f32.mrb[0].mxu0
  %v1626 = vadd.f32 0.0, %v1625
  %v1627 = vpop.f32.mrb[0].mxu0
  %v1628 = vpop.f32.mrb[0].mxu0
  %v1629 = vadd.f32 0.0, %v1628
  %v1630 = vpop.f32.mrb[0].mxu0
  %1631 = vmatprep.mubr.bf16.mxu0 %v1331
  %1632 = vmatmul.mubr.bf16.gmra.mrb[0].mxu0 %v1330
  %v1633 = vpop.f32.mrb[0].mxu0
  %v1634 = vadd.f32 0.0, %v1633
  %v1635 = vpop.f32.mrb[0].mxu0
  %v1636 = vpop.f32.mrb[0].mxu0
  %v1637 = vadd.f32 0.0, %v1636
  %v1638 = vpop.f32.mrb[0].mxu0
  %1639 = vdwg.mxu0
  %1640 = vmatprep.subr.bf16.mxu0 0
  %1641 = vmatpush1.bf16.msra.mxu0 %v1543
  %1642 = vmatprep.subr.bf16.mxu0 0
  %1643 = vmatpush1.bf16.msra.mxu0 %v1544
  %1644 = vmatprep.subr.bf16.mxu0 0
  %1645 = vmatpush1.bf16.msra.mxu0 %v1545
  %1646 = vmatprep.subr.bf16.mxu0 0
  %1647 = vmatpush1.bf16.msra.mxu0 %v1546
  %1648 = vmatprep.subr.bf16.mxu0 0
  %1649 = vmatpush1.bf16.msra.mxu0 %v1547
  %1650 = vmatprep.subr.bf16.mxu0 0
  %1651 = vmatpush1.bf16.msra.mxu0 %v1548
  %1652 = vmatprep.subr.bf16.mxu0 0
  %1653 = vmatpush1.bf16.msra.mxu0 %v1549
  %1654 = vmatprep.subr.bf16.mxu0 0
  %1655 = vmatpush1.bf16.msra.mxu0 %v1550
  %1656 = vmatprep.subr.bf16.mxu0 0
  %1657 = vmatpush1.bf16.msra.mxu0 %v1551
  %1658 = vmatprep.subr.bf16.mxu0 0
  %1659 = vmatpush1.bf16.msra.mxu0 %v1552
  %1660 = vmatprep.subr.bf16.mxu0 0
  %1661 = vmatpush1.bf16.msra.mxu0 %v1553
  %1662 = vmatprep.subr.bf16.mxu0 0
  %1663 = vmatpush1.bf16.msra.mxu0 %v1554
  %1664 = vmatprep.subr.bf16.mxu0 0
  %1665 = vmatpush1.bf16.msra.mxu0 %v1555
  %1666 = vmatprep.subr.bf16.mxu0 0
  %1667 = vmatpush1.bf16.msra.mxu0 %v1556
  %1668 = vmatprep.subr.bf16.mxu0 0
  %1669 = vmatpush1.bf16.msra.mxu0 %v1557
  %1670 = vmatprep.subr.bf16.mxu0 0
  %1671 = vmatpush1.bf16.msra.mxu0 %v1558
  %1672 = vmatprep.mubr.bf16.mxu0 %v1329
  %1673 = vmatmul.mubr.bf16.gmra.mrb[0].mxu0 %v1328
  %v1674 = vpop.f32.mrb[0].mxu0
  %v1675 = vadd.f32 %v1626, %v1674
  %v1676 = vpop.f32.mrb[0].mxu0
  %v1677 = vpop.f32.mrb[0].mxu0
  %v1678 = vadd.f32 %v1629, %v1677
  %v1679 = vpop.f32.mrb[0].mxu0
  %1680 = vmatprep.mubr.bf16.mxu0 %v1333
  %1681 = vmatmul.mubr.bf16.gmra.mrb[0].mxu0 %v1332
  %v1682 = vpop.f32.mrb[0].mxu0
  %v1683 = vadd.f32 %v1634, %v1682
  %v1684 = vpop.f32.mrb[0].mxu0
  %v1685 = vpop.f32.mrb[0].mxu0
  %v1686 = vadd.f32 %v1637, %v1685
  %v1687 = vpop.f32.mrb[0].mxu0
  %1688 = vdwg.mxu0
  %v1753 = vunpack.c.l.b16 %v1020
  %v1754 = vunpack.c.l.b16 %v1021
  %v1755 = vunpack.c.l.b16 %v1022
  %v1756 = vunpack.c.l.b16 %v1023
  %v1757 = vunpack.c.l.b16 %v1024
  %v1758 = vunpack.c.l.b16 %v1025
  %v1759 = vunpack.c.l.b16 %v1026
  %v1760 = vunpack.c.l.b16 %v1027
  %v1761 = vunpack.c.l.b16 %v1028
  %v1762 = vunpack.c.l.b16 %v1029
  %v1763 = vunpack.c.l.b16 %v1030
  %v1764 = vunpack.c.l.b16 %v1031
  %v1765 = vunpack.c.l.b16 %v1032
  %v1766 = vunpack.c.l.b16 %v1033
  %v1767 = vunpack.c.l.b16 %v1034
  %v1768 = vunpack.c.l.b16 %v1035
  %v1769 = vunpack.c.l.b16 %v1036
  %v1770 = vunpack.c.l.b16 %v1037
  %v1771 = vunpack.c.l.b16 %v1038
  %v1772 = vunpack.c.l.b16 %v1039
  %v1773 = vunpack.c.l.b16 %v1040
  %v1774 = vunpack.c.l.b16 %v1041
  %v1775 = vunpack.c.l.b16 %v1042
  %v1776 = vunpack.c.l.b16 %v1043
  %v1777 = vunpack.c.l.b16 %v1044
  %v1778 = vunpack.c.l.b16 %v1045
  %v1779 = vunpack.c.l.b16 %v1046
  %v1780 = vunpack.c.l.b16 %v1047
  %v1781 = vunpack.c.l.b16 %v1048
  %v1782 = vunpack.c.l.b16 %v1049
  %v1783 = vunpack.c.l.b16 %v1050
  %v1784 = vunpack.c.l.b16 %v1051
  %v1785 = vunpack.c.l.b16 %v1052
  %v1786 = vunpack.c.l.b16 %v1053
  %v1787 = vunpack.c.l.b16 %v1054
  %v1788 = vunpack.c.l.b16 %v1055
  %v1789 = vunpack.c.l.b16 %v1056
  %v1790 = vunpack.c.l.b16 %v1057
  %v1791 = vunpack.c.l.b16 %v1058
  %v1792 = vunpack.c.l.b16 %v1059
  %v1793 = vunpack.c.l.b16 %v1060
  %v1794 = vunpack.c.l.b16 %v1061
  %v1795 = vunpack.c.l.b16 %v1062
  %v1796 = vunpack.c.l.b16 %v1063
  %v1797 = vunpack.c.l.b16 %v1064
  %v1798 = vunpack.c.l.b16 %v1065
  %v1799 = vunpack.c.l.b16 %v1066
  %v1800 = vunpack.c.l.b16 %v1067
  %v1801 = vunpack.c.l.b16 %v1068
  %v1802 = vunpack.c.l.b16 %v1069
  %v1803 = vunpack.c.l.b16 %v1070
  %v1804 = vunpack.c.l.b16 %v1071
  %v1805 = vunpack.c.l.b16 %v1072
  %v1806 = vunpack.c.l.b16 %v1073
  %v1807 = vunpack.c.l.b16 %v1074
  %v1808 = vunpack.c.l.b16 %v1075
  %v1809 = vunpack.c.l.b16 %v1076
  %v1810 = vunpack.c.l.b16 %v1077
  %v1811 = vunpack.c.l.b16 %v1078
  %v1812 = vunpack.c.l.b16 %v1079
  %v1813 = vunpack.c.l.b16 %v1080
  %v1814 = vunpack.c.l.b16 %v1081
  %v1815 = vunpack.c.l.b16 %v1082
  %v1816 = vunpack.c.l.b16 %v1083
  %v1817 = vpack.c.b16 %v1754, %v1753
  %v1818 = vpack.c.b16 %v1756, %v1755
  %v1819 = vpack.c.b16 %v1758, %v1757
  %v1820 = vpack.c.b16 %v1760, %v1759
  %v1821 = vpack.c.b16 %v1762, %v1761
  %v1822 = vpack.c.b16 %v1764, %v1763
  %v1823 = vpack.c.b16 %v1766, %v1765
  %v1824 = vpack.c.b16 %v1768, %v1767
  %v1825 = vpack.c.b16 %v1770, %v1769
  %v1826 = vpack.c.b16 %v1772, %v1771
  %v1827 = vpack.c.b16 %v1774, %v1773
  %v1828 = vpack.c.b16 %v1776, %v1775
  %v1829 = vpack.c.b16 %v1778, %v1777
  %v1830 = vpack.c.b16 %v1780, %v1779
  %v1831 = vpack.c.b16 %v1782, %v1781
  %v1832 = vpack.c.b16 %v1784, %v1783
  %v1833 = vpack.c.b16 %v1786, %v1785
  %v1834 = vpack.c.b16 %v1788, %v1787
  %v1835 = vpack.c.b16 %v1790, %v1789
  %v1836 = vpack.c.b16 %v1792, %v1791
  %v1837 = vpack.c.b16 %v1794, %v1793
  %v1838 = vpack.c.b16 %v1796, %v1795
  %v1839 = vpack.c.b16 %v1798, %v1797
  %v1840 = vpack.c.b16 %v1800, %v1799
  %v1841 = vpack.c.b16 %v1802, %v1801
  %v1842 = vpack.c.b16 %v1804, %v1803
  %v1843 = vpack.c.b16 %v1806, %v1805
  %v1844 = vpack.c.b16 %v1808, %v1807
  %v1845 = vpack.c.b16 %v1810, %v1809
  %v1846 = vpack.c.b16 %v1812, %v1811
  %v1847 = vpack.c.b16 %v1814, %v1813
  %v1848 = vpack.c.b16 %v1816, %v1815
  %1881 = vmatprep.subr.bf16.mxu0 0
  %1882 = vmatpush1.bf16.msra.mxu0 %v1817
  %1883 = vmatprep.subr.bf16.mxu0 0
  %1884 = vmatpush1.bf16.msra.mxu0 %v1818
  %1885 = vmatprep.subr.bf16.mxu0 0
  %1886 = vmatpush1.bf16.msra.mxu0 %v1819
  %1887 = vmatprep.subr.bf16.mxu0 0
  %1888 = vmatpush1.bf16.msra.mxu0 %v1820
  %1889 = vmatprep.subr.bf16.mxu0 0
  %1890 = vmatpush1.bf16.msra.mxu0 %v1821
  %1891 = vmatprep.subr.bf16.mxu0 0
  %1892 = vmatpush1.bf16.msra.mxu0 %v1822
  %1893 = vmatprep.subr.bf16.mxu0 0
  %1894 = vmatpush1.bf16.msra.mxu0 %v1823
  %1895 = vmatprep.subr.bf16.mxu0 0
  %1896 = vmatpush1.bf16.msra.mxu0 %v1824
  %1897 = vmatprep.subr.bf16.mxu0 0
  %1898 = vmatpush1.bf16.msra.mxu0 %v1825
  %1899 = vmatprep.subr.bf16.mxu0 0
  %1900 = vmatpush1.bf16.msra.mxu0 %v1826
  %1901 = vmatprep.subr.bf16.mxu0 0
  %1902 = vmatpush1.bf16.msra.mxu0 %v1827
  %1903 = vmatprep.subr.bf16.mxu0 0
  %1904 = vmatpush1.bf16.msra.mxu0 %v1828
  %1905 = vmatprep.subr.bf16.mxu0 0
  %1906 = vmatpush1.bf16.msra.mxu0 %v1829
  %1907 = vmatprep.subr.bf16.mxu0 0
  %1908 = vmatpush1.bf16.msra.mxu0 %v1830
  %1909 = vmatprep.subr.bf16.mxu0 0
  %1910 = vmatpush1.bf16.msra.mxu0 %v1831
  %1911 = vmatprep.subr.bf16.mxu0 0
  %1912 = vmatpush1.bf16.msra.mxu0 %v1832
  %1913 = vmatprep.mubr.bf16.mxu0 %v1013
  %1914 = vmatmul.mubr.bf16.gmra.mrb[0].mxu0 %v1012
  %v1915 = vpop.f32.mrb[0].mxu0
  %v1916 = vadd.f32 %v1675, %v1915
  %v1917 = vpop.f32.mrb[0].mxu0
  %v1918 = vpop.f32.mrb[0].mxu0
  %v1919 = vadd.f32 %v1678, %v1918
  %v1920 = vpop.f32.mrb[0].mxu0
  %1921 = vmatprep.mubr.bf16.mxu0 %v1017
  %1922 = vmatmul.mubr.bf16.gmra.mrb[0].mxu0 %v1016
  %v1923 = vpop.f32.mrb[0].mxu0
  %v1924 = vadd.f32 %v1683, %v1923
  %v1925 = vpop.f32.mrb[0].mxu0
  %v1926 = vpop.f32.mrb[0].mxu0
  %v1927 = vadd.f32 %v1686, %v1926
  %v1928 = vpop.f32.mrb[0].mxu0
  %1929 = vdwg.mxu0
  %1930 = vmatprep.subr.bf16.mxu0 0
  %1931 = vmatpush1.bf16.msra.mxu0 %v1833
  %1932 = vmatprep.subr.bf16.mxu0 0
  %1933 = vmatpush1.bf16.msra.mxu0 %v1834
  %1934 = vmatprep.subr.bf16.mxu0 0
  %1935 = vmatpush1.bf16.msra.mxu0 %v1835
  %1936 = vmatprep.subr.bf16.mxu0 0
  %1937 = vmatpush1.bf16.msra.mxu0 %v1836
  %1938 = vmatprep.subr.bf16.mxu0 0
  %1939 = vmatpush1.bf16.msra.mxu0 %v1837
  %1940 = vmatprep.subr.bf16.mxu0 0
  %1941 = vmatpush1.bf16.msra.mxu0 %v1838
  %1942 = vmatprep.subr.bf16.mxu0 0
  %1943 = vmatpush1.bf16.msra.mxu0 %v1839
  %1944 = vmatprep.subr.bf16.mxu0 0
  %1945 = vmatpush1.bf16.msra.mxu0 %v1840
  %1946 = vmatprep.subr.bf16.mxu0 0
  %1947 = vmatpush1.bf16.msra.mxu0 %v1841
  %1948 = vmatprep.subr.bf16.mxu0 0
  %1949 = vmatpush1.bf16.msra.mxu0 %v1842
  %1950 = vmatprep.subr.bf16.mxu0 0
  %1951 = vmatpush1.bf16.msra.mxu0 %v1843
  %1952 = vmatprep.subr.bf16.mxu0 0
  %1953 = vmatpush1.bf16.msra.mxu0 %v1844
  %1954 = vmatprep.subr.bf16.mxu0 0
  %1955 = vmatpush1.bf16.msra.mxu0 %v1845
  %1956 = vmatprep.subr.bf16.mxu0 0
  %1957 = vmatpush1.bf16.msra.mxu0 %v1846
  %1958 = vmatprep.subr.bf16.mxu0 0
  %1959 = vmatpush1.bf16.msra.mxu0 %v1847
  %1960 = vmatprep.subr.bf16.mxu0 0
  %1961 = vmatpush1.bf16.msra.mxu0 %v1848
  %1962 = vmatprep.mubr.bf16.mxu0 %v1015
  %1963 = vmatmul.mubr.bf16.gmra.mrb[0].mxu0 %v1014
  %v1964 = vpop.f32.mrb[0].mxu0
  %v1965 = vadd.f32 %v1916, %v1964
  %v1966 = vpop.f32.mrb[0].mxu0
  %v1967 = vpop.f32.mrb[0].mxu0
  %v1968 = vadd.f32 %v1919, %v1967
  %v1969 = vpop.f32.mrb[0].mxu0
  %1970 = vmatprep.mubr.bf16.mxu0 %v1019
  %1971 = vmatmul.mubr.bf16.gmra.mrb[0].mxu0 %v1018
  %v1972 = vpop.f32.mrb[0].mxu0
  %v1973 = vadd.f32 %v1924, %v1972
  %v1974 = vpop.f32.mrb[0].mxu0
  %v1975 = vpop.f32.mrb[0].mxu0
  %v1976 = vadd.f32 %v1927, %v1975
  %v1977 = vpop.f32.mrb[0].mxu0
  %1978 = vdwg.mxu0
  %s1979 = scalar_lea.vmem %s7, 32
  %v1980 = vld [vmem:[%s1979] sm:$0xff]
  %v1981 = vld [vmem:[%s1979 + $0x8] sm:$0xff]
  %v1982 = vld [vmem:[%s1979 + $0x40] sm:$0xff]
  %v1983 = vld [vmem:[%s1979 + $0x48] sm:$0xff]
  %v1984 = vld [vmem:[%s1979 + $0x80] sm:$0xff]
  %v1985 = vld [vmem:[%s1979 + $0x88] sm:$0xff]
  %v1986 = vld [vmem:[%s1979 + $0xc0] sm:$0xff]
  %v1987 = vld [vmem:[%s1979 + $0xc8] sm:$0xff]
  %v1988 = vld [vmem:[%s1979 + $0x100] sm:$0xff]
  %v1989 = vld [vmem:[%s1979 + $0x108] sm:$0xff]
  %v1990 = vld [vmem:[%s1979 + $0x140] sm:$0xff]
  %v1991 = vld [vmem:[%s1979 + $0x148] sm:$0xff]
  %v1992 = vld [vmem:[%s1979 + $0x180] sm:$0x11]
  %v1993 = vld [vmem:[%s1979 + $0x188] sm:$0x11]
  %s1994 = scalar_lea.vmem %s8, 8
  %v1995 = vld [vmem:[%s1994] sm:$0xf]
  %v1997 = vlaneseq
  %v1998 = vshrl.u32 %v1997, 7
  %v1999 = vsub.s32 0, %v1998
  %v2000 = vrot.slane %v1995, %v1999
  %v2001 = vlaneseq
  %v2002 = vshrl.u32 %v2001, 7
  %v2003 = vsub.s32 1, %v2002
  %v2004 = vrot.slane %v1995, %v2003
  %v2005 = vlaneseq
  %v2006 = vshrl.u32 %v2005, 7
  %v2007 = vsub.s32 2, %v2006
  %v2008 = vrot.slane %v1995, %v2007
  %v2009 = vlaneseq
  %v2010 = vshrl.u32 %v2009, 7
  %v2011 = vsub.s32 3, %v2010
  %v2012 = vrot.slane %v1995, %v2011
  %v2031 = vunpack.c.l.b16 %v1980
  %v2032 = vunpack.c.h.b16 %v1980
  %v2033 = vunpack.c.l.b16 %v1981
  %v2034 = vunpack.c.h.b16 %v1981
  %v2035 = vunpack.c.l.b16 %v1982
  %v2036 = vunpack.c.h.b16 %v1982
  %v2037 = vunpack.c.l.b16 %v1983
  %v2038 = vunpack.c.h.b16 %v1983
  %v2039 = vunpack.c.l.b16 %v1984
  %v2040 = vunpack.c.h.b16 %v1984
  %v2041 = vunpack.c.l.b16 %v1985
  %v2042 = vunpack.c.h.b16 %v1985
  %v2043 = vunpack.c.l.b16 %v1986
  %v2044 = vunpack.c.h.b16 %v1986
  %v2045 = vunpack.c.l.b16 %v1987
  %v2046 = vunpack.c.h.b16 %v1987
  %v2047 = vunpack.c.l.b16 %v1988
  %v2048 = vunpack.c.h.b16 %v1988
  %v2049 = vunpack.c.l.b16 %v1989
  %v2050 = vunpack.c.h.b16 %v1989
  %v2051 = vunpack.c.l.b16 %v1990
  %v2052 = vunpack.c.h.b16 %v1990
  %v2053 = vunpack.c.l.b16 %v1991
  %v2054 = vunpack.c.h.b16 %v1991
  %v2055 = vunpack.c.l.b16 %v1992
  %v2056 = vunpack.c.h.b16 %v1992
  %v2057 = vunpack.c.l.b16 %v1993
  %v2058 = vunpack.c.h.b16 %v1993
  %v2059 = vpack.c.b16 %v2035, %v2031
  %v2060 = vpack.c.b16 %v2036, %v2032
  %v2061 = vpack.c.b16 %v2037, %v2033
  %v2062 = vpack.c.b16 %v2038, %v2034
  %v2063 = vpack.c.b16 %v2043, %v2039
  %v2064 = vpack.c.b16 %v2044, %v2040
  %v2065 = vpack.c.b16 %v2045, %v2041
  %v2066 = vpack.c.b16 %v2046, %v2042
  %v2067 = vpack.c.b16 %v2051, %v2047
  %v2068 = vpack.c.b16 %v2052, %v2048
  %v2069 = vpack.c.b16 %v2053, %v2049
  %v2070 = vpack.c.b16 %v2054, %v2050
  %v2071 = vpack.c.b16 %v2055, %v2055
  %v2072 = vpack.c.b16 %v2056, %v2056
  %v2073 = vpack.c.b16 %v2057, %v2057
  %v2074 = vpack.c.b16 %v2058, %v2058
  %v2088 = vsel %vm122, %v2071, 0
  %v2091 = vsel %vm122, %v2072, 0
  %v2094 = vsel %vm122, %v2073, 0
  %v2097 = vsel %vm122, %v2074, 0
  %2099 = vmatprep.subr.bf16.mxu0 %v2060
  %2100 = vmatpush1.bf16.msra.mxu0 %v2059
  %2101 = vmatprep.subr.bf16.mxu0 %v2064
  %2102 = vmatpush1.bf16.msra.mxu0 %v2063
  %2103 = vmatprep.subr.bf16.mxu0 %v2068
  %2104 = vmatpush1.bf16.msra.mxu0 %v2067
  %2105 = vmatprep.subr.bf16.mxu0 %v2091
  %2106 = vmatpush1.bf16.msra.mxu0 %v2088
  %2107 = vmatprep.subr.bf16.mxu0 0
  %2108 = vmatpush1.bf16.msra.mxu0 0
  %2109 = vmatprep.subr.bf16.mxu0 0
  %2110 = vmatpush1.bf16.msra.mxu0 0
  %2111 = vmatprep.subr.bf16.mxu0 0
  %2112 = vmatpush1.bf16.msra.mxu0 0
  %2113 = vmatprep.subr.bf16.mxu0 0
  %2114 = vmatpush1.bf16.msra.mxu0 0
  %2115 = vmatprep.subr.bf16.mxu0 0
  %2116 = vmatpush1.bf16.msra.mxu0 0
  %2117 = vmatprep.subr.bf16.mxu0 0
  %2118 = vmatpush1.bf16.msra.mxu0 0
  %2119 = vmatprep.subr.bf16.mxu0 0
  %2120 = vmatpush1.bf16.msra.mxu0 0
  %2121 = vmatprep.subr.bf16.mxu0 0
  %2122 = vmatpush1.bf16.msra.mxu0 0
  %2123 = vmatprep.subr.bf16.mxu0 0
  %2124 = vmatpush1.bf16.msra.mxu0 0
  %2125 = vmatprep.subr.bf16.mxu0 0
  %2126 = vmatpush1.bf16.msra.mxu0 0
  %2127 = vmatprep.subr.bf16.mxu0 0
  %2128 = vmatpush1.bf16.msra.mxu0 0
  %2129 = vmatprep.subr.bf16.mxu0 0
  %2130 = vmatpush1.bf16.msra.mxu0 0
  %2131 = vmatprep.mubr.bf16.mxu0 0
  %2132 = vmatmul.mubr.bf16.gmra.mrb[0].mxu0 %v873
  %v2133 = vpop.f32.mrb[0].mxu0
  %v2134 = vadd.f32 %v2000, %v2133
  %v2135 = vpop.f32.mrb[0].mxu0
  %v2136 = vadd.f32 %v2004, %v2135
  %v2137 = vpop.f32.mrb[0].mxu0
  %v2138 = vadd.f32 %v2000, %v2137
  %v2139 = vpop.f32.mrb[0].mxu0
  %v2140 = vadd.f32 %v2004, %v2139
  %2141 = vmatprep.mubr.bf16.mxu0 0
  %2142 = vmatmul.mubr.bf16.gmra.mrb[0].mxu0 %v876
  %v2143 = vpop.f32.mrb[0].mxu0
  %v2144 = vadd.f32 %v2000, %v2143
  %v2145 = vpop.f32.mrb[0].mxu0
  %v2146 = vadd.f32 %v2004, %v2145
  %v2147 = vpop.f32.mrb[0].mxu0
  %v2148 = vadd.f32 %v2000, %v2147
  %v2149 = vpop.f32.mrb[0].mxu0
  %v2150 = vadd.f32 %v2004, %v2149
  %2151 = vdwg.mxu0
  %2152 = vmatprep.subr.bf16.mxu0 %v2062
  %2153 = vmatpush1.bf16.msra.mxu0 %v2061
  %2154 = vmatprep.subr.bf16.mxu0 %v2066
  %2155 = vmatpush1.bf16.msra.mxu0 %v2065
  %2156 = vmatprep.subr.bf16.mxu0 %v2070
  %2157 = vmatpush1.bf16.msra.mxu0 %v2069
  %2158 = vmatprep.subr.bf16.mxu0 %v2097
  %2159 = vmatpush1.bf16.msra.mxu0 %v2094
  %2160 = vmatprep.subr.bf16.mxu0 0
  %2161 = vmatpush1.bf16.msra.mxu0 0
  %2162 = vmatprep.subr.bf16.mxu0 0
  %2163 = vmatpush1.bf16.msra.mxu0 0
  %2164 = vmatprep.subr.bf16.mxu0 0
  %2165 = vmatpush1.bf16.msra.mxu0 0
  %2166 = vmatprep.subr.bf16.mxu0 0
  %2167 = vmatpush1.bf16.msra.mxu0 0
  %2168 = vmatprep.subr.bf16.mxu0 0
  %2169 = vmatpush1.bf16.msra.mxu0 0
  %2170 = vmatprep.subr.bf16.mxu0 0
  %2171 = vmatpush1.bf16.msra.mxu0 0
  %2172 = vmatprep.subr.bf16.mxu0 0
  %2173 = vmatpush1.bf16.msra.mxu0 0
  %2174 = vmatprep.subr.bf16.mxu0 0
  %2175 = vmatpush1.bf16.msra.mxu0 0
  %2176 = vmatprep.subr.bf16.mxu0 0
  %2177 = vmatpush1.bf16.msra.mxu0 0
  %2178 = vmatprep.subr.bf16.mxu0 0
  %2179 = vmatpush1.bf16.msra.mxu0 0
  %2180 = vmatprep.subr.bf16.mxu0 0
  %2181 = vmatpush1.bf16.msra.mxu0 0
  %2182 = vmatprep.subr.bf16.mxu0 0
  %2183 = vmatpush1.bf16.msra.mxu0 0
  %2184 = vmatprep.mubr.bf16.mxu0 0
  %2185 = vmatmul.mubr.bf16.gmra.mrb[0].mxu0 %v873
  %v2186 = vpop.f32.mrb[0].mxu0
  %v2187 = vadd.f32 %v2008, %v2186
  %v2188 = vpop.f32.mrb[0].mxu0
  %v2189 = vadd.f32 %v2012, %v2188
  %v2190 = vpop.f32.mrb[0].mxu0
  %v2191 = vadd.f32 %v2008, %v2190
  %v2192 = vpop.f32.mrb[0].mxu0
  %v2193 = vadd.f32 %v2012, %v2192
  %2194 = vmatprep.mubr.bf16.mxu0 0
  %2195 = vmatmul.mubr.bf16.gmra.mrb[0].mxu0 %v876
  %v2196 = vpop.f32.mrb[0].mxu0
  %v2197 = vadd.f32 %v2008, %v2196
  %v2198 = vpop.f32.mrb[0].mxu0
  %v2199 = vadd.f32 %v2012, %v2198
  %v2200 = vpop.f32.mrb[0].mxu0
  %v2201 = vadd.f32 %v2008, %v2200
  %v2202 = vpop.f32.mrb[0].mxu0
  %v2203 = vadd.f32 %v2012, %v2202
  %2204 = vdwg.mxu0
  %v2205 = vmax.f32 %v2134, 0.0
  %v2206 = vmax.f32 %v2136, 0.0
  %v2207 = vmax.f32 %v2187, 0.0
  %v2208 = vmax.f32 %v2189, 0.0
  %v2209 = vmax.f32 %v2138, 0.0
  %v2210 = vmax.f32 %v2140, 0.0
  %v2211 = vmax.f32 %v2191, 0.0
  %v2212 = vmax.f32 %v2193, 0.0
  %v2213 = vmax.f32 %v2144, 0.0
  %v2214 = vmax.f32 %v2146, 0.0
  %v2215 = vmax.f32 %v2197, 0.0
  %v2216 = vmax.f32 %v2199, 0.0
  %v2217 = vmax.f32 %v2148, 0.0
  %v2218 = vmax.f32 %v2150, 0.0
  %v2219 = vmax.f32 %v2201, 0.0
  %v2220 = vmax.f32 %v2203, 0.0
  %v2221 = vpack.c.bf16 %v2209, %v2205
  %v2222 = vpack.c.bf16 %v2210, %v2206
  %v2223 = vpack.c.bf16 %v2211, %v2207
  %v2224 = vpack.c.bf16 %v2212, %v2208
  %v2225 = vpack.c.bf16 %v2217, %v2213
  %v2226 = vpack.c.bf16 %v2218, %v2214
  %v2227 = vpack.c.bf16 %v2219, %v2215
  %v2228 = vpack.c.bf16 %v2220, %v2216
  %s2229 = scalar_lea.vmem %s9, 512
  %v2230 = vld [vmem:[%s2229] sm:$0xf]
  %v2231 = vld [vmem:[%s2229 + $0x4] sm:$0xf]
  %v2232 = vld [vmem:[%s2229 + $0x8] sm:$0xf]
  %v2233 = vld [vmem:[%s2229 + $0xc] sm:$0xf]
  %v2234 = vld [vmem:[%s2229 + $0x10] sm:$0xf]
  %v2235 = vld [vmem:[%s2229 + $0x14] sm:$0xf]
  %v2236 = vld [vmem:[%s2229 + $0x18] sm:$0xf]
  %v2237 = vld [vmem:[%s2229 + $0x1c] sm:$0xf]
  %v2238 = vld [vmem:[%s2229 + $0x20] sm:$0xf]
  %v2239 = vld [vmem:[%s2229 + $0x24] sm:$0xf]
  %v2240 = vld [vmem:[%s2229 + $0x28] sm:$0xf]
  %v2241 = vld [vmem:[%s2229 + $0x2c] sm:$0xf]
  %v2242 = vld [vmem:[%s2229 + $0x30] sm:$0xf]
  %v2243 = vld [vmem:[%s2229 + $0x34] sm:$0xf]
  %v2244 = vld [vmem:[%s2229 + $0x38] sm:$0xf]
  %v2245 = vld [vmem:[%s2229 + $0x3c] sm:$0xf]
  %v2246 = vld [vmem:[%s2229 + $0x40] sm:$0xf]
  %v2247 = vld [vmem:[%s2229 + $0x44] sm:$0xf]
  %v2248 = vld [vmem:[%s2229 + $0x48] sm:$0xf]
  %v2249 = vld [vmem:[%s2229 + $0x4c] sm:$0xf]
  %v2250 = vld [vmem:[%s2229 + $0x50] sm:$0xf]
  %v2251 = vld [vmem:[%s2229 + $0x54] sm:$0xf]
  %v2252 = vld [vmem:[%s2229 + $0x58] sm:$0xf]
  %v2253 = vld [vmem:[%s2229 + $0x5c] sm:$0xf]
  %v2254 = vld [vmem:[%s2229 + $0x60] sm:$0xf]
  %v2255 = vld [vmem:[%s2229 + $0x64] sm:$0xf]
  %v2256 = vld [vmem:[%s2229 + $0x68] sm:$0xf]
  %v2257 = vld [vmem:[%s2229 + $0x6c] sm:$0xf]
  %v2258 = vld [vmem:[%s2229 + $0x70] sm:$0xf]
  %v2259 = vld [vmem:[%s2229 + $0x74] sm:$0xf]
  %v2260 = vld [vmem:[%s2229 + $0x78] sm:$0xf]
  %v2261 = vld [vmem:[%s2229 + $0x7c] sm:$0xf]
  %v2262 = vld [vmem:[%s2229 + $0x80] sm:$0xf]
  %v2263 = vld [vmem:[%s2229 + $0x84] sm:$0xf]
  %v2264 = vld [vmem:[%s2229 + $0x88] sm:$0xf]
  %v2265 = vld [vmem:[%s2229 + $0x8c] sm:$0xf]
  %v2266 = vld [vmem:[%s2229 + $0x90] sm:$0xf]
  %v2267 = vld [vmem:[%s2229 + $0x94] sm:$0xf]
  %v2268 = vld [vmem:[%s2229 + $0x98] sm:$0xf]
  %v2269 = vld [vmem:[%s2229 + $0x9c] sm:$0xf]
  %v2270 = vld [vmem:[%s2229 + $0xa0] sm:$0xf]
  %v2271 = vld [vmem:[%s2229 + $0xa4] sm:$0xf]
  %v2272 = vld [vmem:[%s2229 + $0xa8] sm:$0xf]
  %v2273 = vld [vmem:[%s2229 + $0xac] sm:$0xf]
  %v2274 = vld [vmem:[%s2229 + $0xb0] sm:$0xf]
  %v2275 = vld [vmem:[%s2229 + $0xb4] sm:$0xf]
  %v2276 = vld [vmem:[%s2229 + $0xb8] sm:$0xf]
  %v2277 = vld [vmem:[%s2229 + $0xbc] sm:$0xf]
  %v2278 = vld [vmem:[%s2229 + $0xc0] sm:$0xf]
  %v2279 = vld [vmem:[%s2229 + $0xc4] sm:$0xf]
  %v2280 = vld [vmem:[%s2229 + $0xc8] sm:$0xf]
  %v2281 = vld [vmem:[%s2229 + $0xcc] sm:$0xf]
  %v2282 = vld [vmem:[%s2229 + $0xd0] sm:$0xf]
  %v2283 = vld [vmem:[%s2229 + $0xd4] sm:$0xf]
  %v2284 = vld [vmem:[%s2229 + $0xd8] sm:$0xf]
  %v2285 = vld [vmem:[%s2229 + $0xdc] sm:$0xf]
  %v2286 = vld [vmem:[%s2229 + $0xe0] sm:$0xf]
  %v2287 = vld [vmem:[%s2229 + $0xe4] sm:$0xf]
  %v2288 = vld [vmem:[%s2229 + $0xe8] sm:$0xf]
  %v2289 = vld [vmem:[%s2229 + $0xec] sm:$0xf]
  %v2290 = vld [vmem:[%s2229 + $0xf0] sm:$0xf]
  %v2291 = vld [vmem:[%s2229 + $0xf4] sm:$0xf]
  %v2292 = vld [vmem:[%s2229 + $0xf8] sm:$0xf]
  %v2293 = vld [vmem:[%s2229 + $0xfc] sm:$0xf]
  %v2358 = vunpack.c.l.b16 %v2230
  %v2359 = vunpack.c.l.b16 %v2231
  %v2360 = vunpack.c.l.b16 %v2232
  %v2361 = vunpack.c.l.b16 %v2233
  %v2362 = vunpack.c.l.b16 %v2234
  %v2363 = vunpack.c.l.b16 %v2235
  %v2364 = vunpack.c.l.b16 %v2236
  %v2365 = vunpack.c.l.b16 %v2237
  %v2366 = vunpack.c.l.b16 %v2238
  %v2367 = vunpack.c.l.b16 %v2239
  %v2368 = vunpack.c.l.b16 %v2240
  %v2369 = vunpack.c.l.b16 %v2241
  %v2370 = vunpack.c.l.b16 %v2242
  %v2371 = vunpack.c.l.b16 %v2243
  %v2372 = vunpack.c.l.b16 %v2244
  %v2373 = vunpack.c.l.b16 %v2245
  %v2374 = vunpack.c.l.b16 %v2246
  %v2375 = vunpack.c.l.b16 %v2247
  %v2376 = vunpack.c.l.b16 %v2248
  %v2377 = vunpack.c.l.b16 %v2249
  %v2378 = vunpack.c.l.b16 %v2250
  %v2379 = vunpack.c.l.b16 %v2251
  %v2380 = vunpack.c.l.b16 %v2252
  %v2381 = vunpack.c.l.b16 %v2253
  %v2382 = vunpack.c.l.b16 %v2254
  %v2383 = vunpack.c.l.b16 %v2255
  %v2384 = vunpack.c.l.b16 %v2256
  %v2385 = vunpack.c.l.b16 %v2257
  %v2386 = vunpack.c.l.b16 %v2258
  %v2387 = vunpack.c.l.b16 %v2259
  %v2388 = vunpack.c.l.b16 %v2260
  %v2389 = vunpack.c.l.b16 %v2261
  %v2390 = vunpack.c.l.b16 %v2262
  %v2391 = vunpack.c.l.b16 %v2263
  %v2392 = vunpack.c.l.b16 %v2264
  %v2393 = vunpack.c.l.b16 %v2265
  %v2394 = vunpack.c.l.b16 %v2266
  %v2395 = vunpack.c.l.b16 %v2267
  %v2396 = vunpack.c.l.b16 %v2268
  %v2397 = vunpack.c.l.b16 %v2269
  %v2398 = vunpack.c.l.b16 %v2270
  %v2399 = vunpack.c.l.b16 %v2271
  %v2400 = vunpack.c.l.b16 %v2272
  %v2401 = vunpack.c.l.b16 %v2273
  %v2402 = vunpack.c.l.b16 %v2274
  %v2403 = vunpack.c.l.b16 %v2275
  %v2404 = vunpack.c.l.b16 %v2276
  %v2405 = vunpack.c.l.b16 %v2277
  %v2406 = vunpack.c.l.b16 %v2278
  %v2407 = vunpack.c.l.b16 %v2279
  %v2408 = vunpack.c.l.b16 %v2280
  %v2409 = vunpack.c.l.b16 %v2281
  %v2410 = vunpack.c.l.b16 %v2282
  %v2411 = vunpack.c.l.b16 %v2283
  %v2412 = vunpack.c.l.b16 %v2284
  %v2413 = vunpack.c.l.b16 %v2285
  %v2414 = vunpack.c.l.b16 %v2286
  %v2415 = vunpack.c.l.b16 %v2287
  %v2416 = vunpack.c.l.b16 %v2288
  %v2417 = vunpack.c.l.b16 %v2289
  %v2418 = vunpack.c.l.b16 %v2290
  %v2419 = vunpack.c.l.b16 %v2291
  %v2420 = vunpack.c.l.b16 %v2292
  %v2421 = vunpack.c.l.b16 %v2293
  %v2422 = vpack.c.b16 %v2359, %v2358
  %v2423 = vpack.c.b16 %v2361, %v2360
  %v2424 = vpack.c.b16 %v2363, %v2362
  %v2425 = vpack.c.b16 %v2365, %v2364
  %v2426 = vpack.c.b16 %v2367, %v2366
  %v2427 = vpack.c.b16 %v2369, %v2368
  %v2428 = vpack.c.b16 %v2371, %v2370
  %v2429 = vpack.c.b16 %v2373, %v2372
  %v2430 = vpack.c.b16 %v2375, %v2374
  %v2431 = vpack.c.b16 %v2377, %v2376
  %v2432 = vpack.c.b16 %v2379, %v2378
  %v2433 = vpack.c.b16 %v2381, %v2380
  %v2434 = vpack.c.b16 %v2383, %v2382
  %v2435 = vpack.c.b16 %v2385, %v2384
  %v2436 = vpack.c.b16 %v2387, %v2386
  %v2437 = vpack.c.b16 %v2389, %v2388
  %v2438 = vpack.c.b16 %v2391, %v2390
  %v2439 = vpack.c.b16 %v2393, %v2392
  %v2440 = vpack.c.b16 %v2395, %v2394
  %v2441 = vpack.c.b16 %v2397, %v2396
  %v2442 = vpack.c.b16 %v2399, %v2398
  %v2443 = vpack.c.b16 %v2401, %v2400
  %v2444 = vpack.c.b16 %v2403, %v2402
  %v2445 = vpack.c.b16 %v2405, %v2404
  %v2446 = vpack.c.b16 %v2407, %v2406
  %v2447 = vpack.c.b16 %v2409, %v2408
  %v2448 = vpack.c.b16 %v2411, %v2410
  %v2449 = vpack.c.b16 %v2413, %v2412
  %v2450 = vpack.c.b16 %v2415, %v2414
  %v2451 = vpack.c.b16 %v2417, %v2416
  %v2452 = vpack.c.b16 %v2419, %v2418
  %v2453 = vpack.c.b16 %v2421, %v2420
  %2486 = vmatprep.subr.bf16.mxu0 0
  %2487 = vmatpush1.bf16.msra.mxu0 %v2422
  %2488 = vmatprep.subr.bf16.mxu0 0
  %2489 = vmatpush1.bf16.msra.mxu0 %v2423
  %2490 = vmatprep.subr.bf16.mxu0 0
  %2491 = vmatpush1.bf16.msra.mxu0 %v2424
  %2492 = vmatprep.subr.bf16.mxu0 0
  %2493 = vmatpush1.bf16.msra.mxu0 %v2425
  %2494 = vmatprep.subr.bf16.mxu0 0
  %2495 = vmatpush1.bf16.msra.mxu0 %v2426
  %2496 = vmatprep.subr.bf16.mxu0 0
  %2497 = vmatpush1.bf16.msra.mxu0 %v2427
  %2498 = vmatprep.subr.bf16.mxu0 0
  %2499 = vmatpush1.bf16.msra.mxu0 %v2428
  %2500 = vmatprep.subr.bf16.mxu0 0
  %2501 = vmatpush1.bf16.msra.mxu0 %v2429
  %2502 = vmatprep.subr.bf16.mxu0 0
  %2503 = vmatpush1.bf16.msra.mxu0 %v2430
  %2504 = vmatprep.subr.bf16.mxu0 0
  %2505 = vmatpush1.bf16.msra.mxu0 %v2431
  %2506 = vmatprep.subr.bf16.mxu0 0
  %2507 = vmatpush1.bf16.msra.mxu0 %v2432
  %2508 = vmatprep.subr.bf16.mxu0 0
  %2509 = vmatpush1.bf16.msra.mxu0 %v2433
  %2510 = vmatprep.subr.bf16.mxu0 0
  %2511 = vmatpush1.bf16.msra.mxu0 %v2434
  %2512 = vmatprep.subr.bf16.mxu0 0
  %2513 = vmatpush1.bf16.msra.mxu0 %v2435
  %2514 = vmatprep.subr.bf16.mxu0 0
  %2515 = vmatpush1.bf16.msra.mxu0 %v2436
  %2516 = vmatprep.subr.bf16.mxu0 0
  %2517 = vmatpush1.bf16.msra.mxu0 %v2437
  %2518 = vmatprep.mubr.bf16.mxu0 %v2222
  %2519 = vmatmul.mubr.bf16.gmra.mrb[0].mxu0 %v2221
  %v2520 = vpop.f32.mrb[0].mxu0
  %v2521 = vadd.f32 0.0, %v2520
  %v2522 = vpop.f32.mrb[0].mxu0
  %v2523 = vpop.f32.mrb[0].mxu0
  %v2524 = vadd.f32 0.0, %v2523
  %v2525 = vpop.f32.mrb[0].mxu0
  %2526 = vmatprep.mubr.bf16.mxu0 %v2226
  %2527 = vmatmul.mubr.bf16.gmra.mrb[0].mxu0 %v2225
  %v2528 = vpop.f32.mrb[0].mxu0
  %v2529 = vadd.f32 0.0, %v2528
  %v2530 = vpop.f32.mrb[0].mxu0
  %v2531 = vpop.f32.mrb[0].mxu0
  %v2532 = vadd.f32 0.0, %v2531
  %v2533 = vpop.f32.mrb[0].mxu0
  %2534 = vdwg.mxu0
  %2535 = vmatprep.subr.bf16.mxu0 0
  %2536 = vmatpush1.bf16.msra.mxu0 %v2438
  %2537 = vmatprep.subr.bf16.mxu0 0
  %2538 = vmatpush1.bf16.msra.mxu0 %v2439
  %2539 = vmatprep.subr.bf16.mxu0 0
  %2540 = vmatpush1.bf16.msra.mxu0 %v2440
  %2541 = vmatprep.subr.bf16.mxu0 0
  %2542 = vmatpush1.bf16.msra.mxu0 %v2441
  %2543 = vmatprep.subr.bf16.mxu0 0
  %2544 = vmatpush1.bf16.msra.mxu0 %v2442
  %2545 = vmatprep.subr.bf16.mxu0 0
  %2546 = vmatpush1.bf16.msra.mxu0 %v2443
  %2547 = vmatprep.subr.bf16.mxu0 0
  %2548 = vmatpush1.bf16.msra.mxu0 %v2444
  %2549 = vmatprep.subr.bf16.mxu0 0
  %2550 = vmatpush1.bf16.msra.mxu0 %v2445
  %2551 = vmatprep.subr.bf16.mxu0 0
  %2552 = vmatpush1.bf16.msra.mxu0 %v2446
  %2553 = vmatprep.subr.bf16.mxu0 0
  %2554 = vmatpush1.bf16.msra.mxu0 %v2447
  %2555 = vmatprep.subr.bf16.mxu0 0
  %2556 = vmatpush1.bf16.msra.mxu0 %v2448
  %2557 = vmatprep.subr.bf16.mxu0 0
  %2558 = vmatpush1.bf16.msra.mxu0 %v2449
  %2559 = vmatprep.subr.bf16.mxu0 0
  %2560 = vmatpush1.bf16.msra.mxu0 %v2450
  %2561 = vmatprep.subr.bf16.mxu0 0
  %2562 = vmatpush1.bf16.msra.mxu0 %v2451
  %2563 = vmatprep.subr.bf16.mxu0 0
  %2564 = vmatpush1.bf16.msra.mxu0 %v2452
  %2565 = vmatprep.subr.bf16.mxu0 0
  %2566 = vmatpush1.bf16.msra.mxu0 %v2453
  %2567 = vmatprep.mubr.bf16.mxu0 %v2224
  %2568 = vmatmul.mubr.bf16.gmra.mrb[0].mxu0 %v2223
  %v2569 = vpop.f32.mrb[0].mxu0
  %v2570 = vadd.f32 %v2521, %v2569
  %v2571 = vpop.f32.mrb[0].mxu0
  %v2572 = vpop.f32.mrb[0].mxu0
  %v2573 = vadd.f32 %v2524, %v2572
  %v2574 = vpop.f32.mrb[0].mxu0
  %2575 = vmatprep.mubr.bf16.mxu0 %v2228
  %2576 = vmatmul.mubr.bf16.gmra.mrb[0].mxu0 %v2227
  %v2577 = vpop.f32.mrb[0].mxu0
  %v2578 = vadd.f32 %v2529, %v2577
  %v2579 = vpop.f32.mrb[0].mxu0
  %v2580 = vpop.f32.mrb[0].mxu0
  %v2581 = vadd.f32 %v2532, %v2580
  %v2582 = vpop.f32.mrb[0].mxu0
  %2583 = vdwg.mxu0
  %v2584 = vadd.f32 %v1965, %v2570
  %v2585 = vadd.f32 %v1968, %v2573
  %v2586 = vadd.f32 %v1973, %v2578
  %v2587 = vadd.f32 %v1976, %v2581
  %s2588 = scalar_lea.vmem %s7, 48
  %v2589 = vld [vmem:[%s2588] sm:$0xff]
  %v2590 = vld [vmem:[%s2588 + $0x8] sm:$0xff]
  %v2591 = vld [vmem:[%s2588 + $0x40] sm:$0xff]
  %v2592 = vld [vmem:[%s2588 + $0x48] sm:$0xff]
  %v2593 = vld [vmem:[%s2588 + $0x80] sm:$0xff]
  %v2594 = vld [vmem:[%s2588 + $0x88] sm:$0xff]
  %v2595 = vld [vmem:[%s2588 + $0xc0] sm:$0xff]
  %v2596 = vld [vmem:[%s2588 + $0xc8] sm:$0xff]
  %v2597 = vld [vmem:[%s2588 + $0x100] sm:$0xff]
  %v2598 = vld [vmem:[%s2588 + $0x108] sm:$0xff]
  %v2599 = vld [vmem:[%s2588 + $0x140] sm:$0xff]
  %v2600 = vld [vmem:[%s2588 + $0x148] sm:$0xff]
  %v2601 = vld [vmem:[%s2588 + $0x180] sm:$0x11]
  %v2602 = vld [vmem:[%s2588 + $0x188] sm:$0x11]
  %s2603 = scalar_lea.vmem %s8, 12
  %v2604 = vld [vmem:[%s2603] sm:$0xf]
  %v2606 = vlaneseq
  %v2607 = vshrl.u32 %v2606, 7
  %v2608 = vsub.s32 0, %v2607
  %v2609 = vrot.slane %v2604, %v2608
  %v2610 = vlaneseq
  %v2611 = vshrl.u32 %v2610, 7
  %v2612 = vsub.s32 1, %v2611
  %v2613 = vrot.slane %v2604, %v2612
  %v2614 = vlaneseq
  %v2615 = vshrl.u32 %v2614, 7
  %v2616 = vsub.s32 2, %v2615
  %v2617 = vrot.slane %v2604, %v2616
  %v2618 = vlaneseq
  %v2619 = vshrl.u32 %v2618, 7
  %v2620 = vsub.s32 3, %v2619
  %v2621 = vrot.slane %v2604, %v2620
  %v2640 = vunpack.c.l.b16 %v2589
  %v2641 = vunpack.c.h.b16 %v2589
  %v2642 = vunpack.c.l.b16 %v2590
  %v2643 = vunpack.c.h.b16 %v2590
  %v2644 = vunpack.c.l.b16 %v2591
  %v2645 = vunpack.c.h.b16 %v2591
  %v2646 = vunpack.c.l.b16 %v2592
  %v2647 = vunpack.c.h.b16 %v2592
  %v2648 = vunpack.c.l.b16 %v2593
  %v2649 = vunpack.c.h.b16 %v2593
  %v2650 = vunpack.c.l.b16 %v2594
  %v2651 = vunpack.c.h.b16 %v2594
  %v2652 = vunpack.c.l.b16 %v2595
  %v2653 = vunpack.c.h.b16 %v2595
  %v2654 = vunpack.c.l.b16 %v2596
  %v2655 = vunpack.c.h.b16 %v2596
  %v2656 = vunpack.c.l.b16 %v2597
  %v2657 = vunpack.c.h.b16 %v2597
  %v2658 = vunpack.c.l.b16 %v2598
  %v2659 = vunpack.c.h.b16 %v2598
  %v2660 = vunpack.c.l.b16 %v2599
  %v2661 = vunpack.c.h.b16 %v2599
  %v2662 = vunpack.c.l.b16 %v2600
  %v2663 = vunpack.c.h.b16 %v2600
  %v2664 = vunpack.c.l.b16 %v2601
  %v2665 = vunpack.c.h.b16 %v2601
  %v2666 = vunpack.c.l.b16 %v2602
  %v2667 = vunpack.c.h.b16 %v2602
  %v2668 = vpack.c.b16 %v2644, %v2640
  %v2669 = vpack.c.b16 %v2645, %v2641
  %v2670 = vpack.c.b16 %v2646, %v2642
  %v2671 = vpack.c.b16 %v2647, %v2643
  %v2672 = vpack.c.b16 %v2652, %v2648
  %v2673 = vpack.c.b16 %v2653, %v2649
  %v2674 = vpack.c.b16 %v2654, %v2650
  %v2675 = vpack.c.b16 %v2655, %v2651
  %v2676 = vpack.c.b16 %v2660, %v2656
  %v2677 = vpack.c.b16 %v2661, %v2657
  %v2678 = vpack.c.b16 %v2662, %v2658
  %v2679 = vpack.c.b16 %v2663, %v2659
  %v2680 = vpack.c.b16 %v2664, %v2664
  %v2681 = vpack.c.b16 %v2665, %v2665
  %v2682 = vpack.c.b16 %v2666, %v2666
  %v2683 = vpack.c.b16 %v2667, %v2667
  %v2697 = vsel %vm122, %v2680, 0
  %v2700 = vsel %vm122, %v2681, 0
  %v2703 = vsel %vm122, %v2682, 0
  %v2706 = vsel %vm122, %v2683, 0
  %2708 = vmatprep.subr.bf16.mxu0 %v2669
  %2709 = vmatpush1.bf16.msra.mxu0 %v2668
  %2710 = vmatprep.subr.bf16.mxu0 %v2673
  %2711 = vmatpush1.bf16.msra.mxu0 %v2672
  %2712 = vmatprep.subr.bf16.mxu0 %v2677
  %2713 = vmatpush1.bf16.msra.mxu0 %v2676
  %2714 = vmatprep.subr.bf16.mxu0 %v2700
  %2715 = vmatpush1.bf16.msra.mxu0 %v2697
  %2716 = vmatprep.subr.bf16.mxu0 0
  %2717 = vmatpush1.bf16.msra.mxu0 0
  %2718 = vmatprep.subr.bf16.mxu0 0
  %2719 = vmatpush1.bf16.msra.mxu0 0
  %2720 = vmatprep.subr.bf16.mxu0 0
  %2721 = vmatpush1.bf16.msra.mxu0 0
  %2722 = vmatprep.subr.bf16.mxu0 0
  %2723 = vmatpush1.bf16.msra.mxu0 0
  %2724 = vmatprep.subr.bf16.mxu0 0
  %2725 = vmatpush1.bf16.msra.mxu0 0
  %2726 = vmatprep.subr.bf16.mxu0 0
  %2727 = vmatpush1.bf16.msra.mxu0 0
  %2728 = vmatprep.subr.bf16.mxu0 0
  %2729 = vmatpush1.bf16.msra.mxu0 0
  %2730 = vmatprep.subr.bf16.mxu0 0
  %2731 = vmatpush1.bf16.msra.mxu0 0
  %2732 = vmatprep.subr.bf16.mxu0 0
  %2733 = vmatpush1.bf16.msra.mxu0 0
  %2734 = vmatprep.subr.bf16.mxu0 0
  %2735 = vmatpush1.bf16.msra.mxu0 0
  %2736 = vmatprep.subr.bf16.mxu0 0
  %2737 = vmatpush1.bf16.msra.mxu0 0
  %2738 = vmatprep.subr.bf16.mxu0 0
  %2739 = vmatpush1.bf16.msra.mxu0 0
  %2740 = vmatprep.mubr.bf16.mxu0 0
  %2741 = vmatmul.mubr.bf16.gmra.mrb[0].mxu0 %v873
  %v2742 = vpop.f32.mrb[0].mxu0
  %v2743 = vadd.f32 %v2609, %v2742
  %v2744 = vpop.f32.mrb[0].mxu0
  %v2745 = vadd.f32 %v2613, %v2744
  %v2746 = vpop.f32.mrb[0].mxu0
  %v2747 = vadd.f32 %v2609, %v2746
  %v2748 = vpop.f32.mrb[0].mxu0
  %v2749 = vadd.f32 %v2613, %v2748
  %2750 = vmatprep.mubr.bf16.mxu0 0
  %2751 = vmatmul.mubr.bf16.gmra.mrb[0].mxu0 %v876
  %v2752 = vpop.f32.mrb[0].mxu0
  %v2753 = vadd.f32 %v2609, %v2752
  %v2754 = vpop.f32.mrb[0].mxu0
  %v2755 = vadd.f32 %v2613, %v2754
  %v2756 = vpop.f32.mrb[0].mxu0
  %v2757 = vadd.f32 %v2609, %v2756
  %v2758 = vpop.f32.mrb[0].mxu0
  %v2759 = vadd.f32 %v2613, %v2758
  %2760 = vdwg.mxu0
  %2761 = vmatprep.subr.bf16.mxu0 %v2671
  %2762 = vmatpush1.bf16.msra.mxu0 %v2670
  %2763 = vmatprep.subr.bf16.mxu0 %v2675
  %2764 = vmatpush1.bf16.msra.mxu0 %v2674
  %2765 = vmatprep.subr.bf16.mxu0 %v2679
  %2766 = vmatpush1.bf16.msra.mxu0 %v2678
  %2767 = vmatprep.subr.bf16.mxu0 %v2706
  %2768 = vmatpush1.bf16.msra.mxu0 %v2703
  %2769 = vmatprep.subr.bf16.mxu0 0
  %2770 = vmatpush1.bf16.msra.mxu0 0
  %2771 = vmatprep.subr.bf16.mxu0 0
  %2772 = vmatpush1.bf16.msra.mxu0 0
  %2773 = vmatprep.subr.bf16.mxu0 0
  %2774 = vmatpush1.bf16.msra.mxu0 0
  %2775 = vmatprep.subr.bf16.mxu0 0
  %2776 = vmatpush1.bf16.msra.mxu0 0
  %2777 = vmatprep.subr.bf16.mxu0 0
  %2778 = vmatpush1.bf16.msra.mxu0 0
  %2779 = vmatprep.subr.bf16.mxu0 0
  %2780 = vmatpush1.bf16.msra.mxu0 0
  %2781 = vmatprep.subr.bf16.mxu0 0
  %2782 = vmatpush1.bf16.msra.mxu0 0
  %2783 = vmatprep.subr.bf16.mxu0 0
  %2784 = vmatpush1.bf16.msra.mxu0 0
  %2785 = vmatprep.subr.bf16.mxu0 0
  %2786 = vmatpush1.bf16.msra.mxu0 0
  %2787 = vmatprep.subr.bf16.mxu0 0
  %2788 = vmatpush1.bf16.msra.mxu0 0
  %2789 = vmatprep.subr.bf16.mxu0 0
  %2790 = vmatpush1.bf16.msra.mxu0 0
  %2791 = vmatprep.subr.bf16.mxu0 0
  %2792 = vmatpush1.bf16.msra.mxu0 0
  %2793 = vmatprep.mubr.bf16.mxu0 0
  %2794 = vmatmul.mubr.bf16.gmra.mrb[0].mxu0 %v873
  %v2795 = vpop.f32.mrb[0].mxu0
  %v2796 = vadd.f32 %v2617, %v2795
  %v2797 = vpop.f32.mrb[0].mxu0
  %v2798 = vadd.f32 %v2621, %v2797
  %v2799 = vpop.f32.mrb[0].mxu0
  %v2800 = vadd.f32 %v2617, %v2799
  %v2801 = vpop.f32.mrb[0].mxu0
  %v2802 = vadd.f32 %v2621, %v2801
  %2803 = vmatprep.mubr.bf16.mxu0 0
  %2804 = vmatmul.mubr.bf16.gmra.mrb[0].mxu0 %v876
  %v2805 = vpop.f32.mrb[0].mxu0
  %v2806 = vadd.f32 %v2617, %v2805
  %v2807 = vpop.f32.mrb[0].mxu0
  %v2808 = vadd.f32 %v2621, %v2807
  %v2809 = vpop.f32.mrb[0].mxu0
  %v2810 = vadd.f32 %v2617, %v2809
  %v2811 = vpop.f32.mrb[0].mxu0
  %v2812 = vadd.f32 %v2621, %v2811
  %2813 = vdwg.mxu0
  %v2814 = vmax.f32 %v2743, 0.0
  %v2815 = vmax.f32 %v2745, 0.0
  %v2816 = vmax.f32 %v2796, 0.0
  %v2817 = vmax.f32 %v2798, 0.0
  %v2818 = vmax.f32 %v2747, 0.0
  %v2819 = vmax.f32 %v2749, 0.0
  %v2820 = vmax.f32 %v2800, 0.0
  %v2821 = vmax.f32 %v2802, 0.0
  %v2822 = vmax.f32 %v2753, 0.0
  %v2823 = vmax.f32 %v2755, 0.0
  %v2824 = vmax.f32 %v2806, 0.0
  %v2825 = vmax.f32 %v2808, 0.0
  %v2826 = vmax.f32 %v2757, 0.0
  %v2827 = vmax.f32 %v2759, 0.0
  %v2828 = vmax.f32 %v2810, 0.0
  %v2829 = vmax.f32 %v2812, 0.0
  %v2830 = vpack.c.bf16 %v2818, %v2814
  %v2831 = vpack.c.bf16 %v2819, %v2815
  %v2832 = vpack.c.bf16 %v2820, %v2816
  %v2833 = vpack.c.bf16 %v2821, %v2817
  %v2834 = vpack.c.bf16 %v2826, %v2822
  %v2835 = vpack.c.bf16 %v2827, %v2823
  %v2836 = vpack.c.bf16 %v2828, %v2824
  %v2837 = vpack.c.bf16 %v2829, %v2825
  %s2838 = scalar_lea.vmem %s9, 768
  %v2839 = vld [vmem:[%s2838] sm:$0xf]
  %v2840 = vld [vmem:[%s2838 + $0x4] sm:$0xf]
  %v2841 = vld [vmem:[%s2838 + $0x8] sm:$0xf]
  %v2842 = vld [vmem:[%s2838 + $0xc] sm:$0xf]
  %v2843 = vld [vmem:[%s2838 + $0x10] sm:$0xf]
  %v2844 = vld [vmem:[%s2838 + $0x14] sm:$0xf]
  %v2845 = vld [vmem:[%s2838 + $0x18] sm:$0xf]
  %v2846 = vld [vmem:[%s2838 + $0x1c] sm:$0xf]
  %v2847 = vld [vmem:[%s2838 + $0x20] sm:$0xf]
  %v2848 = vld [vmem:[%s2838 + $0x24] sm:$0xf]
  %v2849 = vld [vmem:[%s2838 + $0x28] sm:$0xf]
  %v2850 = vld [vmem:[%s2838 + $0x2c] sm:$0xf]
  %v2851 = vld [vmem:[%s2838 + $0x30] sm:$0xf]
  %v2852 = vld [vmem:[%s2838 + $0x34] sm:$0xf]
  %v2853 = vld [vmem:[%s2838 + $0x38] sm:$0xf]
  %v2854 = vld [vmem:[%s2838 + $0x3c] sm:$0xf]
  %v2855 = vld [vmem:[%s2838 + $0x40] sm:$0xf]
  %v2856 = vld [vmem:[%s2838 + $0x44] sm:$0xf]
  %v2857 = vld [vmem:[%s2838 + $0x48] sm:$0xf]
  %v2858 = vld [vmem:[%s2838 + $0x4c] sm:$0xf]
  %v2859 = vld [vmem:[%s2838 + $0x50] sm:$0xf]
  %v2860 = vld [vmem:[%s2838 + $0x54] sm:$0xf]
  %v2861 = vld [vmem:[%s2838 + $0x58] sm:$0xf]
  %v2862 = vld [vmem:[%s2838 + $0x5c] sm:$0xf]
  %v2863 = vld [vmem:[%s2838 + $0x60] sm:$0xf]
  %v2864 = vld [vmem:[%s2838 + $0x64] sm:$0xf]
  %v2865 = vld [vmem:[%s2838 + $0x68] sm:$0xf]
  %v2866 = vld [vmem:[%s2838 + $0x6c] sm:$0xf]
  %v2867 = vld [vmem:[%s2838 + $0x70] sm:$0xf]
  %v2868 = vld [vmem:[%s2838 + $0x74] sm:$0xf]
  %v2869 = vld [vmem:[%s2838 + $0x78] sm:$0xf]
  %v2870 = vld [vmem:[%s2838 + $0x7c] sm:$0xf]
  %v2871 = vld [vmem:[%s2838 + $0x80] sm:$0xf]
  %v2872 = vld [vmem:[%s2838 + $0x84] sm:$0xf]
  %v2873 = vld [vmem:[%s2838 + $0x88] sm:$0xf]
  %v2874 = vld [vmem:[%s2838 + $0x8c] sm:$0xf]
  %v2875 = vld [vmem:[%s2838 + $0x90] sm:$0xf]
  %v2876 = vld [vmem:[%s2838 + $0x94] sm:$0xf]
  %v2877 = vld [vmem:[%s2838 + $0x98] sm:$0xf]
  %v2878 = vld [vmem:[%s2838 + $0x9c] sm:$0xf]
  %v2879 = vld [vmem:[%s2838 + $0xa0] sm:$0xf]
  %v2880 = vld [vmem:[%s2838 + $0xa4] sm:$0xf]
  %v2881 = vld [vmem:[%s2838 + $0xa8] sm:$0xf]
  %v2882 = vld [vmem:[%s2838 + $0xac] sm:$0xf]
  %v2883 = vld [vmem:[%s2838 + $0xb0] sm:$0xf]
  %v2884 = vld [vmem:[%s2838 + $0xb4] sm:$0xf]
  %v2885 = vld [vmem:[%s2838 + $0xb8] sm:$0xf]
  %v2886 = vld [vmem:[%s2838 + $0xbc] sm:$0xf]
  %v2887 = vld [vmem:[%s2838 + $0xc0] sm:$0xf]
  %v2888 = vld [vmem:[%s2838 + $0xc4] sm:$0xf]
  %v2889 = vld [vmem:[%s2838 + $0xc8] sm:$0xf]
  %v2890 = vld [vmem:[%s2838 + $0xcc] sm:$0xf]
  %v2891 = vld [vmem:[%s2838 + $0xd0] sm:$0xf]
  %v2892 = vld [vmem:[%s2838 + $0xd4] sm:$0xf]
  %v2893 = vld [vmem:[%s2838 + $0xd8] sm:$0xf]
  %v2894 = vld [vmem:[%s2838 + $0xdc] sm:$0xf]
  %v2895 = vld [vmem:[%s2838 + $0xe0] sm:$0xf]
  %v2896 = vld [vmem:[%s2838 + $0xe4] sm:$0xf]
  %v2897 = vld [vmem:[%s2838 + $0xe8] sm:$0xf]
  %v2898 = vld [vmem:[%s2838 + $0xec] sm:$0xf]
  %v2899 = vld [vmem:[%s2838 + $0xf0] sm:$0xf]
  %v2900 = vld [vmem:[%s2838 + $0xf4] sm:$0xf]
  %v2901 = vld [vmem:[%s2838 + $0xf8] sm:$0xf]
  %v2902 = vld [vmem:[%s2838 + $0xfc] sm:$0xf]
  %v2967 = vunpack.c.l.b16 %v2839
  %v2968 = vunpack.c.l.b16 %v2840
  %v2969 = vunpack.c.l.b16 %v2841
  %v2970 = vunpack.c.l.b16 %v2842
  %v2971 = vunpack.c.l.b16 %v2843
  %v2972 = vunpack.c.l.b16 %v2844
  %v2973 = vunpack.c.l.b16 %v2845
  %v2974 = vunpack.c.l.b16 %v2846
  %v2975 = vunpack.c.l.b16 %v2847
  %v2976 = vunpack.c.l.b16 %v2848
  %v2977 = vunpack.c.l.b16 %v2849
  %v2978 = vunpack.c.l.b16 %v2850
  %v2979 = vunpack.c.l.b16 %v2851
  %v2980 = vunpack.c.l.b16 %v2852
  %v2981 = vunpack.c.l.b16 %v2853
  %v2982 = vunpack.c.l.b16 %v2854
  %v2983 = vunpack.c.l.b16 %v2855
  %v2984 = vunpack.c.l.b16 %v2856
  %v2985 = vunpack.c.l.b16 %v2857
  %v2986 = vunpack.c.l.b16 %v2858
  %v2987 = vunpack.c.l.b16 %v2859
  %v2988 = vunpack.c.l.b16 %v2860
  %v2989 = vunpack.c.l.b16 %v2861
  %v2990 = vunpack.c.l.b16 %v2862
  %v2991 = vunpack.c.l.b16 %v2863
  %v2992 = vunpack.c.l.b16 %v2864
  %v2993 = vunpack.c.l.b16 %v2865
  %v2994 = vunpack.c.l.b16 %v2866
  %v2995 = vunpack.c.l.b16 %v2867
  %v2996 = vunpack.c.l.b16 %v2868
  %v2997 = vunpack.c.l.b16 %v2869
  %v2998 = vunpack.c.l.b16 %v2870
  %v2999 = vunpack.c.l.b16 %v2871
  %v3000 = vunpack.c.l.b16 %v2872
  %v3001 = vunpack.c.l.b16 %v2873
  %v3002 = vunpack.c.l.b16 %v2874
  %v3003 = vunpack.c.l.b16 %v2875
  %v3004 = vunpack.c.l.b16 %v2876
  %v3005 = vunpack.c.l.b16 %v2877
  %v3006 = vunpack.c.l.b16 %v2878
  %v3007 = vunpack.c.l.b16 %v2879
  %v3008 = vunpack.c.l.b16 %v2880
  %v3009 = vunpack.c.l.b16 %v2881
  %v3010 = vunpack.c.l.b16 %v2882
  %v3011 = vunpack.c.l.b16 %v2883
  %v3012 = vunpack.c.l.b16 %v2884
  %v3013 = vunpack.c.l.b16 %v2885
  %v3014 = vunpack.c.l.b16 %v2886
  %v3015 = vunpack.c.l.b16 %v2887
  %v3016 = vunpack.c.l.b16 %v2888
  %v3017 = vunpack.c.l.b16 %v2889
  %v3018 = vunpack.c.l.b16 %v2890
  %v3019 = vunpack.c.l.b16 %v2891
  %v3020 = vunpack.c.l.b16 %v2892
  %v3021 = vunpack.c.l.b16 %v2893
  %v3022 = vunpack.c.l.b16 %v2894
  %v3023 = vunpack.c.l.b16 %v2895
  %v3024 = vunpack.c.l.b16 %v2896
  %v3025 = vunpack.c.l.b16 %v2897
  %v3026 = vunpack.c.l.b16 %v2898
  %v3027 = vunpack.c.l.b16 %v2899
  %v3028 = vunpack.c.l.b16 %v2900
  %v3029 = vunpack.c.l.b16 %v2901
  %v3030 = vunpack.c.l.b16 %v2902
  %v3031 = vpack.c.b16 %v2968, %v2967
  %v3032 = vpack.c.b16 %v2970, %v2969
  %v3033 = vpack.c.b16 %v2972, %v2971
  %v3034 = vpack.c.b16 %v2974, %v2973
  %v3035 = vpack.c.b16 %v2976, %v2975
  %v3036 = vpack.c.b16 %v2978, %v2977
  %v3037 = vpack.c.b16 %v2980, %v2979
  %v3038 = vpack.c.b16 %v2982, %v2981
  %v3039 = vpack.c.b16 %v2984, %v2983
  %v3040 = vpack.c.b16 %v2986, %v2985
  %v3041 = vpack.c.b16 %v2988, %v2987
  %v3042 = vpack.c.b16 %v2990, %v2989
  %v3043 = vpack.c.b16 %v2992, %v2991
  %v3044 = vpack.c.b16 %v2994, %v2993
  %v3045 = vpack.c.b16 %v2996, %v2995
  %v3046 = vpack.c.b16 %v2998, %v2997
  %v3047 = vpack.c.b16 %v3000, %v2999
  %v3048 = vpack.c.b16 %v3002, %v3001
  %v3049 = vpack.c.b16 %v3004, %v3003
  %v3050 = vpack.c.b16 %v3006, %v3005
  %v3051 = vpack.c.b16 %v3008, %v3007
  %v3052 = vpack.c.b16 %v3010, %v3009
  %v3053 = vpack.c.b16 %v3012, %v3011
  %v3054 = vpack.c.b16 %v3014, %v3013
  %v3055 = vpack.c.b16 %v3016, %v3015
  %v3056 = vpack.c.b16 %v3018, %v3017
  %v3057 = vpack.c.b16 %v3020, %v3019
  %v3058 = vpack.c.b16 %v3022, %v3021
  %v3059 = vpack.c.b16 %v3024, %v3023
  %v3060 = vpack.c.b16 %v3026, %v3025
  %v3061 = vpack.c.b16 %v3028, %v3027
  %v3062 = vpack.c.b16 %v3030, %v3029
  %3095 = vmatprep.subr.bf16.mxu0 0
  %3096 = vmatpush1.bf16.msra.mxu0 %v3031
  %3097 = vmatprep.subr.bf16.mxu0 0
  %3098 = vmatpush1.bf16.msra.mxu0 %v3032
  %3099 = vmatprep.subr.bf16.mxu0 0
  %3100 = vmatpush1.bf16.msra.mxu0 %v3033
  %3101 = vmatprep.subr.bf16.mxu0 0
  %3102 = vmatpush1.bf16.msra.mxu0 %v3034
  %3103 = vmatprep.subr.bf16.mxu0 0
  %3104 = vmatpush1.bf16.msra.mxu0 %v3035
  %3105 = vmatprep.subr.bf16.mxu0 0
  %3106 = vmatpush1.bf16.msra.mxu0 %v3036
  %3107 = vmatprep.subr.bf16.mxu0 0
  %3108 = vmatpush1.bf16.msra.mxu0 %v3037
  %3109 = vmatprep.subr.bf16.mxu0 0
  %3110 = vmatpush1.bf16.msra.mxu0 %v3038
  %3111 = vmatprep.subr.bf16.mxu0 0
  %3112 = vmatpush1.bf16.msra.mxu0 %v3039
  %3113 = vmatprep.subr.bf16.mxu0 0
  %3114 = vmatpush1.bf16.msra.mxu0 %v3040
  %3115 = vmatprep.subr.bf16.mxu0 0
  %3116 = vmatpush1.bf16.msra.mxu0 %v3041
  %3117 = vmatprep.subr.bf16.mxu0 0
  %3118 = vmatpush1.bf16.msra.mxu0 %v3042
  %3119 = vmatprep.subr.bf16.mxu0 0
  %3120 = vmatpush1.bf16.msra.mxu0 %v3043
  %3121 = vmatprep.subr.bf16.mxu0 0
  %3122 = vmatpush1.bf16.msra.mxu0 %v3044
  %3123 = vmatprep.subr.bf16.mxu0 0
  %3124 = vmatpush1.bf16.msra.mxu0 %v3045
  %3125 = vmatprep.subr.bf16.mxu0 0
  %3126 = vmatpush1.bf16.msra.mxu0 %v3046
  %3127 = vmatprep.mubr.bf16.mxu0 %v2831
  %3128 = vmatmul.mubr.bf16.gmra.mrb[0].mxu0 %v2830
  %v3129 = vpop.f32.mrb[0].mxu0
  %v3130 = vadd.f32 0.0, %v3129
  %v3131 = vpop.f32.mrb[0].mxu0
  %v3132 = vpop.f32.mrb[0].mxu0
  %v3133 = vadd.f32 0.0, %v3132
  %v3134 = vpop.f32.mrb[0].mxu0
  %3135 = vmatprep.mubr.bf16.mxu0 %v2835
  %3136 = vmatmul.mubr.bf16.gmra.mrb[0].mxu0 %v2834
  %v3137 = vpop.f32.mrb[0].mxu0
  %v3138 = vadd.f32 0.0, %v3137
  %v3139 = vpop.f32.mrb[0].mxu0
  %v3140 = vpop.f32.mrb[0].mxu0
  %v3141 = vadd.f32 0.0, %v3140
  %v3142 = vpop.f32.mrb[0].mxu0
  %3143 = vdwg.mxu0
  %3144 = vmatprep.subr.bf16.mxu0 0
  %3145 = vmatpush1.bf16.msra.mxu0 %v3047
  %3146 = vmatprep.subr.bf16.mxu0 0
  %3147 = vmatpush1.bf16.msra.mxu0 %v3048
  %3148 = vmatprep.subr.bf16.mxu0 0
  %3149 = vmatpush1.bf16.msra.mxu0 %v3049
  %3150 = vmatprep.subr.bf16.mxu0 0
  %3151 = vmatpush1.bf16.msra.mxu0 %v3050
  %3152 = vmatprep.subr.bf16.mxu0 0
  %3153 = vmatpush1.bf16.msra.mxu0 %v3051
  %3154 = vmatprep.subr.bf16.mxu0 0
  %3155 = vmatpush1.bf16.msra.mxu0 %v3052
  %3156 = vmatprep.subr.bf16.mxu0 0
  %3157 = vmatpush1.bf16.msra.mxu0 %v3053
  %3158 = vmatprep.subr.bf16.mxu0 0
  %3159 = vmatpush1.bf16.msra.mxu0 %v3054
  %3160 = vmatprep.subr.bf16.mxu0 0
  %3161 = vmatpush1.bf16.msra.mxu0 %v3055
  %3162 = vmatprep.subr.bf16.mxu0 0
  %3163 = vmatpush1.bf16.msra.mxu0 %v3056
  %3164 = vmatprep.subr.bf16.mxu0 0
  %3165 = vmatpush1.bf16.msra.mxu0 %v3057
  %3166 = vmatprep.subr.bf16.mxu0 0
  %3167 = vmatpush1.bf16.msra.mxu0 %v3058
  %3168 = vmatprep.subr.bf16.mxu0 0
  %3169 = vmatpush1.bf16.msra.mxu0 %v3059
  %3170 = vmatprep.subr.bf16.mxu0 0
  %3171 = vmatpush1.bf16.msra.mxu0 %v3060
  %3172 = vmatprep.subr.bf16.mxu0 0
  %3173 = vmatpush1.bf16.msra.mxu0 %v3061
  %3174 = vmatprep.subr.bf16.mxu0 0
  %3175 = vmatpush1.bf16.msra.mxu0 %v3062
  %3176 = vmatprep.mubr.bf16.mxu0 %v2833
  %3177 = vmatmul.mubr.bf16.gmra.mrb[0].mxu0 %v2832
  %v3178 = vpop.f32.mrb[0].mxu0
  %v3179 = vadd.f32 %v3130, %v3178
  %v3180 = vpop.f32.mrb[0].mxu0
  %v3181 = vpop.f32.mrb[0].mxu0
  %v3182 = vadd.f32 %v3133, %v3181
  %v3183 = vpop.f32.mrb[0].mxu0
  %3184 = vmatprep.mubr.bf16.mxu0 %v2837
  %3185 = vmatmul.mubr.bf16.gmra.mrb[0].mxu0 %v2836
  %v3186 = vpop.f32.mrb[0].mxu0
  %v3187 = vadd.f32 %v3138, %v3186
  %v3188 = vpop.f32.mrb[0].mxu0
  %v3189 = vpop.f32.mrb[0].mxu0
  %v3190 = vadd.f32 %v3141, %v3189
  %v3191 = vpop.f32.mrb[0].mxu0
  %3192 = vdwg.mxu0
  %v3193 = vadd.f32 %v2584, %v3179
  %v3194 = vadd.f32 %v2585, %v3182
  %v3195 = vadd.f32 %v2586, %v3187
  %v3196 = vadd.f32 %v2587, %v3190
  %v3197 = vld [vmem:[%s10] sm:$0x1]
  %v3199 = vlaneseq
  %v3200 = vshrl.u32 %v3199, 7
  %v3201 = vsub.s32 0, %v3200
  %v3202 = vrot.slane %v3197, %v3201
  %v3204 = vadd.f32 %v3193, %v3202
  %v3205 = vadd.f32 %v3194, %v3202
  %v3206 = vadd.f32 %v3195, %v3202
  %v3207 = vadd.f32 %v3196, %v3202
  %v3208 = vadd.f32 %v760, %v3204
  %v3209 = vadd.f32 %v761, %v3205
  %v3210 = vadd.f32 %v762, %v3206
  %v3211 = vadd.f32 %v763, %v3207
  %v3212 = vld [vmem:[%s13] sm:$0x1]
  %v3213 = vld [vmem:[%s14] sm:$0x1]
  %v3214 = vsel %vm115, %v3208, 0.0
  %3215 = vadd.xlane.f32.xlu0 %v3214
  %v3216 = vpop.xlane.xlu0 %3215
  %v3217 = vsel %vm115, %v3209, 0.0
  %3218 = vadd.xlane.f32.xlu0 %v3217
  %v3219 = vpop.xlane.xlu0 %3218
  %v3220 = vsel %vm115, %v3210, 0.0
  %3221 = vadd.xlane.f32.xlu0 %v3220
  %v3222 = vpop.xlane.xlu0 %3221
  %v3223 = vsel %vm115, %v3211, 0.0
  %3224 = vadd.xlane.f32.xlu0 %v3223
  %v3225 = vpop.xlane.xlu0 %3224
  %v3226 = vmul.f32 %v3216, %v703
  %v3227 = vmul.f32 %v3219, %v703
  %v3228 = vmul.f32 %v3222, %v703
  %v3229 = vmul.f32 %v3225, %v703
  %v3230 = vsub.f32 %v3208, %v3226
  %v3231 = vsub.f32 %v3209, %v3227
  %v3232 = vsub.f32 %v3210, %v3228
  %v3233 = vsub.f32 %v3211, %v3229
  %v3234 = vmul.f32 %v3230, %v3230
  %v3235 = vmul.f32 %v3231, %v3231
  %v3236 = vmul.f32 %v3232, %v3232
  %v3237 = vmul.f32 %v3233, %v3233
  %v3238 = vsel %vm115, %v3234, 0.0
  %3239 = vadd.xlane.f32.xlu0 %v3238
  %v3240 = vpop.xlane.xlu0 %3239
  %v3241 = vsel %vm115, %v3235, 0.0
  %3242 = vadd.xlane.f32.xlu0 %v3241
  %v3243 = vpop.xlane.xlu0 %3242
  %v3244 = vsel %vm115, %v3236, 0.0
  %3245 = vadd.xlane.f32.xlu0 %v3244
  %v3246 = vpop.xlane.xlu0 %3245
  %v3247 = vsel %vm115, %v3237, 0.0
  %3248 = vadd.xlane.f32.xlu0 %v3247
  %v3249 = vpop.xlane.xlu0 %3248
  %v3250 = vmul.f32 %v3240, %v703
  %v3251 = vmul.f32 %v3243, %v703
  %v3252 = vmul.f32 %v3246, %v703
  %v3253 = vmul.f32 %v3249, %v703
  %v3254 = vadd.f32 %v3250, 1e-05
  %v3255 = vadd.f32 %v3251, 1e-05
  %v3256 = vadd.f32 %v3252, 1e-05
  %v3257 = vadd.f32 %v3253, 1e-05
  %v3258 = vrsqrt.pop %v3254
  %v3259 = vrsqrt.pop %v3255
  %v3260 = vrsqrt.pop %v3256
  %v3261 = vrsqrt.pop %v3257
  %v3262 = vmul.f32 %v3230, %v3258
  %v3263 = vmul.f32 %v3231, %v3259
  %v3264 = vmul.f32 %v3232, %v3260
  %v3265 = vmul.f32 %v3233, %v3261
  %v3267 = vlaneseq
  %v3268 = vshrl.u32 %v3267, 7
  %v3269 = vsub.s32 0, %v3268
  %v3270 = vrot.slane %v3212, %v3269
  %v3272 = vmul.f32 %v3262, %v3270
  %v3273 = vmul.f32 %v3263, %v3270
  %v3274 = vmul.f32 %v3264, %v3270
  %v3275 = vmul.f32 %v3265, %v3270
  %v3277 = vlaneseq
  %v3278 = vshrl.u32 %v3277, 7
  %v3279 = vsub.s32 0, %v3278
  %v3280 = vrot.slane %v3213, %v3279
  %v3282 = vadd.f32 %v3272, %v3280
  %v3283 = vadd.f32 %v3273, %v3280
  %v3284 = vadd.f32 %v3274, %v3280
  %v3285 = vadd.f32 %v3275, %v3280
  %v3286 = vpack.c.bf16 %v3283, %v3282
  %v3287 = vpack.c.bf16 %v3285, %v3284
  %v3290 = vunpack.c.l.b16 %v3286
  %v3291 = vunpack.c.h.b16 %v3286
  %v3292 = vunpack.c.l.b16 %v3287
  %v3293 = vunpack.c.h.b16 %v3287
  %v3294 = vpack.c.b16 %v3290, %v3290
  %v3295 = vpack.c.b16 %v3291, %v3291
  %v3296 = vpack.c.b16 %v3292, %v3292
  %v3297 = vpack.c.b16 %v3293, %v3293
  %vm3302 = vcmask 404480
  %3303 = vst.msk [vmem:[%s15] sm:$0xf] %vm3302, %v3294
  %3304 = vst.msk [vmem:[%s15 + $0x4] sm:$0xf] %vm3302, %v3295
  %3305 = vst.msk [vmem:[%s15 + $0x8] sm:$0xf] %vm3302, %v3296
  %3306 = vst.msk [vmem:[%s15 + $0xc] sm:$0xf] %vm3302, %v3297
  // Predicated region
  $region62: #{disfluency_forward.4} parent=0 // pred_check
    _
  $region63: #{disfluency_forward.4} parent=0 // pred_check_branch
    %3308 = sbr.rel (0) target = $region65
  $region64: #{disfluency_forward.4} parent=0 // pred_region
    _
  $region65: #{disfluency_forward.4} parent=0 // pred_fallthru
    _
  // Predicated region
  $region66: #{disfluency_forward.4} parent=0 // pred_check
    _
  $region67: #{disfluency_forward.4} parent=0 // pred_check_branch
    %3310 = sbr.rel (0) target = $region69
  $region68: #{disfluency_forward.4} parent=0 // pred_region
    _
  $region69: #{disfluency_forward.4} parent=0 // pred_fallthru
    _

</llo_original>
